<compile_context>
chip_gen: v7x
topology: tpu7x:2x2x1
jax: 0.10.0
libtpu: 0.0.40
codegen_flags: <defaults>
</compile_context>

<pallas_src>
import math
import functools

import jax
import jax.numpy as jnp
from jax.experimental import pallas as pl
from jax.experimental.pallas import tpu as pltpu

LN_EPS = 0.1                               # Encoder LayerNorm eps (module default)
LOG2PI = math.log(2.0 * math.pi)
MIX_LOGW = (math.log(3.0 / 20.0), math.log(3.0 / 4.0), math.log(1.0 / 10.0))


# ----------------------------- kernel helpers ---------------------------------

def _layernorm(h, gamma, beta, eps=LN_EPS):
    m = jnp.mean(h, axis=-1, keepdims=True)
    v = jnp.mean((h - m) ** 2, axis=-1, keepdims=True)
    return (h - m) * jax.lax.rsqrt(v + eps) * gamma + beta


def _swish(h):
    return h * jax.nn.sigmoid(h)


def _lnpdf(v, mu, lv):
    return -0.5 * (lv + LOG2PI + (v - mu) ** 2 * jnp.exp(-lv))


# ----------------------------- fused kernel -----------------------------------

def vae_fused_kernel(x_ref, w1_ref, b1_ref, wh_ref, bh_ref, g_ref, be_ref,
                     wml_ref, bml_ref, wd_ref, bd_ref,
                     mll_ref, kld_ref, *, gamma, latent_dim):
    """Fused: normalize -> (encoder, encoder_old) -> decoder -> MLL + KLD partials."""
    x = x_ref[...].astype(jnp.float32)

    # x = x / ||x||_2 (clamped), shared by both encoders. Dropout: identity (eval).
    norm = jnp.sqrt(jnp.sum(x * x, axis=-1, keepdims=True))
    xn = x / jnp.maximum(norm, 1e-8)
    xn_b = xn.astype(jnp.bfloat16)          # bf16 only at the MXU inputs

    def encode(e):
        # fc1 + LN1
        h = _layernorm(
            _swish(jnp.dot(xn_b, w1_ref[e], preferred_element_type=jnp.float32)
                   + b1_ref[e:e + 1, :]),
            g_ref[5 * e:5 * e + 1, :], be_ref[5 * e:5 * e + 1, :])
        res = h                              # running sum h1 + h2 + ...
        for i in range(4):                   # fc2..fc5, static unroll
            pre = (jnp.dot(h.astype(jnp.bfloat16), wh_ref[4 * e + i],
                           preferred_element_type=jnp.float32)
                   + bh_ref[4 * e + i:4 * e + i + 1, :] + res)
            h = _layernorm(_swish(pre),
                           g_ref[5 * e + i + 1:5 * e + i + 2, :],
                           be_ref[5 * e + i + 1:5 * e + i + 2, :])
            res = res + h
        # concatenated [mu | logvar] head: single 128-lane matmul
        mulv = (jnp.dot(h.astype(jnp.bfloat16), wml_ref[e],
                        preferred_element_type=jnp.float32) + bml_ref[e:e + 1, :])
        return mulv[:, :latent_dim], mulv[:, latent_dim:]

    mu, logvar = encode(0)                   # VAE.encoder
    old_mu, old_logvar = encode(1)           # prior.encoder_old
    z = mu                                   # reparameterize() in eval mode

    # decoder + log-softmax MLL rows (uses un-normalized user_embeds x)
    logits = (jnp.dot(z.astype(jnp.bfloat16), wd_ref[...],
                      preferred_element_type=jnp.float32) + bd_ref[...])
    m = jnp.max(logits, axis=-1, keepdims=True)
    lse = jnp.log(jnp.sum(jnp.exp(logits - m), axis=-1, keepdims=True)) + m
    log_sm = logits - lse
    mll_rows = jnp.sum(log_sm * x, axis=-1, keepdims=True)

    # composite prior: logsumexp over {N(0,1), old posterior, N(0, e^10)}
    g0 = _lnpdf(z, 0.0, 0.0) + MIX_LOGW[0]
    g1 = _lnpdf(z, old_mu, old_logvar) + MIX_LOGW[1]
    g2 = _lnpdf(z, 0.0, 10.0) + MIX_LOGW[2]
    gm = jnp.maximum(jnp.maximum(g0, g1), g2)
    prior_ld = gm + jnp.log(jnp.exp(g0 - gm) + jnp.exp(g1 - gm) + jnp.exp(g2 - gm))

    post_ld = _lnpdf(z, mu, logvar)
    kl_rows = jnp.sum(post_ld - prior_ld, axis=-1, keepdims=True)
    kl_weight = gamma * jnp.sum(x, axis=-1, keepdims=True)   # gamma * user_embeds.sum(-1)
    kld_rows = kl_rows * kl_weight

    # one scalar partial sum per tile, written as a lane-dense (8,128) broadcast
    mll_ref[...] = jnp.broadcast_to(jnp.sum(mll_rows, axis=0, keepdims=True), mll_ref.shape)
    kld_ref[...] = jnp.broadcast_to(jnp.sum(kld_rows, axis=0, keepdims=True), kld_ref.shape)


# ----------------------------- wrapper -----------------------------------------

def vae_forward(user_embeds, p, gamma=1.0, tile_b=128):
    """Eval-mode VAE forward with loss. Returns ((mll, kld), negative_elbo)."""
    B, D = user_embeds.shape
    H = p["w1"].shape[-1]
    L = p["wd"].shape[0]
    assert B % tile_b == 0, "batch must be a multiple of tile_b"
    n_tiles = B // tile_b                    # keep this even on v7x (2 TensorCores)

    def const(shape):
        n = len(shape)
        return pl.BlockSpec(shape, lambda i, _n=n: (0,) * _n)

    in_specs = [
        pl.BlockSpec((tile_b, D), lambda i: (i, 0)),   # x (batch-tiled)
        const(p["w1"].shape),   # (2, D, H)   bf16
        const(p["b1"].shape),   # (2, H)      f32
        const(p["wh"].shape),   # (8, H, H)   bf16
        const(p["bh"].shape),   # (8, H)      f32
        const(p["ln_g"].shape),  # (10, H)    f32
        const(p["ln_b"].shape),  # (10, H)    f32
        const(p["wml"].shape),  # (2, H, 2L)  bf16
        const(p["bml"].shape),  # (2, 2L)     f32
        const(p["wd"].shape),   # (L, D)      bf16
        const(p["bd"].shape),   # (1, D)      f32
    ]
    out_specs = [pl.BlockSpec((8, 128), lambda i: (i, 0)),
                 pl.BlockSpec((8, 128), lambda i: (i, 0))]
    out_shape = [jax.ShapeDtypeStruct((n_tiles * 8, 128), jnp.float32),
                 jax.ShapeDtypeStruct((n_tiles * 8, 128), jnp.float32)]

    flops = B * (2 * (2 * D * H + 8 * H * H + 4 * H * L) + 2 * L * D)
    transc = B * (10 * H + D + 8 * L)
    bytes_acc = (B * D * 4                                   # x
                 + 2 * (2 * D * H + 8 * H * H + 4 * H * L + L * D)   # bf16 weights
                 + 4 * (2 * H + 8 * H + 20 * H + 2 * 2 * L + D)      # f32 biases/LN
                 + n_tiles * 8 * 128 * 4 * 2)                # outputs

    kern = functools.partial(vae_fused_kernel, gamma=float(gamma), latent_dim=L)
    mll_p, kld_p = pl.pallas_call(
        kern,
        grid=(n_tiles,),
        in_specs=in_specs,
        out_specs=out_specs,
        out_shape=out_shape,
        compiler_params=pltpu.CompilerParams(dimension_semantics=("parallel",)),
        cost_estimate=pl.CostEstimate(flops=int(flops), transcendentals=int(transc),
                                      bytes_accessed=int(bytes_acc)),
    )(user_embeds, p["w1"], p["b1"], p["wh"], p["bh"], p["ln_g"], p["ln_b"],
      p["wml"], p["bml"], p["wd"], p["bd"])

    # one scalar per tile lives at row 8*i, lane 0 of each output block
    mll = jnp.sum(mll_p[0::8, 0]) / B
    kld = jnp.sum(kld_p[0::8, 0]) / B
    negative_elbo = -(mll - kld)
    return (mll, kld), negative_elbo


# ----------------------------- parameters --------------------------------------

def _lin_init(key, fan_in, shape):
    bound = 1.0 / math.sqrt(fan_in)
    return jax.random.uniform(key, shape, jnp.float32, -bound, bound)


def init_encoder_params(key, input_dim, hidden_dim, latent_dim):
    ks = jax.random.split(key, 8)
    return dict(
        w1=_lin_init(ks[0], input_dim, (input_dim, hidden_dim)),
        b1=_lin_init(ks[1], input_dim, (hidden_dim,)),
        wh=_lin_init(ks[2], hidden_dim, (4, hidden_dim, hidden_dim)),
        bh=_lin_init(ks[3], hidden_dim, (4, hidden_dim)),
        ln_g=jnp.ones((5, hidden_dim), jnp.float32),
        ln_b=jnp.zeros((5, hidden_dim), jnp.float32),
        wmu=_lin_init(ks[4], hidden_dim, (hidden_dim, latent_dim)),
        bmu=_lin_init(ks[5], hidden_dim, (latent_dim,)),
        wlv=_lin_init(ks[6], hidden_dim, (hidden_dim, latent_dim)),
        blv=_lin_init(ks[7], hidden_dim, (latent_dim,)),
    )


def pack_params(enc, old, wd, bd):
    """Stack encoder/encoder_old weights and concatenate mu|logvar heads.
    Matmul weights stored bf16 (f32 accumulation in-kernel); biases/LN stay f32."""
    bf16 = jnp.bfloat16
    cat = lambda a, b: jnp.concatenate([a, b], axis=-1)
    return dict(
        w1=jnp.stack([enc["w1"], old["w1"]]).astype(bf16),                 # (2,D,H)
        b1=jnp.stack([enc["b1"], old["b1"]]),                              # (2,H)
        wh=jnp.concatenate([enc["wh"], old["wh"]], 0).astype(bf16),        # (8,H,H)
        bh=jnp.concatenate([enc["bh"], old["bh"]], 0),                     # (8,H)
        ln_g=jnp.concatenate([enc["ln_g"], old["ln_g"]], 0),               # (10,H)
        ln_b=jnp.concatenate([enc["ln_b"], old["ln_b"]], 0),               # (10,H)
        wml=jnp.stack([cat(enc["wmu"], enc["wlv"]),
                       cat(old["wmu"], old["wlv"])]).astype(bf16),         # (2,H,2L)
        bml=jnp.stack([cat(enc["bmu"], enc["blv"]),
                       cat(old["bmu"], old["blv"])]),                      # (2,2L)
        wd=wd.astype(bf16),                                                # (L,D)
        bd=bd.reshape(1, -1),                                              # (1,D)
    )


# ----------------------------- pure-JAX reference -------------------------------

def vae_forward_ref(x, p, gamma=1.0):
    """Reference forward mirroring the kernel's bf16 matmul casts."""
    L = p["wd"].shape[0]

    def ln(h, gam, bet):
        m = jnp.mean(h, -1, keepdims=True)
        v = jnp.mean((h - m) ** 2, -1, keepdims=True)
        return (h - m) * jax.lax.rsqrt(v + LN_EPS) * gam + bet

    sw = lambda h: h * jax.nn.sigmoid(h)

    def encode(e):
        xn = x / jnp.maximum(jnp.sqrt(jnp.sum(x * x, -1, keepdims=True)), 1e-8)
        h = ln(sw(jnp.dot(xn.astype(jnp.bfloat16), p["w1"][e],
                          preferred_element_type=jnp.float32) + p["b1"][e]),
               p["ln_g"][5 * e], p["ln_b"][5 * e])
        res = h
        for i in range(4):
            pre = (jnp.dot(h.astype(jnp.bfloat16), p["wh"][4 * e + i],
                           preferred_element_type=jnp.float32)
                   + p["bh"][4 * e + i] + res)
            h = ln(sw(pre), p["ln_g"][5 * e + i + 1], p["ln_b"][5 * e + i + 1])
            res = res + h
        mulv = (jnp.dot(h.astype(jnp.bfloat16), p["wml"][e],
                        preferred_element_type=jnp.float32) + p["bml"][e])
        return mulv[:, :L], mulv[:, L:]

    mu, lv = encode(0)
    omu, olv = encode(1)
    z = mu
    logits = (jnp.dot(z.astype(jnp.bfloat16), p["wd"],
                      preferred_element_type=jnp.float32) + p["bd"])
    m = jnp.max(logits, -1, keepdims=True)
    log_sm = logits - (jnp.log(jnp.sum(jnp.exp(logits - m), -1, keepdims=True)) + m)
    mll = jnp.mean(jnp.sum(log_sm * x, -1))

    g0 = _lnpdf(z, 0.0, 0.0) + MIX_LOGW[0]
    g1 = _lnpdf(z, omu, olv) + MIX_LOGW[1]
    g2 = _lnpdf(z, 0.0, 10.0) + MIX_LOGW[2]
    gm = jnp.maximum(jnp.maximum(g0, g1), g2)
    prior = gm + jnp.log(jnp.exp(g0 - gm) + jnp.exp(g1 - gm) + jnp.exp(g2 - gm))
    post = _lnpdf(z, mu, lv)
    kld = jnp.mean(jnp.sum(post - prior, -1) * (gamma * jnp.sum(x, -1)))
    return (mll, kld), -(mll - kld)


# ----------------------------- main ---------------------------------------------

if __name__ == "__main__":
    B, INPUT_DIM, HIDDEN_DIM, LATENT_DIM = 256, 256, 128, 64

    key = jax.random.PRNGKey(0)
    k_x, k_enc, k_old, k_wd, k_bd = jax.random.split(key, 5)

    # user_embeds: non-negative interaction-style vector [batch, input_dim]
    user_embeds = jax.random.uniform(k_x, (B, INPUT_DIM), jnp.float32)

    enc_params = init_encoder_params(k_enc, INPUT_DIM, HIDDEN_DIM, LATENT_DIM)
    old_params = init_encoder_params(k_old, INPUT_DIM, HIDDEN_DIM, LATENT_DIM)
    wd = _lin_init(k_wd, LATENT_DIM, (LATENT_DIM, INPUT_DIM))   # decoder weight [in, out]
    bd = _lin_init(k_bd, LATENT_DIM, (INPUT_DIM,))              # decoder bias

    packed = pack_params(enc_params, old_params, wd, bd)

    fwd = jax.jit(functools.partial(vae_forward, gamma=1.0, tile_b=128))
    (mll, kld), neg_elbo = fwd(user_embeds, packed)
    jax.block_until_ready((mll, kld, neg_elbo))

    # loose sanity check vs pure-JAX reference (same bf16 matmul casts)
    (rmll, rkld), rneg = vae_forward_ref(user_embeds, packed, gamma=1.0)
    for a, b in ((mll, rmll), (kld, rkld), (neg_elbo, rneg)):
        a, b = float(a), float(b)
        assert abs(a - b) <= 1e-2 + 1e-2 * abs(b), (a, b)

    print("KERNEL_OK")
</pallas_src>

<mosaic_0001>
module attributes {stable_mosaic.version = 11 : i64} {
  func.func @vae_fused_kernel(%arg0: i32, %arg1: memref<128x256xf32, #tpu.memory_space<vmem>>, %arg2: memref<2x256x128xbf16, #tpu.memory_space<vmem>>, %arg3: memref<2x128xf32, #tpu.memory_space<vmem>>, %arg4: memref<8x128x128xbf16, #tpu.memory_space<vmem>>, %arg5: memref<8x128xf32, #tpu.memory_space<vmem>>, %arg6: memref<10x128xf32, #tpu.memory_space<vmem>>, %arg7: memref<10x128xf32, #tpu.memory_space<vmem>>, %arg8: memref<2x128x128xbf16, #tpu.memory_space<vmem>>, %arg9: memref<2x128xf32, #tpu.memory_space<vmem>>, %arg10: memref<64x256xbf16, #tpu.memory_space<vmem>>, %arg11: memref<1x256xf32, #tpu.memory_space<vmem>>, %arg12: memref<8x128xf32, #tpu.memory_space<vmem>>, %arg13: memref<8x128xf32, #tpu.memory_space<vmem>>) attributes {dimension_semantics = [#tpu.dimension_semantics<parallel>], iteration_bounds = array<i64: 2>, scalar_prefetch = 0 : i64, scratch_operands = 0 : i64, tpu.core_type = #tpu.core_type<tc>, window_params = [{transform_indices = @transform_0, window_bounds = array<i64: 128, 256>}, {pipeline_mode = #tpu.pipeline_mode<synchronous>, transform_indices = @transform_1, window_bounds = array<i64: 2, 256, 128>}, {pipeline_mode = #tpu.pipeline_mode<synchronous>, transform_indices = @transform_2, window_bounds = array<i64: 2, 128>}, {pipeline_mode = #tpu.pipeline_mode<synchronous>, transform_indices = @transform_3, window_bounds = array<i64: 8, 128, 128>}, {pipeline_mode = #tpu.pipeline_mode<synchronous>, transform_indices = @transform_4, window_bounds = array<i64: 8, 128>}, {pipeline_mode = #tpu.pipeline_mode<synchronous>, transform_indices = @transform_5, window_bounds = array<i64: 10, 128>}, {pipeline_mode = #tpu.pipeline_mode<synchronous>, transform_indices = @transform_6, window_bounds = array<i64: 10, 128>}, {pipeline_mode = #tpu.pipeline_mode<synchronous>, transform_indices = @transform_7, window_bounds = array<i64: 2, 128, 128>}, {pipeline_mode = #tpu.pipeline_mode<synchronous>, transform_indices = @transform_8, window_bounds = array<i64: 2, 128>}, {pipeline_mode = #tpu.pipeline_mode<synchronous>, transform_indices = @transform_9, window_bounds = array<i64: 64, 256>}, {pipeline_mode = #tpu.pipeline_mode<synchronous>, transform_indices = @transform_10, window_bounds = array<i64: 1, 256>}, {transform_indices = @transform_11, window_bounds = array<i64: 8, 128>}, {transform_indices = @transform_12, window_bounds = array<i64: 8, 128>}]} {
    %c0 = arith.constant 0 : index
    %c0_0 = arith.constant 0 : index
    %0 = vector.load %arg1[%c0, %c0_0] : memref<128x256xf32, #tpu.memory_space<vmem>>, vector<128x256xf32>
    %1 = arith.mulf %0, %0 : vector<128x256xf32>
    %cst = arith.constant dense<0.000000e+00> : vector<128xf32>
    %2 = vector.multi_reduction <add>, %1, %cst [1] : vector<128x256xf32> to vector<128xf32>
    %3 = vector.shape_cast %2 : vector<128xf32> to vector<128x1xf32>
    %4 = math.sqrt %3 : vector<128x1xf32>
    %cst_1 = arith.constant 9.99999993E-9 : f32
    %5 = vector.broadcast %cst_1 : f32 to vector<128x1xf32>
    %6 = arith.maximumf %4, %5 : vector<128x1xf32>
    %7 = vector.broadcast %6 : vector<128x1xf32> to vector<128x256xf32>
    %8 = arith.divf %0, %7 : vector<128x256xf32>
    %9 = arith.truncf %8 : vector<128x256xf32> to vector<128x256xbf16>
    %c0_2 = arith.constant 0 : index
    %c0_3 = arith.constant 0 : index
    %c0_4 = arith.constant 0 : index
    %10 = vector.load %arg2[%c0_2, %c0_3, %c0_4] : memref<2x256x128xbf16, #tpu.memory_space<vmem>>, vector<1x256x128xbf16>
    %11 = vector.shape_cast %10 : vector<1x256x128xbf16> to vector<256x128xbf16>
    %cst_5 = arith.constant dense<0.000000e+00> : vector<128x128xf32>
    %12 = tpu.matmul %9, %11, %cst_5 {dimension_numbers = #tpu.dot_dimension_numbers<[1], [0], [0], [1], [0, 0, 1, 1], [], []>} : vector<128x256xbf16>, vector<256x128xbf16>, vector<128x128xf32> -> vector<128x128xf32>
    %c0_6 = arith.constant 0 : index
    %c0_7 = arith.constant 0 : index
    %13 = vector.load %arg3[%c0_6, %c0_7] : memref<2x128xf32, #tpu.memory_space<vmem>>, vector<1x128xf32>
    %14 = vector.broadcast %13 : vector<1x128xf32> to vector<128x128xf32>
    %15 = arith.addf %12, %14 : vector<128x128xf32>
    %16 = arith.negf %15 : vector<128x128xf32>
    %17 = math.exp %16 : vector<128x128xf32>
    %cst_8 = arith.constant 1.000000e+00 : f32
    %18 = vector.broadcast %cst_8 : f32 to vector<128x128xf32>
    %19 = arith.addf %18, %17 : vector<128x128xf32>
    %20 = arith.divf %18, %19 : vector<128x128xf32>
    %21 = arith.mulf %15, %20 : vector<128x128xf32>
    %c0_9 = arith.constant 0 : index
    %c0_10 = arith.constant 0 : index
    %22 = vector.load %arg6[%c0_9, %c0_10] : memref<10x128xf32, #tpu.memory_space<vmem>>, vector<1x128xf32>
    %c0_11 = arith.constant 0 : index
    %c0_12 = arith.constant 0 : index
    %23 = vector.load %arg7[%c0_11, %c0_12] : memref<10x128xf32, #tpu.memory_space<vmem>>, vector<1x128xf32>
    %cst_13 = arith.constant dense<0.000000e+00> : vector<128xf32>
    %24 = vector.multi_reduction <add>, %21, %cst_13 [1] : vector<128x128xf32> to vector<128xf32>
    %25 = vector.shape_cast %24 : vector<128xf32> to vector<128x1xf32>
    %cst_14 = arith.constant 1.280000e+02 : f32
    %26 = vector.broadcast %cst_14 : f32 to vector<128x1xf32>
    %27 = arith.divf %25, %26 : vector<128x1xf32>
    %28 = vector.broadcast %27 : vector<128x1xf32> to vector<128x128xf32>
    %29 = arith.subf %21, %28 : vector<128x128xf32>
    %30 = arith.mulf %29, %29 : vector<128x128xf32>
    %cst_15 = arith.constant dense<0.000000e+00> : vector<128xf32>
    %31 = vector.multi_reduction <add>, %30, %cst_15 [1] : vector<128x128xf32> to vector<128xf32>
    %32 = vector.shape_cast %31 : vector<128xf32> to vector<128x1xf32>
    %cst_16 = arith.constant 1.280000e+02 : f32
    %33 = vector.broadcast %cst_16 : f32 to vector<128x1xf32>
    %34 = arith.divf %32, %33 : vector<128x1xf32>
    %35 = vector.broadcast %27 : vector<128x1xf32> to vector<128x128xf32>
    %36 = arith.subf %21, %35 : vector<128x128xf32>
    %cst_17 = arith.constant 1.000000e-01 : f32
    %37 = vector.broadcast %cst_17 : f32 to vector<128x1xf32>
    %38 = arith.addf %34, %37 : vector<128x1xf32>
    %39 = math.rsqrt %38 : vector<128x1xf32>
    %40 = vector.broadcast %39 : vector<128x1xf32> to vector<128x128xf32>
    %41 = arith.mulf %36, %40 : vector<128x128xf32>
    %42 = vector.broadcast %22 : vector<1x128xf32> to vector<128x128xf32>
    %43 = arith.mulf %41, %42 : vector<128x128xf32>
    %44 = vector.broadcast %23 : vector<1x128xf32> to vector<128x128xf32>
    %45 = arith.addf %43, %44 : vector<128x128xf32>
    %46 = arith.truncf %45 : vector<128x128xf32> to vector<128x128xbf16>
    %c0_18 = arith.constant 0 : index
    %c0_19 = arith.constant 0 : index
    %c0_20 = arith.constant 0 : index
    %47 = vector.load %arg4[%c0_18, %c0_19, %c0_20] : memref<8x128x128xbf16, #tpu.memory_space<vmem>>, vector<1x128x128xbf16>
    %48 = vector.shape_cast %47 : vector<1x128x128xbf16> to vector<128x128xbf16>
    %cst_21 = arith.constant dense<0.000000e+00> : vector<128x128xf32>
    %49 = tpu.matmul %46, %48, %cst_21 {dimension_numbers = #tpu.dot_dimension_numbers<[1], [0], [0], [1], [0, 0, 1, 1], [], []>} : vector<128x128xbf16>, vector<128x128xbf16>, vector<128x128xf32> -> vector<128x128xf32>
    %c0_22 = arith.constant 0 : index
    %c0_23 = arith.constant 0 : index
    %50 = vector.load %arg5[%c0_22, %c0_23] : memref<8x128xf32, #tpu.memory_space<vmem>>, vector<1x128xf32>
    %51 = vector.broadcast %50 : vector<1x128xf32> to vector<128x128xf32>
    %52 = arith.addf %49, %51 : vector<128x128xf32>
    %53 = arith.addf %52, %45 : vector<128x128xf32>
    %54 = arith.negf %53 : vector<128x128xf32>
    %55 = math.exp %54 : vector<128x128xf32>
    %cst_24 = arith.constant 1.000000e+00 : f32
    %56 = vector.broadcast %cst_24 : f32 to vector<128x128xf32>
    %57 = arith.addf %56, %55 : vector<128x128xf32>
    %58 = arith.divf %56, %57 : vector<128x128xf32>
    %59 = arith.mulf %53, %58 : vector<128x128xf32>
    %c1 = arith.constant 1 : index
    %c0_25 = arith.constant 0 : index
    %60 = vector.load %arg6[%c1, %c0_25] : memref<10x128xf32, #tpu.memory_space<vmem>>, vector<1x128xf32>
    %c1_26 = arith.constant 1 : index
    %c0_27 = arith.constant 0 : index
    %61 = vector.load %arg7[%c1_26, %c0_27] : memref<10x128xf32, #tpu.memory_space<vmem>>, vector<1x128xf32>
    %cst_28 = arith.constant dense<0.000000e+00> : vector<128xf32>
    %62 = vector.multi_reduction <add>, %59, %cst_28 [1] : vector<128x128xf32> to vector<128xf32>
    %63 = vector.shape_cast %62 : vector<128xf32> to vector<128x1xf32>
    %cst_29 = arith.constant 1.280000e+02 : f32
    %64 = vector.broadcast %cst_29 : f32 to vector<128x1xf32>
    %65 = arith.divf %63, %64 : vector<128x1xf32>
    %66 = vector.broadcast %65 : vector<128x1xf32> to vector<128x128xf32>
    %67 = arith.subf %59, %66 : vector<128x128xf32>
    %68 = arith.mulf %67, %67 : vector<128x128xf32>
    %cst_30 = arith.constant dense<0.000000e+00> : vector<128xf32>
    %69 = vector.multi_reduction <add>, %68, %cst_30 [1] : vector<128x128xf32> to vector<128xf32>
    %70 = vector.shape_cast %69 : vector<128xf32> to vector<128x1xf32>
    %cst_31 = arith.constant 1.280000e+02 : f32
    %71 = vector.broadcast %cst_31 : f32 to vector<128x1xf32>
    %72 = arith.divf %70, %71 : vector<128x1xf32>
    %73 = vector.broadcast %65 : vector<128x1xf32> to vector<128x128xf32>
    %74 = arith.subf %59, %73 : vector<128x128xf32>
    %cst_32 = arith.constant 1.000000e-01 : f32
    %75 = vector.broadcast %cst_32 : f32 to vector<128x1xf32>
    %76 = arith.addf %72, %75 : vector<128x1xf32>
    %77 = math.rsqrt %76 : vector<128x1xf32>
    %78 = vector.broadcast %77 : vector<128x1xf32> to vector<128x128xf32>
    %79 = arith.mulf %74, %78 : vector<128x128xf32>
    %80 = vector.broadcast %60 : vector<1x128xf32> to vector<128x128xf32>
    %81 = arith.mulf %79, %80 : vector<128x128xf32>
    %82 = vector.broadcast %61 : vector<1x128xf32> to vector<128x128xf32>
    %83 = arith.addf %81, %82 : vector<128x128xf32>
    %84 = arith.addf %45, %83 : vector<128x128xf32>
    %85 = arith.truncf %83 : vector<128x128xf32> to vector<128x128xbf16>
    %c1_33 = arith.constant 1 : index
    %c0_34 = arith.constant 0 : index
    %c0_35 = arith.constant 0 : index
    %86 = vector.load %arg4[%c1_33, %c0_34, %c0_35] : memref<8x128x128xbf16, #tpu.memory_space<vmem>>, vector<1x128x128xbf16>
    %87 = vector.shape_cast %86 : vector<1x128x128xbf16> to vector<128x128xbf16>
    %cst_36 = arith.constant dense<0.000000e+00> : vector<128x128xf32>
    %88 = tpu.matmul %85, %87, %cst_36 {dimension_numbers = #tpu.dot_dimension_numbers<[1], [0], [0], [1], [0, 0, 1, 1], [], []>} : vector<128x128xbf16>, vector<128x128xbf16>, vector<128x128xf32> -> vector<128x128xf32>
    %c1_37 = arith.constant 1 : index
    %c0_38 = arith.constant 0 : index
    %89 = vector.load %arg5[%c1_37, %c0_38] : memref<8x128xf32, #tpu.memory_space<vmem>>, vector<1x128xf32>
    %90 = vector.broadcast %89 : vector<1x128xf32> to vector<128x128xf32>
    %91 = arith.addf %88, %90 : vector<128x128xf32>
    %92 = arith.addf %91, %84 : vector<128x128xf32>
    %93 = arith.negf %92 : vector<128x128xf32>
    %94 = math.exp %93 : vector<128x128xf32>
    %cst_39 = arith.constant 1.000000e+00 : f32
    %95 = vector.broadcast %cst_39 : f32 to vector<128x128xf32>
    %96 = arith.addf %95, %94 : vector<128x128xf32>
    %97 = arith.divf %95, %96 : vector<128x128xf32>
    %98 = arith.mulf %92, %97 : vector<128x128xf32>
    %c2 = arith.constant 2 : index
    %c0_40 = arith.constant 0 : index
    %99 = vector.load %arg6[%c2, %c0_40] : memref<10x128xf32, #tpu.memory_space<vmem>>, vector<1x128xf32>
    %c2_41 = arith.constant 2 : index
    %c0_42 = arith.constant 0 : index
    %100 = vector.load %arg7[%c2_41, %c0_42] : memref<10x128xf32, #tpu.memory_space<vmem>>, vector<1x128xf32>
    %cst_43 = arith.constant dense<0.000000e+00> : vector<128xf32>
    %101 = vector.multi_reduction <add>, %98, %cst_43 [1] : vector<128x128xf32> to vector<128xf32>
    %102 = vector.shape_cast %101 : vector<128xf32> to vector<128x1xf32>
    %cst_44 = arith.constant 1.280000e+02 : f32
    %103 = vector.broadcast %cst_44 : f32 to vector<128x1xf32>
    %104 = arith.divf %102, %103 : vector<128x1xf32>
    %105 = vector.broadcast %104 : vector<128x1xf32> to vector<128x128xf32>
    %106 = arith.subf %98, %105 : vector<128x128xf32>
    %107 = arith.mulf %106, %106 : vector<128x128xf32>
    %cst_45 = arith.constant dense<0.000000e+00> : vector<128xf32>
    %108 = vector.multi_reduction <add>, %107, %cst_45 [1] : vector<128x128xf32> to vector<128xf32>
    %109 = vector.shape_cast %108 : vector<128xf32> to vector<128x1xf32>
    %cst_46 = arith.constant 1.280000e+02 : f32
    %110 = vector.broadcast %cst_46 : f32 to vector<128x1xf32>
    %111 = arith.divf %109, %110 : vector<128x1xf32>
    %112 = vector.broadcast %104 : vector<128x1xf32> to vector<128x128xf32>
    %113 = arith.subf %98, %112 : vector<128x128xf32>
    %cst_47 = arith.constant 1.000000e-01 : f32
    %114 = vector.broadcast %cst_47 : f32 to vector<128x1xf32>
    %115 = arith.addf %111, %114 : vector<128x1xf32>
    %116 = math.rsqrt %115 : vector<128x1xf32>
    %117 = vector.broadcast %116 : vector<128x1xf32> to vector<128x128xf32>
    %118 = arith.mulf %113, %117 : vector<128x128xf32>
    %119 = vector.broadcast %99 : vector<1x128xf32> to vector<128x128xf32>
    %120 = arith.mulf %118, %119 : vector<128x128xf32>
    %121 = vector.broadcast %100 : vector<1x128xf32> to vector<128x128xf32>
    %122 = arith.addf %120, %121 : vector<128x128xf32>
    %123 = arith.addf %84, %122 : vector<128x128xf32>
    %124 = arith.truncf %122 : vector<128x128xf32> to vector<128x128xbf16>
    %c2_48 = arith.constant 2 : index
    %c0_49 = arith.constant 0 : index
    %c0_50 = arith.constant 0 : index
    %125 = vector.load %arg4[%c2_48, %c0_49, %c0_50] : memref<8x128x128xbf16, #tpu.memory_space<vmem>>, vector<1x128x128xbf16>
    %126 = vector.shape_cast %125 : vector<1x128x128xbf16> to vector<128x128xbf16>
    %cst_51 = arith.constant dense<0.000000e+00> : vector<128x128xf32>
    %127 = tpu.matmul %124, %126, %cst_51 {dimension_numbers = #tpu.dot_dimension_numbers<[1], [0], [0], [1], [0, 0, 1, 1], [], []>} : vector<128x128xbf16>, vector<128x128xbf16>, vector<128x128xf32> -> vector<128x128xf32>
    %c2_52 = arith.constant 2 : index
    %c0_53 = arith.constant 0 : index
    %128 = vector.load %arg5[%c2_52, %c0_53] : memref<8x128xf32, #tpu.memory_space<vmem>>, vector<1x128xf32>
    %129 = vector.broadcast %128 : vector<1x128xf32> to vector<128x128xf32>
    %130 = arith.addf %127, %129 : vector<128x128xf32>
    %131 = arith.addf %130, %123 : vector<128x128xf32>
    %132 = arith.negf %131 : vector<128x128xf32>
    %133 = math.exp %132 : vector<128x128xf32>
    %cst_54 = arith.constant 1.000000e+00 : f32
    %134 = vector.broadcast %cst_54 : f32 to vector<128x128xf32>
    %135 = arith.addf %134, %133 : vector<128x128xf32>
    %136 = arith.divf %134, %135 : vector<128x128xf32>
    %137 = arith.mulf %131, %136 : vector<128x128xf32>
    %c3 = arith.constant 3 : index
    %c0_55 = arith.constant 0 : index
    %138 = vector.load %arg6[%c3, %c0_55] : memref<10x128xf32, #tpu.memory_space<vmem>>, vector<1x128xf32>
    %c3_56 = arith.constant 3 : index
    %c0_57 = arith.constant 0 : index
    %139 = vector.load %arg7[%c3_56, %c0_57] : memref<10x128xf32, #tpu.memory_space<vmem>>, vector<1x128xf32>
    %cst_58 = arith.constant dense<0.000000e+00> : vector<128xf32>
    %140 = vector.multi_reduction <add>, %137, %cst_58 [1] : vector<128x128xf32> to vector<128xf32>
    %141 = vector.shape_cast %140 : vector<128xf32> to vector<128x1xf32>
    %cst_59 = arith.constant 1.280000e+02 : f32
    %142 = vector.broadcast %cst_59 : f32 to vector<128x1xf32>
    %143 = arith.divf %141, %142 : vector<128x1xf32>
    %144 = vector.broadcast %143 : vector<128x1xf32> to vector<128x128xf32>
    %145 = arith.subf %137, %144 : vector<128x128xf32>
    %146 = arith.mulf %145, %145 : vector<128x128xf32>
    %cst_60 = arith.constant dense<0.000000e+00> : vector<128xf32>
    %147 = vector.multi_reduction <add>, %146, %cst_60 [1] : vector<128x128xf32> to vector<128xf32>
    %148 = vector.shape_cast %147 : vector<128xf32> to vector<128x1xf32>
    %cst_61 = arith.constant 1.280000e+02 : f32
    %149 = vector.broadcast %cst_61 : f32 to vector<128x1xf32>
    %150 = arith.divf %148, %149 : vector<128x1xf32>
    %151 = vector.broadcast %143 : vector<128x1xf32> to vector<128x128xf32>
    %152 = arith.subf %137, %151 : vector<128x128xf32>
    %cst_62 = arith.constant 1.000000e-01 : f32
    %153 = vector.broadcast %cst_62 : f32 to vector<128x1xf32>
    %154 = arith.addf %150, %153 : vector<128x1xf32>
    %155 = math.rsqrt %154 : vector<128x1xf32>
    %156 = vector.broadcast %155 : vector<128x1xf32> to vector<128x128xf32>
    %157 = arith.mulf %152, %156 : vector<128x128xf32>
    %158 = vector.broadcast %138 : vector<1x128xf32> to vector<128x128xf32>
    %159 = arith.mulf %157, %158 : vector<128x128xf32>
    %160 = vector.broadcast %139 : vector<1x128xf32> to vector<128x128xf32>
    %161 = arith.addf %159, %160 : vector<128x128xf32>
    %162 = arith.addf %123, %161 : vector<128x128xf32>
    %163 = arith.truncf %161 : vector<128x128xf32> to vector<128x128xbf16>
    %c3_63 = arith.constant 3 : index
    %c0_64 = arith.constant 0 : index
    %c0_65 = arith.constant 0 : index
    %164 = vector.load %arg4[%c3_63, %c0_64, %c0_65] : memref<8x128x128xbf16, #tpu.memory_space<vmem>>, vector<1x128x128xbf16>
    %165 = vector.shape_cast %164 : vector<1x128x128xbf16> to vector<128x128xbf16>
    %cst_66 = arith.constant dense<0.000000e+00> : vector<128x128xf32>
    %166 = tpu.matmul %163, %165, %cst_66 {dimension_numbers = #tpu.dot_dimension_numbers<[1], [0], [0], [1], [0, 0, 1, 1], [], []>} : vector<128x128xbf16>, vector<128x128xbf16>, vector<128x128xf32> -> vector<128x128xf32>
    %c3_67 = arith.constant 3 : index
    %c0_68 = arith.constant 0 : index
    %167 = vector.load %arg5[%c3_67, %c0_68] : memref<8x128xf32, #tpu.memory_space<vmem>>, vector<1x128xf32>
    %168 = vector.broadcast %167 : vector<1x128xf32> to vector<128x128xf32>
    %169 = arith.addf %166, %168 : vector<128x128xf32>
    %170 = arith.addf %169, %162 : vector<128x128xf32>
    %171 = arith.negf %170 : vector<128x128xf32>
    %172 = math.exp %171 : vector<128x128xf32>
    %cst_69 = arith.constant 1.000000e+00 : f32
    %173 = vector.broadcast %cst_69 : f32 to vector<128x128xf32>
    %174 = arith.addf %173, %172 : vector<128x128xf32>
    %175 = arith.divf %173, %174 : vector<128x128xf32>
    %176 = arith.mulf %170, %175 : vector<128x128xf32>
    %c4 = arith.constant 4 : index
    %c0_70 = arith.constant 0 : index
    %177 = vector.load %arg6[%c4, %c0_70] : memref<10x128xf32, #tpu.memory_space<vmem>>, vector<1x128xf32>
    %c4_71 = arith.constant 4 : index
    %c0_72 = arith.constant 0 : index
    %178 = vector.load %arg7[%c4_71, %c0_72] : memref<10x128xf32, #tpu.memory_space<vmem>>, vector<1x128xf32>
    %cst_73 = arith.constant dense<0.000000e+00> : vector<128xf32>
    %179 = vector.multi_reduction <add>, %176, %cst_73 [1] : vector<128x128xf32> to vector<128xf32>
    %180 = vector.shape_cast %179 : vector<128xf32> to vector<128x1xf32>
    %cst_74 = arith.constant 1.280000e+02 : f32
    %181 = vector.broadcast %cst_74 : f32 to vector<128x1xf32>
    %182 = arith.divf %180, %181 : vector<128x1xf32>
    %183 = vector.broadcast %182 : vector<128x1xf32> to vector<128x128xf32>
    %184 = arith.subf %176, %183 : vector<128x128xf32>
    %185 = arith.mulf %184, %184 : vector<128x128xf32>
    %cst_75 = arith.constant dense<0.000000e+00> : vector<128xf32>
    %186 = vector.multi_reduction <add>, %185, %cst_75 [1] : vector<128x128xf32> to vector<128xf32>
    %187 = vector.shape_cast %186 : vector<128xf32> to vector<128x1xf32>
    %cst_76 = arith.constant 1.280000e+02 : f32
    %188 = vector.broadcast %cst_76 : f32 to vector<128x1xf32>
    %189 = arith.divf %187, %188 : vector<128x1xf32>
    %190 = vector.broadcast %182 : vector<128x1xf32> to vector<128x128xf32>
    %191 = arith.subf %176, %190 : vector<128x128xf32>
    %cst_77 = arith.constant 1.000000e-01 : f32
    %192 = vector.broadcast %cst_77 : f32 to vector<128x1xf32>
    %193 = arith.addf %189, %192 : vector<128x1xf32>
    %194 = math.rsqrt %193 : vector<128x1xf32>
    %195 = vector.broadcast %194 : vector<128x1xf32> to vector<128x128xf32>
    %196 = arith.mulf %191, %195 : vector<128x128xf32>
    %197 = vector.broadcast %177 : vector<1x128xf32> to vector<128x128xf32>
    %198 = arith.mulf %196, %197 : vector<128x128xf32>
    %199 = vector.broadcast %178 : vector<1x128xf32> to vector<128x128xf32>
    %200 = arith.addf %198, %199 : vector<128x128xf32>
    %201 = arith.truncf %200 : vector<128x128xf32> to vector<128x128xbf16>
    %c0_78 = arith.constant 0 : index
    %c0_79 = arith.constant 0 : index
    %c0_80 = arith.constant 0 : index
    %202 = vector.load %arg8[%c0_78, %c0_79, %c0_80] : memref<2x128x128xbf16, #tpu.memory_space<vmem>>, vector<1x128x128xbf16>
    %203 = vector.shape_cast %202 : vector<1x128x128xbf16> to vector<128x128xbf16>
    %cst_81 = arith.constant dense<0.000000e+00> : vector<128x128xf32>
    %204 = tpu.matmul %201, %203, %cst_81 {dimension_numbers = #tpu.dot_dimension_numbers<[1], [0], [0], [1], [0, 0, 1, 1], [], []>} : vector<128x128xbf16>, vector<128x128xbf16>, vector<128x128xf32> -> vector<128x128xf32>
    %c0_82 = arith.constant 0 : index
    %c0_83 = arith.constant 0 : index
    %205 = vector.load %arg9[%c0_82, %c0_83] : memref<2x128xf32, #tpu.memory_space<vmem>>, vector<1x128xf32>
    %206 = vector.broadcast %205 : vector<1x128xf32> to vector<128x128xf32>
    %207 = arith.addf %204, %206 : vector<128x128xf32>
    %208 = vector.extract_strided_slice %207 {offsets = [0, 0], sizes = [128, 64], strides = [1, 1]} : vector<128x128xf32> to vector<128x64xf32>
    %209 = vector.extract_strided_slice %207 {offsets = [0, 64], sizes = [128, 64], strides = [1, 1]} : vector<128x128xf32> to vector<128x64xf32>
    %c1_84 = arith.constant 1 : index
    %c0_85 = arith.constant 0 : index
    %c0_86 = arith.constant 0 : index
    %210 = vector.load %arg2[%c1_84, %c0_85, %c0_86] : memref<2x256x128xbf16, #tpu.memory_space<vmem>>, vector<1x256x128xbf16>
    %211 = vector.shape_cast %210 : vector<1x256x128xbf16> to vector<256x128xbf16>
    %cst_87 = arith.constant dense<0.000000e+00> : vector<128x128xf32>
    %212 = tpu.matmul %9, %211, %cst_87 {dimension_numbers = #tpu.dot_dimension_numbers<[1], [0], [0], [1], [0, 0, 1, 1], [], []>} : vector<128x256xbf16>, vector<256x128xbf16>, vector<128x128xf32> -> vector<128x128xf32>
    %c1_88 = arith.constant 1 : index
    %c0_89 = arith.constant 0 : index
    %213 = vector.load %arg3[%c1_88, %c0_89] : memref<2x128xf32, #tpu.memory_space<vmem>>, vector<1x128xf32>
    %214 = vector.broadcast %213 : vector<1x128xf32> to vector<128x128xf32>
    %215 = arith.addf %212, %214 : vector<128x128xf32>
    %216 = arith.negf %215 : vector<128x128xf32>
    %217 = math.exp %216 : vector<128x128xf32>
    %cst_90 = arith.constant 1.000000e+00 : f32
    %218 = vector.broadcast %cst_90 : f32 to vector<128x128xf32>
    %219 = arith.addf %218, %217 : vector<128x128xf32>
    %220 = arith.divf %218, %219 : vector<128x128xf32>
    %221 = arith.mulf %215, %220 : vector<128x128xf32>
    %c5 = arith.constant 5 : index
    %c0_91 = arith.constant 0 : index
    %222 = vector.load %arg6[%c5, %c0_91] : memref<10x128xf32, #tpu.memory_space<vmem>>, vector<1x128xf32>
    %c5_92 = arith.constant 5 : index
    %c0_93 = arith.constant 0 : index
    %223 = vector.load %arg7[%c5_92, %c0_93] : memref<10x128xf32, #tpu.memory_space<vmem>>, vector<1x128xf32>
    %cst_94 = arith.constant dense<0.000000e+00> : vector<128xf32>
    %224 = vector.multi_reduction <add>, %221, %cst_94 [1] : vector<128x128xf32> to vector<128xf32>
    %225 = vector.shape_cast %224 : vector<128xf32> to vector<128x1xf32>
    %cst_95 = arith.constant 1.280000e+02 : f32
    %226 = vector.broadcast %cst_95 : f32 to vector<128x1xf32>
    %227 = arith.divf %225, %226 : vector<128x1xf32>
    %228 = vector.broadcast %227 : vector<128x1xf32> to vector<128x128xf32>
    %229 = arith.subf %221, %228 : vector<128x128xf32>
    %230 = arith.mulf %229, %229 : vector<128x128xf32>
    %cst_96 = arith.constant dense<0.000000e+00> : vector<128xf32>
    %231 = vector.multi_reduction <add>, %230, %cst_96 [1] : vector<128x128xf32> to vector<128xf32>
    %232 = vector.shape_cast %231 : vector<128xf32> to vector<128x1xf32>
    %cst_97 = arith.constant 1.280000e+02 : f32
    %233 = vector.broadcast %cst_97 : f32 to vector<128x1xf32>
    %234 = arith.divf %232, %233 : vector<128x1xf32>
    %235 = vector.broadcast %227 : vector<128x1xf32> to vector<128x128xf32>
    %236 = arith.subf %221, %235 : vector<128x128xf32>
    %cst_98 = arith.constant 1.000000e-01 : f32
    %237 = vector.broadcast %cst_98 : f32 to vector<128x1xf32>
    %238 = arith.addf %234, %237 : vector<128x1xf32>
    %239 = math.rsqrt %238 : vector<128x1xf32>
    %240 = vector.broadcast %239 : vector<128x1xf32> to vector<128x128xf32>
    %241 = arith.mulf %236, %240 : vector<128x128xf32>
    %242 = vector.broadcast %222 : vector<1x128xf32> to vector<128x128xf32>
    %243 = arith.mulf %241, %242 : vector<128x128xf32>
    %244 = vector.broadcast %223 : vector<1x128xf32> to vector<128x128xf32>
    %245 = arith.addf %243, %244 : vector<128x128xf32>
    %246 = arith.truncf %245 : vector<128x128xf32> to vector<128x128xbf16>
    %c4_99 = arith.constant 4 : index
    %c0_100 = arith.constant 0 : index
    %c0_101 = arith.constant 0 : index
    %247 = vector.load %arg4[%c4_99, %c0_100, %c0_101] : memref<8x128x128xbf16, #tpu.memory_space<vmem>>, vector<1x128x128xbf16>
    %248 = vector.shape_cast %247 : vector<1x128x128xbf16> to vector<128x128xbf16>
    %cst_102 = arith.constant dense<0.000000e+00> : vector<128x128xf32>
    %249 = tpu.matmul %246, %248, %cst_102 {dimension_numbers = #tpu.dot_dimension_numbers<[1], [0], [0], [1], [0, 0, 1, 1], [], []>} : vector<128x128xbf16>, vector<128x128xbf16>, vector<128x128xf32> -> vector<128x128xf32>
    %c4_103 = arith.constant 4 : index
    %c0_104 = arith.constant 0 : index
    %250 = vector.load %arg5[%c4_103, %c0_104] : memref<8x128xf32, #tpu.memory_space<vmem>>, vector<1x128xf32>
    %251 = vector.broadcast %250 : vector<1x128xf32> to vector<128x128xf32>
    %252 = arith.addf %249, %251 : vector<128x128xf32>
    %253 = arith.addf %252, %245 : vector<128x128xf32>
    %254 = arith.negf %253 : vector<128x128xf32>
    %255 = math.exp %254 : vector<128x128xf32>
    %cst_105 = arith.constant 1.000000e+00 : f32
    %256 = vector.broadcast %cst_105 : f32 to vector<128x128xf32>
    %257 = arith.addf %256, %255 : vector<128x128xf32>
    %258 = arith.divf %256, %257 : vector<128x128xf32>
    %259 = arith.mulf %253, %258 : vector<128x128xf32>
    %c6 = arith.constant 6 : index
    %c0_106 = arith.constant 0 : index
    %260 = vector.load %arg6[%c6, %c0_106] : memref<10x128xf32, #tpu.memory_space<vmem>>, vector<1x128xf32>
    %c6_107 = arith.constant 6 : index
    %c0_108 = arith.constant 0 : index
    %261 = vector.load %arg7[%c6_107, %c0_108] : memref<10x128xf32, #tpu.memory_space<vmem>>, vector<1x128xf32>
    %cst_109 = arith.constant dense<0.000000e+00> : vector<128xf32>
    %262 = vector.multi_reduction <add>, %259, %cst_109 [1] : vector<128x128xf32> to vector<128xf32>
    %263 = vector.shape_cast %262 : vector<128xf32> to vector<128x1xf32>
    %cst_110 = arith.constant 1.280000e+02 : f32
    %264 = vector.broadcast %cst_110 : f32 to vector<128x1xf32>
    %265 = arith.divf %263, %264 : vector<128x1xf32>
    %266 = vector.broadcast %265 : vector<128x1xf32> to vector<128x128xf32>
    %267 = arith.subf %259, %266 : vector<128x128xf32>
    %268 = arith.mulf %267, %267 : vector<128x128xf32>
    %cst_111 = arith.constant dense<0.000000e+00> : vector<128xf32>
    %269 = vector.multi_reduction <add>, %268, %cst_111 [1] : vector<128x128xf32> to vector<128xf32>
    %270 = vector.shape_cast %269 : vector<128xf32> to vector<128x1xf32>
    %cst_112 = arith.constant 1.280000e+02 : f32
    %271 = vector.broadcast %cst_112 : f32 to vector<128x1xf32>
    %272 = arith.divf %270, %271 : vector<128x1xf32>
    %273 = vector.broadcast %265 : vector<128x1xf32> to vector<128x128xf32>
    %274 = arith.subf %259, %273 : vector<128x128xf32>
    %cst_113 = arith.constant 1.000000e-01 : f32
    %275 = vector.broadcast %cst_113 : f32 to vector<128x1xf32>
    %276 = arith.addf %272, %275 : vector<128x1xf32>
    %277 = math.rsqrt %276 : vector<128x1xf32>
    %278 = vector.broadcast %277 : vector<128x1xf32> to vector<128x128xf32>
    %279 = arith.mulf %274, %278 : vector<128x128xf32>
    %280 = vector.broadcast %260 : vector<1x128xf32> to vector<128x128xf32>
    %281 = arith.mulf %279, %280 : vector<128x128xf32>
    %282 = vector.broadcast %261 : vector<1x128xf32> to vector<128x128xf32>
    %283 = arith.addf %281, %282 : vector<128x128xf32>
    %284 = arith.addf %245, %283 : vector<128x128xf32>
    %285 = arith.truncf %283 : vector<128x128xf32> to vector<128x128xbf16>
    %c5_114 = arith.constant 5 : index
    %c0_115 = arith.constant 0 : index
    %c0_116 = arith.constant 0 : index
    %286 = vector.load %arg4[%c5_114, %c0_115, %c0_116] : memref<8x128x128xbf16, #tpu.memory_space<vmem>>, vector<1x128x128xbf16>
    %287 = vector.shape_cast %286 : vector<1x128x128xbf16> to vector<128x128xbf16>
    %cst_117 = arith.constant dense<0.000000e+00> : vector<128x128xf32>
    %288 = tpu.matmul %285, %287, %cst_117 {dimension_numbers = #tpu.dot_dimension_numbers<[1], [0], [0], [1], [0, 0, 1, 1], [], []>} : vector<128x128xbf16>, vector<128x128xbf16>, vector<128x128xf32> -> vector<128x128xf32>
    %c5_118 = arith.constant 5 : index
    %c0_119 = arith.constant 0 : index
    %289 = vector.load %arg5[%c5_118, %c0_119] : memref<8x128xf32, #tpu.memory_space<vmem>>, vector<1x128xf32>
    %290 = vector.broadcast %289 : vector<1x128xf32> to vector<128x128xf32>
    %291 = arith.addf %288, %290 : vector<128x128xf32>
    %292 = arith.addf %291, %284 : vector<128x128xf32>
    %293 = arith.negf %292 : vector<128x128xf32>
    %294 = math.exp %293 : vector<128x128xf32>
    %cst_120 = arith.constant 1.000000e+00 : f32
    %295 = vector.broadcast %cst_120 : f32 to vector<128x128xf32>
    %296 = arith.addf %295, %294 : vector<128x128xf32>
    %297 = arith.divf %295, %296 : vector<128x128xf32>
    %298 = arith.mulf %292, %297 : vector<128x128xf32>
    %c7 = arith.constant 7 : index
    %c0_121 = arith.constant 0 : index
    %299 = vector.load %arg6[%c7, %c0_121] : memref<10x128xf32, #tpu.memory_space<vmem>>, vector<1x128xf32>
    %c7_122 = arith.constant 7 : index
    %c0_123 = arith.constant 0 : index
    %300 = vector.load %arg7[%c7_122, %c0_123] : memref<10x128xf32, #tpu.memory_space<vmem>>, vector<1x128xf32>
    %cst_124 = arith.constant dense<0.000000e+00> : vector<128xf32>
    %301 = vector.multi_reduction <add>, %298, %cst_124 [1] : vector<128x128xf32> to vector<128xf32>
    %302 = vector.shape_cast %301 : vector<128xf32> to vector<128x1xf32>
    %cst_125 = arith.constant 1.280000e+02 : f32
    %303 = vector.broadcast %cst_125 : f32 to vector<128x1xf32>
    %304 = arith.divf %302, %303 : vector<128x1xf32>
    %305 = vector.broadcast %304 : vector<128x1xf32> to vector<128x128xf32>
    %306 = arith.subf %298, %305 : vector<128x128xf32>
    %307 = arith.mulf %306, %306 : vector<128x128xf32>
    %cst_126 = arith.constant dense<0.000000e+00> : vector<128xf32>
    %308 = vector.multi_reduction <add>, %307, %cst_126 [1] : vector<128x128xf32> to vector<128xf32>
    %309 = vector.shape_cast %308 : vector<128xf32> to vector<128x1xf32>
    %cst_127 = arith.constant 1.280000e+02 : f32
    %310 = vector.broadcast %cst_127 : f32 to vector<128x1xf32>
    %311 = arith.divf %309, %310 : vector<128x1xf32>
    %312 = vector.broadcast %304 : vector<128x1xf32> to vector<128x128xf32>
    %313 = arith.subf %298, %312 : vector<128x128xf32>
    %cst_128 = arith.constant 1.000000e-01 : f32
    %314 = vector.broadcast %cst_128 : f32 to vector<128x1xf32>
    %315 = arith.addf %311, %314 : vector<128x1xf32>
    %316 = math.rsqrt %315 : vector<128x1xf32>
    %317 = vector.broadcast %316 : vector<128x1xf32> to vector<128x128xf32>
    %318 = arith.mulf %313, %317 : vector<128x128xf32>
    %319 = vector.broadcast %299 : vector<1x128xf32> to vector<128x128xf32>
    %320 = arith.mulf %318, %319 : vector<128x128xf32>
    %321 = vector.broadcast %300 : vector<1x128xf32> to vector<128x128xf32>
    %322 = arith.addf %320, %321 : vector<128x128xf32>
    %323 = arith.addf %284, %322 : vector<128x128xf32>
    %324 = arith.truncf %322 : vector<128x128xf32> to vector<128x128xbf16>
    %c6_129 = arith.constant 6 : index
    %c0_130 = arith.constant 0 : index
    %c0_131 = arith.constant 0 : index
    %325 = vector.load %arg4[%c6_129, %c0_130, %c0_131] : memref<8x128x128xbf16, #tpu.memory_space<vmem>>, vector<1x128x128xbf16>
    %326 = vector.shape_cast %325 : vector<1x128x128xbf16> to vector<128x128xbf16>
    %cst_132 = arith.constant dense<0.000000e+00> : vector<128x128xf32>
    %327 = tpu.matmul %324, %326, %cst_132 {dimension_numbers = #tpu.dot_dimension_numbers<[1], [0], [0], [1], [0, 0, 1, 1], [], []>} : vector<128x128xbf16>, vector<128x128xbf16>, vector<128x128xf32> -> vector<128x128xf32>
    %c6_133 = arith.constant 6 : index
    %c0_134 = arith.constant 0 : index
    %328 = vector.load %arg5[%c6_133, %c0_134] : memref<8x128xf32, #tpu.memory_space<vmem>>, vector<1x128xf32>
    %329 = vector.broadcast %328 : vector<1x128xf32> to vector<128x128xf32>
    %330 = arith.addf %327, %329 : vector<128x128xf32>
    %331 = arith.addf %330, %323 : vector<128x128xf32>
    %332 = arith.negf %331 : vector<128x128xf32>
    %333 = math.exp %332 : vector<128x128xf32>
    %cst_135 = arith.constant 1.000000e+00 : f32
    %334 = vector.broadcast %cst_135 : f32 to vector<128x128xf32>
    %335 = arith.addf %334, %333 : vector<128x128xf32>
    %336 = arith.divf %334, %335 : vector<128x128xf32>
    %337 = arith.mulf %331, %336 : vector<128x128xf32>
    %c8 = arith.constant 8 : index
    %c0_136 = arith.constant 0 : index
    %338 = vector.load %arg6[%c8, %c0_136] : memref<10x128xf32, #tpu.memory_space<vmem>>, vector<1x128xf32>
    %c8_137 = arith.constant 8 : index
    %c0_138 = arith.constant 0 : index
    %339 = vector.load %arg7[%c8_137, %c0_138] : memref<10x128xf32, #tpu.memory_space<vmem>>, vector<1x128xf32>
    %cst_139 = arith.constant dense<0.000000e+00> : vector<128xf32>
    %340 = vector.multi_reduction <add>, %337, %cst_139 [1] : vector<128x128xf32> to vector<128xf32>
    %341 = vector.shape_cast %340 : vector<128xf32> to vector<128x1xf32>
    %cst_140 = arith.constant 1.280000e+02 : f32
    %342 = vector.broadcast %cst_140 : f32 to vector<128x1xf32>
    %343 = arith.divf %341, %342 : vector<128x1xf32>
    %344 = vector.broadcast %343 : vector<128x1xf32> to vector<128x128xf32>
    %345 = arith.subf %337, %344 : vector<128x128xf32>
    %346 = arith.mulf %345, %345 : vector<128x128xf32>
    %cst_141 = arith.constant dense<0.000000e+00> : vector<128xf32>
    %347 = vector.multi_reduction <add>, %346, %cst_141 [1] : vector<128x128xf32> to vector<128xf32>
    %348 = vector.shape_cast %347 : vector<128xf32> to vector<128x1xf32>
    %cst_142 = arith.constant 1.280000e+02 : f32
    %349 = vector.broadcast %cst_142 : f32 to vector<128x1xf32>
    %350 = arith.divf %348, %349 : vector<128x1xf32>
    %351 = vector.broadcast %343 : vector<128x1xf32> to vector<128x128xf32>
    %352 = arith.subf %337, %351 : vector<128x128xf32>
    %cst_143 = arith.constant 1.000000e-01 : f32
    %353 = vector.broadcast %cst_143 : f32 to vector<128x1xf32>
    %354 = arith.addf %350, %353 : vector<128x1xf32>
    %355 = math.rsqrt %354 : vector<128x1xf32>
    %356 = vector.broadcast %355 : vector<128x1xf32> to vector<128x128xf32>
    %357 = arith.mulf %352, %356 : vector<128x128xf32>
    %358 = vector.broadcast %338 : vector<1x128xf32> to vector<128x128xf32>
    %359 = arith.mulf %357, %358 : vector<128x128xf32>
    %360 = vector.broadcast %339 : vector<1x128xf32> to vector<128x128xf32>
    %361 = arith.addf %359, %360 : vector<128x128xf32>
    %362 = arith.addf %323, %361 : vector<128x128xf32>
    %363 = arith.truncf %361 : vector<128x128xf32> to vector<128x128xbf16>
    %c7_144 = arith.constant 7 : index
    %c0_145 = arith.constant 0 : index
    %c0_146 = arith.constant 0 : index
    %364 = vector.load %arg4[%c7_144, %c0_145, %c0_146] : memref<8x128x128xbf16, #tpu.memory_space<vmem>>, vector<1x128x128xbf16>
    %365 = vector.shape_cast %364 : vector<1x128x128xbf16> to vector<128x128xbf16>
    %cst_147 = arith.constant dense<0.000000e+00> : vector<128x128xf32>
    %366 = tpu.matmul %363, %365, %cst_147 {dimension_numbers = #tpu.dot_dimension_numbers<[1], [0], [0], [1], [0, 0, 1, 1], [], []>} : vector<128x128xbf16>, vector<128x128xbf16>, vector<128x128xf32> -> vector<128x128xf32>
    %c7_148 = arith.constant 7 : index
    %c0_149 = arith.constant 0 : index
    %367 = vector.load %arg5[%c7_148, %c0_149] : memref<8x128xf32, #tpu.memory_space<vmem>>, vector<1x128xf32>
    %368 = vector.broadcast %367 : vector<1x128xf32> to vector<128x128xf32>
    %369 = arith.addf %366, %368 : vector<128x128xf32>
    %370 = arith.addf %369, %362 : vector<128x128xf32>
    %371 = arith.negf %370 : vector<128x128xf32>
    %372 = math.exp %371 : vector<128x128xf32>
    %cst_150 = arith.constant 1.000000e+00 : f32
    %373 = vector.broadcast %cst_150 : f32 to vector<128x128xf32>
    %374 = arith.addf %373, %372 : vector<128x128xf32>
    %375 = arith.divf %373, %374 : vector<128x128xf32>
    %376 = arith.mulf %370, %375 : vector<128x128xf32>
    %c9 = arith.constant 9 : index
    %c0_151 = arith.constant 0 : index
    %377 = vector.load %arg6[%c9, %c0_151] : memref<10x128xf32, #tpu.memory_space<vmem>>, vector<1x128xf32>
    %c9_152 = arith.constant 9 : index
    %c0_153 = arith.constant 0 : index
    %378 = vector.load %arg7[%c9_152, %c0_153] : memref<10x128xf32, #tpu.memory_space<vmem>>, vector<1x128xf32>
    %cst_154 = arith.constant dense<0.000000e+00> : vector<128xf32>
    %379 = vector.multi_reduction <add>, %376, %cst_154 [1] : vector<128x128xf32> to vector<128xf32>
    %380 = vector.shape_cast %379 : vector<128xf32> to vector<128x1xf32>
    %cst_155 = arith.constant 1.280000e+02 : f32
    %381 = vector.broadcast %cst_155 : f32 to vector<128x1xf32>
    %382 = arith.divf %380, %381 : vector<128x1xf32>
    %383 = vector.broadcast %382 : vector<128x1xf32> to vector<128x128xf32>
    %384 = arith.subf %376, %383 : vector<128x128xf32>
    %385 = arith.mulf %384, %384 : vector<128x128xf32>
    %cst_156 = arith.constant dense<0.000000e+00> : vector<128xf32>
    %386 = vector.multi_reduction <add>, %385, %cst_156 [1] : vector<128x128xf32> to vector<128xf32>
    %387 = vector.shape_cast %386 : vector<128xf32> to vector<128x1xf32>
    %cst_157 = arith.constant 1.280000e+02 : f32
    %388 = vector.broadcast %cst_157 : f32 to vector<128x1xf32>
    %389 = arith.divf %387, %388 : vector<128x1xf32>
    %390 = vector.broadcast %382 : vector<128x1xf32> to vector<128x128xf32>
    %391 = arith.subf %376, %390 : vector<128x128xf32>
    %cst_158 = arith.constant 1.000000e-01 : f32
    %392 = vector.broadcast %cst_158 : f32 to vector<128x1xf32>
    %393 = arith.addf %389, %392 : vector<128x1xf32>
    %394 = math.rsqrt %393 : vector<128x1xf32>
    %395 = vector.broadcast %394 : vector<128x1xf32> to vector<128x128xf32>
    %396 = arith.mulf %391, %395 : vector<128x128xf32>
    %397 = vector.broadcast %377 : vector<1x128xf32> to vector<128x128xf32>
    %398 = arith.mulf %396, %397 : vector<128x128xf32>
    %399 = vector.broadcast %378 : vector<1x128xf32> to vector<128x128xf32>
    %400 = arith.addf %398, %399 : vector<128x128xf32>
    %401 = arith.truncf %400 : vector<128x128xf32> to vector<128x128xbf16>
    %c1_159 = arith.constant 1 : index
    %c0_160 = arith.constant 0 : index
    %c0_161 = arith.constant 0 : index
    %402 = vector.load %arg8[%c1_159, %c0_160, %c0_161] : memref<2x128x128xbf16, #tpu.memory_space<vmem>>, vector<1x128x128xbf16>
    %403 = vector.shape_cast %402 : vector<1x128x128xbf16> to vector<128x128xbf16>
    %cst_162 = arith.constant dense<0.000000e+00> : vector<128x128xf32>
    %404 = tpu.matmul %401, %403, %cst_162 {dimension_numbers = #tpu.dot_dimension_numbers<[1], [0], [0], [1], [0, 0, 1, 1], [], []>} : vector<128x128xbf16>, vector<128x128xbf16>, vector<128x128xf32> -> vector<128x128xf32>
    %c1_163 = arith.constant 1 : index
    %c0_164 = arith.constant 0 : index
    %405 = vector.load %arg9[%c1_163, %c0_164] : memref<2x128xf32, #tpu.memory_space<vmem>>, vector<1x128xf32>
    %406 = vector.broadcast %405 : vector<1x128xf32> to vector<128x128xf32>
    %407 = arith.addf %404, %406 : vector<128x128xf32>
    %408 = vector.extract_strided_slice %407 {offsets = [0, 0], sizes = [128, 64], strides = [1, 1]} : vector<128x128xf32> to vector<128x64xf32>
    %409 = vector.extract_strided_slice %407 {offsets = [0, 64], sizes = [128, 64], strides = [1, 1]} : vector<128x128xf32> to vector<128x64xf32>
    %410 = arith.truncf %208 : vector<128x64xf32> to vector<128x64xbf16>
    %c0_165 = arith.constant 0 : index
    %c0_166 = arith.constant 0 : index
    %411 = vector.load %arg10[%c0_165, %c0_166] : memref<64x256xbf16, #tpu.memory_space<vmem>>, vector<64x256xbf16>
    %cst_167 = arith.constant dense<0.000000e+00> : vector<128x256xf32>
    %412 = tpu.matmul %410, %411, %cst_167 {dimension_numbers = #tpu.dot_dimension_numbers<[1], [0], [0], [1], [0, 0, 1, 1], [], []>} : vector<128x64xbf16>, vector<64x256xbf16>, vector<128x256xf32> -> vector<128x256xf32>
    %c0_168 = arith.constant 0 : index
    %c0_169 = arith.constant 0 : index
    %413 = vector.load %arg11[%c0_168, %c0_169] : memref<1x256xf32, #tpu.memory_space<vmem>>, vector<1x256xf32>
    %414 = vector.broadcast %413 : vector<1x256xf32> to vector<128x256xf32>
    %415 = arith.addf %412, %414 : vector<128x256xf32>
    %cst_170 = arith.constant dense<0xFF800000> : vector<128xf32>
    %416 = vector.multi_reduction <maximumf>, %415, %cst_170 [1] : vector<128x256xf32> to vector<128xf32>
    %417 = vector.shape_cast %416 : vector<128xf32> to vector<128x1xf32>
    %418 = vector.broadcast %417 : vector<128x1xf32> to vector<128x256xf32>
    %419 = arith.subf %415, %418 : vector<128x256xf32>
    %420 = math.exp %419 : vector<128x256xf32>
    %cst_171 = arith.constant dense<0.000000e+00> : vector<128xf32>
    %421 = vector.multi_reduction <add>, %420, %cst_171 [1] : vector<128x256xf32> to vector<128xf32>
    %422 = vector.shape_cast %421 : vector<128xf32> to vector<128x1xf32>
    %423 = math.log %422 : vector<128x1xf32>
    %424 = arith.addf %423, %417 : vector<128x1xf32>
    %425 = vector.broadcast %424 : vector<128x1xf32> to vector<128x256xf32>
    %426 = arith.subf %415, %425 : vector<128x256xf32>
    %427 = arith.mulf %426, %0 : vector<128x256xf32>
    %cst_172 = arith.constant dense<0.000000e+00> : vector<128xf32>
    %428 = vector.multi_reduction <add>, %427, %cst_172 [1] : vector<128x256xf32> to vector<128xf32>
    %429 = vector.shape_cast %428 : vector<128xf32> to vector<128x1xf32>
    %cst_173 = arith.constant 0.000000e+00 : f32
    %430 = vector.broadcast %cst_173 : f32 to vector<128x64xf32>
    %431 = arith.subf %208, %430 : vector<128x64xf32>
    %432 = arith.mulf %431, %431 : vector<128x64xf32>
    %cst_174 = arith.constant -0.000000e+00 : f32
    %433 = math.exp %cst_174 : f32
    %434 = vector.broadcast %433 : f32 to vector<128x64xf32>
    %435 = arith.mulf %432, %434 : vector<128x64xf32>
    %cst_175 = arith.constant 1.83787704 : f32
    %436 = vector.broadcast %cst_175 : f32 to vector<128x64xf32>
    %437 = arith.addf %436, %435 : vector<128x64xf32>
    %cst_176 = arith.constant -5.000000e-01 : f32
    %438 = vector.broadcast %cst_176 : f32 to vector<128x64xf32>
    %439 = arith.mulf %438, %437 : vector<128x64xf32>
    %cst_177 = arith.constant -1.897120e+00 : f32
    %440 = vector.broadcast %cst_177 : f32 to vector<128x64xf32>
    %441 = arith.addf %439, %440 : vector<128x64xf32>
    %cst_178 = arith.constant 1.83787704 : f32
    %442 = vector.broadcast %cst_178 : f32 to vector<128x64xf32>
    %443 = arith.addf %409, %442 : vector<128x64xf32>
    %444 = arith.subf %208, %408 : vector<128x64xf32>
    %445 = arith.mulf %444, %444 : vector<128x64xf32>
    %cst_179 = arith.constant 0.000000e+00 : f32
    %446 = vector.broadcast %cst_179 : f32 to vector<128x64xf32>
    %447 = arith.subf %446, %409 : vector<128x64xf32>
    %448 = math.exp %447 : vector<128x64xf32>
    %449 = arith.mulf %445, %448 : vector<128x64xf32>
    %450 = arith.addf %443, %449 : vector<128x64xf32>
    %cst_180 = arith.constant -5.000000e-01 : f32
    %451 = vector.broadcast %cst_180 : f32 to vector<128x64xf32>
    %452 = arith.mulf %451, %450 : vector<128x64xf32>
    %cst_181 = arith.constant -0.287682086 : f32
    %453 = vector.broadcast %cst_181 : f32 to vector<128x64xf32>
    %454 = arith.addf %452, %453 : vector<128x64xf32>
    %cst_182 = arith.constant 0.000000e+00 : f32
    %455 = vector.broadcast %cst_182 : f32 to vector<128x64xf32>
    %456 = arith.subf %208, %455 : vector<128x64xf32>
    %457 = arith.mulf %456, %456 : vector<128x64xf32>
    %cst_183 = arith.constant -1.000000e+01 : f32
    %458 = math.exp %cst_183 : f32
    %459 = vector.broadcast %458 : f32 to vector<128x64xf32>
    %460 = arith.mulf %457, %459 : vector<128x64xf32>
    %cst_184 = arith.constant 11.8378773 : f32
    %461 = vector.broadcast %cst_184 : f32 to vector<128x64xf32>
    %462 = arith.addf %461, %460 : vector<128x64xf32>
    %cst_185 = arith.constant -5.000000e-01 : f32
    %463 = vector.broadcast %cst_185 : f32 to vector<128x64xf32>
    %464 = arith.mulf %463, %462 : vector<128x64xf32>
    %cst_186 = arith.constant -2.30258512 : f32
    %465 = vector.broadcast %cst_186 : f32 to vector<128x64xf32>
    %466 = arith.addf %464, %465 : vector<128x64xf32>
    %467 = arith.maximumf %441, %454 : vector<128x64xf32>
    %468 = arith.maximumf %467, %466 : vector<128x64xf32>
    %469 = arith.subf %441, %468 : vector<128x64xf32>
    %470 = math.exp %469 : vector<128x64xf32>
    %471 = arith.subf %454, %468 : vector<128x64xf32>
    %472 = math.exp %471 : vector<128x64xf32>
    %473 = arith.addf %470, %472 : vector<128x64xf32>
    %474 = arith.subf %466, %468 : vector<128x64xf32>
    %475 = math.exp %474 : vector<128x64xf32>
    %476 = arith.addf %473, %475 : vector<128x64xf32>
    %477 = math.log %476 : vector<128x64xf32>
    %478 = arith.addf %468, %477 : vector<128x64xf32>
    %cst_187 = arith.constant 1.83787704 : f32
    %479 = vector.broadcast %cst_187 : f32 to vector<128x64xf32>
    %480 = arith.addf %209, %479 : vector<128x64xf32>
    %481 = arith.subf %208, %208 : vector<128x64xf32>
    %482 = arith.mulf %481, %481 : vector<128x64xf32>
    %cst_188 = arith.constant 0.000000e+00 : f32
    %483 = vector.broadcast %cst_188 : f32 to vector<128x64xf32>
    %484 = arith.subf %483, %209 : vector<128x64xf32>
    %485 = math.exp %484 : vector<128x64xf32>
    %486 = arith.mulf %482, %485 : vector<128x64xf32>
    %487 = arith.addf %480, %486 : vector<128x64xf32>
    %cst_189 = arith.constant -5.000000e-01 : f32
    %488 = vector.broadcast %cst_189 : f32 to vector<128x64xf32>
    %489 = arith.mulf %488, %487 : vector<128x64xf32>
    %490 = arith.subf %489, %478 : vector<128x64xf32>
    %cst_190 = arith.constant dense<0.000000e+00> : vector<128xf32>
    %491 = vector.multi_reduction <add>, %490, %cst_190 [1] : vector<128x64xf32> to vector<128xf32>
    %492 = vector.shape_cast %491 : vector<128xf32> to vector<128x1xf32>
    %cst_191 = arith.constant dense<0.000000e+00> : vector<128xf32>
    %493 = vector.multi_reduction <add>, %0, %cst_191 [1] : vector<128x256xf32> to vector<128xf32>
    %494 = vector.shape_cast %493 : vector<128xf32> to vector<128x1xf32>
    %cst_192 = arith.constant 1.000000e+00 : f32
    %495 = vector.broadcast %cst_192 : f32 to vector<128x1xf32>
    %496 = arith.mulf %495, %494 : vector<128x1xf32>
    %497 = arith.mulf %492, %496 : vector<128x1xf32>
    %cst_193 = arith.constant dense<0.000000e+00> : vector<1xf32>
    %498 = vector.multi_reduction <add>, %429, %cst_193 [0] : vector<128x1xf32> to vector<1xf32>
    %499 = vector.shape_cast %498 : vector<1xf32> to vector<1x1xf32>
    %500 = vector.shape_cast %499 : vector<1x1xf32> to vector<1x1xf32>
    %501 = vector.broadcast %500 : vector<1x1xf32> to vector<8x128xf32>
    %c0_194 = arith.constant 0 : index
    %c0_195 = arith.constant 0 : index
    %502 = vector.load %arg12[%c0_194, %c0_195] : memref<8x128xf32, #tpu.memory_space<vmem>>, vector<8x128xf32>
    tpu.vector_store %arg12[%c0_194, %c0_195], %501 {strides = array<i32>} : memref<8x128xf32, #tpu.memory_space<vmem>>, vector<8x128xf32>,
    %cst_196 = arith.constant dense<0.000000e+00> : vector<1xf32>
    %503 = vector.multi_reduction <add>, %497, %cst_196 [0] : vector<128x1xf32> to vector<1xf32>
    %504 = vector.shape_cast %503 : vector<1xf32> to vector<1x1xf32>
    %505 = vector.shape_cast %504 : vector<1x1xf32> to vector<1x1xf32>
    %506 = vector.broadcast %505 : vector<1x1xf32> to vector<8x128xf32>
    %c0_197 = arith.constant 0 : index
    %c0_198 = arith.constant 0 : index
    %507 = vector.load %arg13[%c0_197, %c0_198] : memref<8x128xf32, #tpu.memory_space<vmem>>, vector<8x128xf32>
    tpu.vector_store %arg13[%c0_197, %c0_198], %506 {strides = array<i32>} : memref<8x128xf32, #tpu.memory_space<vmem>>, vector<8x128xf32>,
    return
  }
  func.func @transform_0(%arg0: i32) -> (i32, i32) {
    %c0_i32 = arith.constant 0 : i32
    %c0_i32_0 = arith.constant 0 : i32
    return %arg0, %c0_i32 : i32, i32
  }
  func.func @transform_1(%arg0: i32) -> (i32, i32, i32) {
    %c0_i32 = arith.constant 0 : i32
    %c0_i32_0 = arith.constant 0 : i32
    %c0_i32_1 = arith.constant 0 : i32
    %c0_i32_2 = arith.constant 0 : i32
    return %c0_i32, %c0_i32_0, %c0_i32_1 : i32, i32, i32
  }
  func.func @transform_2(%arg0: i32) -> (i32, i32) {
    %c0_i32 = arith.constant 0 : i32
    %c0_i32_0 = arith.constant 0 : i32
    %c0_i32_1 = arith.constant 0 : i32
    return %c0_i32, %c0_i32_0 : i32, i32
  }
  func.func @transform_3(%arg0: i32) -> (i32, i32, i32) {
    %c0_i32 = arith.constant 0 : i32
    %c0_i32_0 = arith.constant 0 : i32
    %c0_i32_1 = arith.constant 0 : i32
    %c0_i32_2 = arith.constant 0 : i32
    return %c0_i32, %c0_i32_0, %c0_i32_1 : i32, i32, i32
  }
  func.func @transform_4(%arg0: i32) -> (i32, i32) {
    %c0_i32 = arith.constant 0 : i32
    %c0_i32_0 = arith.constant 0 : i32
    %c0_i32_1 = arith.constant 0 : i32
    return %c0_i32, %c0_i32_0 : i32, i32
  }
  func.func @transform_5(%arg0: i32) -> (i32, i32) {
    %c0_i32 = arith.constant 0 : i32
    %c0_i32_0 = arith.constant 0 : i32
    %c0_i32_1 = arith.constant 0 : i32
    return %c0_i32, %c0_i32_0 : i32, i32
  }
  func.func @transform_6(%arg0: i32) -> (i32, i32) {
    %c0_i32 = arith.constant 0 : i32
    %c0_i32_0 = arith.constant 0 : i32
    %c0_i32_1 = arith.constant 0 : i32
    return %c0_i32, %c0_i32_0 : i32, i32
  }
  func.func @transform_7(%arg0: i32) -> (i32, i32, i32) {
    %c0_i32 = arith.constant 0 : i32
    %c0_i32_0 = arith.constant 0 : i32
    %c0_i32_1 = arith.constant 0 : i32
    %c0_i32_2 = arith.constant 0 : i32
    return %c0_i32, %c0_i32_0, %c0_i32_1 : i32, i32, i32
  }
  func.func @transform_8(%arg0: i32) -> (i32, i32) {
    %c0_i32 = arith.constant 0 : i32
    %c0_i32_0 = arith.constant 0 : i32
    %c0_i32_1 = arith.constant 0 : i32
    return %c0_i32, %c0_i32_0 : i32, i32
  }
  func.func @transform_9(%arg0: i32) -> (i32, i32) {
    %c0_i32 = arith.constant 0 : i32
    %c0_i32_0 = arith.constant 0 : i32
    %c0_i32_1 = arith.constant 0 : i32
    return %c0_i32, %c0_i32_0 : i32, i32
  }
  func.func @transform_10(%arg0: i32) -> (i32, i32) {
    %c0_i32 = arith.constant 0 : i32
    %c0_i32_0 = arith.constant 0 : i32
    %c0_i32_1 = arith.constant 0 : i32
    return %c0_i32, %c0_i32_0 : i32, i32
  }
  func.func @transform_11(%arg0: i32) -> (i32, i32) {
    %c0_i32 = arith.constant 0 : i32
    %c0_i32_0 = arith.constant 0 : i32
    return %arg0, %c0_i32 : i32, i32
  }
  func.func @transform_12(%arg0: i32) -> (i32, i32) {
    %c0_i32 = arith.constant 0 : i32
    %c0_i32_0 = arith.constant 0 : i32
    return %arg0, %c0_i32 : i32, i32
  }
}

</mosaic_0001>

<llo_original>
// kernel: vae_forward.1
$region0: #{vae_forward.1}
  #allocation0 [shape = 'u32[]', space=smem, size = 0x4, offset = 0x4, fixed_abs, tag = 'smem constant byte address 0x4 - core index']
  #allocation1 [shape = 'u32[144,128]{1,0:T(1,128)}', space=vmem, size = 0x12000, scoped, tag = 'internal scratch']
  %s0 = inlined_call_operand.hbm [shape: f32[256,256], index: 0, kind: input, shape index: {}]
  %s1 = inlined_call_operand.hbm [shape: bf16[2,256,128], index: 1, kind: input, shape index: {}]
  %s2 = inlined_call_operand.vmem [shape: f32[2,128], index: 2, kind: input, shape index: {}]
  %s3 = inlined_call_operand.hbm [shape: bf16[8,128,128], index: 3, kind: input, shape index: {}]
  %s4 = inlined_call_operand.hbm [shape: f32[8,128], index: 4, kind: input, shape index: {}]
  %s5 = inlined_call_operand.vmem [shape: f32[10,128], index: 5, kind: input, shape index: {}]
  %s6 = inlined_call_operand.hbm [shape: f32[10,128], index: 6, kind: input, shape index: {}]
  %s7 = inlined_call_operand.hbm [shape: bf16[2,128,128], index: 7, kind: input, shape index: {}]
  %s8 = inlined_call_operand.vmem [shape: f32[2,128], index: 8, kind: input, shape index: {}]
  %s9 = inlined_call_operand.hbm [shape: bf16[64,256], index: 9, kind: input, shape index: {}]
  %s10 = inlined_call_operand.vmem [shape: f32[1,256], index: 10, kind: input, shape index: {}]
  %s11 = inlined_call_operand.vmem [shape: f32[16,128], index: 11, kind: output, shape index: {0}]
  %s12 = inlined_call_operand.vmem [shape: f32[16,128], index: 12, kind: output, shape index: {1}]
  %13 = xla_tuple %s11, %s12
  %s14 = sld [smem:[#allocation0]]
  $region113: #{vae_forward.1} parent=0
    _
  %s16 = ssub.s32 1, %s14
  %s17 = scalar_select 0, %s16, %s14
  $region1: #{vae_forward.1} parent=0
    #allocation2 [shape = 'u8[262144]{0}', space=vmem, size = 0x40000, scoped, tag = 'input window, operand 0']
    #allocation3 [shape = 's32[2]{0}', space=sflag, size = 0x8, scoped, tag = 'scoped memory for vae_forward.1']
    #allocation4 [shape = 'u8[131072]{0}', space=vmem, size = 0x20000, scoped, tag = 'input window, operand 1, single buffered']
    #allocation5 [shape = 's32[1]{0}', space=sflag, size = 0x4, scoped, tag = 'scoped memory for vae_forward.1']
    #allocation6 [shape = 'u8[262144]{0}', space=vmem, size = 0x40000, scoped, tag = 'input window, operand 3, single buffered']
    #allocation7 [shape = 'u8[4096]{0}', space=vmem, size = 0x1000, scoped, tag = 'input window, operand 4, single buffered']
    #allocation8 [shape = 's32[1]{0}', space=sflag, size = 0x4, scoped, tag = 'scoped memory for vae_forward.1']
    #allocation9 [shape = 'u8[8192]{0}', space=vmem, size = 0x2000, scoped, tag = 'input window, operand 6, single buffered']
    #allocation10 [shape = 'u8[65536]{0}', space=vmem, size = 0x10000, scoped, tag = 'input window, operand 7, single buffered']
    #allocation11 [shape = 's32[1]{0}', space=sflag, size = 0x4, scoped, tag = 'scoped memory for vae_forward.1']
    #allocation12 [shape = 'u8[32768]{0}', space=vmem, size = 0x8000, scoped, tag = 'input window, operand 9, single buffered']
    %18 = vsyncpa [#allocation3], 0
    %s19 = scalar_lea.sflag [#allocation3], 1
    %20 = vsyncpa %s19, 0
    %21 = vsyncpa [#allocation5], 0
    %22 = vsyncpa [#allocation8], 0
    %23 = vsyncpa [#allocation11], 0
    loop: start=0, step=1, limit=4
    $region2: #{vae_forward.1} parent=1 // loop_pre_header
      _
    $region3: #{vae_forward.1} parent=1 // loop_header
      %s25 = sphi 0, %s29
      %p26 = scmp.ge.s32.totalorder %s25, 4
      %s35 = sphi 0, %s37
      %s38 = sphi 0, %s35
      %s39 = sphi 0, %s38
      %s55 = sphi 0, %s39
      %s59 = sphi 0, %s59
      %s61 = sphi 0, %s59
      %s62 = sphi 0, %s61
      %s76 = sphi 0, %s62
      %s80 = sphi 0, %s80
      %s82 = sphi 0, %s80
      %s83 = sphi 0, %s82
      %s97 = sphi 0, %s83
      %s101 = sphi 0, %s101
      %s103 = sphi 0, %s101
      %s104 = sphi 0, %s103
      %s118 = sphi 0, %s104
      %s122 = sphi 0, %s122
      %s124 = sphi 0, %s122
      %s125 = sphi 0, %s124
      %s139 = sphi 0, %s125
      %s143 = sphi 0, %s143
      %s145 = sphi 0, %s143
      %s146 = sphi 0, %s145
      %s160 = sphi 0, %s146
      %s164 = sphi 0, %s164
      %s166 = sphi 0, %s164
      %s167 = sphi 0, %s166
      %s181 = sphi 0, %s167
      %s185 = sphi 0, %s185
      %s187 = sphi 0, %s185
      %s188 = sphi 0, %s187
      %s202 = sphi 0, %s188
      %s206 = sphi 0, %s206
      %s208 = sphi 0, %s206
      %s209 = sphi 0, %s208
      %s223 = sphi 0, %s209
      %s227 = sphi 0, %s227
      %s229 = sphi 0, %s227
      %s230 = sphi 0, %s229
      %s244 = sphi 0, %s230
      %s248 = sphi 0, %s248
      %s250 = sphi 0, %s248
      %s251 = sphi 0, %s250
      %s265 = sphi 0, %s251
      %s271 = sphi 0, %s273
      %s274 = sphi 0, %s271
      %s275 = sphi 0, %s274
      %s291 = sphi 0, %s275
      %s297 = sphi 0, %s299
      %s300 = sphi 0, %s297
      %s301 = sphi 0, %s300
      %s317 = sphi 0, %s301
    $region4: #{vae_forward.1} parent=1 // loop_header_branch
      %28 = sbr.rel (%p26) target = $region8
    $region5: #{vae_forward.1} parent=1 // loop_body
      %s30 = ssub.s32 %s25, 1
      %s31 = ssub.s32 %s25, 2
      %s32 = sadd.s32 %s25, 1
      %s33 = ssub.s32 %s25, %s32
      %p34 = scmp.eq.s32.totalorder %s33, 0
      %s36 = sadd.s32 %s35, 1
      %s37 = scalar_select %p34, %s35, %s36
      %p40 = pneg %p34
      %p41 = scmp.eq.s32.totalorder %s25, 1
      %p42 = por %p40, %p41
      %p43 = scmp.ne.s32.totalorder %s35, %s38
      %p44 = scmp.eq.s32.totalorder %s25, 0
      %p45 = por %p43, %p44
      %p46 = scmp.ne.s32.totalorder %s35, %s38
      %p47 = scmp.eq.s32.totalorder %s30, 1
      %p48 = por %p46, %p47
      %p49 = scmp.ne.s32.totalorder %s38, %s39
      %p50 = scmp.eq.s32.totalorder %s30, 0
      %p51 = por %p49, %p50
      %p52 = scmp.ne.s32.totalorder %s38, %s39
      %p53 = scmp.eq.s32.totalorder %s31, 1
      %p54 = por %p52, %p53
      %p56 = scmp.ne.s32.totalorder %s39, %s55
      %p57 = scmp.eq.s32.totalorder %s31, 0
      %p58 = por %p56, %p57
      %s60 = sadd.s32 %s59, 1
      %p63 = scmp.eq.s32.totalorder %s25, 1
      %p64 = scmp.ne.s32.totalorder %s59, %s61
      %p65 = scmp.eq.s32.totalorder %s25, 0
      %p66 = por %p64, %p65
      %p67 = scmp.ne.s32.totalorder %s59, %s61
      %p68 = scmp.eq.s32.totalorder %s30, 1
      %p69 = por %p67, %p68
      %p70 = scmp.ne.s32.totalorder %s61, %s62
      %p71 = scmp.eq.s32.totalorder %s30, 0
      %p72 = por %p70, %p71
      %p73 = scmp.ne.s32.totalorder %s61, %s62
      %p74 = scmp.eq.s32.totalorder %s31, 1
      %p75 = por %p73, %p74
      %p77 = scmp.ne.s32.totalorder %s62, %s76
      %p78 = scmp.eq.s32.totalorder %s31, 0
      %p79 = por %p77, %p78
      %s81 = sadd.s32 %s80, 1
      %p84 = scmp.eq.s32.totalorder %s25, 1
      %p85 = scmp.ne.s32.totalorder %s80, %s82
      %p86 = scmp.eq.s32.totalorder %s25, 0
      %p87 = por %p85, %p86
      %p88 = scmp.ne.s32.totalorder %s80, %s82
      %p89 = scmp.eq.s32.totalorder %s30, 1
      %p90 = por %p88, %p89
      %p91 = scmp.ne.s32.totalorder %s82, %s83
      %p92 = scmp.eq.s32.totalorder %s30, 0
      %p93 = por %p91, %p92
      %p94 = scmp.ne.s32.totalorder %s82, %s83
      %p95 = scmp.eq.s32.totalorder %s31, 1
      %p96 = por %p94, %p95
      %p98 = scmp.ne.s32.totalorder %s83, %s97
      %p99 = scmp.eq.s32.totalorder %s31, 0
      %p100 = por %p98, %p99
      %s102 = sadd.s32 %s101, 1
      %p105 = scmp.eq.s32.totalorder %s25, 1
      %p106 = scmp.ne.s32.totalorder %s101, %s103
      %p107 = scmp.eq.s32.totalorder %s25, 0
      %p108 = por %p106, %p107
      %p109 = scmp.ne.s32.totalorder %s101, %s103
      %p110 = scmp.eq.s32.totalorder %s30, 1
      %p111 = por %p109, %p110
      %p112 = scmp.ne.s32.totalorder %s103, %s104
      %p113 = scmp.eq.s32.totalorder %s30, 0
      %p114 = por %p112, %p113
      %p115 = scmp.ne.s32.totalorder %s103, %s104
      %p116 = scmp.eq.s32.totalorder %s31, 1
      %p117 = por %p115, %p116
      %p119 = scmp.ne.s32.totalorder %s104, %s118
      %p120 = scmp.eq.s32.totalorder %s31, 0
      %p121 = por %p119, %p120
      %s123 = sadd.s32 %s122, 1
      %p126 = scmp.eq.s32.totalorder %s25, 1
      %p127 = scmp.ne.s32.totalorder %s122, %s124
      %p128 = scmp.eq.s32.totalorder %s25, 0
      %p129 = por %p127, %p128
      %p130 = scmp.ne.s32.totalorder %s122, %s124
      %p131 = scmp.eq.s32.totalorder %s30, 1
      %p132 = por %p130, %p131
      %p133 = scmp.ne.s32.totalorder %s124, %s125
      %p134 = scmp.eq.s32.totalorder %s30, 0
      %p135 = por %p133, %p134
      %p136 = scmp.ne.s32.totalorder %s124, %s125
      %p137 = scmp.eq.s32.totalorder %s31, 1
      %p138 = por %p136, %p137
      %p140 = scmp.ne.s32.totalorder %s125, %s139
      %p141 = scmp.eq.s32.totalorder %s31, 0
      %p142 = por %p140, %p141
      %s144 = sadd.s32 %s143, 1
      %p147 = scmp.eq.s32.totalorder %s25, 1
      %p148 = scmp.ne.s32.totalorder %s143, %s145
      %p149 = scmp.eq.s32.totalorder %s25, 0
      %p150 = por %p148, %p149
      %p151 = scmp.ne.s32.totalorder %s143, %s145
      %p152 = scmp.eq.s32.totalorder %s30, 1
      %p153 = por %p151, %p152
      %p154 = scmp.ne.s32.totalorder %s145, %s146
      %p155 = scmp.eq.s32.totalorder %s30, 0
      %p156 = por %p154, %p155
      %p157 = scmp.ne.s32.totalorder %s145, %s146
      %p158 = scmp.eq.s32.totalorder %s31, 1
      %p159 = por %p157, %p158
      %p161 = scmp.ne.s32.totalorder %s146, %s160
      %p162 = scmp.eq.s32.totalorder %s31, 0
      %p163 = por %p161, %p162
      %s165 = sadd.s32 %s164, 1
      %p168 = scmp.eq.s32.totalorder %s25, 1
      %p169 = scmp.ne.s32.totalorder %s164, %s166
      %p170 = scmp.eq.s32.totalorder %s25, 0
      %p171 = por %p169, %p170
      %p172 = scmp.ne.s32.totalorder %s164, %s166
      %p173 = scmp.eq.s32.totalorder %s30, 1
      %p174 = por %p172, %p173
      %p175 = scmp.ne.s32.totalorder %s166, %s167
      %p176 = scmp.eq.s32.totalorder %s30, 0
      %p177 = por %p175, %p176
      %p178 = scmp.ne.s32.totalorder %s166, %s167
      %p179 = scmp.eq.s32.totalorder %s31, 1
      %p180 = por %p178, %p179
      %p182 = scmp.ne.s32.totalorder %s167, %s181
      %p183 = scmp.eq.s32.totalorder %s31, 0
      %p184 = por %p182, %p183
      %s186 = sadd.s32 %s185, 1
      %p189 = scmp.eq.s32.totalorder %s25, 1
      %p190 = scmp.ne.s32.totalorder %s185, %s187
      %p191 = scmp.eq.s32.totalorder %s25, 0
      %p192 = por %p190, %p191
      %p193 = scmp.ne.s32.totalorder %s185, %s187
      %p194 = scmp.eq.s32.totalorder %s30, 1
      %p195 = por %p193, %p194
      %p196 = scmp.ne.s32.totalorder %s187, %s188
      %p197 = scmp.eq.s32.totalorder %s30, 0
      %p198 = por %p196, %p197
      %p199 = scmp.ne.s32.totalorder %s187, %s188
      %p200 = scmp.eq.s32.totalorder %s31, 1
      %p201 = por %p199, %p200
      %p203 = scmp.ne.s32.totalorder %s188, %s202
      %p204 = scmp.eq.s32.totalorder %s31, 0
      %p205 = por %p203, %p204
      %s207 = sadd.s32 %s206, 1
      %p210 = scmp.eq.s32.totalorder %s25, 1
      %p211 = scmp.ne.s32.totalorder %s206, %s208
      %p212 = scmp.eq.s32.totalorder %s25, 0
      %p213 = por %p211, %p212
      %p214 = scmp.ne.s32.totalorder %s206, %s208
      %p215 = scmp.eq.s32.totalorder %s30, 1
      %p216 = por %p214, %p215
      %p217 = scmp.ne.s32.totalorder %s208, %s209
      %p218 = scmp.eq.s32.totalorder %s30, 0
      %p219 = por %p217, %p218
      %p220 = scmp.ne.s32.totalorder %s208, %s209
      %p221 = scmp.eq.s32.totalorder %s31, 1
      %p222 = por %p220, %p221
      %p224 = scmp.ne.s32.totalorder %s209, %s223
      %p225 = scmp.eq.s32.totalorder %s31, 0
      %p226 = por %p224, %p225
      %s228 = sadd.s32 %s227, 1
      %p231 = scmp.eq.s32.totalorder %s25, 1
      %p232 = scmp.ne.s32.totalorder %s227, %s229
      %p233 = scmp.eq.s32.totalorder %s25, 0
      %p234 = por %p232, %p233
      %p235 = scmp.ne.s32.totalorder %s227, %s229
      %p236 = scmp.eq.s32.totalorder %s30, 1
      %p237 = por %p235, %p236
      %p238 = scmp.ne.s32.totalorder %s229, %s230
      %p239 = scmp.eq.s32.totalorder %s30, 0
      %p240 = por %p238, %p239
      %p241 = scmp.ne.s32.totalorder %s229, %s230
      %p242 = scmp.eq.s32.totalorder %s31, 1
      %p243 = por %p241, %p242
      %p245 = scmp.ne.s32.totalorder %s230, %s244
      %p246 = scmp.eq.s32.totalorder %s31, 0
      %p247 = por %p245, %p246
      %s249 = sadd.s32 %s248, 1
      %p252 = scmp.eq.s32.totalorder %s25, 1
      %p253 = scmp.ne.s32.totalorder %s248, %s250
      %p254 = scmp.eq.s32.totalorder %s25, 0
      %p255 = por %p253, %p254
      %p256 = scmp.ne.s32.totalorder %s248, %s250
      %p257 = scmp.eq.s32.totalorder %s30, 1
      %p258 = por %p256, %p257
      %p259 = scmp.ne.s32.totalorder %s250, %s251
      %p260 = scmp.eq.s32.totalorder %s30, 0
      %p261 = por %p259, %p260
      %p262 = scmp.ne.s32.totalorder %s250, %s251
      %p263 = scmp.eq.s32.totalorder %s31, 1
      %p264 = por %p262, %p263
      %p266 = scmp.ne.s32.totalorder %s251, %s265
      %p267 = scmp.eq.s32.totalorder %s31, 0
      %p268 = por %p266, %p267
      %s269 = ssub.s32 %s25, %s32
      %p270 = scmp.eq.s32.totalorder %s269, 0
      %s272 = sadd.s32 %s271, 1
      %s273 = scalar_select %p270, %s271, %s272
      %p276 = pneg %p270
      %p277 = scmp.eq.s32.totalorder %s25, 1
      %p278 = por %p276, %p277
      %p279 = scmp.ne.s32.totalorder %s271, %s274
      %p280 = scmp.eq.s32.totalorder %s25, 0
      %p281 = por %p279, %p280
      %p282 = scmp.ne.s32.totalorder %s271, %s274
      %p283 = scmp.eq.s32.totalorder %s30, 1
      %p284 = por %p282, %p283
      %p285 = scmp.ne.s32.totalorder %s274, %s275
      %p286 = scmp.eq.s32.totalorder %s30, 0
      %p287 = por %p285, %p286
      %p288 = scmp.ne.s32.totalorder %s274, %s275
      %p289 = scmp.eq.s32.totalorder %s31, 1
      %p290 = por %p288, %p289
      %p292 = scmp.ne.s32.totalorder %s275, %s291
      %p293 = scmp.eq.s32.totalorder %s31, 0
      %p294 = por %p292, %p293
      %s295 = ssub.s32 %s25, %s32
      %p296 = scmp.eq.s32.totalorder %s295, 0
      %s298 = sadd.s32 %s297, 1
      %s299 = scalar_select %p296, %s297, %s298
      %p302 = pneg %p296
      %p303 = scmp.eq.s32.totalorder %s25, 1
      %p304 = por %p302, %p303
      %p305 = scmp.ne.s32.totalorder %s297, %s300
      %p306 = scmp.eq.s32.totalorder %s25, 0
      %p307 = por %p305, %p306
      %p308 = scmp.ne.s32.totalorder %s297, %s300
      %p309 = scmp.eq.s32.totalorder %s30, 1
      %p310 = por %p308, %p309
      %p311 = scmp.ne.s32.totalorder %s300, %s301
      %p312 = scmp.eq.s32.totalorder %s30, 0
      %p313 = por %p311, %p312
      %p314 = scmp.ne.s32.totalorder %s300, %s301
      %p315 = scmp.eq.s32.totalorder %s31, 1
      %p316 = por %p314, %p315
      %p318 = scmp.ne.s32.totalorder %s301, %s317
      %p319 = scmp.eq.s32.totalorder %s31, 0
      %p320 = por %p318, %p319
      %p321 = scmp.le.s32.totalorder 1, %s25
      %p322 = scmp.lt.s32.totalorder %s25, 3
      %p323 = pnand %p321, %p322
      %p324 = pneg %p323
      // Predicated region
      $region9: #{vae_forward.1} parent=5 // pred_check
        _
      $region10: #{vae_forward.1} parent=5 // pred_check_branch
        %326 = sbr.rel (%p323) target = $region12
      $region11: #{vae_forward.1} parent=5 // pred_region
        %s327 = ssub.s32 %s25, 1
        // Predicated region
        $region13: #{vae_forward.1} parent=11 // pred_check
          %p328 = pneg %p72
        $region14: #{vae_forward.1} parent=11 // pred_check_branch
          %330 = sbr.rel (%p328) target = $region16
        $region15: #{vae_forward.1} parent=11 // pred_region
          %s332 = ssub.s32 4096, 4096
          %333 = vsyncadd [#allocation5], %s332
          %s334 = sshll.u32 [#allocation4], 4
          %s335 = int_to_ptr.vmem [resolvable:$true] %s334
          %340 = dma.hbm_to_vmem [thread:$0]  %s1, 4096, %s335, [#allocation5], 64, 64, 4
        $region16: #{vae_forward.1} parent=11 // pred_fallthru
          _
        // Predicated region
        $region17: #{vae_forward.1} parent=11 // pred_check
          %p341 = pneg %p93
        $region18: #{vae_forward.1} parent=11 // pred_check_branch
          %343 = sbr.rel (%p341) target = $region20
        $region19: #{vae_forward.1} parent=11 // pred_region
          _
        $region20: #{vae_forward.1} parent=11 // pred_fallthru
          _
        // Predicated region
        $region21: #{vae_forward.1} parent=11 // pred_check
          %p344 = pneg %p114
        $region22: #{vae_forward.1} parent=11 // pred_check_branch
          %346 = sbr.rel (%p344) target = $region24
        $region23: #{vae_forward.1} parent=11 // pred_region
          %s348 = ssub.s32 8192, 8192
          %349 = vsyncadd [#allocation5], %s348
          %s350 = sshll.u32 [#allocation6], 4
          %s351 = int_to_ptr.vmem [resolvable:$true] %s350
          %356 = dma.hbm_to_vmem [thread:$0]  %s3, 8192, %s351, [#allocation5], 64, 64, 4
        $region24: #{vae_forward.1} parent=11 // pred_fallthru
          _
        // Predicated region
        $region25: #{vae_forward.1} parent=11 // pred_check
          %p357 = pneg %p135
        $region26: #{vae_forward.1} parent=11 // pred_check_branch
          %359 = sbr.rel (%p357) target = $region28
        $region27: #{vae_forward.1} parent=11 // pred_region
          %s361 = ssub.s32 128, 128
          %362 = vsyncadd [#allocation8], %s361
          %s364 = sshll.u32 [#allocation7], 4
          %s365 = int_to_ptr.vmem [resolvable:$true] %s364
          %367 = dma.hbm_to_vmem [thread:$0]  %s4, 128, %s365, [#allocation8]
        $region28: #{vae_forward.1} parent=11 // pred_fallthru
          _
        // Predicated region
        $region29: #{vae_forward.1} parent=11 // pred_check
          %p368 = pneg %p156
        $region30: #{vae_forward.1} parent=11 // pred_check_branch
          %370 = sbr.rel (%p368) target = $region32
        $region31: #{vae_forward.1} parent=11 // pred_region
          _
        $region32: #{vae_forward.1} parent=11 // pred_fallthru
          _
        // Predicated region
        $region33: #{vae_forward.1} parent=11 // pred_check
          %p371 = pneg %p177
        $region34: #{vae_forward.1} parent=11 // pred_check_branch
          %373 = sbr.rel (%p371) target = $region36
        $region35: #{vae_forward.1} parent=11 // pred_region
          %s375 = ssub.s32 256, 256
          %376 = vsyncadd [#allocation8], %s375
          %s377 = sshll.u32 [#allocation9], 4
          %s378 = int_to_ptr.vmem [resolvable:$true] %s377
          %383 = dma.hbm_to_vmem [thread:$0]  %s6, 256, %s378, [#allocation8], 128, 128, 8
        $region36: #{vae_forward.1} parent=11 // pred_fallthru
          _
        // Predicated region
        $region37: #{vae_forward.1} parent=11 // pred_check
          %p384 = pneg %p198
        $region38: #{vae_forward.1} parent=11 // pred_check_branch
          %386 = sbr.rel (%p384) target = $region40
        $region39: #{vae_forward.1} parent=11 // pred_region
          %s388 = ssub.s32 2048, 2048
          %389 = vsyncadd [#allocation11], %s388
          %s390 = sshll.u32 [#allocation10], 4
          %s391 = int_to_ptr.vmem [resolvable:$true] %s390
          %396 = dma.hbm_to_vmem [thread:$0]  %s7, 2048, %s391, [#allocation11], 64, 64, 4
        $region40: #{vae_forward.1} parent=11 // pred_fallthru
          _
        // Predicated region
        $region41: #{vae_forward.1} parent=11 // pred_check
          %p397 = pneg %p219
        $region42: #{vae_forward.1} parent=11 // pred_check_branch
          %399 = sbr.rel (%p397) target = $region44
        $region43: #{vae_forward.1} parent=11 // pred_region
          _
        $region44: #{vae_forward.1} parent=11 // pred_fallthru
          _
        // Predicated region
        $region45: #{vae_forward.1} parent=11 // pred_check
          %p400 = pneg %p240
        $region46: #{vae_forward.1} parent=11 // pred_check_branch
          %402 = sbr.rel (%p400) target = $region48
        $region47: #{vae_forward.1} parent=11 // pred_region
          %s404 = ssub.s32 1024, 1024
          %405 = vsyncadd [#allocation11], %s404
          %s406 = sshll.u32 [#allocation12], 4
          %s407 = int_to_ptr.vmem [resolvable:$true] %s406
          %412 = dma.hbm_to_vmem [thread:$0]  %s9, 1024, %s407, [#allocation11], 128, 128, 8
        $region48: #{vae_forward.1} parent=11 // pred_fallthru
          _
        // Predicated region
        $region49: #{vae_forward.1} parent=11 // pred_check
          %p413 = pneg %p261
        $region50: #{vae_forward.1} parent=11 // pred_check_branch
          %415 = sbr.rel (%p413) target = $region52
        $region51: #{vae_forward.1} parent=11 // pred_region
          _
        $region52: #{vae_forward.1} parent=11 // pred_fallthru
          _
      $region12: #{vae_forward.1} parent=5 // pred_fallthru
        _
      %p416 = scmp.lt.s32.totalorder %s25, 2
      // Predicated region
      $region53: #{vae_forward.1} parent=5 // pred_check
        %p417 = pneg %p416
      $region54: #{vae_forward.1} parent=5 // pred_check_branch
        %419 = sbr.rel (%p417) target = $region56
      $region55: #{vae_forward.1} parent=5 // pred_region
        // Predicated region
        $region57: #{vae_forward.1} parent=55 // pred_check
          %p420 = pneg %p45
        $region58: #{vae_forward.1} parent=55 // pred_check_branch
          %422 = sbr.rel (%p420) target = $region60
        $region59: #{vae_forward.1} parent=55 // pred_region
          %s423 = sand.u32 %s35, 1
          %s424 = scalar_lea.sflag [#allocation3], %s423
          %s425 = sand.u32 %s35, 1
          %s426 = smul.addr %s425, 256
          %s427 = scalar_lea.vmem [#allocation2], %s426
          %s428 = smul.u32 16, %s25
          %s430 = ssub.s32 4096, 4096
          %431 = vsyncadd %s424, %s430
          %s432 = smul.addr %s428, 2
          %s433 = smul.addr %s432, 128
          %s434 = scalar_lea.hbm %s0, %s433
          %s435 = sshll.u32 %s427, 4
          %s436 = int_to_ptr.vmem [resolvable:$true] %s435
          %441 = dma.hbm_to_vmem [thread:$0]  %s434, 4096, %s436, %s424, 256, 256, 16
        $region60: #{vae_forward.1} parent=55 // pred_fallthru
          _
      $region56: #{vae_forward.1} parent=5 // pred_fallthru
        _
      %p442 = scmp.le.s32.totalorder 1, %s25
      %p443 = scmp.lt.s32.totalorder %s25, 3
      %p444 = pnand %p442, %p443
      %p445 = pneg %p444
      // Predicated region
      $region61: #{vae_forward.1} parent=5 // pred_check
        _
      $region62: #{vae_forward.1} parent=5 // pred_check_branch
        %447 = sbr.rel (%p444) target = $region64
      $region63: #{vae_forward.1} parent=5 // pred_region
        %s448 = ssub.s32 %s25, 1
        %s449 = sand.u32 %s38, 1
        %s450 = scalar_lea.sflag [#allocation3], %s449
        %s451 = sand.u32 %s38, 1
        %s452 = smul.addr %s451, 256
        %s453 = scalar_lea.vmem [#allocation2], %s452
        // Predicated region
        $region65: #{vae_forward.1} parent=63 // pred_check
          %p454 = pneg %p51
        $region66: #{vae_forward.1} parent=63 // pred_check_branch
          %456 = sbr.rel (%p454) target = $region68
        $region67: #{vae_forward.1} parent=63 // pred_region
          %457 = dma.done %s450, 4096
        $region68: #{vae_forward.1} parent=63 // pred_fallthru
          _
        // Predicated region
        $region69: #{vae_forward.1} parent=63 // pred_check
          %p458 = pneg %p72
        $region70: #{vae_forward.1} parent=63 // pred_check_branch
          %460 = sbr.rel (%p458) target = $region72
        $region71: #{vae_forward.1} parent=63 // pred_region
          %461 = dma.done [#allocation5], 4096
        $region72: #{vae_forward.1} parent=63 // pred_fallthru
          _
        // Predicated region
        $region73: #{vae_forward.1} parent=63 // pred_check
          %p462 = pneg %p114
        $region74: #{vae_forward.1} parent=63 // pred_check_branch
          %464 = sbr.rel (%p462) target = $region76
        $region75: #{vae_forward.1} parent=63 // pred_region
          %465 = dma.done [#allocation5], 8192
        $region76: #{vae_forward.1} parent=63 // pred_fallthru
          _
        // Predicated region
        $region77: #{vae_forward.1} parent=63 // pred_check
          %p466 = pneg %p135
        $region78: #{vae_forward.1} parent=63 // pred_check_branch
          %468 = sbr.rel (%p466) target = $region80
        $region79: #{vae_forward.1} parent=63 // pred_region
          %469 = dma.done [#allocation8], 128
        $region80: #{vae_forward.1} parent=63 // pred_fallthru
          _
        // Predicated region
        $region81: #{vae_forward.1} parent=63 // pred_check
          %p470 = pneg %p177
        $region82: #{vae_forward.1} parent=63 // pred_check_branch
          %472 = sbr.rel (%p470) target = $region84
        $region83: #{vae_forward.1} parent=63 // pred_region
          %473 = dma.done [#allocation8], 256
        $region84: #{vae_forward.1} parent=63 // pred_fallthru
          _
        // Predicated region
        $region85: #{vae_forward.1} parent=63 // pred_check
          %p474 = pneg %p198
        $region86: #{vae_forward.1} parent=63 // pred_check_branch
          %476 = sbr.rel (%p474) target = $region88
        $region87: #{vae_forward.1} parent=63 // pred_region
          %477 = dma.done [#allocation11], 2048
        $region88: #{vae_forward.1} parent=63 // pred_fallthru
          _
        // Predicated region
        $region89: #{vae_forward.1} parent=63 // pred_check
          %p478 = pneg %p240
        $region90: #{vae_forward.1} parent=63 // pred_check_branch
          %480 = sbr.rel (%p478) target = $region92
        $region91: #{vae_forward.1} parent=63 // pred_region
          %481 = dma.done [#allocation11], 1024
        $region92: #{vae_forward.1} parent=63 // pred_fallthru
          _
        %s482 = sand.u32 %s38, 1
        %s483 = scalar_lea.sflag [#allocation3], %s482
        %s484 = sand.u32 %s38, 1
        %s485 = smul.addr %s484, 256
        %s486 = scalar_lea.vmem [#allocation2], %s485
        %p487 = pneg %p51
        %p488 = pneg %p48
        %p489 = pneg %p72
        %p490 = pneg %p69
        %p491 = pneg %p93
        %p492 = pneg %p90
        %p493 = pneg %p114
        %p494 = pneg %p111
        %p495 = pneg %p135
        %p496 = pneg %p132
        %p497 = pneg %p156
        %p498 = pneg %p153
        %p499 = pneg %p177
        %p500 = pneg %p174
        %p501 = pneg %p198
        %p502 = pneg %p195
        %p503 = pneg %p219
        %p504 = pneg %p216
        %p505 = pneg %p240
        %p506 = pneg %p237
        %p507 = pneg %p261
        %p508 = pneg %p258
        %p509 = pneg %p287
        %p510 = pneg %p284
        %p511 = scmp.lt.s32.totalorder %s30, 1
        %s512 = scalar_select %p511, %s30, 1
        %s513 = smul.addr %s512, 8
        %s514 = scalar_lea.vmem %s11, %s513
        %p515 = pneg %p313
        %p516 = pneg %p310
        %p517 = scmp.lt.s32.totalorder %s30, 1
        %s518 = scalar_select %p517, %s30, 1
        %s519 = smul.addr %s518, 8
        %s520 = scalar_lea.vmem %s12, %s519
        %s521 = smul.u32 16, %s30
        %p522 = scmp.lt.s32.totalorder %s30, 1
        %s523 = scalar_select %p522, %s30, 1
        %s524 = smul.addr %s523, 8
        %s525 = scalar_lea.vmem %s11, %s524
        %p526 = scmp.lt.s32.totalorder %s30, 1
        %s527 = scalar_select %p526, %s30, 1
        %s528 = smul.addr %s527, 8
        %s529 = scalar_lea.vmem %s12, %s528
        %v531 = vld [vmem:[%s453] sm:$0xff]
        %v532 = vld [vmem:[%s453 + $0x8] sm:$0xff]
        %v533 = vld [vmem:[%s453 + $0x10] sm:$0xff]
        %v534 = vld [vmem:[%s453 + $0x18] sm:$0xff]
        %v535 = vld [vmem:[%s453 + $0x20] sm:$0xff]
        %v536 = vld [vmem:[%s453 + $0x28] sm:$0xff]
        %v537 = vld [vmem:[%s453 + $0x30] sm:$0xff]
        %v538 = vld [vmem:[%s453 + $0x38] sm:$0xff]
        %v539 = vld [vmem:[%s453 + $0x40] sm:$0xff]
        %v540 = vld [vmem:[%s453 + $0x48] sm:$0xff]
        %v541 = vld [vmem:[%s453 + $0x50] sm:$0xff]
        %v542 = vld [vmem:[%s453 + $0x58] sm:$0xff]
        %v543 = vld [vmem:[%s453 + $0x60] sm:$0xff]
        %v544 = vld [vmem:[%s453 + $0x68] sm:$0xff]
        %v545 = vld [vmem:[%s453 + $0x70] sm:$0xff]
        %v546 = vld [vmem:[%s453 + $0x78] sm:$0xff]
        %v547 = vld [vmem:[%s453 + $0x80] sm:$0xff]
        %v548 = vld [vmem:[%s453 + $0x88] sm:$0xff]
        %v549 = vld [vmem:[%s453 + $0x90] sm:$0xff]
        %v550 = vld [vmem:[%s453 + $0x98] sm:$0xff]
        %v551 = vld [vmem:[%s453 + $0xa0] sm:$0xff]
        %v552 = vld [vmem:[%s453 + $0xa8] sm:$0xff]
        %v553 = vld [vmem:[%s453 + $0xb0] sm:$0xff]
        %v554 = vld [vmem:[%s453 + $0xb8] sm:$0xff]
        %v555 = vld [vmem:[%s453 + $0xc0] sm:$0xff]
        %v556 = vld [vmem:[%s453 + $0xc8] sm:$0xff]
        %v557 = vld [vmem:[%s453 + $0xd0] sm:$0xff]
        %v558 = vld [vmem:[%s453 + $0xd8] sm:$0xff]
        %v559 = vld [vmem:[%s453 + $0xe0] sm:$0xff]
        %v560 = vld [vmem:[%s453 + $0xe8] sm:$0xff]
        %v561 = vld [vmem:[%s453 + $0xf0] sm:$0xff]
        %v562 = vld [vmem:[%s453 + $0xf8] sm:$0xff]
        %v563 = vmul.f32 %v531, %v531
        %v564 = vmul.f32 %v532, %v532
        %v565 = vmul.f32 %v533, %v533
        %v566 = vmul.f32 %v534, %v534
        %v567 = vmul.f32 %v535, %v535
        %v568 = vmul.f32 %v536, %v536
        %v569 = vmul.f32 %v537, %v537
        %v570 = vmul.f32 %v538, %v538
        %v571 = vmul.f32 %v539, %v539
        %v572 = vmul.f32 %v540, %v540
        %v573 = vmul.f32 %v541, %v541
        %v574 = vmul.f32 %v542, %v542
        %v575 = vmul.f32 %v543, %v543
        %v576 = vmul.f32 %v544, %v544
        %v577 = vmul.f32 %v545, %v545
        %v578 = vmul.f32 %v546, %v546
        %v579 = vmul.f32 %v547, %v547
        %v580 = vmul.f32 %v548, %v548
        %v581 = vmul.f32 %v549, %v549
        %v582 = vmul.f32 %v550, %v550
        %v583 = vmul.f32 %v551, %v551
        %v584 = vmul.f32 %v552, %v552
        %v585 = vmul.f32 %v553, %v553
        %v586 = vmul.f32 %v554, %v554
        %v587 = vmul.f32 %v555, %v555
        %v588 = vmul.f32 %v556, %v556
        %v589 = vmul.f32 %v557, %v557
        %v590 = vmul.f32 %v558, %v558
        %v591 = vmul.f32 %v559, %v559
        %v592 = vmul.f32 %v560, %v560
        %v593 = vmul.f32 %v561, %v561
        %v594 = vmul.f32 %v562, %v562
        %v595 = vadd.f32 %v563, %v564
        %596 = vadd.xlane.f32.xlu0 %v595
        %v597 = vpop.xlane.xlu0 %596
        %v598 = vadd.f32 %v565, %v566
        %599 = vadd.xlane.f32.xlu0 %v598
        %v600 = vpop.xlane.xlu0 %599
        %v601 = vadd.f32 %v567, %v568
        %602 = vadd.xlane.f32.xlu0 %v601
        %v603 = vpop.xlane.xlu0 %602
        %v604 = vadd.f32 %v569, %v570
        %605 = vadd.xlane.f32.xlu0 %v604
        %v606 = vpop.xlane.xlu0 %605
        %v607 = vadd.f32 %v571, %v572
        %608 = vadd.xlane.f32.xlu0 %v607
        %v609 = vpop.xlane.xlu0 %608
        %v610 = vadd.f32 %v573, %v574
        %611 = vadd.xlane.f32.xlu0 %v610
        %v612 = vpop.xlane.xlu0 %611
        %v613 = vadd.f32 %v575, %v576
        %614 = vadd.xlane.f32.xlu0 %v613
        %v615 = vpop.xlane.xlu0 %614
        %v616 = vadd.f32 %v577, %v578
        %617 = vadd.xlane.f32.xlu0 %v616
        %v618 = vpop.xlane.xlu0 %617
        %v619 = vadd.f32 %v579, %v580
        %620 = vadd.xlane.f32.xlu0 %v619
        %v621 = vpop.xlane.xlu0 %620
        %v622 = vadd.f32 %v581, %v582
        %623 = vadd.xlane.f32.xlu0 %v622
        %v624 = vpop.xlane.xlu0 %623
        %v625 = vadd.f32 %v583, %v584
        %626 = vadd.xlane.f32.xlu0 %v625
        %v627 = vpop.xlane.xlu0 %626
        %v628 = vadd.f32 %v585, %v586
        %629 = vadd.xlane.f32.xlu0 %v628
        %v630 = vpop.xlane.xlu0 %629
        %v631 = vadd.f32 %v587, %v588
        %632 = vadd.xlane.f32.xlu0 %v631
        %v633 = vpop.xlane.xlu0 %632
        %v634 = vadd.f32 %v589, %v590
        %635 = vadd.xlane.f32.xlu0 %v634
        %v636 = vpop.xlane.xlu0 %635
        %v637 = vadd.f32 %v591, %v592
        %638 = vadd.xlane.f32.xlu0 %v637
        %v639 = vpop.xlane.xlu0 %638
        %v640 = vadd.f32 %v593, %v594
        %641 = vadd.xlane.f32.xlu0 %v640
        %v642 = vpop.xlane.xlu0 %641
        %v643 = vrsqrt.pop %v597
        %v644 = vmul.f32 %v597, %v643
        %vm645 = vcmp.eq.f32.partialorder %v597, inf
        %v646 = vsel %vm645, %v597, %v644
        %vm647 = vcmp.eq.f32.partialorder %v597, 0.0
        %v648 = vand.u32 %v597, 2147483648
        %v649 = vsel %vm647, %v648, %v646
        %v650 = vrsqrt.pop %v600
        %v651 = vmul.f32 %v600, %v650
        %vm652 = vcmp.eq.f32.partialorder %v600, inf
        %v653 = vsel %vm652, %v600, %v651
        %vm654 = vcmp.eq.f32.partialorder %v600, 0.0
        %v655 = vand.u32 %v600, 2147483648
        %v656 = vsel %vm654, %v655, %v653
        %v657 = vrsqrt.pop %v603
        %v658 = vmul.f32 %v603, %v657
        %vm659 = vcmp.eq.f32.partialorder %v603, inf
        %v660 = vsel %vm659, %v603, %v658
        %vm661 = vcmp.eq.f32.partialorder %v603, 0.0
        %v662 = vand.u32 %v603, 2147483648
        %v663 = vsel %vm661, %v662, %v660
        %v664 = vrsqrt.pop %v606
        %v665 = vmul.f32 %v606, %v664
        %vm666 = vcmp.eq.f32.partialorder %v606, inf
        %v667 = vsel %vm666, %v606, %v665
        %vm668 = vcmp.eq.f32.partialorder %v606, 0.0
        %v669 = vand.u32 %v606, 2147483648
        %v670 = vsel %vm668, %v669, %v667
        %v671 = vrsqrt.pop %v609
        %v672 = vmul.f32 %v609, %v671
        %vm673 = vcmp.eq.f32.partialorder %v609, inf
        %v674 = vsel %vm673, %v609, %v672
        %vm675 = vcmp.eq.f32.partialorder %v609, 0.0
        %v676 = vand.u32 %v609, 2147483648
        %v677 = vsel %vm675, %v676, %v674
        %v678 = vrsqrt.pop %v612
        %v679 = vmul.f32 %v612, %v678
        %vm680 = vcmp.eq.f32.partialorder %v612, inf
        %v681 = vsel %vm680, %v612, %v679
        %vm682 = vcmp.eq.f32.partialorder %v612, 0.0
        %v683 = vand.u32 %v612, 2147483648
        %v684 = vsel %vm682, %v683, %v681
        %v685 = vrsqrt.pop %v615
        %v686 = vmul.f32 %v615, %v685
        %vm687 = vcmp.eq.f32.partialorder %v615, inf
        %v688 = vsel %vm687, %v615, %v686
        %vm689 = vcmp.eq.f32.partialorder %v615, 0.0
        %v690 = vand.u32 %v615, 2147483648
        %v691 = vsel %vm689, %v690, %v688
        %v692 = vrsqrt.pop %v618
        %v693 = vmul.f32 %v618, %v692
        %vm694 = vcmp.eq.f32.partialorder %v618, inf
        %v695 = vsel %vm694, %v618, %v693
        %vm696 = vcmp.eq.f32.partialorder %v618, 0.0
        %v697 = vand.u32 %v618, 2147483648
        %v698 = vsel %vm696, %v697, %v695
        %v699 = vrsqrt.pop %v621
        %v700 = vmul.f32 %v621, %v699
        %vm701 = vcmp.eq.f32.partialorder %v621, inf
        %v702 = vsel %vm701, %v621, %v700
        %vm703 = vcmp.eq.f32.partialorder %v621, 0.0
        %v704 = vand.u32 %v621, 2147483648
        %v705 = vsel %vm703, %v704, %v702
        %v706 = vrsqrt.pop %v624
        %v707 = vmul.f32 %v624, %v706
        %vm708 = vcmp.eq.f32.partialorder %v624, inf
        %v709 = vsel %vm708, %v624, %v707
        %vm710 = vcmp.eq.f32.partialorder %v624, 0.0
        %v711 = vand.u32 %v624, 2147483648
        %v712 = vsel %vm710, %v711, %v709
        %v713 = vrsqrt.pop %v627
        %v714 = vmul.f32 %v627, %v713
        %vm715 = vcmp.eq.f32.partialorder %v627, inf
        %v716 = vsel %vm715, %v627, %v714
        %vm717 = vcmp.eq.f32.partialorder %v627, 0.0
        %v718 = vand.u32 %v627, 2147483648
        %v719 = vsel %vm717, %v718, %v716
        %v720 = vrsqrt.pop %v630
        %v721 = vmul.f32 %v630, %v720
        %vm722 = vcmp.eq.f32.partialorder %v630, inf
        %v723 = vsel %vm722, %v630, %v721
        %vm724 = vcmp.eq.f32.partialorder %v630, 0.0
        %v725 = vand.u32 %v630, 2147483648
        %v726 = vsel %vm724, %v725, %v723
        %v727 = vrsqrt.pop %v633
        %v728 = vmul.f32 %v633, %v727
        %vm729 = vcmp.eq.f32.partialorder %v633, inf
        %v730 = vsel %vm729, %v633, %v728
        %vm731 = vcmp.eq.f32.partialorder %v633, 0.0
        %v732 = vand.u32 %v633, 2147483648
        %v733 = vsel %vm731, %v732, %v730
        %v734 = vrsqrt.pop %v636
        %v735 = vmul.f32 %v636, %v734
        %vm736 = vcmp.eq.f32.partialorder %v636, inf
        %v737 = vsel %vm736, %v636, %v735
        %vm738 = vcmp.eq.f32.partialorder %v636, 0.0
        %v739 = vand.u32 %v636, 2147483648
        %v740 = vsel %vm738, %v739, %v737
        %v741 = vrsqrt.pop %v639
        %v742 = vmul.f32 %v639, %v741
        %vm743 = vcmp.eq.f32.partialorder %v639, inf
        %v744 = vsel %vm743, %v639, %v742
        %vm745 = vcmp.eq.f32.partialorder %v639, 0.0
        %v746 = vand.u32 %v639, 2147483648
        %v747 = vsel %vm745, %v746, %v744
        %v748 = vrsqrt.pop %v642
        %v749 = vmul.f32 %v642, %v748
        %vm750 = vcmp.eq.f32.partialorder %v642, inf
        %v751 = vsel %vm750, %v642, %v749
        %vm752 = vcmp.eq.f32.partialorder %v642, 0.0
        %v753 = vand.u32 %v642, 2147483648
        %v754 = vsel %vm752, %v753, %v751
        %v755 = vmax.f32 %v649, 1e-08
        %v756 = vmax.f32 %v656, 1e-08
        %v757 = vmax.f32 %v663, 1e-08
        %v758 = vmax.f32 %v670, 1e-08
        %v759 = vmax.f32 %v677, 1e-08
        %v760 = vmax.f32 %v684, 1e-08
        %v761 = vmax.f32 %v691, 1e-08
        %v762 = vmax.f32 %v698, 1e-08
        %v763 = vmax.f32 %v705, 1e-08
        %v764 = vmax.f32 %v712, 1e-08
        %v765 = vmax.f32 %v719, 1e-08
        %v766 = vmax.f32 %v726, 1e-08
        %v767 = vmax.f32 %v733, 1e-08
        %v768 = vmax.f32 %v740, 1e-08
        %v769 = vmax.f32 %v747, 1e-08
        %v770 = vmax.f32 %v754, 1e-08
        %v771 = vrcp.pop %v755
        %v772 = vmul.f32 %v531, %v771
        %v773 = vmul.f32 %v532, %v771
        %v774 = vrcp.pop %v756
        %v775 = vmul.f32 %v533, %v774
        %v776 = vmul.f32 %v534, %v774
        %v777 = vrcp.pop %v757
        %v778 = vmul.f32 %v535, %v777
        %v779 = vmul.f32 %v536, %v777
        %v780 = vrcp.pop %v758
        %v781 = vmul.f32 %v537, %v780
        %v782 = vmul.f32 %v538, %v780
        %v783 = vrcp.pop %v759
        %v784 = vmul.f32 %v539, %v783
        %v785 = vmul.f32 %v540, %v783
        %v786 = vrcp.pop %v760
        %v787 = vmul.f32 %v541, %v786
        %v788 = vmul.f32 %v542, %v786
        %v789 = vrcp.pop %v761
        %v790 = vmul.f32 %v543, %v789
        %v791 = vmul.f32 %v544, %v789
        %v792 = vrcp.pop %v762
        %v793 = vmul.f32 %v545, %v792
        %v794 = vmul.f32 %v546, %v792
        %v795 = vrcp.pop %v763
        %v796 = vmul.f32 %v547, %v795
        %v797 = vmul.f32 %v548, %v795
        %v798 = vrcp.pop %v764
        %v799 = vmul.f32 %v549, %v798
        %v800 = vmul.f32 %v550, %v798
        %v801 = vrcp.pop %v765
        %v802 = vmul.f32 %v551, %v801
        %v803 = vmul.f32 %v552, %v801
        %v804 = vrcp.pop %v766
        %v805 = vmul.f32 %v553, %v804
        %v806 = vmul.f32 %v554, %v804
        %v807 = vrcp.pop %v767
        %v808 = vmul.f32 %v555, %v807
        %v809 = vmul.f32 %v556, %v807
        %v810 = vrcp.pop %v768
        %v811 = vmul.f32 %v557, %v810
        %v812 = vmul.f32 %v558, %v810
        %v813 = vrcp.pop %v769
        %v814 = vmul.f32 %v559, %v813
        %v815 = vmul.f32 %v560, %v813
        %v816 = vrcp.pop %v770
        %v817 = vmul.f32 %v561, %v816
        %v818 = vmul.f32 %v562, %v816
        %v819 = vpack.c.bf16 %v775, %v772
        %v820 = vpack.c.bf16 %v776, %v773
        %v821 = vpack.c.bf16 %v781, %v778
        %v822 = vpack.c.bf16 %v782, %v779
        %v823 = vpack.c.bf16 %v787, %v784
        %v824 = vpack.c.bf16 %v788, %v785
        %v825 = vpack.c.bf16 %v793, %v790
        %v826 = vpack.c.bf16 %v794, %v791
        %v827 = vpack.c.bf16 %v799, %v796
        %v828 = vpack.c.bf16 %v800, %v797
        %v829 = vpack.c.bf16 %v805, %v802
        %v830 = vpack.c.bf16 %v806, %v803
        %v831 = vpack.c.bf16 %v811, %v808
        %v832 = vpack.c.bf16 %v812, %v809
        %v833 = vpack.c.bf16 %v817, %v814
        %v834 = vpack.c.bf16 %v818, %v815
        %v835 = vld [vmem:[#allocation4] sm:$0xf]
        %v836 = vld [vmem:[#allocation4 + $0x4] sm:$0xf]
        %v837 = vld [vmem:[#allocation4 + $0x8] sm:$0xf]
        %v838 = vld [vmem:[#allocation4 + $0xc] sm:$0xf]
        %v839 = vld [vmem:[#allocation4 + $0x10] sm:$0xf]
        %v840 = vld [vmem:[#allocation4 + $0x14] sm:$0xf]
        %v841 = vld [vmem:[#allocation4 + $0x18] sm:$0xf]
        %v842 = vld [vmem:[#allocation4 + $0x1c] sm:$0xf]
        %v843 = vld [vmem:[#allocation4 + $0x20] sm:$0xf]
        %v844 = vld [vmem:[#allocation4 + $0x24] sm:$0xf]
        %v845 = vld [vmem:[#allocation4 + $0x28] sm:$0xf]
        %v846 = vld [vmem:[#allocation4 + $0x2c] sm:$0xf]
        %v847 = vld [vmem:[#allocation4 + $0x30] sm:$0xf]
        %v848 = vld [vmem:[#allocation4 + $0x34] sm:$0xf]
        %v849 = vld [vmem:[#allocation4 + $0x38] sm:$0xf]
        %v850 = vld [vmem:[#allocation4 + $0x3c] sm:$0xf]
        %v851 = vld [vmem:[#allocation4 + $0x40] sm:$0xf]
        %v852 = vld [vmem:[#allocation4 + $0x44] sm:$0xf]
        %v853 = vld [vmem:[#allocation4 + $0x48] sm:$0xf]
        %v854 = vld [vmem:[#allocation4 + $0x4c] sm:$0xf]
        %v855 = vld [vmem:[#allocation4 + $0x50] sm:$0xf]
        %v856 = vld [vmem:[#allocation4 + $0x54] sm:$0xf]
        %v857 = vld [vmem:[#allocation4 + $0x58] sm:$0xf]
        %v858 = vld [vmem:[#allocation4 + $0x5c] sm:$0xf]
        %v859 = vld [vmem:[#allocation4 + $0x60] sm:$0xf]
        %v860 = vld [vmem:[#allocation4 + $0x64] sm:$0xf]
        %v861 = vld [vmem:[#allocation4 + $0x68] sm:$0xf]
        %v862 = vld [vmem:[#allocation4 + $0x6c] sm:$0xf]
        %v863 = vld [vmem:[#allocation4 + $0x70] sm:$0xf]
        %v864 = vld [vmem:[#allocation4 + $0x74] sm:$0xf]
        %v865 = vld [vmem:[#allocation4 + $0x78] sm:$0xf]
        %v866 = vld [vmem:[#allocation4 + $0x7c] sm:$0xf]
        %v867 = vld [vmem:[%s2] sm:$0x1]
        %v868 = vlaneseq
        %v869 = vshrl.u32 %v868, 7
        %v870 = vsub.s32 0, %v869
        %v871 = vrot.slane %v867, %v870
        %v904 = vunpack.c.l.b16 %v835
        %v905 = vunpack.c.l.b16 %v836
        %v906 = vunpack.c.l.b16 %v837
        %v907 = vunpack.c.l.b16 %v838
        %v908 = vunpack.c.l.b16 %v839
        %v909 = vunpack.c.l.b16 %v840
        %v910 = vunpack.c.l.b16 %v841
        %v911 = vunpack.c.l.b16 %v842
        %v912 = vunpack.c.l.b16 %v843
        %v913 = vunpack.c.l.b16 %v844
        %v914 = vunpack.c.l.b16 %v845
        %v915 = vunpack.c.l.b16 %v846
        %v916 = vunpack.c.l.b16 %v847
        %v917 = vunpack.c.l.b16 %v848
        %v918 = vunpack.c.l.b16 %v849
        %v919 = vunpack.c.l.b16 %v850
        %v920 = vunpack.c.l.b16 %v851
        %v921 = vunpack.c.l.b16 %v852
        %v922 = vunpack.c.l.b16 %v853
        %v923 = vunpack.c.l.b16 %v854
        %v924 = vunpack.c.l.b16 %v855
        %v925 = vunpack.c.l.b16 %v856
        %v926 = vunpack.c.l.b16 %v857
        %v927 = vunpack.c.l.b16 %v858
        %v928 = vunpack.c.l.b16 %v859
        %v929 = vunpack.c.l.b16 %v860
        %v930 = vunpack.c.l.b16 %v861
        %v931 = vunpack.c.l.b16 %v862
        %v932 = vunpack.c.l.b16 %v863
        %v933 = vunpack.c.l.b16 %v864
        %v934 = vunpack.c.l.b16 %v865
        %v935 = vunpack.c.l.b16 %v866
        %v936 = vpack.c.b16 %v905, %v904
        %v937 = vpack.c.b16 %v907, %v906
        %v938 = vpack.c.b16 %v909, %v908
        %v939 = vpack.c.b16 %v911, %v910
        %v940 = vpack.c.b16 %v913, %v912
        %v941 = vpack.c.b16 %v915, %v914
        %v942 = vpack.c.b16 %v917, %v916
        %v943 = vpack.c.b16 %v919, %v918
        %v944 = vpack.c.b16 %v921, %v920
        %v945 = vpack.c.b16 %v923, %v922
        %v946 = vpack.c.b16 %v925, %v924
        %v947 = vpack.c.b16 %v927, %v926
        %v948 = vpack.c.b16 %v929, %v928
        %v949 = vpack.c.b16 %v931, %v930
        %v950 = vpack.c.b16 %v933, %v932
        %v951 = vpack.c.b16 %v935, %v934
        %968 = vmatprep.subr.bf16.mxu0 0
        %969 = vmatpush1.bf16.msra.mxu0 %v936
        %970 = vmatprep.subr.bf16.mxu0 0
        %971 = vmatpush1.bf16.msra.mxu0 %v937
        %972 = vmatprep.subr.bf16.mxu0 0
        %973 = vmatpush1.bf16.msra.mxu0 %v938
        %974 = vmatprep.subr.bf16.mxu0 0
        %975 = vmatpush1.bf16.msra.mxu0 %v939
        %976 = vmatprep.subr.bf16.mxu0 0
        %977 = vmatpush1.bf16.msra.mxu0 %v940
        %978 = vmatprep.subr.bf16.mxu0 0
        %979 = vmatpush1.bf16.msra.mxu0 %v941
        %980 = vmatprep.subr.bf16.mxu0 0
        %981 = vmatpush1.bf16.msra.mxu0 %v942
        %982 = vmatprep.subr.bf16.mxu0 0
        %983 = vmatpush1.bf16.msra.mxu0 %v943
        %984 = vmatprep.subr.bf16.mxu0 0
        %985 = vmatpush1.bf16.msra.mxu0 %v944
        %986 = vmatprep.subr.bf16.mxu0 0
        %987 = vmatpush1.bf16.msra.mxu0 %v945
        %988 = vmatprep.subr.bf16.mxu0 0
        %989 = vmatpush1.bf16.msra.mxu0 %v946
        %990 = vmatprep.subr.bf16.mxu0 0
        %991 = vmatpush1.bf16.msra.mxu0 %v947
        %992 = vmatprep.subr.bf16.mxu0 0
        %993 = vmatpush1.bf16.msra.mxu0 %v948
        %994 = vmatprep.subr.bf16.mxu0 0
        %995 = vmatpush1.bf16.msra.mxu0 %v949
        %996 = vmatprep.subr.bf16.mxu0 0
        %997 = vmatpush1.bf16.msra.mxu0 %v950
        %998 = vmatprep.subr.bf16.mxu0 0
        %999 = vmatpush1.bf16.msra.mxu0 %v951
        %1000 = vmatprep.mubr.bf16.mxu0 %v820
        %1001 = vmatmul.mubr.bf16.gmra.mrb[0].mxu0 %v819
        %v1002 = vpop.f32.mrb[0].mxu0
        %v1003 = vadd.f32 %v871, %v1002
        %v1004 = vpop.f32.mrb[0].mxu0
        %v1005 = vpop.f32.mrb[0].mxu0
        %v1006 = vadd.f32 %v871, %v1005
        %v1007 = vpop.f32.mrb[0].mxu0
        %1008 = vmatprep.mubr.bf16.mxu0 %v822
        %1009 = vmatmul.mubr.bf16.gmra.mrb[0].mxu0 %v821
        %v1010 = vpop.f32.mrb[0].mxu0
        %v1011 = vadd.f32 %v871, %v1010
        %v1012 = vpop.f32.mrb[0].mxu0
        %v1013 = vpop.f32.mrb[0].mxu0
        %v1014 = vadd.f32 %v871, %v1013
        %v1015 = vpop.f32.mrb[0].mxu0
        %1016 = vmatprep.mubr.bf16.mxu0 %v824
        %1017 = vmatmul.mubr.bf16.gmra.mrb[0].mxu0 %v823
        %v1018 = vpop.f32.mrb[0].mxu0
        %v1019 = vadd.f32 %v871, %v1018
        %v1020 = vpop.f32.mrb[0].mxu0
        %v1021 = vpop.f32.mrb[0].mxu0
        %v1022 = vadd.f32 %v871, %v1021
        %v1023 = vpop.f32.mrb[0].mxu0
        %1024 = vmatprep.mubr.bf16.mxu0 %v826
        %1025 = vmatmul.mubr.bf16.gmra.mrb[0].mxu0 %v825
        %v1026 = vpop.f32.mrb[0].mxu0
        %v1027 = vadd.f32 %v871, %v1026
        %v1028 = vpop.f32.mrb[0].mxu0
        %v1029 = vpop.f32.mrb[0].mxu0
        %v1030 = vadd.f32 %v871, %v1029
        %v1031 = vpop.f32.mrb[0].mxu0
        %1032 = vmatprep.mubr.bf16.mxu0 %v828
        %1033 = vmatmul.mubr.bf16.gmra.mrb[0].mxu0 %v827
        %v1034 = vpop.f32.mrb[0].mxu0
        %v1035 = vadd.f32 %v871, %v1034
        %v1036 = vpop.f32.mrb[0].mxu0
        %v1037 = vpop.f32.mrb[0].mxu0
        %v1038 = vadd.f32 %v871, %v1037
        %v1039 = vpop.f32.mrb[0].mxu0
        %1040 = vmatprep.mubr.bf16.mxu0 %v830
        %1041 = vmatmul.mubr.bf16.gmra.mrb[0].mxu0 %v829
        %v1042 = vpop.f32.mrb[0].mxu0
        %v1043 = vadd.f32 %v871, %v1042
        %v1044 = vpop.f32.mrb[0].mxu0
        %v1045 = vpop.f32.mrb[0].mxu0
        %v1046 = vadd.f32 %v871, %v1045
        %v1047 = vpop.f32.mrb[0].mxu0
        %1048 = vmatprep.mubr.bf16.mxu0 %v832
        %1049 = vmatmul.mubr.bf16.gmra.mrb[0].mxu0 %v831
        %v1050 = vpop.f32.mrb[0].mxu0
        %v1051 = vadd.f32 %v871, %v1050
        %v1052 = vpop.f32.mrb[0].mxu0
        %v1053 = vpop.f32.mrb[0].mxu0
        %v1054 = vadd.f32 %v871, %v1053
        %v1055 = vpop.f32.mrb[0].mxu0
        %1056 = vmatprep.mubr.bf16.mxu0 %v834
        %1057 = vmatmul.mubr.bf16.gmra.mrb[0].mxu0 %v833
        %v1058 = vpop.f32.mrb[0].mxu0
        %v1059 = vadd.f32 %v871, %v1058
        %v1060 = vpop.f32.mrb[0].mxu0
        %v1061 = vpop.f32.mrb[0].mxu0
        %v1062 = vadd.f32 %v871, %v1061
        %v1063 = vpop.f32.mrb[0].mxu0
        %1064 = vdwg.mxu0
        %v1065 = vxor.u32 %v1003, 2147483648
        %v1066 = vxor.u32 %v1006, 2147483648
        %v1067 = vxor.u32 %v1011, 2147483648
        %v1068 = vxor.u32 %v1014, 2147483648
        %v1069 = vxor.u32 %v1019, 2147483648
        %v1070 = vxor.u32 %v1022, 2147483648
        %v1071 = vxor.u32 %v1027, 2147483648
        %v1072 = vxor.u32 %v1030, 2147483648
        %v1073 = vxor.u32 %v1035, 2147483648
        %v1074 = vxor.u32 %v1038, 2147483648
        %v1075 = vxor.u32 %v1043, 2147483648
        %v1076 = vxor.u32 %v1046, 2147483648
        %v1077 = vxor.u32 %v1051, 2147483648
        %v1078 = vxor.u32 %v1054, 2147483648
        %v1079 = vxor.u32 %v1059, 2147483648
        %v1080 = vxor.u32 %v1062, 2147483648
        %v1081 = vmul.f32 %v1065, 1.442695
        %v1082 = vpow.pop %v1081
        %v1083 = vmul.f32 %v1066, 1.442695
        %v1084 = vpow.pop %v1083
        %v1085 = vmul.f32 %v1067, 1.442695
        %v1086 = vpow.pop %v1085
        %v1087 = vmul.f32 %v1068, 1.442695
        %v1088 = vpow.pop %v1087
        %v1089 = vmul.f32 %v1069, 1.442695
        %v1090 = vpow.pop %v1089
        %v1091 = vmul.f32 %v1070, 1.442695
        %v1092 = vpow.pop %v1091
        %v1093 = vmul.f32 %v1071, 1.442695
        %v1094 = vpow.pop %v1093
        %v1095 = vmul.f32 %v1072, 1.442695
        %v1096 = vpow.pop %v1095
        %v1097 = vmul.f32 %v1073, 1.442695
        %v1098 = vpow.pop %v1097
        %v1099 = vmul.f32 %v1074, 1.442695
        %v1100 = vpow.pop %v1099
        %v1101 = vmul.f32 %v1075, 1.442695
        %v1102 = vpow.pop %v1101
        %v1103 = vmul.f32 %v1076, 1.442695
        %v1104 = vpow.pop %v1103
        %v1105 = vmul.f32 %v1077, 1.442695
        %v1106 = vpow.pop %v1105
        %v1107 = vmul.f32 %v1078, 1.442695
        %v1108 = vpow.pop %v1107
        %v1109 = vmul.f32 %v1079, 1.442695
        %v1110 = vpow.pop %v1109
        %v1111 = vmul.f32 %v1080, 1.442695
        %v1112 = vpow.pop %v1111
        %v1113 = vadd.f32 %v1082, 1.0
        %v1114 = vadd.f32 %v1084, 1.0
        %v1115 = vadd.f32 %v1086, 1.0
        %v1116 = vadd.f32 %v1088, 1.0
        %v1117 = vadd.f32 %v1090, 1.0
        %v1118 = vadd.f32 %v1092, 1.0
        %v1119 = vadd.f32 %v1094, 1.0
        %v1120 = vadd.f32 %v1096, 1.0
        %v1121 = vadd.f32 %v1098, 1.0
        %v1122 = vadd.f32 %v1100, 1.0
        %v1123 = vadd.f32 %v1102, 1.0
        %v1124 = vadd.f32 %v1104, 1.0
        %v1125 = vadd.f32 %v1106, 1.0
        %v1126 = vadd.f32 %v1108, 1.0
        %v1127 = vadd.f32 %v1110, 1.0
        %v1128 = vadd.f32 %v1112, 1.0
        %v1129 = vrcp.pop %v1113
        %v1130 = vmul.f32 1.0, %v1129
        %v1131 = vrcp.pop %v1114
        %v1132 = vmul.f32 1.0, %v1131
        %v1133 = vrcp.pop %v1115
        %v1134 = vmul.f32 1.0, %v1133
        %v1135 = vrcp.pop %v1116
        %v1136 = vmul.f32 1.0, %v1135
        %v1137 = vrcp.pop %v1117
        %v1138 = vmul.f32 1.0, %v1137
        %v1139 = vrcp.pop %v1118
        %v1140 = vmul.f32 1.0, %v1139
        %v1141 = vrcp.pop %v1119
        %v1142 = vmul.f32 1.0, %v1141
        %v1143 = vrcp.pop %v1120
        %v1144 = vmul.f32 1.0, %v1143
        %v1145 = vrcp.pop %v1121
        %v1146 = vmul.f32 1.0, %v1145
        %v1147 = vrcp.pop %v1122
        %v1148 = vmul.f32 1.0, %v1147
        %v1149 = vrcp.pop %v1123
        %v1150 = vmul.f32 1.0, %v1149
        %v1151 = vrcp.pop %v1124
        %v1152 = vmul.f32 1.0, %v1151
        %v1153 = vrcp.pop %v1125
        %v1154 = vmul.f32 1.0, %v1153
        %v1155 = vrcp.pop %v1126
        %v1156 = vmul.f32 1.0, %v1155
        %v1157 = vrcp.pop %v1127
        %v1158 = vmul.f32 1.0, %v1157
        %v1159 = vrcp.pop %v1128
        %v1160 = vmul.f32 1.0, %v1159
        %v1161 = vmul.f32 %v1003, %v1130
        %v1162 = vmul.f32 %v1006, %v1132
        %v1163 = vmul.f32 %v1011, %v1134
        %v1164 = vmul.f32 %v1014, %v1136
        %v1165 = vmul.f32 %v1019, %v1138
        %v1166 = vmul.f32 %v1022, %v1140
        %v1167 = vmul.f32 %v1027, %v1142
        %v1168 = vmul.f32 %v1030, %v1144
        %v1169 = vmul.f32 %v1035, %v1146
        %v1170 = vmul.f32 %v1038, %v1148
        %v1171 = vmul.f32 %v1043, %v1150
        %v1172 = vmul.f32 %v1046, %v1152
        %v1173 = vmul.f32 %v1051, %v1154
        %v1174 = vmul.f32 %v1054, %v1156
        %v1175 = vmul.f32 %v1059, %v1158
        %v1176 = vmul.f32 %v1062, %v1160
        %v1177 = vld [vmem:[%s5] sm:$0x1]
        %v1178 = vld [vmem:[#allocation9] sm:$0x1]
        %1179 = vadd.xlane.f32.xlu0 %v1161
        %v1180 = vpop.xlane.xlu0 %1179
        %1181 = vadd.xlane.f32.xlu0 %v1162
        %v1182 = vpop.xlane.xlu0 %1181
        %1183 = vadd.xlane.f32.xlu0 %v1163
        %v1184 = vpop.xlane.xlu0 %1183
        %1185 = vadd.xlane.f32.xlu0 %v1164
        %v1186 = vpop.xlane.xlu0 %1185
        %1187 = vadd.xlane.f32.xlu0 %v1165
        %v1188 = vpop.xlane.xlu0 %1187
        %1189 = vadd.xlane.f32.xlu0 %v1166
        %v1190 = vpop.xlane.xlu0 %1189
        %1191 = vadd.xlane.f32.xlu0 %v1167
        %v1192 = vpop.xlane.xlu0 %1191
        %1193 = vadd.xlane.f32.xlu0 %v1168
        %v1194 = vpop.xlane.xlu0 %1193
        %1195 = vadd.xlane.f32.xlu0 %v1169
        %v1196 = vpop.xlane.xlu0 %1195
        %1197 = vadd.xlane.f32.xlu0 %v1170
        %v1198 = vpop.xlane.xlu0 %1197
        %1199 = vadd.xlane.f32.xlu0 %v1171
        %v1200 = vpop.xlane.xlu0 %1199
        %1201 = vadd.xlane.f32.xlu0 %v1172
        %v1202 = vpop.xlane.xlu0 %1201
        %1203 = vadd.xlane.f32.xlu0 %v1173
        %v1204 = vpop.xlane.xlu0 %1203
        %1205 = vadd.xlane.f32.xlu0 %v1174
        %v1206 = vpop.xlane.xlu0 %1205
        %1207 = vadd.xlane.f32.xlu0 %v1175
        %v1208 = vpop.xlane.xlu0 %1207
        %1209 = vadd.xlane.f32.xlu0 %v1176
        %v1210 = vpop.xlane.xlu0 %1209
        %v1211 = vrcp.pop 128.0
        %v1212 = vmul.f32 %v1180, %v1211
        %v1213 = vmul.f32 %v1182, %v1211
        %v1214 = vmul.f32 %v1184, %v1211
        %v1215 = vmul.f32 %v1186, %v1211
        %v1216 = vmul.f32 %v1188, %v1211
        %v1217 = vmul.f32 %v1190, %v1211
        %v1218 = vmul.f32 %v1192, %v1211
        %v1219 = vmul.f32 %v1194, %v1211
        %v1220 = vmul.f32 %v1196, %v1211
        %v1221 = vmul.f32 %v1198, %v1211
        %v1222 = vmul.f32 %v1200, %v1211
        %v1223 = vmul.f32 %v1202, %v1211
        %v1224 = vmul.f32 %v1204, %v1211
        %v1225 = vmul.f32 %v1206, %v1211
        %v1226 = vmul.f32 %v1208, %v1211
        %v1227 = vmul.f32 %v1210, %v1211
        %v1228 = vsub.f32 %v1161, %v1212
        %v1229 = vsub.f32 %v1162, %v1213
        %v1230 = vsub.f32 %v1163, %v1214
        %v1231 = vsub.f32 %v1164, %v1215
        %v1232 = vsub.f32 %v1165, %v1216
        %v1233 = vsub.f32 %v1166, %v1217
        %v1234 = vsub.f32 %v1167, %v1218
        %v1235 = vsub.f32 %v1168, %v1219
        %v1236 = vsub.f32 %v1169, %v1220
        %v1237 = vsub.f32 %v1170, %v1221
        %v1238 = vsub.f32 %v1171, %v1222
        %v1239 = vsub.f32 %v1172, %v1223
        %v1240 = vsub.f32 %v1173, %v1224
        %v1241 = vsub.f32 %v1174, %v1225
        %v1242 = vsub.f32 %v1175, %v1226
        %v1243 = vsub.f32 %v1176, %v1227
        %v1244 = vmul.f32 %v1228, %v1228
        %v1245 = vmul.f32 %v1229, %v1229
        %v1246 = vmul.f32 %v1230, %v1230
        %v1247 = vmul.f32 %v1231, %v1231
        %v1248 = vmul.f32 %v1232, %v1232
        %v1249 = vmul.f32 %v1233, %v1233
        %v1250 = vmul.f32 %v1234, %v1234
        %v1251 = vmul.f32 %v1235, %v1235
        %v1252 = vmul.f32 %v1236, %v1236
        %v1253 = vmul.f32 %v1237, %v1237
        %v1254 = vmul.f32 %v1238, %v1238
        %v1255 = vmul.f32 %v1239, %v1239
        %v1256 = vmul.f32 %v1240, %v1240
        %v1257 = vmul.f32 %v1241, %v1241
        %v1258 = vmul.f32 %v1242, %v1242
        %v1259 = vmul.f32 %v1243, %v1243
        %1260 = vadd.xlane.f32.xlu0 %v1244
        %v1261 = vpop.xlane.xlu0 %1260
        %1262 = vadd.xlane.f32.xlu0 %v1245
        %v1263 = vpop.xlane.xlu0 %1262
        %1264 = vadd.xlane.f32.xlu0 %v1246
        %v1265 = vpop.xlane.xlu0 %1264
        %1266 = vadd.xlane.f32.xlu0 %v1247
        %v1267 = vpop.xlane.xlu0 %1266
        %1268 = vadd.xlane.f32.xlu0 %v1248
        %v1269 = vpop.xlane.xlu0 %1268
        %1270 = vadd.xlane.f32.xlu0 %v1249
        %v1271 = vpop.xlane.xlu0 %1270
        %1272 = vadd.xlane.f32.xlu0 %v1250
        %v1273 = vpop.xlane.xlu0 %1272
        %1274 = vadd.xlane.f32.xlu0 %v1251
        %v1275 = vpop.xlane.xlu0 %1274
        %1276 = vadd.xlane.f32.xlu0 %v1252
        %v1277 = vpop.xlane.xlu0 %1276
        %1278 = vadd.xlane.f32.xlu0 %v1253
        %v1279 = vpop.xlane.xlu0 %1278
        %1280 = vadd.xlane.f32.xlu0 %v1254
        %v1281 = vpop.xlane.xlu0 %1280
        %1282 = vadd.xlane.f32.xlu0 %v1255
        %v1283 = vpop.xlane.xlu0 %1282
        %1284 = vadd.xlane.f32.xlu0 %v1256
        %v1285 = vpop.xlane.xlu0 %1284
        %1286 = vadd.xlane.f32.xlu0 %v1257
        %v1287 = vpop.xlane.xlu0 %1286
        %1288 = vadd.xlane.f32.xlu0 %v1258
        %v1289 = vpop.xlane.xlu0 %1288
        %1290 = vadd.xlane.f32.xlu0 %v1259
        %v1291 = vpop.xlane.xlu0 %1290
        %v1292 = vmul.f32 %v1261, %v1211
        %v1293 = vmul.f32 %v1263, %v1211
        %v1294 = vmul.f32 %v1265, %v1211
        %v1295 = vmul.f32 %v1267, %v1211
        %v1296 = vmul.f32 %v1269, %v1211
        %v1297 = vmul.f32 %v1271, %v1211
        %v1298 = vmul.f32 %v1273, %v1211
        %v1299 = vmul.f32 %v1275, %v1211
        %v1300 = vmul.f32 %v1277, %v1211
        %v1301 = vmul.f32 %v1279, %v1211
        %v1302 = vmul.f32 %v1281, %v1211
        %v1303 = vmul.f32 %v1283, %v1211
        %v1304 = vmul.f32 %v1285, %v1211
        %v1305 = vmul.f32 %v1287, %v1211
        %v1306 = vmul.f32 %v1289, %v1211
        %v1307 = vmul.f32 %v1291, %v1211
        %v1308 = vadd.f32 %v1292, 0.1
        %v1309 = vadd.f32 %v1293, 0.1
        %v1310 = vadd.f32 %v1294, 0.1
        %v1311 = vadd.f32 %v1295, 0.1
        %v1312 = vadd.f32 %v1296, 0.1
        %v1313 = vadd.f32 %v1297, 0.1
        %v1314 = vadd.f32 %v1298, 0.1
        %v1315 = vadd.f32 %v1299, 0.1
        %v1316 = vadd.f32 %v1300, 0.1
        %v1317 = vadd.f32 %v1301, 0.1
        %v1318 = vadd.f32 %v1302, 0.1
        %v1319 = vadd.f32 %v1303, 0.1
        %v1320 = vadd.f32 %v1304, 0.1
        %v1321 = vadd.f32 %v1305, 0.1
        %v1322 = vadd.f32 %v1306, 0.1
        %v1323 = vadd.f32 %v1307, 0.1
        %v1324 = vrsqrt.pop %v1308
        %v1325 = vrsqrt.pop %v1309
        %v1326 = vrsqrt.pop %v1310
        %v1327 = vrsqrt.pop %v1311
        %v1328 = vrsqrt.pop %v1312
        %v1329 = vrsqrt.pop %v1313
        %v1330 = vrsqrt.pop %v1314
        %v1331 = vrsqrt.pop %v1315
        %v1332 = vrsqrt.pop %v1316
        %v1333 = vrsqrt.pop %v1317
        %v1334 = vrsqrt.pop %v1318
        %v1335 = vrsqrt.pop %v1319
        %v1336 = vrsqrt.pop %v1320
        %v1337 = vrsqrt.pop %v1321
        %v1338 = vrsqrt.pop %v1322
        %v1339 = vrsqrt.pop %v1323
        %v1340 = vmul.f32 %v1228, %v1324
        %v1341 = vmul.f32 %v1229, %v1325
        %v1342 = vmul.f32 %v1230, %v1326
        %v1343 = vmul.f32 %v1231, %v1327
        %v1344 = vmul.f32 %v1232, %v1328
        %v1345 = vmul.f32 %v1233, %v1329
        %v1346 = vmul.f32 %v1234, %v1330
        %v1347 = vmul.f32 %v1235, %v1331
        %v1348 = vmul.f32 %v1236, %v1332
        %v1349 = vmul.f32 %v1237, %v1333
        %v1350 = vmul.f32 %v1238, %v1334
        %v1351 = vmul.f32 %v1239, %v1335
        %v1352 = vmul.f32 %v1240, %v1336
        %v1353 = vmul.f32 %v1241, %v1337
        %v1354 = vmul.f32 %v1242, %v1338
        %v1355 = vmul.f32 %v1243, %v1339
        %v1356 = vlaneseq
        %v1357 = vshrl.u32 %v1356, 7
        %v1358 = vsub.s32 0, %v1357
        %v1359 = vrot.slane %v1177, %v1358
        %v1360 = vmul.f32 %v1340, %v1359
        %v1361 = vmul.f32 %v1341, %v1359
        %v1362 = vmul.f32 %v1342, %v1359
        %v1363 = vmul.f32 %v1343, %v1359
        %v1364 = vmul.f32 %v1344, %v1359
        %v1365 = vmul.f32 %v1345, %v1359
        %v1366 = vmul.f32 %v1346, %v1359
        %v1367 = vmul.f32 %v1347, %v1359
        %v1368 = vmul.f32 %v1348, %v1359
        %v1369 = vmul.f32 %v1349, %v1359
        %v1370 = vmul.f32 %v1350, %v1359
        %v1371 = vmul.f32 %v1351, %v1359
        %v1372 = vmul.f32 %v1352, %v1359
        %v1373 = vmul.f32 %v1353, %v1359
        %v1374 = vmul.f32 %v1354, %v1359
        %v1375 = vmul.f32 %v1355, %v1359
        %v1376 = vlaneseq
        %v1377 = vshrl.u32 %v1376, 7
        %v1378 = vsub.s32 0, %v1377
        %v1379 = vrot.slane %v1178, %v1378
        %v1380 = vadd.f32 %v1360, %v1379
        %v1381 = vadd.f32 %v1361, %v1379
        %v1382 = vadd.f32 %v1362, %v1379
        %v1383 = vadd.f32 %v1363, %v1379
        %v1384 = vadd.f32 %v1364, %v1379
        %v1385 = vadd.f32 %v1365, %v1379
        %v1386 = vadd.f32 %v1366, %v1379
        %v1387 = vadd.f32 %v1367, %v1379
        %v1388 = vadd.f32 %v1368, %v1379
        %v1389 = vadd.f32 %v1369, %v1379
        %v1390 = vadd.f32 %v1370, %v1379
        %v1391 = vadd.f32 %v1371, %v1379
        %v1392 = vadd.f32 %v1372, %v1379
        %v1393 = vadd.f32 %v1373, %v1379
        %v1394 = vadd.f32 %v1374, %v1379
        %v1395 = vadd.f32 %v1375, %v1379
        %v1396 = vpack.c.bf16 %v1381, %v1380
        %v1397 = vpack.c.bf16 %v1383, %v1382
        %v1398 = vpack.c.bf16 %v1385, %v1384
        %v1399 = vpack.c.bf16 %v1387, %v1386
        %v1400 = vpack.c.bf16 %v1389, %v1388
        %v1401 = vpack.c.bf16 %v1391, %v1390
        %v1402 = vpack.c.bf16 %v1393, %v1392
        %v1403 = vpack.c.bf16 %v1395, %v1394
        %v1404 = vld [vmem:[#allocation6] sm:$0xf]
        %v1405 = vld [vmem:[#allocation6 + $0x4] sm:$0xf]
        %v1406 = vld [vmem:[#allocation6 + $0x8] sm:$0xf]
        %v1407 = vld [vmem:[#allocation6 + $0xc] sm:$0xf]
        %v1408 = vld [vmem:[#allocation6 + $0x10] sm:$0xf]
        %v1409 = vld [vmem:[#allocation6 + $0x14] sm:$0xf]
        %v1410 = vld [vmem:[#allocation6 + $0x18] sm:$0xf]
        %v1411 = vld [vmem:[#allocation6 + $0x1c] sm:$0xf]
        %v1412 = vld [vmem:[#allocation6 + $0x20] sm:$0xf]
        %v1413 = vld [vmem:[#allocation6 + $0x24] sm:$0xf]
        %v1414 = vld [vmem:[#allocation6 + $0x28] sm:$0xf]
        %v1415 = vld [vmem:[#allocation6 + $0x2c] sm:$0xf]
        %v1416 = vld [vmem:[#allocation6 + $0x30] sm:$0xf]
        %v1417 = vld [vmem:[#allocation6 + $0x34] sm:$0xf]
        %v1418 = vld [vmem:[#allocation6 + $0x38] sm:$0xf]
        %v1419 = vld [vmem:[#allocation6 + $0x3c] sm:$0xf]
        %v1420 = vld [vmem:[#allocation7] sm:$0x1]
        %v1421 = vlaneseq
        %v1422 = vshrl.u32 %v1421, 7
        %v1423 = vsub.s32 0, %v1422
        %v1424 = vrot.slane %v1420, %v1423
        %v1441 = vunpack.c.l.b16 %v1404
        %v1442 = vunpack.c.l.b16 %v1405
        %v1443 = vunpack.c.l.b16 %v1406
        %v1444 = vunpack.c.l.b16 %v1407
        %v1445 = vunpack.c.l.b16 %v1408
        %v1446 = vunpack.c.l.b16 %v1409
        %v1447 = vunpack.c.l.b16 %v1410
        %v1448 = vunpack.c.l.b16 %v1411
        %v1449 = vunpack.c.l.b16 %v1412
        %v1450 = vunpack.c.l.b16 %v1413
        %v1451 = vunpack.c.l.b16 %v1414
        %v1452 = vunpack.c.l.b16 %v1415
        %v1453 = vunpack.c.l.b16 %v1416
        %v1454 = vunpack.c.l.b16 %v1417
        %v1455 = vunpack.c.l.b16 %v1418
        %v1456 = vunpack.c.l.b16 %v1419
        %v1457 = vpack.c.b16 %v1442, %v1441
        %v1458 = vpack.c.b16 %v1444, %v1443
        %v1459 = vpack.c.b16 %v1446, %v1445
        %v1460 = vpack.c.b16 %v1448, %v1447
        %v1461 = vpack.c.b16 %v1450, %v1449
        %v1462 = vpack.c.b16 %v1452, %v1451
        %v1463 = vpack.c.b16 %v1454, %v1453
        %v1464 = vpack.c.b16 %v1456, %v1455
        %1473 = vmatprep.subr.bf16.mxu0 0
        %1474 = vmatpush1.bf16.msra.mxu0 %v1457
        %1475 = vmatprep.subr.bf16.mxu0 0
        %1476 = vmatpush1.bf16.msra.mxu0 %v1458
        %1477 = vmatprep.subr.bf16.mxu0 0
        %1478 = vmatpush1.bf16.msra.mxu0 %v1459
        %1479 = vmatprep.subr.bf16.mxu0 0
        %1480 = vmatpush1.bf16.msra.mxu0 %v1460
        %1481 = vmatprep.subr.bf16.mxu0 0
        %1482 = vmatpush1.bf16.msra.mxu0 %v1461
        %1483 = vmatprep.subr.bf16.mxu0 0
        %1484 = vmatpush1.bf16.msra.mxu0 %v1462
        %1485 = vmatprep.subr.bf16.mxu0 0
        %1486 = vmatpush1.bf16.msra.mxu0 %v1463
        %1487 = vmatprep.subr.bf16.mxu0 0
        %1488 = vmatpush1.bf16.msra.mxu0 %v1464
        %1489 = vmatprep.subr.bf16.mxu0 0
        %1490 = vmatpush1.bf16.msra.mxu0 0
        %1491 = vmatprep.subr.bf16.mxu0 0
        %1492 = vmatpush1.bf16.msra.mxu0 0
        %1493 = vmatprep.subr.bf16.mxu0 0
        %1494 = vmatpush1.bf16.msra.mxu0 0
        %1495 = vmatprep.subr.bf16.mxu0 0
        %1496 = vmatpush1.bf16.msra.mxu0 0
        %1497 = vmatprep.subr.bf16.mxu0 0
        %1498 = vmatpush1.bf16.msra.mxu0 0
        %1499 = vmatprep.subr.bf16.mxu0 0
        %1500 = vmatpush1.bf16.msra.mxu0 0
        %1501 = vmatprep.subr.bf16.mxu0 0
        %1502 = vmatpush1.bf16.msra.mxu0 0
        %1503 = vmatprep.subr.bf16.mxu0 0
        %1504 = vmatpush1.bf16.msra.mxu0 0
        %1505 = vmatprep.mubr.bf16.mxu0 0
        %1506 = vmatmul.mubr.bf16.gmra.mrb[0].mxu0 %v1396
        %v1507 = vpop.f32.mrb[0].mxu0
        %v1508 = vadd.f32 %v1424, %v1507
        %v1509 = vpop.f32.mrb[0].mxu0
        %v1510 = vpop.f32.mrb[0].mxu0
        %v1511 = vadd.f32 %v1424, %v1510
        %v1512 = vpop.f32.mrb[0].mxu0
        %1513 = vmatprep.mubr.bf16.mxu0 0
        %1514 = vmatmul.mubr.bf16.gmra.mrb[0].mxu0 %v1397
        %v1515 = vpop.f32.mrb[0].mxu0
        %v1516 = vadd.f32 %v1424, %v1515
        %v1517 = vpop.f32.mrb[0].mxu0
        %v1518 = vpop.f32.mrb[0].mxu0
        %v1519 = vadd.f32 %v1424, %v1518
        %v1520 = vpop.f32.mrb[0].mxu0
        %1521 = vmatprep.mubr.bf16.mxu0 0
        %1522 = vmatmul.mubr.bf16.gmra.mrb[0].mxu0 %v1398
        %v1523 = vpop.f32.mrb[0].mxu0
        %v1524 = vadd.f32 %v1424, %v1523
        %v1525 = vpop.f32.mrb[0].mxu0
        %v1526 = vpop.f32.mrb[0].mxu0
        %v1527 = vadd.f32 %v1424, %v1526
        %v1528 = vpop.f32.mrb[0].mxu0
        %1529 = vmatprep.mubr.bf16.mxu0 0
        %1530 = vmatmul.mubr.bf16.gmra.mrb[0].mxu0 %v1399
        %v1531 = vpop.f32.mrb[0].mxu0
        %v1532 = vadd.f32 %v1424, %v1531
        %v1533 = vpop.f32.mrb[0].mxu0
        %v1534 = vpop.f32.mrb[0].mxu0
        %v1535 = vadd.f32 %v1424, %v1534
        %v1536 = vpop.f32.mrb[0].mxu0
        %1537 = vmatprep.mubr.bf16.mxu0 0
        %1538 = vmatmul.mubr.bf16.gmra.mrb[0].mxu0 %v1400
        %v1539 = vpop.f32.mrb[0].mxu0
        %v1540 = vadd.f32 %v1424, %v1539
        %v1541 = vpop.f32.mrb[0].mxu0
        %v1542 = vpop.f32.mrb[0].mxu0
        %v1543 = vadd.f32 %v1424, %v1542
        %v1544 = vpop.f32.mrb[0].mxu0
        %1545 = vmatprep.mubr.bf16.mxu0 0
        %1546 = vmatmul.mubr.bf16.gmra.mrb[0].mxu0 %v1401
        %v1547 = vpop.f32.mrb[0].mxu0
        %v1548 = vadd.f32 %v1424, %v1547
        %v1549 = vpop.f32.mrb[0].mxu0
        %v1550 = vpop.f32.mrb[0].mxu0
        %v1551 = vadd.f32 %v1424, %v1550
        %v1552 = vpop.f32.mrb[0].mxu0
        %1553 = vmatprep.mubr.bf16.mxu0 0
        %1554 = vmatmul.mubr.bf16.gmra.mrb[0].mxu0 %v1402
        %v1555 = vpop.f32.mrb[0].mxu0
        %v1556 = vadd.f32 %v1424, %v1555
        %v1557 = vpop.f32.mrb[0].mxu0
        %v1558 = vpop.f32.mrb[0].mxu0
        %v1559 = vadd.f32 %v1424, %v1558
        %v1560 = vpop.f32.mrb[0].mxu0
        %1561 = vmatprep.mubr.bf16.mxu0 0
        %1562 = vmatmul.mubr.bf16.gmra.mrb[0].mxu0 %v1403
        %v1563 = vpop.f32.mrb[0].mxu0
        %v1564 = vadd.f32 %v1424, %v1563
        %v1565 = vpop.f32.mrb[0].mxu0
        %v1566 = vpop.f32.mrb[0].mxu0
        %v1567 = vadd.f32 %v1424, %v1566
        %v1568 = vpop.f32.mrb[0].mxu0
        %1569 = vdwg.mxu0
        %v1570 = vadd.f32 %v1508, %v1380
        %v1571 = vadd.f32 %v1511, %v1381
        %v1572 = vadd.f32 %v1516, %v1382
        %v1573 = vadd.f32 %v1519, %v1383
        %v1574 = vadd.f32 %v1524, %v1384
        %v1575 = vadd.f32 %v1527, %v1385
        %v1576 = vadd.f32 %v1532, %v1386
        %v1577 = vadd.f32 %v1535, %v1387
        %v1578 = vadd.f32 %v1540, %v1388
        %v1579 = vadd.f32 %v1543, %v1389
        %v1580 = vadd.f32 %v1548, %v1390
        %v1581 = vadd.f32 %v1551, %v1391
        %v1582 = vadd.f32 %v1556, %v1392
        %v1583 = vadd.f32 %v1559, %v1393
        %v1584 = vadd.f32 %v1564, %v1394
        %v1585 = vadd.f32 %v1567, %v1395
        %v1586 = vxor.u32 %v1570, 2147483648
        %v1587 = vxor.u32 %v1571, 2147483648
        %v1588 = vxor.u32 %v1572, 2147483648
        %v1589 = vxor.u32 %v1573, 2147483648
        %v1590 = vxor.u32 %v1574, 2147483648
        %v1591 = vxor.u32 %v1575, 2147483648
        %v1592 = vxor.u32 %v1576, 2147483648
        %v1593 = vxor.u32 %v1577, 2147483648
        %v1594 = vxor.u32 %v1578, 2147483648
        %v1595 = vxor.u32 %v1579, 2147483648
        %v1596 = vxor.u32 %v1580, 2147483648
        %v1597 = vxor.u32 %v1581, 2147483648
        %v1598 = vxor.u32 %v1582, 2147483648
        %v1599 = vxor.u32 %v1583, 2147483648
        %v1600 = vxor.u32 %v1584, 2147483648
        %v1601 = vxor.u32 %v1585, 2147483648
        %v1602 = vmul.f32 %v1586, 1.442695
        %v1603 = vpow.pop %v1602
        %v1604 = vmul.f32 %v1587, 1.442695
        %v1605 = vpow.pop %v1604
        %v1606 = vmul.f32 %v1588, 1.442695
        %v1607 = vpow.pop %v1606
        %v1608 = vmul.f32 %v1589, 1.442695
        %v1609 = vpow.pop %v1608
        %v1610 = vmul.f32 %v1590, 1.442695
        %v1611 = vpow.pop %v1610
        %v1612 = vmul.f32 %v1591, 1.442695
        %v1613 = vpow.pop %v1612
        %v1614 = vmul.f32 %v1592, 1.442695
        %v1615 = vpow.pop %v1614
        %v1616 = vmul.f32 %v1593, 1.442695
        %v1617 = vpow.pop %v1616
        %v1618 = vmul.f32 %v1594, 1.442695
        %v1619 = vpow.pop %v1618
        %v1620 = vmul.f32 %v1595, 1.442695
        %v1621 = vpow.pop %v1620
        %v1622 = vmul.f32 %v1596, 1.442695
        %v1623 = vpow.pop %v1622
        %v1624 = vmul.f32 %v1597, 1.442695
        %v1625 = vpow.pop %v1624
        %v1626 = vmul.f32 %v1598, 1.442695
        %v1627 = vpow.pop %v1626
        %v1628 = vmul.f32 %v1599, 1.442695
        %v1629 = vpow.pop %v1628
        %v1630 = vmul.f32 %v1600, 1.442695
        %v1631 = vpow.pop %v1630
        %v1632 = vmul.f32 %v1601, 1.442695
        %v1633 = vpow.pop %v1632
        %v1634 = vadd.f32 %v1603, 1.0
        %v1635 = vadd.f32 %v1605, 1.0
        %v1636 = vadd.f32 %v1607, 1.0
        %v1637 = vadd.f32 %v1609, 1.0
        %v1638 = vadd.f32 %v1611, 1.0
        %v1639 = vadd.f32 %v1613, 1.0
        %v1640 = vadd.f32 %v1615, 1.0
        %v1641 = vadd.f32 %v1617, 1.0
        %v1642 = vadd.f32 %v1619, 1.0
        %v1643 = vadd.f32 %v1621, 1.0
        %v1644 = vadd.f32 %v1623, 1.0
        %v1645 = vadd.f32 %v1625, 1.0
        %v1646 = vadd.f32 %v1627, 1.0
        %v1647 = vadd.f32 %v1629, 1.0
        %v1648 = vadd.f32 %v1631, 1.0
        %v1649 = vadd.f32 %v1633, 1.0
        %v1650 = vrcp.pop %v1634
        %v1651 = vmul.f32 1.0, %v1650
        %v1652 = vrcp.pop %v1635
        %v1653 = vmul.f32 1.0, %v1652
        %v1654 = vrcp.pop %v1636
        %v1655 = vmul.f32 1.0, %v1654
        %v1656 = vrcp.pop %v1637
        %v1657 = vmul.f32 1.0, %v1656
        %v1658 = vrcp.pop %v1638
        %v1659 = vmul.f32 1.0, %v1658
        %v1660 = vrcp.pop %v1639
        %v1661 = vmul.f32 1.0, %v1660
        %v1662 = vrcp.pop %v1640
        %v1663 = vmul.f32 1.0, %v1662
        %v1664 = vrcp.pop %v1641
        %v1665 = vmul.f32 1.0, %v1664
        %v1666 = vrcp.pop %v1642
        %v1667 = vmul.f32 1.0, %v1666
        %v1668 = vrcp.pop %v1643
        %v1669 = vmul.f32 1.0, %v1668
        %v1670 = vrcp.pop %v1644
        %v1671 = vmul.f32 1.0, %v1670
        %v1672 = vrcp.pop %v1645
        %v1673 = vmul.f32 1.0, %v1672
        %v1674 = vrcp.pop %v1646
        %v1675 = vmul.f32 1.0, %v1674
        %v1676 = vrcp.pop %v1647
        %v1677 = vmul.f32 1.0, %v1676
        %v1678 = vrcp.pop %v1648
        %v1679 = vmul.f32 1.0, %v1678
        %v1680 = vrcp.pop %v1649
        %v1681 = vmul.f32 1.0, %v1680
        %v1682 = vmul.f32 %v1570, %v1651
        %v1683 = vmul.f32 %v1571, %v1653
        %v1684 = vmul.f32 %v1572, %v1655
        %v1685 = vmul.f32 %v1573, %v1657
        %v1686 = vmul.f32 %v1574, %v1659
        %v1687 = vmul.f32 %v1575, %v1661
        %v1688 = vmul.f32 %v1576, %v1663
        %v1689 = vmul.f32 %v1577, %v1665
        %v1690 = vmul.f32 %v1578, %v1667
        %v1691 = vmul.f32 %v1579, %v1669
        %v1692 = vmul.f32 %v1580, %v1671
        %v1693 = vmul.f32 %v1581, %v1673
        %v1694 = vmul.f32 %v1582, %v1675
        %v1695 = vmul.f32 %v1583, %v1677
        %v1696 = vmul.f32 %v1584, %v1679
        %v1697 = vmul.f32 %v1585, %v1681
        %v1698 = vld [vmem:[%s5 + $0x1] sm:$0x1]
        %v1699 = vld [vmem:[#allocation9 + $0x1] sm:$0x1]
        %1700 = vadd.xlane.f32.xlu0 %v1682
        %v1701 = vpop.xlane.xlu0 %1700
        %1702 = vadd.xlane.f32.xlu0 %v1683
        %v1703 = vpop.xlane.xlu0 %1702
        %1704 = vadd.xlane.f32.xlu0 %v1684
        %v1705 = vpop.xlane.xlu0 %1704
        %1706 = vadd.xlane.f32.xlu0 %v1685
        %v1707 = vpop.xlane.xlu0 %1706
        %1708 = vadd.xlane.f32.xlu0 %v1686
        %v1709 = vpop.xlane.xlu0 %1708
        %1710 = vadd.xlane.f32.xlu0 %v1687
        %v1711 = vpop.xlane.xlu0 %1710
        %1712 = vadd.xlane.f32.xlu0 %v1688
        %v1713 = vpop.xlane.xlu0 %1712
        %1714 = vadd.xlane.f32.xlu0 %v1689
        %v1715 = vpop.xlane.xlu0 %1714
        %1716 = vadd.xlane.f32.xlu0 %v1690
        %v1717 = vpop.xlane.xlu0 %1716
        %1718 = vadd.xlane.f32.xlu0 %v1691
        %v1719 = vpop.xlane.xlu0 %1718
        %1720 = vadd.xlane.f32.xlu0 %v1692
        %v1721 = vpop.xlane.xlu0 %1720
        %1722 = vadd.xlane.f32.xlu0 %v1693
        %v1723 = vpop.xlane.xlu0 %1722
        %1724 = vadd.xlane.f32.xlu0 %v1694
        %v1725 = vpop.xlane.xlu0 %1724
        %1726 = vadd.xlane.f32.xlu0 %v1695
        %v1727 = vpop.xlane.xlu0 %1726
        %1728 = vadd.xlane.f32.xlu0 %v1696
        %v1729 = vpop.xlane.xlu0 %1728
        %1730 = vadd.xlane.f32.xlu0 %v1697
        %v1731 = vpop.xlane.xlu0 %1730
        %v1732 = vmul.f32 %v1701, %v1211
        %v1733 = vmul.f32 %v1703, %v1211
        %v1734 = vmul.f32 %v1705, %v1211
        %v1735 = vmul.f32 %v1707, %v1211
        %v1736 = vmul.f32 %v1709, %v1211
        %v1737 = vmul.f32 %v1711, %v1211
        %v1738 = vmul.f32 %v1713, %v1211
        %v1739 = vmul.f32 %v1715, %v1211
        %v1740 = vmul.f32 %v1717, %v1211
        %v1741 = vmul.f32 %v1719, %v1211
        %v1742 = vmul.f32 %v1721, %v1211
        %v1743 = vmul.f32 %v1723, %v1211
        %v1744 = vmul.f32 %v1725, %v1211
        %v1745 = vmul.f32 %v1727, %v1211
        %v1746 = vmul.f32 %v1729, %v1211
        %v1747 = vmul.f32 %v1731, %v1211
        %v1748 = vsub.f32 %v1682, %v1732
        %v1749 = vsub.f32 %v1683, %v1733
        %v1750 = vsub.f32 %v1684, %v1734
        %v1751 = vsub.f32 %v1685, %v1735
        %v1752 = vsub.f32 %v1686, %v1736
        %v1753 = vsub.f32 %v1687, %v1737
        %v1754 = vsub.f32 %v1688, %v1738
        %v1755 = vsub.f32 %v1689, %v1739
        %v1756 = vsub.f32 %v1690, %v1740
        %v1757 = vsub.f32 %v1691, %v1741
        %v1758 = vsub.f32 %v1692, %v1742
        %v1759 = vsub.f32 %v1693, %v1743
        %v1760 = vsub.f32 %v1694, %v1744
        %v1761 = vsub.f32 %v1695, %v1745
        %v1762 = vsub.f32 %v1696, %v1746
        %v1763 = vsub.f32 %v1697, %v1747
        %v1764 = vmul.f32 %v1748, %v1748
        %v1765 = vmul.f32 %v1749, %v1749
        %v1766 = vmul.f32 %v1750, %v1750
        %v1767 = vmul.f32 %v1751, %v1751
        %v1768 = vmul.f32 %v1752, %v1752
        %v1769 = vmul.f32 %v1753, %v1753
        %v1770 = vmul.f32 %v1754, %v1754
        %v1771 = vmul.f32 %v1755, %v1755
        %v1772 = vmul.f32 %v1756, %v1756
        %v1773 = vmul.f32 %v1757, %v1757
        %v1774 = vmul.f32 %v1758, %v1758
        %v1775 = vmul.f32 %v1759, %v1759
        %v1776 = vmul.f32 %v1760, %v1760
        %v1777 = vmul.f32 %v1761, %v1761
        %v1778 = vmul.f32 %v1762, %v1762
        %v1779 = vmul.f32 %v1763, %v1763
        %1780 = vadd.xlane.f32.xlu0 %v1764
        %v1781 = vpop.xlane.xlu0 %1780
        %1782 = vadd.xlane.f32.xlu0 %v1765
        %v1783 = vpop.xlane.xlu0 %1782
        %1784 = vadd.xlane.f32.xlu0 %v1766
        %v1785 = vpop.xlane.xlu0 %1784
        %1786 = vadd.xlane.f32.xlu0 %v1767
        %v1787 = vpop.xlane.xlu0 %1786
        %1788 = vadd.xlane.f32.xlu0 %v1768
        %v1789 = vpop.xlane.xlu0 %1788
        %1790 = vadd.xlane.f32.xlu0 %v1769
        %v1791 = vpop.xlane.xlu0 %1790
        %1792 = vadd.xlane.f32.xlu0 %v1770
        %v1793 = vpop.xlane.xlu0 %1792
        %1794 = vadd.xlane.f32.xlu0 %v1771
        %v1795 = vpop.xlane.xlu0 %1794
        %1796 = vadd.xlane.f32.xlu0 %v1772
        %v1797 = vpop.xlane.xlu0 %1796
        %1798 = vadd.xlane.f32.xlu0 %v1773
        %v1799 = vpop.xlane.xlu0 %1798
        %1800 = vadd.xlane.f32.xlu0 %v1774
        %v1801 = vpop.xlane.xlu0 %1800
        %1802 = vadd.xlane.f32.xlu0 %v1775
        %v1803 = vpop.xlane.xlu0 %1802
        %1804 = vadd.xlane.f32.xlu0 %v1776
        %v1805 = vpop.xlane.xlu0 %1804
        %1806 = vadd.xlane.f32.xlu0 %v1777
        %v1807 = vpop.xlane.xlu0 %1806
        %1808 = vadd.xlane.f32.xlu0 %v1778
        %v1809 = vpop.xlane.xlu0 %1808
        %1810 = vadd.xlane.f32.xlu0 %v1779
        %v1811 = vpop.xlane.xlu0 %1810
        %v1812 = vmul.f32 %v1781, %v1211
        %v1813 = vmul.f32 %v1783, %v1211
        %v1814 = vmul.f32 %v1785, %v1211
        %v1815 = vmul.f32 %v1787, %v1211
        %v1816 = vmul.f32 %v1789, %v1211
        %v1817 = vmul.f32 %v1791, %v1211
        %v1818 = vmul.f32 %v1793, %v1211
        %v1819 = vmul.f32 %v1795, %v1211
        %v1820 = vmul.f32 %v1797, %v1211
        %v1821 = vmul.f32 %v1799, %v1211
        %v1822 = vmul.f32 %v1801, %v1211
        %v1823 = vmul.f32 %v1803, %v1211
        %v1824 = vmul.f32 %v1805, %v1211
        %v1825 = vmul.f32 %v1807, %v1211
        %v1826 = vmul.f32 %v1809, %v1211
        %v1827 = vmul.f32 %v1811, %v1211
        %v1828 = vadd.f32 %v1812, 0.1
        %v1829 = vadd.f32 %v1813, 0.1
        %v1830 = vadd.f32 %v1814, 0.1
        %v1831 = vadd.f32 %v1815, 0.1
        %v1832 = vadd.f32 %v1816, 0.1
        %v1833 = vadd.f32 %v1817, 0.1
        %v1834 = vadd.f32 %v1818, 0.1
        %v1835 = vadd.f32 %v1819, 0.1
        %v1836 = vadd.f32 %v1820, 0.1
        %v1837 = vadd.f32 %v1821, 0.1
        %v1838 = vadd.f32 %v1822, 0.1
        %v1839 = vadd.f32 %v1823, 0.1
        %v1840 = vadd.f32 %v1824, 0.1
        %v1841 = vadd.f32 %v1825, 0.1
        %v1842 = vadd.f32 %v1826, 0.1
        %v1843 = vadd.f32 %v1827, 0.1
        %v1844 = vrsqrt.pop %v1828
        %v1845 = vrsqrt.pop %v1829
        %v1846 = vrsqrt.pop %v1830
        %v1847 = vrsqrt.pop %v1831
        %v1848 = vrsqrt.pop %v1832
        %v1849 = vrsqrt.pop %v1833
        %v1850 = vrsqrt.pop %v1834
        %v1851 = vrsqrt.pop %v1835
        %v1852 = vrsqrt.pop %v1836
        %v1853 = vrsqrt.pop %v1837
        %v1854 = vrsqrt.pop %v1838
        %v1855 = vrsqrt.pop %v1839
        %v1856 = vrsqrt.pop %v1840
        %v1857 = vrsqrt.pop %v1841
        %v1858 = vrsqrt.pop %v1842
        %v1859 = vrsqrt.pop %v1843
        %v1860 = vmul.f32 %v1748, %v1844
        %v1861 = vmul.f32 %v1749, %v1845
        %v1862 = vmul.f32 %v1750, %v1846
        %v1863 = vmul.f32 %v1751, %v1847
        %v1864 = vmul.f32 %v1752, %v1848
        %v1865 = vmul.f32 %v1753, %v1849
        %v1866 = vmul.f32 %v1754, %v1850
        %v1867 = vmul.f32 %v1755, %v1851
        %v1868 = vmul.f32 %v1756, %v1852
        %v1869 = vmul.f32 %v1757, %v1853
        %v1870 = vmul.f32 %v1758, %v1854
        %v1871 = vmul.f32 %v1759, %v1855
        %v1872 = vmul.f32 %v1760, %v1856
        %v1873 = vmul.f32 %v1761, %v1857
        %v1874 = vmul.f32 %v1762, %v1858
        %v1875 = vmul.f32 %v1763, %v1859
        %v1876 = vlaneseq
        %v1877 = vshrl.u32 %v1876, 7
        %v1878 = vsub.s32 0, %v1877
        %v1879 = vrot.slane %v1698, %v1878
        %v1880 = vmul.f32 %v1860, %v1879
        %v1881 = vmul.f32 %v1861, %v1879
        %v1882 = vmul.f32 %v1862, %v1879
        %v1883 = vmul.f32 %v1863, %v1879
        %v1884 = vmul.f32 %v1864, %v1879
        %v1885 = vmul.f32 %v1865, %v1879
        %v1886 = vmul.f32 %v1866, %v1879
        %v1887 = vmul.f32 %v1867, %v1879
        %v1888 = vmul.f32 %v1868, %v1879
        %v1889 = vmul.f32 %v1869, %v1879
        %v1890 = vmul.f32 %v1870, %v1879
        %v1891 = vmul.f32 %v1871, %v1879
        %v1892 = vmul.f32 %v1872, %v1879
        %v1893 = vmul.f32 %v1873, %v1879
        %v1894 = vmul.f32 %v1874, %v1879
        %v1895 = vmul.f32 %v1875, %v1879
        %v1896 = vlaneseq
        %v1897 = vshrl.u32 %v1896, 7
        %v1898 = vsub.s32 0, %v1897
        %v1899 = vrot.slane %v1699, %v1898
        %v1900 = vadd.f32 %v1880, %v1899
        %v1901 = vadd.f32 %v1881, %v1899
        %v1902 = vadd.f32 %v1882, %v1899
        %v1903 = vadd.f32 %v1883, %v1899
        %v1904 = vadd.f32 %v1884, %v1899
        %v1905 = vadd.f32 %v1885, %v1899
        %v1906 = vadd.f32 %v1886, %v1899
        %v1907 = vadd.f32 %v1887, %v1899
        %v1908 = vadd.f32 %v1888, %v1899
        %v1909 = vadd.f32 %v1889, %v1899
        %v1910 = vadd.f32 %v1890, %v1899
        %v1911 = vadd.f32 %v1891, %v1899
        %v1912 = vadd.f32 %v1892, %v1899
        %v1913 = vadd.f32 %v1893, %v1899
        %v1914 = vadd.f32 %v1894, %v1899
        %v1915 = vadd.f32 %v1895, %v1899
        %v1916 = vadd.f32 %v1380, %v1900
        %v1917 = vadd.f32 %v1381, %v1901
        %v1918 = vadd.f32 %v1382, %v1902
        %v1919 = vadd.f32 %v1383, %v1903
        %v1920 = vadd.f32 %v1384, %v1904
        %v1921 = vadd.f32 %v1385, %v1905
        %v1922 = vadd.f32 %v1386, %v1906
        %v1923 = vadd.f32 %v1387, %v1907
        %v1924 = vadd.f32 %v1388, %v1908
        %v1925 = vadd.f32 %v1389, %v1909
        %v1926 = vadd.f32 %v1390, %v1910
        %v1927 = vadd.f32 %v1391, %v1911
        %v1928 = vadd.f32 %v1392, %v1912
        %v1929 = vadd.f32 %v1393, %v1913
        %v1930 = vadd.f32 %v1394, %v1914
        %v1931 = vadd.f32 %v1395, %v1915
        %v1932 = vpack.c.bf16 %v1901, %v1900
        %v1933 = vpack.c.bf16 %v1903, %v1902
        %v1934 = vpack.c.bf16 %v1905, %v1904
        %v1935 = vpack.c.bf16 %v1907, %v1906
        %v1936 = vpack.c.bf16 %v1909, %v1908
        %v1937 = vpack.c.bf16 %v1911, %v1910
        %v1938 = vpack.c.bf16 %v1913, %v1912
        %v1939 = vpack.c.bf16 %v1915, %v1914
        %s1940 = scalar_lea.vmem [#allocation6], 64
        %v1941 = vld [vmem:[%s1940] sm:$0xf]
        %v1942 = vld [vmem:[%s1940 + $0x4] sm:$0xf]
        %v1943 = vld [vmem:[%s1940 + $0x8] sm:$0xf]
        %v1944 = vld [vmem:[%s1940 + $0xc] sm:$0xf]
        %v1945 = vld [vmem:[%s1940 + $0x10] sm:$0xf]
        %v1946 = vld [vmem:[%s1940 + $0x14] sm:$0xf]
        %v1947 = vld [vmem:[%s1940 + $0x18] sm:$0xf]
        %v1948 = vld [vmem:[%s1940 + $0x1c] sm:$0xf]
        %v1949 = vld [vmem:[%s1940 + $0x20] sm:$0xf]
        %v1950 = vld [vmem:[%s1940 + $0x24] sm:$0xf]
        %v1951 = vld [vmem:[%s1940 + $0x28] sm:$0xf]
        %v1952 = vld [vmem:[%s1940 + $0x2c] sm:$0xf]
        %v1953 = vld [vmem:[%s1940 + $0x30] sm:$0xf]
        %v1954 = vld [vmem:[%s1940 + $0x34] sm:$0xf]
        %v1955 = vld [vmem:[%s1940 + $0x38] sm:$0xf]
        %v1956 = vld [vmem:[%s1940 + $0x3c] sm:$0xf]
        %v1957 = vld [vmem:[#allocation7 + $0x1] sm:$0x1]
        %v1958 = vlaneseq
        %v1959 = vshrl.u32 %v1958, 7
        %v1960 = vsub.s32 0, %v1959
        %v1961 = vrot.slane %v1957, %v1960
        %v1978 = vunpack.c.l.b16 %v1941
        %v1979 = vunpack.c.l.b16 %v1942
        %v1980 = vunpack.c.l.b16 %v1943
        %v1981 = vunpack.c.l.b16 %v1944
        %v1982 = vunpack.c.l.b16 %v1945
        %v1983 = vunpack.c.l.b16 %v1946
        %v1984 = vunpack.c.l.b16 %v1947
        %v1985 = vunpack.c.l.b16 %v1948
        %v1986 = vunpack.c.l.b16 %v1949
        %v1987 = vunpack.c.l.b16 %v1950
        %v1988 = vunpack.c.l.b16 %v1951
        %v1989 = vunpack.c.l.b16 %v1952
        %v1990 = vunpack.c.l.b16 %v1953
        %v1991 = vunpack.c.l.b16 %v1954
        %v1992 = vunpack.c.l.b16 %v1955
        %v1993 = vunpack.c.l.b16 %v1956
        %v1994 = vpack.c.b16 %v1979, %v1978
        %v1995 = vpack.c.b16 %v1981, %v1980
        %v1996 = vpack.c.b16 %v1983, %v1982
        %v1997 = vpack.c.b16 %v1985, %v1984
        %v1998 = vpack.c.b16 %v1987, %v1986
        %v1999 = vpack.c.b16 %v1989, %v1988
        %v2000 = vpack.c.b16 %v1991, %v1990
        %v2001 = vpack.c.b16 %v1993, %v1992
        %2010 = vmatprep.subr.bf16.mxu0 0
        %2011 = vmatpush1.bf16.msra.mxu0 %v1994
        %2012 = vmatprep.subr.bf16.mxu0 0
        %2013 = vmatpush1.bf16.msra.mxu0 %v1995
        %2014 = vmatprep.subr.bf16.mxu0 0
        %2015 = vmatpush1.bf16.msra.mxu0 %v1996
        %2016 = vmatprep.subr.bf16.mxu0 0
        %2017 = vmatpush1.bf16.msra.mxu0 %v1997
        %2018 = vmatprep.subr.bf16.mxu0 0
        %2019 = vmatpush1.bf16.msra.mxu0 %v1998
        %2020 = vmatprep.subr.bf16.mxu0 0
        %2021 = vmatpush1.bf16.msra.mxu0 %v1999
        %2022 = vmatprep.subr.bf16.mxu0 0
        %2023 = vmatpush1.bf16.msra.mxu0 %v2000
        %2024 = vmatprep.subr.bf16.mxu0 0
        %2025 = vmatpush1.bf16.msra.mxu0 %v2001
        %2026 = vmatprep.subr.bf16.mxu0 0
        %2027 = vmatpush1.bf16.msra.mxu0 0
        %2028 = vmatprep.subr.bf16.mxu0 0
        %2029 = vmatpush1.bf16.msra.mxu0 0
        %2030 = vmatprep.subr.bf16.mxu0 0
        %2031 = vmatpush1.bf16.msra.mxu0 0
        %2032 = vmatprep.subr.bf16.mxu0 0
        %2033 = vmatpush1.bf16.msra.mxu0 0
        %2034 = vmatprep.subr.bf16.mxu0 0
        %2035 = vmatpush1.bf16.msra.mxu0 0
        %2036 = vmatprep.subr.bf16.mxu0 0
        %2037 = vmatpush1.bf16.msra.mxu0 0
        %2038 = vmatprep.subr.bf16.mxu0 0
        %2039 = vmatpush1.bf16.msra.mxu0 0
        %2040 = vmatprep.subr.bf16.mxu0 0
        %2041 = vmatpush1.bf16.msra.mxu0 0
        %2042 = vmatprep.mubr.bf16.mxu0 0
        %2043 = vmatmul.mubr.bf16.gmra.mrb[0].mxu0 %v1932
        %v2044 = vpop.f32.mrb[0].mxu0
        %v2045 = vadd.f32 %v1961, %v2044
        %v2046 = vpop.f32.mrb[0].mxu0
        %v2047 = vpop.f32.mrb[0].mxu0
        %v2048 = vadd.f32 %v1961, %v2047
        %v2049 = vpop.f32.mrb[0].mxu0
        %2050 = vmatprep.mubr.bf16.mxu0 0
        %2051 = vmatmul.mubr.bf16.gmra.mrb[0].mxu0 %v1933
        %v2052 = vpop.f32.mrb[0].mxu0
        %v2053 = vadd.f32 %v1961, %v2052
        %v2054 = vpop.f32.mrb[0].mxu0
        %v2055 = vpop.f32.mrb[0].mxu0
        %v2056 = vadd.f32 %v1961, %v2055
        %v2057 = vpop.f32.mrb[0].mxu0
        %2058 = vmatprep.mubr.bf16.mxu0 0
        %2059 = vmatmul.mubr.bf16.gmra.mrb[0].mxu0 %v1934
        %v2060 = vpop.f32.mrb[0].mxu0
        %v2061 = vadd.f32 %v1961, %v2060
        %v2062 = vpop.f32.mrb[0].mxu0
        %v2063 = vpop.f32.mrb[0].mxu0
        %v2064 = vadd.f32 %v1961, %v2063
        %v2065 = vpop.f32.mrb[0].mxu0
        %2066 = vmatprep.mubr.bf16.mxu0 0
        %2067 = vmatmul.mubr.bf16.gmra.mrb[0].mxu0 %v1935
        %v2068 = vpop.f32.mrb[0].mxu0
        %v2069 = vadd.f32 %v1961, %v2068
        %v2070 = vpop.f32.mrb[0].mxu0
        %v2071 = vpop.f32.mrb[0].mxu0
        %v2072 = vadd.f32 %v1961, %v2071
        %v2073 = vpop.f32.mrb[0].mxu0
        %2074 = vmatprep.mubr.bf16.mxu0 0
        %2075 = vmatmul.mubr.bf16.gmra.mrb[0].mxu0 %v1936
        %v2076 = vpop.f32.mrb[0].mxu0
        %v2077 = vadd.f32 %v1961, %v2076
        %v2078 = vpop.f32.mrb[0].mxu0
        %v2079 = vpop.f32.mrb[0].mxu0
        %v2080 = vadd.f32 %v1961, %v2079
        %v2081 = vpop.f32.mrb[0].mxu0
        %2082 = vmatprep.mubr.bf16.mxu0 0
        %2083 = vmatmul.mubr.bf16.gmra.mrb[0].mxu0 %v1937
        %v2084 = vpop.f32.mrb[0].mxu0
        %v2085 = vadd.f32 %v1961, %v2084
        %v2086 = vpop.f32.mrb[0].mxu0
        %v2087 = vpop.f32.mrb[0].mxu0
        %v2088 = vadd.f32 %v1961, %v2087
        %v2089 = vpop.f32.mrb[0].mxu0
        %2090 = vmatprep.mubr.bf16.mxu0 0
        %2091 = vmatmul.mubr.bf16.gmra.mrb[0].mxu0 %v1938
        %v2092 = vpop.f32.mrb[0].mxu0
        %v2093 = vadd.f32 %v1961, %v2092
        %v2094 = vpop.f32.mrb[0].mxu0
        %v2095 = vpop.f32.mrb[0].mxu0
        %v2096 = vadd.f32 %v1961, %v2095
        %v2097 = vpop.f32.mrb[0].mxu0
        %2098 = vmatprep.mubr.bf16.mxu0 0
        %2099 = vmatmul.mubr.bf16.gmra.mrb[0].mxu0 %v1939
        %v2100 = vpop.f32.mrb[0].mxu0
        %v2101 = vadd.f32 %v1961, %v2100
        %v2102 = vpop.f32.mrb[0].mxu0
        %v2103 = vpop.f32.mrb[0].mxu0
        %v2104 = vadd.f32 %v1961, %v2103
        %v2105 = vpop.f32.mrb[0].mxu0
        %2106 = vdwg.mxu0
        %v2107 = vadd.f32 %v2045, %v1916
        %v2108 = vadd.f32 %v2048, %v1917
        %v2109 = vadd.f32 %v2053, %v1918
        %v2110 = vadd.f32 %v2056, %v1919
        %v2111 = vadd.f32 %v2061, %v1920
        %v2112 = vadd.f32 %v2064, %v1921
        %v2113 = vadd.f32 %v2069, %v1922
        %v2114 = vadd.f32 %v2072, %v1923
        %v2115 = vadd.f32 %v2077, %v1924
        %v2116 = vadd.f32 %v2080, %v1925
        %v2117 = vadd.f32 %v2085, %v1926
        %v2118 = vadd.f32 %v2088, %v1927
        %v2119 = vadd.f32 %v2093, %v1928
        %v2120 = vadd.f32 %v2096, %v1929
        %v2121 = vadd.f32 %v2101, %v1930
        %v2122 = vadd.f32 %v2104, %v1931
        %v2123 = vxor.u32 %v2107, 2147483648
        %v2124 = vxor.u32 %v2108, 2147483648
        %v2125 = vxor.u32 %v2109, 2147483648
        %v2126 = vxor.u32 %v2110, 2147483648
        %v2127 = vxor.u32 %v2111, 2147483648
        %v2128 = vxor.u32 %v2112, 2147483648
        %v2129 = vxor.u32 %v2113, 2147483648
        %v2130 = vxor.u32 %v2114, 2147483648
        %v2131 = vxor.u32 %v2115, 2147483648
        %v2132 = vxor.u32 %v2116, 2147483648
        %v2133 = vxor.u32 %v2117, 2147483648
        %v2134 = vxor.u32 %v2118, 2147483648
        %v2135 = vxor.u32 %v2119, 2147483648
        %v2136 = vxor.u32 %v2120, 2147483648
        %v2137 = vxor.u32 %v2121, 2147483648
        %v2138 = vxor.u32 %v2122, 2147483648
        %v2139 = vmul.f32 %v2123, 1.442695
        %v2140 = vpow.pop %v2139
        %v2141 = vmul.f32 %v2124, 1.442695
        %v2142 = vpow.pop %v2141
        %v2143 = vmul.f32 %v2125, 1.442695
        %v2144 = vpow.pop %v2143
        %v2145 = vmul.f32 %v2126, 1.442695
        %v2146 = vpow.pop %v2145
        %v2147 = vmul.f32 %v2127, 1.442695
        %v2148 = vpow.pop %v2147
        %v2149 = vmul.f32 %v2128, 1.442695
        %v2150 = vpow.pop %v2149
        %v2151 = vmul.f32 %v2129, 1.442695
        %v2152 = vpow.pop %v2151
        %v2153 = vmul.f32 %v2130, 1.442695
        %v2154 = vpow.pop %v2153
        %v2155 = vmul.f32 %v2131, 1.442695
        %v2156 = vpow.pop %v2155
        %v2157 = vmul.f32 %v2132, 1.442695
        %v2158 = vpow.pop %v2157
        %v2159 = vmul.f32 %v2133, 1.442695
        %v2160 = vpow.pop %v2159
        %v2161 = vmul.f32 %v2134, 1.442695
        %v2162 = vpow.pop %v2161
        %v2163 = vmul.f32 %v2135, 1.442695
        %v2164 = vpow.pop %v2163
        %v2165 = vmul.f32 %v2136, 1.442695
        %v2166 = vpow.pop %v2165
        %v2167 = vmul.f32 %v2137, 1.442695
        %v2168 = vpow.pop %v2167
        %v2169 = vmul.f32 %v2138, 1.442695
        %v2170 = vpow.pop %v2169
        %v2171 = vadd.f32 %v2140, 1.0
        %v2172 = vadd.f32 %v2142, 1.0
        %v2173 = vadd.f32 %v2144, 1.0
        %v2174 = vadd.f32 %v2146, 1.0
        %v2175 = vadd.f32 %v2148, 1.0
        %v2176 = vadd.f32 %v2150, 1.0
        %v2177 = vadd.f32 %v2152, 1.0
        %v2178 = vadd.f32 %v2154, 1.0
        %v2179 = vadd.f32 %v2156, 1.0
        %v2180 = vadd.f32 %v2158, 1.0
        %v2181 = vadd.f32 %v2160, 1.0
        %v2182 = vadd.f32 %v2162, 1.0
        %v2183 = vadd.f32 %v2164, 1.0
        %v2184 = vadd.f32 %v2166, 1.0
        %v2185 = vadd.f32 %v2168, 1.0
        %v2186 = vadd.f32 %v2170, 1.0
        %v2187 = vrcp.pop %v2171
        %v2188 = vmul.f32 1.0, %v2187
        %v2189 = vrcp.pop %v2172
        %v2190 = vmul.f32 1.0, %v2189
        %v2191 = vrcp.pop %v2173
        %v2192 = vmul.f32 1.0, %v2191
        %v2193 = vrcp.pop %v2174
        %v2194 = vmul.f32 1.0, %v2193
        %v2195 = vrcp.pop %v2175
        %v2196 = vmul.f32 1.0, %v2195
        %v2197 = vrcp.pop %v2176
        %v2198 = vmul.f32 1.0, %v2197
        %v2199 = vrcp.pop %v2177
        %v2200 = vmul.f32 1.0, %v2199
        %v2201 = vrcp.pop %v2178
        %v2202 = vmul.f32 1.0, %v2201
        %v2203 = vrcp.pop %v2179
        %v2204 = vmul.f32 1.0, %v2203
        %v2205 = vrcp.pop %v2180
        %v2206 = vmul.f32 1.0, %v2205
        %v2207 = vrcp.pop %v2181
        %v2208 = vmul.f32 1.0, %v2207
        %v2209 = vrcp.pop %v2182
        %v2210 = vmul.f32 1.0, %v2209
        %v2211 = vrcp.pop %v2183
        %v2212 = vmul.f32 1.0, %v2211
        %v2213 = vrcp.pop %v2184
        %v2214 = vmul.f32 1.0, %v2213
        %v2215 = vrcp.pop %v2185
        %v2216 = vmul.f32 1.0, %v2215
        %v2217 = vrcp.pop %v2186
        %v2218 = vmul.f32 1.0, %v2217
        %v2219 = vmul.f32 %v2107, %v2188
        %v2220 = vmul.f32 %v2108, %v2190
        %v2221 = vmul.f32 %v2109, %v2192
        %v2222 = vmul.f32 %v2110, %v2194
        %v2223 = vmul.f32 %v2111, %v2196
        %v2224 = vmul.f32 %v2112, %v2198
        %v2225 = vmul.f32 %v2113, %v2200
        %v2226 = vmul.f32 %v2114, %v2202
        %v2227 = vmul.f32 %v2115, %v2204
        %v2228 = vmul.f32 %v2116, %v2206
        %v2229 = vmul.f32 %v2117, %v2208
        %v2230 = vmul.f32 %v2118, %v2210
        %v2231 = vmul.f32 %v2119, %v2212
        %v2232 = vmul.f32 %v2120, %v2214
        %v2233 = vmul.f32 %v2121, %v2216
        %v2234 = vmul.f32 %v2122, %v2218
        %v2235 = vld [vmem:[%s5 + $0x2] sm:$0x1]
        %v2236 = vld [vmem:[#allocation9 + $0x2] sm:$0x1]
        %2237 = vadd.xlane.f32.xlu0 %v2219
        %v2238 = vpop.xlane.xlu0 %2237
        %2239 = vadd.xlane.f32.xlu0 %v2220
        %v2240 = vpop.xlane.xlu0 %2239
        %2241 = vadd.xlane.f32.xlu0 %v2221
        %v2242 = vpop.xlane.xlu0 %2241
        %2243 = vadd.xlane.f32.xlu0 %v2222
        %v2244 = vpop.xlane.xlu0 %2243
        %2245 = vadd.xlane.f32.xlu0 %v2223
        %v2246 = vpop.xlane.xlu0 %2245
        %2247 = vadd.xlane.f32.xlu0 %v2224
        %v2248 = vpop.xlane.xlu0 %2247
        %2249 = vadd.xlane.f32.xlu0 %v2225
        %v2250 = vpop.xlane.xlu0 %2249
        %2251 = vadd.xlane.f32.xlu0 %v2226
        %v2252 = vpop.xlane.xlu0 %2251
        %2253 = vadd.xlane.f32.xlu0 %v2227
        %v2254 = vpop.xlane.xlu0 %2253
        %2255 = vadd.xlane.f32.xlu0 %v2228
        %v2256 = vpop.xlane.xlu0 %2255
        %2257 = vadd.xlane.f32.xlu0 %v2229
        %v2258 = vpop.xlane.xlu0 %2257
        %2259 = vadd.xlane.f32.xlu0 %v2230
        %v2260 = vpop.xlane.xlu0 %2259
        %2261 = vadd.xlane.f32.xlu0 %v2231
        %v2262 = vpop.xlane.xlu0 %2261
        %2263 = vadd.xlane.f32.xlu0 %v2232
        %v2264 = vpop.xlane.xlu0 %2263
        %2265 = vadd.xlane.f32.xlu0 %v2233
        %v2266 = vpop.xlane.xlu0 %2265
        %2267 = vadd.xlane.f32.xlu0 %v2234
        %v2268 = vpop.xlane.xlu0 %2267
        %v2269 = vmul.f32 %v2238, %v1211
        %v2270 = vmul.f32 %v2240, %v1211
        %v2271 = vmul.f32 %v2242, %v1211
        %v2272 = vmul.f32 %v2244, %v1211
        %v2273 = vmul.f32 %v2246, %v1211
        %v2274 = vmul.f32 %v2248, %v1211
        %v2275 = vmul.f32 %v2250, %v1211
        %v2276 = vmul.f32 %v2252, %v1211
        %v2277 = vmul.f32 %v2254, %v1211
        %v2278 = vmul.f32 %v2256, %v1211
        %v2279 = vmul.f32 %v2258, %v1211
        %v2280 = vmul.f32 %v2260, %v1211
        %v2281 = vmul.f32 %v2262, %v1211
        %v2282 = vmul.f32 %v2264, %v1211
        %v2283 = vmul.f32 %v2266, %v1211
        %v2284 = vmul.f32 %v2268, %v1211
        %v2285 = vsub.f32 %v2219, %v2269
        %v2286 = vsub.f32 %v2220, %v2270
        %v2287 = vsub.f32 %v2221, %v2271
        %v2288 = vsub.f32 %v2222, %v2272
        %v2289 = vsub.f32 %v2223, %v2273
        %v2290 = vsub.f32 %v2224, %v2274
        %v2291 = vsub.f32 %v2225, %v2275
        %v2292 = vsub.f32 %v2226, %v2276
        %v2293 = vsub.f32 %v2227, %v2277
        %v2294 = vsub.f32 %v2228, %v2278
        %v2295 = vsub.f32 %v2229, %v2279
        %v2296 = vsub.f32 %v2230, %v2280
        %v2297 = vsub.f32 %v2231, %v2281
        %v2298 = vsub.f32 %v2232, %v2282
        %v2299 = vsub.f32 %v2233, %v2283
        %v2300 = vsub.f32 %v2234, %v2284
        %v2301 = vmul.f32 %v2285, %v2285
        %v2302 = vmul.f32 %v2286, %v2286
        %v2303 = vmul.f32 %v2287, %v2287
        %v2304 = vmul.f32 %v2288, %v2288
        %v2305 = vmul.f32 %v2289, %v2289
        %v2306 = vmul.f32 %v2290, %v2290
        %v2307 = vmul.f32 %v2291, %v2291
        %v2308 = vmul.f32 %v2292, %v2292
        %v2309 = vmul.f32 %v2293, %v2293
        %v2310 = vmul.f32 %v2294, %v2294
        %v2311 = vmul.f32 %v2295, %v2295
        %v2312 = vmul.f32 %v2296, %v2296
        %v2313 = vmul.f32 %v2297, %v2297
        %v2314 = vmul.f32 %v2298, %v2298
        %v2315 = vmul.f32 %v2299, %v2299
        %v2316 = vmul.f32 %v2300, %v2300
        %2317 = vadd.xlane.f32.xlu0 %v2301
        %v2318 = vpop.xlane.xlu0 %2317
        %2319 = vadd.xlane.f32.xlu0 %v2302
        %v2320 = vpop.xlane.xlu0 %2319
        %2321 = vadd.xlane.f32.xlu0 %v2303
        %v2322 = vpop.xlane.xlu0 %2321
        %2323 = vadd.xlane.f32.xlu0 %v2304
        %v2324 = vpop.xlane.xlu0 %2323
        %2325 = vadd.xlane.f32.xlu0 %v2305
        %v2326 = vpop.xlane.xlu0 %2325
        %2327 = vadd.xlane.f32.xlu0 %v2306
        %v2328 = vpop.xlane.xlu0 %2327
        %2329 = vadd.xlane.f32.xlu0 %v2307
        %v2330 = vpop.xlane.xlu0 %2329
        %2331 = vadd.xlane.f32.xlu0 %v2308
        %v2332 = vpop.xlane.xlu0 %2331
        %2333 = vadd.xlane.f32.xlu0 %v2309
        %v2334 = vpop.xlane.xlu0 %2333
        %2335 = vadd.xlane.f32.xlu0 %v2310
        %v2336 = vpop.xlane.xlu0 %2335
        %2337 = vadd.xlane.f32.xlu0 %v2311
        %v2338 = vpop.xlane.xlu0 %2337
        %2339 = vadd.xlane.f32.xlu0 %v2312
        %v2340 = vpop.xlane.xlu0 %2339
        %2341 = vadd.xlane.f32.xlu0 %v2313
        %v2342 = vpop.xlane.xlu0 %2341
        %2343 = vadd.xlane.f32.xlu0 %v2314
        %v2344 = vpop.xlane.xlu0 %2343
        %2345 = vadd.xlane.f32.xlu0 %v2315
        %v2346 = vpop.xlane.xlu0 %2345
        %2347 = vadd.xlane.f32.xlu0 %v2316
        %v2348 = vpop.xlane.xlu0 %2347
        %v2349 = vmul.f32 %v2318, %v1211
        %v2350 = vmul.f32 %v2320, %v1211
        %v2351 = vmul.f32 %v2322, %v1211
        %v2352 = vmul.f32 %v2324, %v1211
        %v2353 = vmul.f32 %v2326, %v1211
        %v2354 = vmul.f32 %v2328, %v1211
        %v2355 = vmul.f32 %v2330, %v1211
        %v2356 = vmul.f32 %v2332, %v1211
        %v2357 = vmul.f32 %v2334, %v1211
        %v2358 = vmul.f32 %v2336, %v1211
        %v2359 = vmul.f32 %v2338, %v1211
        %v2360 = vmul.f32 %v2340, %v1211
        %v2361 = vmul.f32 %v2342, %v1211
        %v2362 = vmul.f32 %v2344, %v1211
        %v2363 = vmul.f32 %v2346, %v1211
        %v2364 = vmul.f32 %v2348, %v1211
        %v2365 = vadd.f32 %v2349, 0.1
        %v2366 = vadd.f32 %v2350, 0.1
        %v2367 = vadd.f32 %v2351, 0.1
        %v2368 = vadd.f32 %v2352, 0.1
        %v2369 = vadd.f32 %v2353, 0.1
        %v2370 = vadd.f32 %v2354, 0.1
        %v2371 = vadd.f32 %v2355, 0.1
        %v2372 = vadd.f32 %v2356, 0.1
        %v2373 = vadd.f32 %v2357, 0.1
        %v2374 = vadd.f32 %v2358, 0.1
        %v2375 = vadd.f32 %v2359, 0.1
        %v2376 = vadd.f32 %v2360, 0.1
        %v2377 = vadd.f32 %v2361, 0.1
        %v2378 = vadd.f32 %v2362, 0.1
        %v2379 = vadd.f32 %v2363, 0.1
        %v2380 = vadd.f32 %v2364, 0.1
        %v2381 = vrsqrt.pop %v2365
        %v2382 = vrsqrt.pop %v2366
        %v2383 = vrsqrt.pop %v2367
        %v2384 = vrsqrt.pop %v2368
        %v2385 = vrsqrt.pop %v2369
        %v2386 = vrsqrt.pop %v2370
        %v2387 = vrsqrt.pop %v2371
        %v2388 = vrsqrt.pop %v2372
        %v2389 = vrsqrt.pop %v2373
        %v2390 = vrsqrt.pop %v2374
        %v2391 = vrsqrt.pop %v2375
        %v2392 = vrsqrt.pop %v2376
        %v2393 = vrsqrt.pop %v2377
        %v2394 = vrsqrt.pop %v2378
        %v2395 = vrsqrt.pop %v2379
        %v2396 = vrsqrt.pop %v2380
        %v2397 = vmul.f32 %v2285, %v2381
        %v2398 = vmul.f32 %v2286, %v2382
        %v2399 = vmul.f32 %v2287, %v2383
        %v2400 = vmul.f32 %v2288, %v2384
        %v2401 = vmul.f32 %v2289, %v2385
        %v2402 = vmul.f32 %v2290, %v2386
        %v2403 = vmul.f32 %v2291, %v2387
        %v2404 = vmul.f32 %v2292, %v2388
        %v2405 = vmul.f32 %v2293, %v2389
        %v2406 = vmul.f32 %v2294, %v2390
        %v2407 = vmul.f32 %v2295, %v2391
        %v2408 = vmul.f32 %v2296, %v2392
        %v2409 = vmul.f32 %v2297, %v2393
        %v2410 = vmul.f32 %v2298, %v2394
        %v2411 = vmul.f32 %v2299, %v2395
        %v2412 = vmul.f32 %v2300, %v2396
        %v2413 = vlaneseq
        %v2414 = vshrl.u32 %v2413, 7
        %v2415 = vsub.s32 0, %v2414
        %v2416 = vrot.slane %v2235, %v2415
        %v2417 = vmul.f32 %v2397, %v2416
        %v2418 = vmul.f32 %v2398, %v2416
        %v2419 = vmul.f32 %v2399, %v2416
        %v2420 = vmul.f32 %v2400, %v2416
        %v2421 = vmul.f32 %v2401, %v2416
        %v2422 = vmul.f32 %v2402, %v2416
        %v2423 = vmul.f32 %v2403, %v2416
        %v2424 = vmul.f32 %v2404, %v2416
        %v2425 = vmul.f32 %v2405, %v2416
        %v2426 = vmul.f32 %v2406, %v2416
        %v2427 = vmul.f32 %v2407, %v2416
        %v2428 = vmul.f32 %v2408, %v2416
        %v2429 = vmul.f32 %v2409, %v2416
        %v2430 = vmul.f32 %v2410, %v2416
        %v2431 = vmul.f32 %v2411, %v2416
        %v2432 = vmul.f32 %v2412, %v2416
        %v2433 = vlaneseq
        %v2434 = vshrl.u32 %v2433, 7
        %v2435 = vsub.s32 0, %v2434
        %v2436 = vrot.slane %v2236, %v2435
        %v2437 = vadd.f32 %v2417, %v2436
        %v2438 = vadd.f32 %v2418, %v2436
        %v2439 = vadd.f32 %v2419, %v2436
        %v2440 = vadd.f32 %v2420, %v2436
        %v2441 = vadd.f32 %v2421, %v2436
        %v2442 = vadd.f32 %v2422, %v2436
        %v2443 = vadd.f32 %v2423, %v2436
        %v2444 = vadd.f32 %v2424, %v2436
        %v2445 = vadd.f32 %v2425, %v2436
        %v2446 = vadd.f32 %v2426, %v2436
        %v2447 = vadd.f32 %v2427, %v2436
        %v2448 = vadd.f32 %v2428, %v2436
        %v2449 = vadd.f32 %v2429, %v2436
        %v2450 = vadd.f32 %v2430, %v2436
        %v2451 = vadd.f32 %v2431, %v2436
        %v2452 = vadd.f32 %v2432, %v2436
        %v2453 = vadd.f32 %v1916, %v2437
        %v2454 = vadd.f32 %v1917, %v2438
        %v2455 = vadd.f32 %v1918, %v2439
        %v2456 = vadd.f32 %v1919, %v2440
        %v2457 = vadd.f32 %v1920, %v2441
        %v2458 = vadd.f32 %v1921, %v2442
        %v2459 = vadd.f32 %v1922, %v2443
        %v2460 = vadd.f32 %v1923, %v2444
        %v2461 = vadd.f32 %v1924, %v2445
        %v2462 = vadd.f32 %v1925, %v2446
        %v2463 = vadd.f32 %v1926, %v2447
        %v2464 = vadd.f32 %v1927, %v2448
        %v2465 = vadd.f32 %v1928, %v2449
        %v2466 = vadd.f32 %v1929, %v2450
        %v2467 = vadd.f32 %v1930, %v2451
        %v2468 = vadd.f32 %v1931, %v2452
        %v2469 = vpack.c.bf16 %v2438, %v2437
        %v2470 = vpack.c.bf16 %v2440, %v2439
        %v2471 = vpack.c.bf16 %v2442, %v2441
        %v2472 = vpack.c.bf16 %v2444, %v2443
        %v2473 = vpack.c.bf16 %v2446, %v2445
        %v2474 = vpack.c.bf16 %v2448, %v2447
        %v2475 = vpack.c.bf16 %v2450, %v2449
        %v2476 = vpack.c.bf16 %v2452, %v2451
        %s2477 = scalar_lea.vmem [#allocation6], 128
        %v2478 = vld [vmem:[%s2477] sm:$0xf]
        %v2479 = vld [vmem:[%s2477 + $0x4] sm:$0xf]
        %v2480 = vld [vmem:[%s2477 + $0x8] sm:$0xf]
        %v2481 = vld [vmem:[%s2477 + $0xc] sm:$0xf]
        %v2482 = vld [vmem:[%s2477 + $0x10] sm:$0xf]
        %v2483 = vld [vmem:[%s2477 + $0x14] sm:$0xf]
        %v2484 = vld [vmem:[%s2477 + $0x18] sm:$0xf]
        %v2485 = vld [vmem:[%s2477 + $0x1c] sm:$0xf]
        %v2486 = vld [vmem:[%s2477 + $0x20] sm:$0xf]
        %v2487 = vld [vmem:[%s2477 + $0x24] sm:$0xf]
        %v2488 = vld [vmem:[%s2477 + $0x28] sm:$0xf]
        %v2489 = vld [vmem:[%s2477 + $0x2c] sm:$0xf]
        %v2490 = vld [vmem:[%s2477 + $0x30] sm:$0xf]
        %v2491 = vld [vmem:[%s2477 + $0x34] sm:$0xf]
        %v2492 = vld [vmem:[%s2477 + $0x38] sm:$0xf]
        %v2493 = vld [vmem:[%s2477 + $0x3c] sm:$0xf]
        %v2494 = vld [vmem:[#allocation7 + $0x2] sm:$0x1]
        %v2495 = vlaneseq
        %v2496 = vshrl.u32 %v2495, 7
        %v2497 = vsub.s32 0, %v2496
        %v2498 = vrot.slane %v2494, %v2497
        %v2515 = vunpack.c.l.b16 %v2478
        %v2516 = vunpack.c.l.b16 %v2479
        %v2517 = vunpack.c.l.b16 %v2480
        %v2518 = vunpack.c.l.b16 %v2481
        %v2519 = vunpack.c.l.b16 %v2482
        %v2520 = vunpack.c.l.b16 %v2483
        %v2521 = vunpack.c.l.b16 %v2484
        %v2522 = vunpack.c.l.b16 %v2485
        %v2523 = vunpack.c.l.b16 %v2486
        %v2524 = vunpack.c.l.b16 %v2487
        %v2525 = vunpack.c.l.b16 %v2488
        %v2526 = vunpack.c.l.b16 %v2489
        %v2527 = vunpack.c.l.b16 %v2490
        %v2528 = vunpack.c.l.b16 %v2491
        %v2529 = vunpack.c.l.b16 %v2492
        %v2530 = vunpack.c.l.b16 %v2493
        %v2531 = vpack.c.b16 %v2516, %v2515
        %v2532 = vpack.c.b16 %v2518, %v2517
        %v2533 = vpack.c.b16 %v2520, %v2519
        %v2534 = vpack.c.b16 %v2522, %v2521
        %v2535 = vpack.c.b16 %v2524, %v2523
        %v2536 = vpack.c.b16 %v2526, %v2525
        %v2537 = vpack.c.b16 %v2528, %v2527
        %v2538 = vpack.c.b16 %v2530, %v2529
        %2547 = vmatprep.subr.bf16.mxu0 0
        %2548 = vmatpush1.bf16.msra.mxu0 %v2531
        %2549 = vmatprep.subr.bf16.mxu0 0
        %2550 = vmatpush1.bf16.msra.mxu0 %v2532
        %2551 = vmatprep.subr.bf16.mxu0 0
        %2552 = vmatpush1.bf16.msra.mxu0 %v2533
        %2553 = vmatprep.subr.bf16.mxu0 0
        %2554 = vmatpush1.bf16.msra.mxu0 %v2534
        %2555 = vmatprep.subr.bf16.mxu0 0
        %2556 = vmatpush1.bf16.msra.mxu0 %v2535
        %2557 = vmatprep.subr.bf16.mxu0 0
        %2558 = vmatpush1.bf16.msra.mxu0 %v2536
        %2559 = vmatprep.subr.bf16.mxu0 0
        %2560 = vmatpush1.bf16.msra.mxu0 %v2537
        %2561 = vmatprep.subr.bf16.mxu0 0
        %2562 = vmatpush1.bf16.msra.mxu0 %v2538
        %2563 = vmatprep.subr.bf16.mxu0 0
        %2564 = vmatpush1.bf16.msra.mxu0 0
        %2565 = vmatprep.subr.bf16.mxu0 0
        %2566 = vmatpush1.bf16.msra.mxu0 0
        %2567 = vmatprep.subr.bf16.mxu0 0
        %2568 = vmatpush1.bf16.msra.mxu0 0
        %2569 = vmatprep.subr.bf16.mxu0 0
        %2570 = vmatpush1.bf16.msra.mxu0 0
        %2571 = vmatprep.subr.bf16.mxu0 0
        %2572 = vmatpush1.bf16.msra.mxu0 0
        %2573 = vmatprep.subr.bf16.mxu0 0
        %2574 = vmatpush1.bf16.msra.mxu0 0
        %2575 = vmatprep.subr.bf16.mxu0 0
        %2576 = vmatpush1.bf16.msra.mxu0 0
        %2577 = vmatprep.subr.bf16.mxu0 0
        %2578 = vmatpush1.bf16.msra.mxu0 0
        %2579 = vmatprep.mubr.bf16.mxu0 0
        %2580 = vmatmul.mubr.bf16.gmra.mrb[0].mxu0 %v2469
        %v2581 = vpop.f32.mrb[0].mxu0
        %v2582 = vadd.f32 %v2498, %v2581
        %v2583 = vpop.f32.mrb[0].mxu0
        %v2584 = vpop.f32.mrb[0].mxu0
        %v2585 = vadd.f32 %v2498, %v2584
        %v2586 = vpop.f32.mrb[0].mxu0
        %2587 = vmatprep.mubr.bf16.mxu0 0
        %2588 = vmatmul.mubr.bf16.gmra.mrb[0].mxu0 %v2470
        %v2589 = vpop.f32.mrb[0].mxu0
        %v2590 = vadd.f32 %v2498, %v2589
        %v2591 = vpop.f32.mrb[0].mxu0
        %v2592 = vpop.f32.mrb[0].mxu0
        %v2593 = vadd.f32 %v2498, %v2592
        %v2594 = vpop.f32.mrb[0].mxu0
        %2595 = vmatprep.mubr.bf16.mxu0 0
        %2596 = vmatmul.mubr.bf16.gmra.mrb[0].mxu0 %v2471
        %v2597 = vpop.f32.mrb[0].mxu0
        %v2598 = vadd.f32 %v2498, %v2597
        %v2599 = vpop.f32.mrb[0].mxu0
        %v2600 = vpop.f32.mrb[0].mxu0
        %v2601 = vadd.f32 %v2498, %v2600
        %v2602 = vpop.f32.mrb[0].mxu0
        %2603 = vmatprep.mubr.bf16.mxu0 0
        %2604 = vmatmul.mubr.bf16.gmra.mrb[0].mxu0 %v2472
        %v2605 = vpop.f32.mrb[0].mxu0
        %v2606 = vadd.f32 %v2498, %v2605
        %v2607 = vpop.f32.mrb[0].mxu0
        %v2608 = vpop.f32.mrb[0].mxu0
        %v2609 = vadd.f32 %v2498, %v2608
        %v2610 = vpop.f32.mrb[0].mxu0
        %2611 = vmatprep.mubr.bf16.mxu0 0
        %2612 = vmatmul.mubr.bf16.gmra.mrb[0].mxu0 %v2473
        %v2613 = vpop.f32.mrb[0].mxu0
        %v2614 = vadd.f32 %v2498, %v2613
        %v2615 = vpop.f32.mrb[0].mxu0
        %v2616 = vpop.f32.mrb[0].mxu0
        %v2617 = vadd.f32 %v2498, %v2616
        %v2618 = vpop.f32.mrb[0].mxu0
        %2619 = vmatprep.mubr.bf16.mxu0 0
        %2620 = vmatmul.mubr.bf16.gmra.mrb[0].mxu0 %v2474
        %v2621 = vpop.f32.mrb[0].mxu0
        %v2622 = vadd.f32 %v2498, %v2621
        %v2623 = vpop.f32.mrb[0].mxu0
        %v2624 = vpop.f32.mrb[0].mxu0
        %v2625 = vadd.f32 %v2498, %v2624
        %v2626 = vpop.f32.mrb[0].mxu0
        %2627 = vmatprep.mubr.bf16.mxu0 0
        %2628 = vmatmul.mubr.bf16.gmra.mrb[0].mxu0 %v2475
        %v2629 = vpop.f32.mrb[0].mxu0
        %v2630 = vadd.f32 %v2498, %v2629
        %v2631 = vpop.f32.mrb[0].mxu0
        %v2632 = vpop.f32.mrb[0].mxu0
        %v2633 = vadd.f32 %v2498, %v2632
        %v2634 = vpop.f32.mrb[0].mxu0
        %2635 = vmatprep.mubr.bf16.mxu0 0
        %2636 = vmatmul.mubr.bf16.gmra.mrb[0].mxu0 %v2476
        %v2637 = vpop.f32.mrb[0].mxu0
        %v2638 = vadd.f32 %v2498, %v2637
        %v2639 = vpop.f32.mrb[0].mxu0
        %v2640 = vpop.f32.mrb[0].mxu0
        %v2641 = vadd.f32 %v2498, %v2640
        %v2642 = vpop.f32.mrb[0].mxu0
        %2643 = vdwg.mxu0
        %v2644 = vadd.f32 %v2582, %v2453
        %v2645 = vadd.f32 %v2585, %v2454
        %v2646 = vadd.f32 %v2590, %v2455
        %v2647 = vadd.f32 %v2593, %v2456
        %v2648 = vadd.f32 %v2598, %v2457
        %v2649 = vadd.f32 %v2601, %v2458
        %v2650 = vadd.f32 %v2606, %v2459
        %v2651 = vadd.f32 %v2609, %v2460
        %v2652 = vadd.f32 %v2614, %v2461
        %v2653 = vadd.f32 %v2617, %v2462
        %v2654 = vadd.f32 %v2622, %v2463
        %v2655 = vadd.f32 %v2625, %v2464
        %v2656 = vadd.f32 %v2630, %v2465
        %v2657 = vadd.f32 %v2633, %v2466
        %v2658 = vadd.f32 %v2638, %v2467
        %v2659 = vadd.f32 %v2641, %v2468
        %v2660 = vxor.u32 %v2644, 2147483648
        %v2661 = vxor.u32 %v2645, 2147483648
        %v2662 = vxor.u32 %v2646, 2147483648
        %v2663 = vxor.u32 %v2647, 2147483648
        %v2664 = vxor.u32 %v2648, 2147483648
        %v2665 = vxor.u32 %v2649, 2147483648
        %v2666 = vxor.u32 %v2650, 2147483648
        %v2667 = vxor.u32 %v2651, 2147483648
        %v2668 = vxor.u32 %v2652, 2147483648
        %v2669 = vxor.u32 %v2653, 2147483648
        %v2670 = vxor.u32 %v2654, 2147483648
        %v2671 = vxor.u32 %v2655, 2147483648
        %v2672 = vxor.u32 %v2656, 2147483648
        %v2673 = vxor.u32 %v2657, 2147483648
        %v2674 = vxor.u32 %v2658, 2147483648
        %v2675 = vxor.u32 %v2659, 2147483648
        %v2676 = vmul.f32 %v2660, 1.442695
        %v2677 = vpow.pop %v2676
        %v2678 = vmul.f32 %v2661, 1.442695
        %v2679 = vpow.pop %v2678
        %v2680 = vmul.f32 %v2662, 1.442695
        %v2681 = vpow.pop %v2680
        %v2682 = vmul.f32 %v2663, 1.442695
        %v2683 = vpow.pop %v2682
        %v2684 = vmul.f32 %v2664, 1.442695
        %v2685 = vpow.pop %v2684
        %v2686 = vmul.f32 %v2665, 1.442695
        %v2687 = vpow.pop %v2686
        %v2688 = vmul.f32 %v2666, 1.442695
        %v2689 = vpow.pop %v2688
        %v2690 = vmul.f32 %v2667, 1.442695
        %v2691 = vpow.pop %v2690
        %v2692 = vmul.f32 %v2668, 1.442695
        %v2693 = vpow.pop %v2692
        %v2694 = vmul.f32 %v2669, 1.442695
        %v2695 = vpow.pop %v2694
        %v2696 = vmul.f32 %v2670, 1.442695
        %v2697 = vpow.pop %v2696
        %v2698 = vmul.f32 %v2671, 1.442695
        %v2699 = vpow.pop %v2698
        %v2700 = vmul.f32 %v2672, 1.442695
        %v2701 = vpow.pop %v2700
        %v2702 = vmul.f32 %v2673, 1.442695
        %v2703 = vpow.pop %v2702
        %v2704 = vmul.f32 %v2674, 1.442695
        %v2705 = vpow.pop %v2704
        %v2706 = vmul.f32 %v2675, 1.442695
        %v2707 = vpow.pop %v2706
        %v2708 = vadd.f32 %v2677, 1.0
        %v2709 = vadd.f32 %v2679, 1.0
        %v2710 = vadd.f32 %v2681, 1.0
        %v2711 = vadd.f32 %v2683, 1.0
        %v2712 = vadd.f32 %v2685, 1.0
        %v2713 = vadd.f32 %v2687, 1.0
        %v2714 = vadd.f32 %v2689, 1.0
        %v2715 = vadd.f32 %v2691, 1.0
        %v2716 = vadd.f32 %v2693, 1.0
        %v2717 = vadd.f32 %v2695, 1.0
        %v2718 = vadd.f32 %v2697, 1.0
        %v2719 = vadd.f32 %v2699, 1.0
        %v2720 = vadd.f32 %v2701, 1.0
        %v2721 = vadd.f32 %v2703, 1.0
        %v2722 = vadd.f32 %v2705, 1.0
        %v2723 = vadd.f32 %v2707, 1.0
        %v2724 = vrcp.pop %v2708
        %v2725 = vmul.f32 1.0, %v2724
        %v2726 = vrcp.pop %v2709
        %v2727 = vmul.f32 1.0, %v2726
        %v2728 = vrcp.pop %v2710
        %v2729 = vmul.f32 1.0, %v2728
        %v2730 = vrcp.pop %v2711
        %v2731 = vmul.f32 1.0, %v2730
        %v2732 = vrcp.pop %v2712
        %v2733 = vmul.f32 1.0, %v2732
        %v2734 = vrcp.pop %v2713
        %v2735 = vmul.f32 1.0, %v2734
        %v2736 = vrcp.pop %v2714
        %v2737 = vmul.f32 1.0, %v2736
        %v2738 = vrcp.pop %v2715
        %v2739 = vmul.f32 1.0, %v2738
        %v2740 = vrcp.pop %v2716
        %v2741 = vmul.f32 1.0, %v2740
        %v2742 = vrcp.pop %v2717
        %v2743 = vmul.f32 1.0, %v2742
        %v2744 = vrcp.pop %v2718
        %v2745 = vmul.f32 1.0, %v2744
        %v2746 = vrcp.pop %v2719
        %v2747 = vmul.f32 1.0, %v2746
        %v2748 = vrcp.pop %v2720
        %v2749 = vmul.f32 1.0, %v2748
        %v2750 = vrcp.pop %v2721
        %v2751 = vmul.f32 1.0, %v2750
        %v2752 = vrcp.pop %v2722
        %v2753 = vmul.f32 1.0, %v2752
        %v2754 = vrcp.pop %v2723
        %v2755 = vmul.f32 1.0, %v2754
        %v2756 = vmul.f32 %v2644, %v2725
        %v2757 = vmul.f32 %v2645, %v2727
        %v2758 = vmul.f32 %v2646, %v2729
        %v2759 = vmul.f32 %v2647, %v2731
        %v2760 = vmul.f32 %v2648, %v2733
        %v2761 = vmul.f32 %v2649, %v2735
        %v2762 = vmul.f32 %v2650, %v2737
        %v2763 = vmul.f32 %v2651, %v2739
        %v2764 = vmul.f32 %v2652, %v2741
        %v2765 = vmul.f32 %v2653, %v2743
        %v2766 = vmul.f32 %v2654, %v2745
        %v2767 = vmul.f32 %v2655, %v2747
        %v2768 = vmul.f32 %v2656, %v2749
        %v2769 = vmul.f32 %v2657, %v2751
        %v2770 = vmul.f32 %v2658, %v2753
        %v2771 = vmul.f32 %v2659, %v2755
        %v2772 = vld [vmem:[%s5 + $0x3] sm:$0x1]
        %v2773 = vld [vmem:[#allocation9 + $0x3] sm:$0x1]
        %2774 = vadd.xlane.f32.xlu0 %v2756
        %v2775 = vpop.xlane.xlu0 %2774
        %2776 = vadd.xlane.f32.xlu0 %v2757
        %v2777 = vpop.xlane.xlu0 %2776
        %2778 = vadd.xlane.f32.xlu0 %v2758
        %v2779 = vpop.xlane.xlu0 %2778
        %2780 = vadd.xlane.f32.xlu0 %v2759
        %v2781 = vpop.xlane.xlu0 %2780
        %2782 = vadd.xlane.f32.xlu0 %v2760
        %v2783 = vpop.xlane.xlu0 %2782
        %2784 = vadd.xlane.f32.xlu0 %v2761
        %v2785 = vpop.xlane.xlu0 %2784
        %2786 = vadd.xlane.f32.xlu0 %v2762
        %v2787 = vpop.xlane.xlu0 %2786
        %2788 = vadd.xlane.f32.xlu0 %v2763
        %v2789 = vpop.xlane.xlu0 %2788
        %2790 = vadd.xlane.f32.xlu0 %v2764
        %v2791 = vpop.xlane.xlu0 %2790
        %2792 = vadd.xlane.f32.xlu0 %v2765
        %v2793 = vpop.xlane.xlu0 %2792
        %2794 = vadd.xlane.f32.xlu0 %v2766
        %v2795 = vpop.xlane.xlu0 %2794
        %2796 = vadd.xlane.f32.xlu0 %v2767
        %v2797 = vpop.xlane.xlu0 %2796
        %2798 = vadd.xlane.f32.xlu0 %v2768
        %v2799 = vpop.xlane.xlu0 %2798
        %2800 = vadd.xlane.f32.xlu0 %v2769
        %v2801 = vpop.xlane.xlu0 %2800
        %2802 = vadd.xlane.f32.xlu0 %v2770
        %v2803 = vpop.xlane.xlu0 %2802
        %2804 = vadd.xlane.f32.xlu0 %v2771
        %v2805 = vpop.xlane.xlu0 %2804
        %v2806 = vmul.f32 %v2775, %v1211
        %v2807 = vmul.f32 %v2777, %v1211
        %v2808 = vmul.f32 %v2779, %v1211
        %v2809 = vmul.f32 %v2781, %v1211
        %v2810 = vmul.f32 %v2783, %v1211
        %v2811 = vmul.f32 %v2785, %v1211
        %v2812 = vmul.f32 %v2787, %v1211
        %v2813 = vmul.f32 %v2789, %v1211
        %v2814 = vmul.f32 %v2791, %v1211
        %v2815 = vmul.f32 %v2793, %v1211
        %v2816 = vmul.f32 %v2795, %v1211
        %v2817 = vmul.f32 %v2797, %v1211
        %v2818 = vmul.f32 %v2799, %v1211
        %v2819 = vmul.f32 %v2801, %v1211
        %v2820 = vmul.f32 %v2803, %v1211
        %v2821 = vmul.f32 %v2805, %v1211
        %v2822 = vsub.f32 %v2756, %v2806
        %v2823 = vsub.f32 %v2757, %v2807
        %v2824 = vsub.f32 %v2758, %v2808
        %v2825 = vsub.f32 %v2759, %v2809
        %v2826 = vsub.f32 %v2760, %v2810
        %v2827 = vsub.f32 %v2761, %v2811
        %v2828 = vsub.f32 %v2762, %v2812
        %v2829 = vsub.f32 %v2763, %v2813
        %v2830 = vsub.f32 %v2764, %v2814
        %v2831 = vsub.f32 %v2765, %v2815
        %v2832 = vsub.f32 %v2766, %v2816
        %v2833 = vsub.f32 %v2767, %v2817
        %v2834 = vsub.f32 %v2768, %v2818
        %v2835 = vsub.f32 %v2769, %v2819
        %v2836 = vsub.f32 %v2770, %v2820
        %v2837 = vsub.f32 %v2771, %v2821
        %v2838 = vmul.f32 %v2822, %v2822
        %v2839 = vmul.f32 %v2823, %v2823
        %v2840 = vmul.f32 %v2824, %v2824
        %v2841 = vmul.f32 %v2825, %v2825
        %v2842 = vmul.f32 %v2826, %v2826
        %v2843 = vmul.f32 %v2827, %v2827
        %v2844 = vmul.f32 %v2828, %v2828
        %v2845 = vmul.f32 %v2829, %v2829
        %v2846 = vmul.f32 %v2830, %v2830
        %v2847 = vmul.f32 %v2831, %v2831
        %v2848 = vmul.f32 %v2832, %v2832
        %v2849 = vmul.f32 %v2833, %v2833
        %v2850 = vmul.f32 %v2834, %v2834
        %v2851 = vmul.f32 %v2835, %v2835
        %v2852 = vmul.f32 %v2836, %v2836
        %v2853 = vmul.f32 %v2837, %v2837
        %2854 = vadd.xlane.f32.xlu0 %v2838
        %v2855 = vpop.xlane.xlu0 %2854
        %2856 = vadd.xlane.f32.xlu0 %v2839
        %v2857 = vpop.xlane.xlu0 %2856
        %2858 = vadd.xlane.f32.xlu0 %v2840
        %v2859 = vpop.xlane.xlu0 %2858
        %2860 = vadd.xlane.f32.xlu0 %v2841
        %v2861 = vpop.xlane.xlu0 %2860
        %2862 = vadd.xlane.f32.xlu0 %v2842
        %v2863 = vpop.xlane.xlu0 %2862
        %2864 = vadd.xlane.f32.xlu0 %v2843
        %v2865 = vpop.xlane.xlu0 %2864
        %2866 = vadd.xlane.f32.xlu0 %v2844
        %v2867 = vpop.xlane.xlu0 %2866
        %2868 = vadd.xlane.f32.xlu0 %v2845
        %v2869 = vpop.xlane.xlu0 %2868
        %2870 = vadd.xlane.f32.xlu0 %v2846
        %v2871 = vpop.xlane.xlu0 %2870
        %2872 = vadd.xlane.f32.xlu0 %v2847
        %v2873 = vpop.xlane.xlu0 %2872
        %2874 = vadd.xlane.f32.xlu0 %v2848
        %v2875 = vpop.xlane.xlu0 %2874
        %2876 = vadd.xlane.f32.xlu0 %v2849
        %v2877 = vpop.xlane.xlu0 %2876
        %2878 = vadd.xlane.f32.xlu0 %v2850
        %v2879 = vpop.xlane.xlu0 %2878
        %2880 = vadd.xlane.f32.xlu0 %v2851
        %v2881 = vpop.xlane.xlu0 %2880
        %2882 = vadd.xlane.f32.xlu0 %v2852
        %v2883 = vpop.xlane.xlu0 %2882
        %2884 = vadd.xlane.f32.xlu0 %v2853
        %v2885 = vpop.xlane.xlu0 %2884
        %v2886 = vmul.f32 %v2855, %v1211
        %v2887 = vmul.f32 %v2857, %v1211
        %v2888 = vmul.f32 %v2859, %v1211
        %v2889 = vmul.f32 %v2861, %v1211
        %v2890 = vmul.f32 %v2863, %v1211
        %v2891 = vmul.f32 %v2865, %v1211
        %v2892 = vmul.f32 %v2867, %v1211
        %v2893 = vmul.f32 %v2869, %v1211
        %v2894 = vmul.f32 %v2871, %v1211
        %v2895 = vmul.f32 %v2873, %v1211
        %v2896 = vmul.f32 %v2875, %v1211
        %v2897 = vmul.f32 %v2877, %v1211
        %v2898 = vmul.f32 %v2879, %v1211
        %v2899 = vmul.f32 %v2881, %v1211
        %v2900 = vmul.f32 %v2883, %v1211
        %v2901 = vmul.f32 %v2885, %v1211
        %v2902 = vadd.f32 %v2886, 0.1
        %v2903 = vadd.f32 %v2887, 0.1
        %v2904 = vadd.f32 %v2888, 0.1
        %v2905 = vadd.f32 %v2889, 0.1
        %v2906 = vadd.f32 %v2890, 0.1
        %v2907 = vadd.f32 %v2891, 0.1
        %v2908 = vadd.f32 %v2892, 0.1
        %v2909 = vadd.f32 %v2893, 0.1
        %v2910 = vadd.f32 %v2894, 0.1
        %v2911 = vadd.f32 %v2895, 0.1
        %v2912 = vadd.f32 %v2896, 0.1
        %v2913 = vadd.f32 %v2897, 0.1
        %v2914 = vadd.f32 %v2898, 0.1
        %v2915 = vadd.f32 %v2899, 0.1
        %v2916 = vadd.f32 %v2900, 0.1
        %v2917 = vadd.f32 %v2901, 0.1
        %v2918 = vrsqrt.pop %v2902
        %v2919 = vrsqrt.pop %v2903
        %v2920 = vrsqrt.pop %v2904
        %v2921 = vrsqrt.pop %v2905
        %v2922 = vrsqrt.pop %v2906
        %v2923 = vrsqrt.pop %v2907
        %v2924 = vrsqrt.pop %v2908
        %v2925 = vrsqrt.pop %v2909
        %v2926 = vrsqrt.pop %v2910
        %v2927 = vrsqrt.pop %v2911
        %v2928 = vrsqrt.pop %v2912
        %v2929 = vrsqrt.pop %v2913
        %v2930 = vrsqrt.pop %v2914
        %v2931 = vrsqrt.pop %v2915
        %v2932 = vrsqrt.pop %v2916
        %v2933 = vrsqrt.pop %v2917
        %v2934 = vmul.f32 %v2822, %v2918
        %v2935 = vmul.f32 %v2823, %v2919
        %v2936 = vmul.f32 %v2824, %v2920
        %v2937 = vmul.f32 %v2825, %v2921
        %v2938 = vmul.f32 %v2826, %v2922
        %v2939 = vmul.f32 %v2827, %v2923
        %v2940 = vmul.f32 %v2828, %v2924
        %v2941 = vmul.f32 %v2829, %v2925
        %v2942 = vmul.f32 %v2830, %v2926
        %v2943 = vmul.f32 %v2831, %v2927
        %v2944 = vmul.f32 %v2832, %v2928
        %v2945 = vmul.f32 %v2833, %v2929
        %v2946 = vmul.f32 %v2834, %v2930
        %v2947 = vmul.f32 %v2835, %v2931
        %v2948 = vmul.f32 %v2836, %v2932
        %v2949 = vmul.f32 %v2837, %v2933
        %v2950 = vlaneseq
        %v2951 = vshrl.u32 %v2950, 7
        %v2952 = vsub.s32 0, %v2951
        %v2953 = vrot.slane %v2772, %v2952
        %v2954 = vmul.f32 %v2934, %v2953
        %v2955 = vmul.f32 %v2935, %v2953
        %v2956 = vmul.f32 %v2936, %v2953
        %v2957 = vmul.f32 %v2937, %v2953
        %v2958 = vmul.f32 %v2938, %v2953
        %v2959 = vmul.f32 %v2939, %v2953
        %v2960 = vmul.f32 %v2940, %v2953
        %v2961 = vmul.f32 %v2941, %v2953
        %v2962 = vmul.f32 %v2942, %v2953
        %v2963 = vmul.f32 %v2943, %v2953
        %v2964 = vmul.f32 %v2944, %v2953
        %v2965 = vmul.f32 %v2945, %v2953
        %v2966 = vmul.f32 %v2946, %v2953
        %v2967 = vmul.f32 %v2947, %v2953
        %v2968 = vmul.f32 %v2948, %v2953
        %v2969 = vmul.f32 %v2949, %v2953
        %v2970 = vlaneseq
        %v2971 = vshrl.u32 %v2970, 7
        %v2972 = vsub.s32 0, %v2971
        %v2973 = vrot.slane %v2773, %v2972
        %v2974 = vadd.f32 %v2954, %v2973
        %v2975 = vadd.f32 %v2955, %v2973
        %v2976 = vadd.f32 %v2956, %v2973
        %v2977 = vadd.f32 %v2957, %v2973
        %v2978 = vadd.f32 %v2958, %v2973
        %v2979 = vadd.f32 %v2959, %v2973
        %v2980 = vadd.f32 %v2960, %v2973
        %v2981 = vadd.f32 %v2961, %v2973
        %v2982 = vadd.f32 %v2962, %v2973
        %v2983 = vadd.f32 %v2963, %v2973
        %v2984 = vadd.f32 %v2964, %v2973
        %v2985 = vadd.f32 %v2965, %v2973
        %v2986 = vadd.f32 %v2966, %v2973
        %v2987 = vadd.f32 %v2967, %v2973
        %v2988 = vadd.f32 %v2968, %v2973
        %v2989 = vadd.f32 %v2969, %v2973
        %v2990 = vadd.f32 %v2453, %v2974
        %v2991 = vadd.f32 %v2454, %v2975
        %v2992 = vadd.f32 %v2455, %v2976
        %v2993 = vadd.f32 %v2456, %v2977
        %v2994 = vadd.f32 %v2457, %v2978
        %v2995 = vadd.f32 %v2458, %v2979
        %v2996 = vadd.f32 %v2459, %v2980
        %v2997 = vadd.f32 %v2460, %v2981
        %v2998 = vadd.f32 %v2461, %v2982
        %v2999 = vadd.f32 %v2462, %v2983
        %v3000 = vadd.f32 %v2463, %v2984
        %v3001 = vadd.f32 %v2464, %v2985
        %v3002 = vadd.f32 %v2465, %v2986
        %v3003 = vadd.f32 %v2466, %v2987
        %v3004 = vadd.f32 %v2467, %v2988
        %v3005 = vadd.f32 %v2468, %v2989
        %v3006 = vpack.c.bf16 %v2975, %v2974
        %v3007 = vpack.c.bf16 %v2977, %v2976
        %v3008 = vpack.c.bf16 %v2979, %v2978
        %v3009 = vpack.c.bf16 %v2981, %v2980
        %v3010 = vpack.c.bf16 %v2983, %v2982
        %v3011 = vpack.c.bf16 %v2985, %v2984
        %v3012 = vpack.c.bf16 %v2987, %v2986
        %v3013 = vpack.c.bf16 %v2989, %v2988
        %s3014 = scalar_lea.vmem [#allocation6], 192
        %v3015 = vld [vmem:[%s3014] sm:$0xf]
        %v3016 = vld [vmem:[%s3014 + $0x4] sm:$0xf]
        %v3017 = vld [vmem:[%s3014 + $0x8] sm:$0xf]
        %v3018 = vld [vmem:[%s3014 + $0xc] sm:$0xf]
        %v3019 = vld [vmem:[%s3014 + $0x10] sm:$0xf]
        %v3020 = vld [vmem:[%s3014 + $0x14] sm:$0xf]
        %v3021 = vld [vmem:[%s3014 + $0x18] sm:$0xf]
        %v3022 = vld [vmem:[%s3014 + $0x1c] sm:$0xf]
        %v3023 = vld [vmem:[%s3014 + $0x20] sm:$0xf]
        %v3024 = vld [vmem:[%s3014 + $0x24] sm:$0xf]
        %v3025 = vld [vmem:[%s3014 + $0x28] sm:$0xf]
        %v3026 = vld [vmem:[%s3014 + $0x2c] sm:$0xf]
        %v3027 = vld [vmem:[%s3014 + $0x30] sm:$0xf]
        %v3028 = vld [vmem:[%s3014 + $0x34] sm:$0xf]
        %v3029 = vld [vmem:[%s3014 + $0x38] sm:$0xf]
        %v3030 = vld [vmem:[%s3014 + $0x3c] sm:$0xf]
        %v3031 = vld [vmem:[#allocation7 + $0x3] sm:$0x1]
        %v3032 = vlaneseq
        %v3033 = vshrl.u32 %v3032, 7
        %v3034 = vsub.s32 0, %v3033
        %v3035 = vrot.slane %v3031, %v3034
        %v3052 = vunpack.c.l.b16 %v3015
        %v3053 = vunpack.c.l.b16 %v3016
        %v3054 = vunpack.c.l.b16 %v3017
        %v3055 = vunpack.c.l.b16 %v3018
        %v3056 = vunpack.c.l.b16 %v3019
        %v3057 = vunpack.c.l.b16 %v3020
        %v3058 = vunpack.c.l.b16 %v3021
        %v3059 = vunpack.c.l.b16 %v3022
        %v3060 = vunpack.c.l.b16 %v3023
        %v3061 = vunpack.c.l.b16 %v3024
        %v3062 = vunpack.c.l.b16 %v3025
        %v3063 = vunpack.c.l.b16 %v3026
        %v3064 = vunpack.c.l.b16 %v3027
        %v3065 = vunpack.c.l.b16 %v3028
        %v3066 = vunpack.c.l.b16 %v3029
        %v3067 = vunpack.c.l.b16 %v3030
        %v3068 = vpack.c.b16 %v3053, %v3052
        %v3069 = vpack.c.b16 %v3055, %v3054
        %v3070 = vpack.c.b16 %v3057, %v3056
        %v3071 = vpack.c.b16 %v3059, %v3058
        %v3072 = vpack.c.b16 %v3061, %v3060
        %v3073 = vpack.c.b16 %v3063, %v3062
        %v3074 = vpack.c.b16 %v3065, %v3064
        %v3075 = vpack.c.b16 %v3067, %v3066
        %3084 = vmatprep.subr.bf16.mxu0 0
        %3085 = vmatpush1.bf16.msra.mxu0 %v3068
        %3086 = vmatprep.subr.bf16.mxu0 0
        %3087 = vmatpush1.bf16.msra.mxu0 %v3069
        %3088 = vmatprep.subr.bf16.mxu0 0
        %3089 = vmatpush1.bf16.msra.mxu0 %v3070
        %3090 = vmatprep.subr.bf16.mxu0 0
        %3091 = vmatpush1.bf16.msra.mxu0 %v3071
        %3092 = vmatprep.subr.bf16.mxu0 0
        %3093 = vmatpush1.bf16.msra.mxu0 %v3072
        %3094 = vmatprep.subr.bf16.mxu0 0
        %3095 = vmatpush1.bf16.msra.mxu0 %v3073
        %3096 = vmatprep.subr.bf16.mxu0 0
        %3097 = vmatpush1.bf16.msra.mxu0 %v3074
        %3098 = vmatprep.subr.bf16.mxu0 0
        %3099 = vmatpush1.bf16.msra.mxu0 %v3075
        %3100 = vmatprep.subr.bf16.mxu0 0
        %3101 = vmatpush1.bf16.msra.mxu0 0
        %3102 = vmatprep.subr.bf16.mxu0 0
        %3103 = vmatpush1.bf16.msra.mxu0 0
        %3104 = vmatprep.subr.bf16.mxu0 0
        %3105 = vmatpush1.bf16.msra.mxu0 0
        %3106 = vmatprep.subr.bf16.mxu0 0
        %3107 = vmatpush1.bf16.msra.mxu0 0
        %3108 = vmatprep.subr.bf16.mxu0 0
        %3109 = vmatpush1.bf16.msra.mxu0 0
        %3110 = vmatprep.subr.bf16.mxu0 0
        %3111 = vmatpush1.bf16.msra.mxu0 0
        %3112 = vmatprep.subr.bf16.mxu0 0
        %3113 = vmatpush1.bf16.msra.mxu0 0
        %3114 = vmatprep.subr.bf16.mxu0 0
        %3115 = vmatpush1.bf16.msra.mxu0 0
        %3116 = vmatprep.mubr.bf16.mxu0 0
        %3117 = vmatmul.mubr.bf16.gmra.mrb[0].mxu0 %v3006
        %v3118 = vpop.f32.mrb[0].mxu0
        %v3119 = vadd.f32 %v3035, %v3118
        %v3120 = vpop.f32.mrb[0].mxu0
        %v3121 = vpop.f32.mrb[0].mxu0
        %v3122 = vadd.f32 %v3035, %v3121
        %v3123 = vpop.f32.mrb[0].mxu0
        %3124 = vmatprep.mubr.bf16.mxu0 0
        %3125 = vmatmul.mubr.bf16.gmra.mrb[0].mxu0 %v3007
        %v3126 = vpop.f32.mrb[0].mxu0
        %v3127 = vadd.f32 %v3035, %v3126
        %v3128 = vpop.f32.mrb[0].mxu0
        %v3129 = vpop.f32.mrb[0].mxu0
        %v3130 = vadd.f32 %v3035, %v3129
        %v3131 = vpop.f32.mrb[0].mxu0
        %3132 = vmatprep.mubr.bf16.mxu0 0
        %3133 = vmatmul.mubr.bf16.gmra.mrb[0].mxu0 %v3008
        %v3134 = vpop.f32.mrb[0].mxu0
        %v3135 = vadd.f32 %v3035, %v3134
        %v3136 = vpop.f32.mrb[0].mxu0
        %v3137 = vpop.f32.mrb[0].mxu0
        %v3138 = vadd.f32 %v3035, %v3137
        %v3139 = vpop.f32.mrb[0].mxu0
        %3140 = vmatprep.mubr.bf16.mxu0 0
        %3141 = vmatmul.mubr.bf16.gmra.mrb[0].mxu0 %v3009
        %v3142 = vpop.f32.mrb[0].mxu0
        %v3143 = vadd.f32 %v3035, %v3142
        %v3144 = vpop.f32.mrb[0].mxu0
        %v3145 = vpop.f32.mrb[0].mxu0
        %v3146 = vadd.f32 %v3035, %v3145
        %v3147 = vpop.f32.mrb[0].mxu0
        %3148 = vmatprep.mubr.bf16.mxu0 0
        %3149 = vmatmul.mubr.bf16.gmra.mrb[0].mxu0 %v3010
        %v3150 = vpop.f32.mrb[0].mxu0
        %v3151 = vadd.f32 %v3035, %v3150
        %v3152 = vpop.f32.mrb[0].mxu0
        %v3153 = vpop.f32.mrb[0].mxu0
        %v3154 = vadd.f32 %v3035, %v3153
        %v3155 = vpop.f32.mrb[0].mxu0
        %3156 = vmatprep.mubr.bf16.mxu0 0
        %3157 = vmatmul.mubr.bf16.gmra.mrb[0].mxu0 %v3011
        %v3158 = vpop.f32.mrb[0].mxu0
        %v3159 = vadd.f32 %v3035, %v3158
        %v3160 = vpop.f32.mrb[0].mxu0
        %v3161 = vpop.f32.mrb[0].mxu0
        %v3162 = vadd.f32 %v3035, %v3161
        %v3163 = vpop.f32.mrb[0].mxu0
        %3164 = vmatprep.mubr.bf16.mxu0 0
        %3165 = vmatmul.mubr.bf16.gmra.mrb[0].mxu0 %v3012
        %v3166 = vpop.f32.mrb[0].mxu0
        %v3167 = vadd.f32 %v3035, %v3166
        %v3168 = vpop.f32.mrb[0].mxu0
        %v3169 = vpop.f32.mrb[0].mxu0
        %v3170 = vadd.f32 %v3035, %v3169
        %v3171 = vpop.f32.mrb[0].mxu0
        %3172 = vmatprep.mubr.bf16.mxu0 0
        %3173 = vmatmul.mubr.bf16.gmra.mrb[0].mxu0 %v3013
        %v3174 = vpop.f32.mrb[0].mxu0
        %v3175 = vadd.f32 %v3035, %v3174
        %v3176 = vpop.f32.mrb[0].mxu0
        %v3177 = vpop.f32.mrb[0].mxu0
        %v3178 = vadd.f32 %v3035, %v3177
        %v3179 = vpop.f32.mrb[0].mxu0
        %3180 = vdwg.mxu0
        %v3181 = vadd.f32 %v3119, %v2990
        %v3182 = vadd.f32 %v3122, %v2991
        %v3183 = vadd.f32 %v3127, %v2992
        %v3184 = vadd.f32 %v3130, %v2993
        %v3185 = vadd.f32 %v3135, %v2994
        %v3186 = vadd.f32 %v3138, %v2995
        %v3187 = vadd.f32 %v3143, %v2996
        %v3188 = vadd.f32 %v3146, %v2997
        %v3189 = vadd.f32 %v3151, %v2998
        %v3190 = vadd.f32 %v3154, %v2999
        %v3191 = vadd.f32 %v3159, %v3000
        %v3192 = vadd.f32 %v3162, %v3001
        %v3193 = vadd.f32 %v3167, %v3002
        %v3194 = vadd.f32 %v3170, %v3003
        %v3195 = vadd.f32 %v3175, %v3004
        %v3196 = vadd.f32 %v3178, %v3005
        %v3197 = vxor.u32 %v3181, 2147483648
        %v3198 = vxor.u32 %v3182, 2147483648
        %v3199 = vxor.u32 %v3183, 2147483648
        %v3200 = vxor.u32 %v3184, 2147483648
        %v3201 = vxor.u32 %v3185, 2147483648
        %v3202 = vxor.u32 %v3186, 2147483648
        %v3203 = vxor.u32 %v3187, 2147483648
        %v3204 = vxor.u32 %v3188, 2147483648
        %v3205 = vxor.u32 %v3189, 2147483648
        %v3206 = vxor.u32 %v3190, 2147483648
        %v3207 = vxor.u32 %v3191, 2147483648
        %v3208 = vxor.u32 %v3192, 2147483648
        %v3209 = vxor.u32 %v3193, 2147483648
        %v3210 = vxor.u32 %v3194, 2147483648
        %v3211 = vxor.u32 %v3195, 2147483648
        %v3212 = vxor.u32 %v3196, 2147483648
        %v3213 = vmul.f32 %v3197, 1.442695
        %v3214 = vpow.pop %v3213
        %v3215 = vmul.f32 %v3198, 1.442695
        %v3216 = vpow.pop %v3215
        %v3217 = vmul.f32 %v3199, 1.442695
        %v3218 = vpow.pop %v3217
        %v3219 = vmul.f32 %v3200, 1.442695
        %v3220 = vpow.pop %v3219
        %v3221 = vmul.f32 %v3201, 1.442695
        %v3222 = vpow.pop %v3221
        %v3223 = vmul.f32 %v3202, 1.442695
        %v3224 = vpow.pop %v3223
        %v3225 = vmul.f32 %v3203, 1.442695
        %v3226 = vpow.pop %v3225
        %v3227 = vmul.f32 %v3204, 1.442695
        %v3228 = vpow.pop %v3227
        %v3229 = vmul.f32 %v3205, 1.442695
        %v3230 = vpow.pop %v3229
        %v3231 = vmul.f32 %v3206, 1.442695
        %v3232 = vpow.pop %v3231
        %v3233 = vmul.f32 %v3207, 1.442695
        %v3234 = vpow.pop %v3233
        %v3235 = vmul.f32 %v3208, 1.442695
        %v3236 = vpow.pop %v3235
        %v3237 = vmul.f32 %v3209, 1.442695
        %v3238 = vpow.pop %v3237
        %v3239 = vmul.f32 %v3210, 1.442695
        %v3240 = vpow.pop %v3239
        %v3241 = vmul.f32 %v3211, 1.442695
        %v3242 = vpow.pop %v3241
        %v3243 = vmul.f32 %v3212, 1.442695
        %v3244 = vpow.pop %v3243
        %v3245 = vadd.f32 %v3214, 1.0
        %v3246 = vadd.f32 %v3216, 1.0
        %v3247 = vadd.f32 %v3218, 1.0
        %v3248 = vadd.f32 %v3220, 1.0
        %v3249 = vadd.f32 %v3222, 1.0
        %v3250 = vadd.f32 %v3224, 1.0
        %v3251 = vadd.f32 %v3226, 1.0
        %v3252 = vadd.f32 %v3228, 1.0
        %v3253 = vadd.f32 %v3230, 1.0
        %v3254 = vadd.f32 %v3232, 1.0
        %v3255 = vadd.f32 %v3234, 1.0
        %v3256 = vadd.f32 %v3236, 1.0
        %v3257 = vadd.f32 %v3238, 1.0
        %v3258 = vadd.f32 %v3240, 1.0
        %v3259 = vadd.f32 %v3242, 1.0
        %v3260 = vadd.f32 %v3244, 1.0
        %v3261 = vrcp.pop %v3245
        %v3262 = vmul.f32 1.0, %v3261
        %v3263 = vrcp.pop %v3246
        %v3264 = vmul.f32 1.0, %v3263
        %v3265 = vrcp.pop %v3247
        %v3266 = vmul.f32 1.0, %v3265
        %v3267 = vrcp.pop %v3248
        %v3268 = vmul.f32 1.0, %v3267
        %v3269 = vrcp.pop %v3249
        %v3270 = vmul.f32 1.0, %v3269
        %v3271 = vrcp.pop %v3250
        %v3272 = vmul.f32 1.0, %v3271
        %v3273 = vrcp.pop %v3251
        %v3274 = vmul.f32 1.0, %v3273
        %v3275 = vrcp.pop %v3252
        %v3276 = vmul.f32 1.0, %v3275
        %v3277 = vrcp.pop %v3253
        %v3278 = vmul.f32 1.0, %v3277
        %v3279 = vrcp.pop %v3254
        %v3280 = vmul.f32 1.0, %v3279
        %v3281 = vrcp.pop %v3255
        %v3282 = vmul.f32 1.0, %v3281
        %v3283 = vrcp.pop %v3256
        %v3284 = vmul.f32 1.0, %v3283
        %v3285 = vrcp.pop %v3257
        %v3286 = vmul.f32 1.0, %v3285
        %v3287 = vrcp.pop %v3258
        %v3288 = vmul.f32 1.0, %v3287
        %v3289 = vrcp.pop %v3259
        %v3290 = vmul.f32 1.0, %v3289
        %v3291 = vrcp.pop %v3260
        %v3292 = vmul.f32 1.0, %v3291
        %v3293 = vmul.f32 %v3181, %v3262
        %v3294 = vmul.f32 %v3182, %v3264
        %v3295 = vmul.f32 %v3183, %v3266
        %v3296 = vmul.f32 %v3184, %v3268
        %v3297 = vmul.f32 %v3185, %v3270
        %v3298 = vmul.f32 %v3186, %v3272
        %v3299 = vmul.f32 %v3187, %v3274
        %v3300 = vmul.f32 %v3188, %v3276
        %v3301 = vmul.f32 %v3189, %v3278
        %v3302 = vmul.f32 %v3190, %v3280
        %v3303 = vmul.f32 %v3191, %v3282
        %v3304 = vmul.f32 %v3192, %v3284
        %v3305 = vmul.f32 %v3193, %v3286
        %v3306 = vmul.f32 %v3194, %v3288
        %v3307 = vmul.f32 %v3195, %v3290
        %v3308 = vmul.f32 %v3196, %v3292
        %v3309 = vld [vmem:[%s5 + $0x4] sm:$0x1]
        %v3310 = vld [vmem:[#allocation9 + $0x4] sm:$0x1]
        %3311 = vadd.xlane.f32.xlu0 %v3293
        %v3312 = vpop.xlane.xlu0 %3311
        %3313 = vadd.xlane.f32.xlu0 %v3294
        %v3314 = vpop.xlane.xlu0 %3313
        %3315 = vadd.xlane.f32.xlu0 %v3295
        %v3316 = vpop.xlane.xlu0 %3315
        %3317 = vadd.xlane.f32.xlu0 %v3296
        %v3318 = vpop.xlane.xlu0 %3317
        %3319 = vadd.xlane.f32.xlu0 %v3297
        %v3320 = vpop.xlane.xlu0 %3319
        %3321 = vadd.xlane.f32.xlu0 %v3298
        %v3322 = vpop.xlane.xlu0 %3321
        %3323 = vadd.xlane.f32.xlu0 %v3299
        %v3324 = vpop.xlane.xlu0 %3323
        %3325 = vadd.xlane.f32.xlu0 %v3300
        %v3326 = vpop.xlane.xlu0 %3325
        %3327 = vadd.xlane.f32.xlu0 %v3301
        %v3328 = vpop.xlane.xlu0 %3327
        %3329 = vadd.xlane.f32.xlu0 %v3302
        %v3330 = vpop.xlane.xlu0 %3329
        %3331 = vadd.xlane.f32.xlu0 %v3303
        %v3332 = vpop.xlane.xlu0 %3331
        %3333 = vadd.xlane.f32.xlu0 %v3304
        %v3334 = vpop.xlane.xlu0 %3333
        %3335 = vadd.xlane.f32.xlu0 %v3305
        %v3336 = vpop.xlane.xlu0 %3335
        %3337 = vadd.xlane.f32.xlu0 %v3306
        %v3338 = vpop.xlane.xlu0 %3337
        %3339 = vadd.xlane.f32.xlu0 %v3307
        %v3340 = vpop.xlane.xlu0 %3339
        %3341 = vadd.xlane.f32.xlu0 %v3308
        %v3342 = vpop.xlane.xlu0 %3341
        %v3343 = vmul.f32 %v3312, %v1211
        %v3344 = vmul.f32 %v3314, %v1211
        %v3345 = vmul.f32 %v3316, %v1211
        %v3346 = vmul.f32 %v3318, %v1211
        %v3347 = vmul.f32 %v3320, %v1211
        %v3348 = vmul.f32 %v3322, %v1211
        %v3349 = vmul.f32 %v3324, %v1211
        %v3350 = vmul.f32 %v3326, %v1211
        %v3351 = vmul.f32 %v3328, %v1211
        %v3352 = vmul.f32 %v3330, %v1211
        %v3353 = vmul.f32 %v3332, %v1211
        %v3354 = vmul.f32 %v3334, %v1211
        %v3355 = vmul.f32 %v3336, %v1211
        %v3356 = vmul.f32 %v3338, %v1211
        %v3357 = vmul.f32 %v3340, %v1211
        %v3358 = vmul.f32 %v3342, %v1211
        %v3359 = vsub.f32 %v3293, %v3343
        %v3360 = vsub.f32 %v3294, %v3344
        %v3361 = vsub.f32 %v3295, %v3345
        %v3362 = vsub.f32 %v3296, %v3346
        %v3363 = vsub.f32 %v3297, %v3347
        %v3364 = vsub.f32 %v3298, %v3348
        %v3365 = vsub.f32 %v3299, %v3349
        %v3366 = vsub.f32 %v3300, %v3350
        %v3367 = vsub.f32 %v3301, %v3351
        %v3368 = vsub.f32 %v3302, %v3352
        %v3369 = vsub.f32 %v3303, %v3353
        %v3370 = vsub.f32 %v3304, %v3354
        %v3371 = vsub.f32 %v3305, %v3355
        %v3372 = vsub.f32 %v3306, %v3356
        %v3373 = vsub.f32 %v3307, %v3357
        %v3374 = vsub.f32 %v3308, %v3358
        %v3375 = vmul.f32 %v3359, %v3359
        %v3376 = vmul.f32 %v3360, %v3360
        %v3377 = vmul.f32 %v3361, %v3361
        %v3378 = vmul.f32 %v3362, %v3362
        %v3379 = vmul.f32 %v3363, %v3363
        %v3380 = vmul.f32 %v3364, %v3364
        %v3381 = vmul.f32 %v3365, %v3365
        %v3382 = vmul.f32 %v3366, %v3366
        %v3383 = vmul.f32 %v3367, %v3367
        %v3384 = vmul.f32 %v3368, %v3368
        %v3385 = vmul.f32 %v3369, %v3369
        %v3386 = vmul.f32 %v3370, %v3370
        %v3387 = vmul.f32 %v3371, %v3371
        %v3388 = vmul.f32 %v3372, %v3372
        %v3389 = vmul.f32 %v3373, %v3373
        %v3390 = vmul.f32 %v3374, %v3374
        %3391 = vadd.xlane.f32.xlu0 %v3375
        %v3392 = vpop.xlane.xlu0 %3391
        %3393 = vadd.xlane.f32.xlu0 %v3376
        %v3394 = vpop.xlane.xlu0 %3393
        %3395 = vadd.xlane.f32.xlu0 %v3377
        %v3396 = vpop.xlane.xlu0 %3395
        %3397 = vadd.xlane.f32.xlu0 %v3378
        %v3398 = vpop.xlane.xlu0 %3397
        %3399 = vadd.xlane.f32.xlu0 %v3379
        %v3400 = vpop.xlane.xlu0 %3399
        %3401 = vadd.xlane.f32.xlu0 %v3380
        %v3402 = vpop.xlane.xlu0 %3401
        %3403 = vadd.xlane.f32.xlu0 %v3381
        %v3404 = vpop.xlane.xlu0 %3403
        %3405 = vadd.xlane.f32.xlu0 %v3382
        %v3406 = vpop.xlane.xlu0 %3405
        %3407 = vadd.xlane.f32.xlu0 %v3383
        %v3408 = vpop.xlane.xlu0 %3407
        %3409 = vadd.xlane.f32.xlu0 %v3384
        %v3410 = vpop.xlane.xlu0 %3409
        %3411 = vadd.xlane.f32.xlu0 %v3385
        %v3412 = vpop.xlane.xlu0 %3411
        %3413 = vadd.xlane.f32.xlu0 %v3386
        %v3414 = vpop.xlane.xlu0 %3413
        %3415 = vadd.xlane.f32.xlu0 %v3387
        %v3416 = vpop.xlane.xlu0 %3415
        %3417 = vadd.xlane.f32.xlu0 %v3388
        %v3418 = vpop.xlane.xlu0 %3417
        %3419 = vadd.xlane.f32.xlu0 %v3389
        %v3420 = vpop.xlane.xlu0 %3419
        %3421 = vadd.xlane.f32.xlu0 %v3390
        %v3422 = vpop.xlane.xlu0 %3421
        %v3423 = vmul.f32 %v3392, %v1211
        %v3424 = vmul.f32 %v3394, %v1211
        %v3425 = vmul.f32 %v3396, %v1211
        %v3426 = vmul.f32 %v3398, %v1211
        %v3427 = vmul.f32 %v3400, %v1211
        %v3428 = vmul.f32 %v3402, %v1211
        %v3429 = vmul.f32 %v3404, %v1211
        %v3430 = vmul.f32 %v3406, %v1211
        %v3431 = vmul.f32 %v3408, %v1211
        %v3432 = vmul.f32 %v3410, %v1211
        %v3433 = vmul.f32 %v3412, %v1211
        %v3434 = vmul.f32 %v3414, %v1211
        %v3435 = vmul.f32 %v3416, %v1211
        %v3436 = vmul.f32 %v3418, %v1211
        %v3437 = vmul.f32 %v3420, %v1211
        %v3438 = vmul.f32 %v3422, %v1211
        %v3439 = vadd.f32 %v3423, 0.1
        %v3440 = vadd.f32 %v3424, 0.1
        %v3441 = vadd.f32 %v3425, 0.1
        %v3442 = vadd.f32 %v3426, 0.1
        %v3443 = vadd.f32 %v3427, 0.1
        %v3444 = vadd.f32 %v3428, 0.1
        %v3445 = vadd.f32 %v3429, 0.1
        %v3446 = vadd.f32 %v3430, 0.1
        %v3447 = vadd.f32 %v3431, 0.1
        %v3448 = vadd.f32 %v3432, 0.1
        %v3449 = vadd.f32 %v3433, 0.1
        %v3450 = vadd.f32 %v3434, 0.1
        %v3451 = vadd.f32 %v3435, 0.1
        %v3452 = vadd.f32 %v3436, 0.1
        %v3453 = vadd.f32 %v3437, 0.1
        %v3454 = vadd.f32 %v3438, 0.1
        %v3455 = vrsqrt.pop %v3439
        %v3456 = vrsqrt.pop %v3440
        %v3457 = vrsqrt.pop %v3441
        %v3458 = vrsqrt.pop %v3442
        %v3459 = vrsqrt.pop %v3443
        %v3460 = vrsqrt.pop %v3444
        %v3461 = vrsqrt.pop %v3445
        %v3462 = vrsqrt.pop %v3446
        %v3463 = vrsqrt.pop %v3447
        %v3464 = vrsqrt.pop %v3448
        %v3465 = vrsqrt.pop %v3449
        %v3466 = vrsqrt.pop %v3450
        %v3467 = vrsqrt.pop %v3451
        %v3468 = vrsqrt.pop %v3452
        %v3469 = vrsqrt.pop %v3453
        %v3470 = vrsqrt.pop %v3454
        %v3471 = vmul.f32 %v3359, %v3455
        %v3472 = vmul.f32 %v3360, %v3456
        %v3473 = vmul.f32 %v3361, %v3457
        %v3474 = vmul.f32 %v3362, %v3458
        %v3475 = vmul.f32 %v3363, %v3459
        %v3476 = vmul.f32 %v3364, %v3460
        %v3477 = vmul.f32 %v3365, %v3461
        %v3478 = vmul.f32 %v3366, %v3462
        %v3479 = vmul.f32 %v3367, %v3463
        %v3480 = vmul.f32 %v3368, %v3464
        %v3481 = vmul.f32 %v3369, %v3465
        %v3482 = vmul.f32 %v3370, %v3466
        %v3483 = vmul.f32 %v3371, %v3467
        %v3484 = vmul.f32 %v3372, %v3468
        %v3485 = vmul.f32 %v3373, %v3469
        %v3486 = vmul.f32 %v3374, %v3470
        %v3487 = vlaneseq
        %v3488 = vshrl.u32 %v3487, 7
        %v3489 = vsub.s32 0, %v3488
        %v3490 = vrot.slane %v3309, %v3489
        %v3491 = vmul.f32 %v3471, %v3490
        %v3492 = vmul.f32 %v3472, %v3490
        %v3493 = vmul.f32 %v3473, %v3490
        %v3494 = vmul.f32 %v3474, %v3490
        %v3495 = vmul.f32 %v3475, %v3490
        %v3496 = vmul.f32 %v3476, %v3490
        %v3497 = vmul.f32 %v3477, %v3490
        %v3498 = vmul.f32 %v3478, %v3490
        %v3499 = vmul.f32 %v3479, %v3490
        %v3500 = vmul.f32 %v3480, %v3490
        %v3501 = vmul.f32 %v3481, %v3490
        %v3502 = vmul.f32 %v3482, %v3490
        %v3503 = vmul.f32 %v3483, %v3490
        %v3504 = vmul.f32 %v3484, %v3490
        %v3505 = vmul.f32 %v3485, %v3490
        %v3506 = vmul.f32 %v3486, %v3490
        %v3507 = vlaneseq
        %v3508 = vshrl.u32 %v3507, 7
        %v3509 = vsub.s32 0, %v3508
        %v3510 = vrot.slane %v3310, %v3509
        %v3511 = vadd.f32 %v3491, %v3510
        %v3512 = vadd.f32 %v3492, %v3510
        %v3513 = vadd.f32 %v3493, %v3510
        %v3514 = vadd.f32 %v3494, %v3510
        %v3515 = vadd.f32 %v3495, %v3510
        %v3516 = vadd.f32 %v3496, %v3510
        %v3517 = vadd.f32 %v3497, %v3510
        %v3518 = vadd.f32 %v3498, %v3510
        %v3519 = vadd.f32 %v3499, %v3510
        %v3520 = vadd.f32 %v3500, %v3510
        %v3521 = vadd.f32 %v3501, %v3510
        %v3522 = vadd.f32 %v3502, %v3510
        %v3523 = vadd.f32 %v3503, %v3510
        %v3524 = vadd.f32 %v3504, %v3510
        %v3525 = vadd.f32 %v3505, %v3510
        %v3526 = vadd.f32 %v3506, %v3510
        %v3527 = vpack.c.bf16 %v3512, %v3511
        %v3528 = vpack.c.bf16 %v3514, %v3513
        %v3529 = vpack.c.bf16 %v3516, %v3515
        %v3530 = vpack.c.bf16 %v3518, %v3517
        %v3531 = vpack.c.bf16 %v3520, %v3519
        %v3532 = vpack.c.bf16 %v3522, %v3521
        %v3533 = vpack.c.bf16 %v3524, %v3523
        %v3534 = vpack.c.bf16 %v3526, %v3525
        %v3535 = vld [vmem:[#allocation10] sm:$0xf]
        %v3536 = vld [vmem:[#allocation10 + $0x4] sm:$0xf]
        %v3537 = vld [vmem:[#allocation10 + $0x8] sm:$0xf]
        %v3538 = vld [vmem:[#allocation10 + $0xc] sm:$0xf]
        %v3539 = vld [vmem:[#allocation10 + $0x10] sm:$0xf]
        %v3540 = vld [vmem:[#allocation10 + $0x14] sm:$0xf]
        %v3541 = vld [vmem:[#allocation10 + $0x18] sm:$0xf]
        %v3542 = vld [vmem:[#allocation10 + $0x1c] sm:$0xf]
        %v3543 = vld [vmem:[#allocation10 + $0x20] sm:$0xf]
        %v3544 = vld [vmem:[#allocation10 + $0x24] sm:$0xf]
        %v3545 = vld [vmem:[#allocation10 + $0x28] sm:$0xf]
        %v3546 = vld [vmem:[#allocation10 + $0x2c] sm:$0xf]
        %v3547 = vld [vmem:[#allocation10 + $0x30] sm:$0xf]
        %v3548 = vld [vmem:[#allocation10 + $0x34] sm:$0xf]
        %v3549 = vld [vmem:[#allocation10 + $0x38] sm:$0xf]
        %v3550 = vld [vmem:[#allocation10 + $0x3c] sm:$0xf]
        %v3551 = vld [vmem:[%s8] sm:$0x1]
        %v3552 = vlaneseq
        %v3553 = vshrl.u32 %v3552, 7
        %v3554 = vsub.s32 0, %v3553
        %v3555 = vrot.slane %v3551, %v3554
        %v3572 = vunpack.c.l.b16 %v3535
        %v3573 = vunpack.c.l.b16 %v3536
        %v3574 = vunpack.c.l.b16 %v3537
        %v3575 = vunpack.c.l.b16 %v3538
        %v3576 = vunpack.c.l.b16 %v3539
        %v3577 = vunpack.c.l.b16 %v3540
        %v3578 = vunpack.c.l.b16 %v3541
        %v3579 = vunpack.c.l.b16 %v3542
        %v3580 = vunpack.c.l.b16 %v3543
        %v3581 = vunpack.c.l.b16 %v3544
        %v3582 = vunpack.c.l.b16 %v3545
        %v3583 = vunpack.c.l.b16 %v3546
        %v3584 = vunpack.c.l.b16 %v3547
        %v3585 = vunpack.c.l.b16 %v3548
        %v3586 = vunpack.c.l.b16 %v3549
        %v3587 = vunpack.c.l.b16 %v3550
        %v3588 = vpack.c.b16 %v3573, %v3572
        %v3589 = vpack.c.b16 %v3575, %v3574
        %v3590 = vpack.c.b16 %v3577, %v3576
        %v3591 = vpack.c.b16 %v3579, %v3578
        %v3592 = vpack.c.b16 %v3581, %v3580
        %v3593 = vpack.c.b16 %v3583, %v3582
        %v3594 = vpack.c.b16 %v3585, %v3584
        %v3595 = vpack.c.b16 %v3587, %v3586
        %3604 = vmatprep.subr.bf16.mxu0 0
        %3605 = vmatpush1.bf16.msra.mxu0 %v3588
        %3606 = vmatprep.subr.bf16.mxu0 0
        %3607 = vmatpush1.bf16.msra.mxu0 %v3589
        %3608 = vmatprep.subr.bf16.mxu0 0
        %3609 = vmatpush1.bf16.msra.mxu0 %v3590
        %3610 = vmatprep.subr.bf16.mxu0 0
        %3611 = vmatpush1.bf16.msra.mxu0 %v3591
        %3612 = vmatprep.subr.bf16.mxu0 0
        %3613 = vmatpush1.bf16.msra.mxu0 %v3592
        %3614 = vmatprep.subr.bf16.mxu0 0
        %3615 = vmatpush1.bf16.msra.mxu0 %v3593
        %3616 = vmatprep.subr.bf16.mxu0 0
        %3617 = vmatpush1.bf16.msra.mxu0 %v3594
        %3618 = vmatprep.subr.bf16.mxu0 0
        %3619 = vmatpush1.bf16.msra.mxu0 %v3595
        %3620 = vmatprep.subr.bf16.mxu0 0
        %3621 = vmatpush1.bf16.msra.mxu0 0
        %3622 = vmatprep.subr.bf16.mxu0 0
        %3623 = vmatpush1.bf16.msra.mxu0 0
        %3624 = vmatprep.subr.bf16.mxu0 0
        %3625 = vmatpush1.bf16.msra.mxu0 0
        %3626 = vmatprep.subr.bf16.mxu0 0
        %3627 = vmatpush1.bf16.msra.mxu0 0
        %3628 = vmatprep.subr.bf16.mxu0 0
        %3629 = vmatpush1.bf16.msra.mxu0 0
        %3630 = vmatprep.subr.bf16.mxu0 0
        %3631 = vmatpush1.bf16.msra.mxu0 0
        %3632 = vmatprep.subr.bf16.mxu0 0
        %3633 = vmatpush1.bf16.msra.mxu0 0
        %3634 = vmatprep.subr.bf16.mxu0 0
        %3635 = vmatpush1.bf16.msra.mxu0 0
        %3636 = vmatprep.mubr.bf16.mxu0 0
        %3637 = vmatmul.mubr.bf16.gmra.mrb[0].mxu0 %v3527
        %v3638 = vpop.f32.mrb[0].mxu0
        %v3639 = vadd.f32 %v3555, %v3638
        %v3640 = vpop.f32.mrb[0].mxu0
        %v3641 = vpop.f32.mrb[0].mxu0
        %v3642 = vadd.f32 %v3555, %v3641
        %v3643 = vpop.f32.mrb[0].mxu0
        %3644 = vmatprep.mubr.bf16.mxu0 0
        %3645 = vmatmul.mubr.bf16.gmra.mrb[0].mxu0 %v3528
        %v3646 = vpop.f32.mrb[0].mxu0
        %v3647 = vadd.f32 %v3555, %v3646
        %v3648 = vpop.f32.mrb[0].mxu0
        %v3649 = vpop.f32.mrb[0].mxu0
        %v3650 = vadd.f32 %v3555, %v3649
        %v3651 = vpop.f32.mrb[0].mxu0
        %3652 = vmatprep.mubr.bf16.mxu0 0
        %3653 = vmatmul.mubr.bf16.gmra.mrb[0].mxu0 %v3529
        %v3654 = vpop.f32.mrb[0].mxu0
        %v3655 = vadd.f32 %v3555, %v3654
        %v3656 = vpop.f32.mrb[0].mxu0
        %v3657 = vpop.f32.mrb[0].mxu0
        %v3658 = vadd.f32 %v3555, %v3657
        %v3659 = vpop.f32.mrb[0].mxu0
        %3660 = vmatprep.mubr.bf16.mxu0 0
        %3661 = vmatmul.mubr.bf16.gmra.mrb[0].mxu0 %v3530
        %v3662 = vpop.f32.mrb[0].mxu0
        %v3663 = vadd.f32 %v3555, %v3662
        %v3664 = vpop.f32.mrb[0].mxu0
        %v3665 = vpop.f32.mrb[0].mxu0
        %v3666 = vadd.f32 %v3555, %v3665
        %v3667 = vpop.f32.mrb[0].mxu0
        %3668 = vmatprep.mubr.bf16.mxu0 0
        %3669 = vmatmul.mubr.bf16.gmra.mrb[0].mxu0 %v3531
        %v3670 = vpop.f32.mrb[0].mxu0
        %v3671 = vadd.f32 %v3555, %v3670
        %v3672 = vpop.f32.mrb[0].mxu0
        %v3673 = vpop.f32.mrb[0].mxu0
        %v3674 = vadd.f32 %v3555, %v3673
        %v3675 = vpop.f32.mrb[0].mxu0
        %3676 = vmatprep.mubr.bf16.mxu0 0
        %3677 = vmatmul.mubr.bf16.gmra.mrb[0].mxu0 %v3532
        %v3678 = vpop.f32.mrb[0].mxu0
        %v3679 = vadd.f32 %v3555, %v3678
        %v3680 = vpop.f32.mrb[0].mxu0
        %v3681 = vpop.f32.mrb[0].mxu0
        %v3682 = vadd.f32 %v3555, %v3681
        %v3683 = vpop.f32.mrb[0].mxu0
        %3684 = vmatprep.mubr.bf16.mxu0 0
        %3685 = vmatmul.mubr.bf16.gmra.mrb[0].mxu0 %v3533
        %v3686 = vpop.f32.mrb[0].mxu0
        %v3687 = vadd.f32 %v3555, %v3686
        %v3688 = vpop.f32.mrb[0].mxu0
        %v3689 = vpop.f32.mrb[0].mxu0
        %v3690 = vadd.f32 %v3555, %v3689
        %v3691 = vpop.f32.mrb[0].mxu0
        %3692 = vmatprep.mubr.bf16.mxu0 0
        %3693 = vmatmul.mubr.bf16.gmra.mrb[0].mxu0 %v3534
        %v3694 = vpop.f32.mrb[0].mxu0
        %v3695 = vadd.f32 %v3555, %v3694
        %v3696 = vpop.f32.mrb[0].mxu0
        %v3697 = vpop.f32.mrb[0].mxu0
        %v3698 = vadd.f32 %v3555, %v3697
        %v3699 = vpop.f32.mrb[0].mxu0
        %3700 = vdwg.mxu0
        %s3701 = scalar_lea.vmem [#allocation4], 128
        %v3702 = vld [vmem:[%s3701] sm:$0xf]
        %v3703 = vld [vmem:[%s3701 + $0x4] sm:$0xf]
        %v3704 = vld [vmem:[%s3701 + $0x8] sm:$0xf]
        %v3705 = vld [vmem:[%s3701 + $0xc] sm:$0xf]
        %v3706 = vld [vmem:[%s3701 + $0x10] sm:$0xf]
        %v3707 = vld [vmem:[%s3701 + $0x14] sm:$0xf]
        %v3708 = vld [vmem:[%s3701 + $0x18] sm:$0xf]
        %v3709 = vld [vmem:[%s3701 + $0x1c] sm:$0xf]
        %v3710 = vld [vmem:[%s3701 + $0x20] sm:$0xf]
        %v3711 = vld [vmem:[%s3701 + $0x24] sm:$0xf]
        %v3712 = vld [vmem:[%s3701 + $0x28] sm:$0xf]
        %v3713 = vld [vmem:[%s3701 + $0x2c] sm:$0xf]
        %v3714 = vld [vmem:[%s3701 + $0x30] sm:$0xf]
        %v3715 = vld [vmem:[%s3701 + $0x34] sm:$0xf]
        %v3716 = vld [vmem:[%s3701 + $0x38] sm:$0xf]
        %v3717 = vld [vmem:[%s3701 + $0x3c] sm:$0xf]
        %v3718 = vld [vmem:[%s3701 + $0x40] sm:$0xf]
        %v3719 = vld [vmem:[%s3701 + $0x44] sm:$0xf]
        %v3720 = vld [vmem:[%s3701 + $0x48] sm:$0xf]
        %v3721 = vld [vmem:[%s3701 + $0x4c] sm:$0xf]
        %v3722 = vld [vmem:[%s3701 + $0x50] sm:$0xf]
        %v3723 = vld [vmem:[%s3701 + $0x54] sm:$0xf]
        %v3724 = vld [vmem:[%s3701 + $0x58] sm:$0xf]
        %v3725 = vld [vmem:[%s3701 + $0x5c] sm:$0xf]
        %v3726 = vld [vmem:[%s3701 + $0x60] sm:$0xf]
        %v3727 = vld [vmem:[%s3701 + $0x64] sm:$0xf]
        %v3728 = vld [vmem:[%s3701 + $0x68] sm:$0xf]
        %v3729 = vld [vmem:[%s3701 + $0x6c] sm:$0xf]
        %v3730 = vld [vmem:[%s3701 + $0x70] sm:$0xf]
        %v3731 = vld [vmem:[%s3701 + $0x74] sm:$0xf]
        %v3732 = vld [vmem:[%s3701 + $0x78] sm:$0xf]
        %v3733 = vld [vmem:[%s3701 + $0x7c] sm:$0xf]
        %v3734 = vld [vmem:[%s2 + $0x1] sm:$0x1]
        %v3735 = vlaneseq
        %v3736 = vshrl.u32 %v3735, 7
        %v3737 = vsub.s32 0, %v3736
        %v3738 = vrot.slane %v3734, %v3737
        %v3771 = vunpack.c.l.b16 %v3702
        %v3772 = vunpack.c.l.b16 %v3703
        %v3773 = vunpack.c.l.b16 %v3704
        %v3774 = vunpack.c.l.b16 %v3705
        %v3775 = vunpack.c.l.b16 %v3706
        %v3776 = vunpack.c.l.b16 %v3707
        %v3777 = vunpack.c.l.b16 %v3708
        %v3778 = vunpack.c.l.b16 %v3709
        %v3779 = vunpack.c.l.b16 %v3710
        %v3780 = vunpack.c.l.b16 %v3711
        %v3781 = vunpack.c.l.b16 %v3712
        %v3782 = vunpack.c.l.b16 %v3713
        %v3783 = vunpack.c.l.b16 %v3714
        %v3784 = vunpack.c.l.b16 %v3715
        %v3785 = vunpack.c.l.b16 %v3716
        %v3786 = vunpack.c.l.b16 %v3717
        %v3787 = vunpack.c.l.b16 %v3718
        %v3788 = vunpack.c.l.b16 %v3719
        %v3789 = vunpack.c.l.b16 %v3720
        %v3790 = vunpack.c.l.b16 %v3721
        %v3791 = vunpack.c.l.b16 %v3722
        %v3792 = vunpack.c.l.b16 %v3723
        %v3793 = vunpack.c.l.b16 %v3724
        %v3794 = vunpack.c.l.b16 %v3725
        %v3795 = vunpack.c.l.b16 %v3726
        %v3796 = vunpack.c.l.b16 %v3727
        %v3797 = vunpack.c.l.b16 %v3728
        %v3798 = vunpack.c.l.b16 %v3729
        %v3799 = vunpack.c.l.b16 %v3730
        %v3800 = vunpack.c.l.b16 %v3731
        %v3801 = vunpack.c.l.b16 %v3732
        %v3802 = vunpack.c.l.b16 %v3733
        %v3803 = vpack.c.b16 %v3772, %v3771
        %v3804 = vpack.c.b16 %v3774, %v3773
        %v3805 = vpack.c.b16 %v3776, %v3775
        %v3806 = vpack.c.b16 %v3778, %v3777
        %v3807 = vpack.c.b16 %v3780, %v3779
        %v3808 = vpack.c.b16 %v3782, %v3781
        %v3809 = vpack.c.b16 %v3784, %v3783
        %v3810 = vpack.c.b16 %v3786, %v3785
        %v3811 = vpack.c.b16 %v3788, %v3787
        %v3812 = vpack.c.b16 %v3790, %v3789
        %v3813 = vpack.c.b16 %v3792, %v3791
        %v3814 = vpack.c.b16 %v3794, %v3793
        %v3815 = vpack.c.b16 %v3796, %v3795
        %v3816 = vpack.c.b16 %v3798, %v3797
        %v3817 = vpack.c.b16 %v3800, %v3799
        %v3818 = vpack.c.b16 %v3802, %v3801
        %3835 = vmatprep.subr.bf16.mxu0 0
        %3836 = vmatpush1.bf16.msra.mxu0 %v3803
        %3837 = vmatprep.subr.bf16.mxu0 0
        %3838 = vmatpush1.bf16.msra.mxu0 %v3804
        %3839 = vmatprep.subr.bf16.mxu0 0
        %3840 = vmatpush1.bf16.msra.mxu0 %v3805
        %3841 = vmatprep.subr.bf16.mxu0 0
        %3842 = vmatpush1.bf16.msra.mxu0 %v3806
        %3843 = vmatprep.subr.bf16.mxu0 0
        %3844 = vmatpush1.bf16.msra.mxu0 %v3807
        %3845 = vmatprep.subr.bf16.mxu0 0
        %3846 = vmatpush1.bf16.msra.mxu0 %v3808
        %3847 = vmatprep.subr.bf16.mxu0 0
        %3848 = vmatpush1.bf16.msra.mxu0 %v3809
        %3849 = vmatprep.subr.bf16.mxu0 0
        %3850 = vmatpush1.bf16.msra.mxu0 %v3810
        %3851 = vmatprep.subr.bf16.mxu0 0
        %3852 = vmatpush1.bf16.msra.mxu0 %v3811
        %3853 = vmatprep.subr.bf16.mxu0 0
        %3854 = vmatpush1.bf16.msra.mxu0 %v3812
        %3855 = vmatprep.subr.bf16.mxu0 0
        %3856 = vmatpush1.bf16.msra.mxu0 %v3813
        %3857 = vmatprep.subr.bf16.mxu0 0
        %3858 = vmatpush1.bf16.msra.mxu0 %v3814
        %3859 = vmatprep.subr.bf16.mxu0 0
        %3860 = vmatpush1.bf16.msra.mxu0 %v3815
        %3861 = vmatprep.subr.bf16.mxu0 0
        %3862 = vmatpush1.bf16.msra.mxu0 %v3816
        %3863 = vmatprep.subr.bf16.mxu0 0
        %3864 = vmatpush1.bf16.msra.mxu0 %v3817
        %3865 = vmatprep.subr.bf16.mxu0 0
        %3866 = vmatpush1.bf16.msra.mxu0 %v3818
        %3867 = vmatprep.mubr.bf16.mxu0 %v820
        %3868 = vmatmul.mubr.bf16.gmra.mrb[0].mxu0 %v819
        %v3869 = vpop.f32.mrb[0].mxu0
        %v3870 = vadd.f32 %v3738, %v3869
        %v3871 = vpop.f32.mrb[0].mxu0
        %v3872 = vpop.f32.mrb[0].mxu0
        %v3873 = vadd.f32 %v3738, %v3872
        %v3874 = vpop.f32.mrb[0].mxu0
        %3875 = vmatprep.mubr.bf16.mxu0 %v822
        %3876 = vmatmul.mubr.bf16.gmra.mrb[0].mxu0 %v821
        %v3877 = vpop.f32.mrb[0].mxu0
        %v3878 = vadd.f32 %v3738, %v3877
        %v3879 = vpop.f32.mrb[0].mxu0
        %v3880 = vpop.f32.mrb[0].mxu0
        %v3881 = vadd.f32 %v3738, %v3880
        %v3882 = vpop.f32.mrb[0].mxu0
        %3883 = vmatprep.mubr.bf16.mxu0 %v824
        %3884 = vmatmul.mubr.bf16.gmra.mrb[0].mxu0 %v823
        %v3885 = vpop.f32.mrb[0].mxu0
        %v3886 = vadd.f32 %v3738, %v3885
        %v3887 = vpop.f32.mrb[0].mxu0
        %v3888 = vpop.f32.mrb[0].mxu0
        %v3889 = vadd.f32 %v3738, %v3888
        %v3890 = vpop.f32.mrb[0].mxu0
        %3891 = vmatprep.mubr.bf16.mxu0 %v826
        %3892 = vmatmul.mubr.bf16.gmra.mrb[0].mxu0 %v825
        %v3893 = vpop.f32.mrb[0].mxu0
        %v3894 = vadd.f32 %v3738, %v3893
        %v3895 = vpop.f32.mrb[0].mxu0
        %v3896 = vpop.f32.mrb[0].mxu0
        %v3897 = vadd.f32 %v3738, %v3896
        %v3898 = vpop.f32.mrb[0].mxu0
        %3899 = vmatprep.mubr.bf16.mxu0 %v828
        %3900 = vmatmul.mubr.bf16.gmra.mrb[0].mxu0 %v827
        %v3901 = vpop.f32.mrb[0].mxu0
        %v3902 = vadd.f32 %v3738, %v3901
        %v3903 = vpop.f32.mrb[0].mxu0
        %v3904 = vpop.f32.mrb[0].mxu0
        %v3905 = vadd.f32 %v3738, %v3904
        %v3906 = vpop.f32.mrb[0].mxu0
        %3907 = vmatprep.mubr.bf16.mxu0 %v830
        %3908 = vmatmul.mubr.bf16.gmra.mrb[0].mxu0 %v829
        %v3909 = vpop.f32.mrb[0].mxu0
        %v3910 = vadd.f32 %v3738, %v3909
        %v3911 = vpop.f32.mrb[0].mxu0
        %v3912 = vpop.f32.mrb[0].mxu0
        %v3913 = vadd.f32 %v3738, %v3912
        %v3914 = vpop.f32.mrb[0].mxu0
        %3915 = vmatprep.mubr.bf16.mxu0 %v832
        %3916 = vmatmul.mubr.bf16.gmra.mrb[0].mxu0 %v831
        %v3917 = vpop.f32.mrb[0].mxu0
        %v3918 = vadd.f32 %v3738, %v3917
        %v3919 = vpop.f32.mrb[0].mxu0
        %v3920 = vpop.f32.mrb[0].mxu0
        %v3921 = vadd.f32 %v3738, %v3920
        %v3922 = vpop.f32.mrb[0].mxu0
        %3923 = vmatprep.mubr.bf16.mxu0 %v834
        %3924 = vmatmul.mubr.bf16.gmra.mrb[0].mxu0 %v833
        %v3925 = vpop.f32.mrb[0].mxu0
        %v3926 = vadd.f32 %v3738, %v3925
        %v3927 = vpop.f32.mrb[0].mxu0
        %v3928 = vpop.f32.mrb[0].mxu0
        %v3929 = vadd.f32 %v3738, %v3928
        %v3930 = vpop.f32.mrb[0].mxu0
        %3931 = vdwg.mxu0
        %v3932 = vxor.u32 %v3870, 2147483648
        %v3933 = vxor.u32 %v3873, 2147483648
        %v3934 = vxor.u32 %v3878, 2147483648
        %v3935 = vxor.u32 %v3881, 2147483648
        %v3936 = vxor.u32 %v3886, 2147483648
        %v3937 = vxor.u32 %v3889, 2147483648
        %v3938 = vxor.u32 %v3894, 2147483648
        %v3939 = vxor.u32 %v3897, 2147483648
        %v3940 = vxor.u32 %v3902, 2147483648
        %v3941 = vxor.u32 %v3905, 2147483648
        %v3942 = vxor.u32 %v3910, 2147483648
        %v3943 = vxor.u32 %v3913, 2147483648
        %v3944 = vxor.u32 %v3918, 2147483648
        %v3945 = vxor.u32 %v3921, 2147483648
        %v3946 = vxor.u32 %v3926, 2147483648
        %v3947 = vxor.u32 %v3929, 2147483648
        %v3948 = vmul.f32 %v3932, 1.442695
        %v3949 = vpow.pop %v3948
        %v3950 = vmul.f32 %v3933, 1.442695
        %v3951 = vpow.pop %v3950
        %v3952 = vmul.f32 %v3934, 1.442695
        %v3953 = vpow.pop %v3952
        %v3954 = vmul.f32 %v3935, 1.442695
        %v3955 = vpow.pop %v3954
        %v3956 = vmul.f32 %v3936, 1.442695
        %v3957 = vpow.pop %v3956
        %v3958 = vmul.f32 %v3937, 1.442695
        %v3959 = vpow.pop %v3958
        %v3960 = vmul.f32 %v3938, 1.442695
        %v3961 = vpow.pop %v3960
        %v3962 = vmul.f32 %v3939, 1.442695
        %v3963 = vpow.pop %v3962
        %v3964 = vmul.f32 %v3940, 1.442695
        %v3965 = vpow.pop %v3964
        %v3966 = vmul.f32 %v3941, 1.442695
        %v3967 = vpow.pop %v3966
        %v3968 = vmul.f32 %v3942, 1.442695
        %v3969 = vpow.pop %v3968
        %v3970 = vmul.f32 %v3943, 1.442695
        %v3971 = vpow.pop %v3970
        %v3972 = vmul.f32 %v3944, 1.442695
        %v3973 = vpow.pop %v3972
        %v3974 = vmul.f32 %v3945, 1.442695
        %v3975 = vpow.pop %v3974
        %v3976 = vmul.f32 %v3946, 1.442695
        %v3977 = vpow.pop %v3976
        %v3978 = vmul.f32 %v3947, 1.442695
        %v3979 = vpow.pop %v3978
        %v3980 = vadd.f32 %v3949, 1.0
        %v3981 = vadd.f32 %v3951, 1.0
        %v3982 = vadd.f32 %v3953, 1.0
        %v3983 = vadd.f32 %v3955, 1.0
        %v3984 = vadd.f32 %v3957, 1.0
        %v3985 = vadd.f32 %v3959, 1.0
        %v3986 = vadd.f32 %v3961, 1.0
        %v3987 = vadd.f32 %v3963, 1.0
        %v3988 = vadd.f32 %v3965, 1.0
        %v3989 = vadd.f32 %v3967, 1.0
        %v3990 = vadd.f32 %v3969, 1.0
        %v3991 = vadd.f32 %v3971, 1.0
        %v3992 = vadd.f32 %v3973, 1.0
        %v3993 = vadd.f32 %v3975, 1.0
        %v3994 = vadd.f32 %v3977, 1.0
        %v3995 = vadd.f32 %v3979, 1.0
        %v3996 = vrcp.pop %v3980
        %v3997 = vmul.f32 1.0, %v3996
        %v3998 = vrcp.pop %v3981
        %v3999 = vmul.f32 1.0, %v3998
        %v4000 = vrcp.pop %v3982
        %v4001 = vmul.f32 1.0, %v4000
        %v4002 = vrcp.pop %v3983
        %v4003 = vmul.f32 1.0, %v4002
        %v4004 = vrcp.pop %v3984
        %v4005 = vmul.f32 1.0, %v4004
        %v4006 = vrcp.pop %v3985
        %v4007 = vmul.f32 1.0, %v4006
        %v4008 = vrcp.pop %v3986
        %v4009 = vmul.f32 1.0, %v4008
        %v4010 = vrcp.pop %v3987
        %v4011 = vmul.f32 1.0, %v4010
        %v4012 = vrcp.pop %v3988
        %v4013 = vmul.f32 1.0, %v4012
        %v4014 = vrcp.pop %v3989
        %v4015 = vmul.f32 1.0, %v4014
        %v4016 = vrcp.pop %v3990
        %v4017 = vmul.f32 1.0, %v4016
        %v4018 = vrcp.pop %v3991
        %v4019 = vmul.f32 1.0, %v4018
        %v4020 = vrcp.pop %v3992
        %v4021 = vmul.f32 1.0, %v4020
        %v4022 = vrcp.pop %v3993
        %v4023 = vmul.f32 1.0, %v4022
        %v4024 = vrcp.pop %v3994
        %v4025 = vmul.f32 1.0, %v4024
        %v4026 = vrcp.pop %v3995
        %v4027 = vmul.f32 1.0, %v4026
        %v4028 = vmul.f32 %v3870, %v3997
        %v4029 = vmul.f32 %v3873, %v3999
        %v4030 = vmul.f32 %v3878, %v4001
        %v4031 = vmul.f32 %v3881, %v4003
        %v4032 = vmul.f32 %v3886, %v4005
        %v4033 = vmul.f32 %v3889, %v4007
        %v4034 = vmul.f32 %v3894, %v4009
        %v4035 = vmul.f32 %v3897, %v4011
        %v4036 = vmul.f32 %v3902, %v4013
        %v4037 = vmul.f32 %v3905, %v4015
        %v4038 = vmul.f32 %v3910, %v4017
        %v4039 = vmul.f32 %v3913, %v4019
        %v4040 = vmul.f32 %v3918, %v4021
        %v4041 = vmul.f32 %v3921, %v4023
        %v4042 = vmul.f32 %v3926, %v4025
        %v4043 = vmul.f32 %v3929, %v4027
        %v4044 = vld [vmem:[%s5 + $0x5] sm:$0x1]
        %v4045 = vld [vmem:[#allocation9 + $0x5] sm:$0x1]
        %4046 = vadd.xlane.f32.xlu0 %v4028
        %v4047 = vpop.xlane.xlu0 %4046
        %4048 = vadd.xlane.f32.xlu0 %v4029
        %v4049 = vpop.xlane.xlu0 %4048
        %4050 = vadd.xlane.f32.xlu0 %v4030
        %v4051 = vpop.xlane.xlu0 %4050
        %4052 = vadd.xlane.f32.xlu0 %v4031
        %v4053 = vpop.xlane.xlu0 %4052
        %4054 = vadd.xlane.f32.xlu0 %v4032
        %v4055 = vpop.xlane.xlu0 %4054
        %4056 = vadd.xlane.f32.xlu0 %v4033
        %v4057 = vpop.xlane.xlu0 %4056
        %4058 = vadd.xlane.f32.xlu0 %v4034
        %v4059 = vpop.xlane.xlu0 %4058
        %4060 = vadd.xlane.f32.xlu0 %v4035
        %v4061 = vpop.xlane.xlu0 %4060
        %4062 = vadd.xlane.f32.xlu0 %v4036
        %v4063 = vpop.xlane.xlu0 %4062
        %4064 = vadd.xlane.f32.xlu0 %v4037
        %v4065 = vpop.xlane.xlu0 %4064
        %4066 = vadd.xlane.f32.xlu0 %v4038
        %v4067 = vpop.xlane.xlu0 %4066
        %4068 = vadd.xlane.f32.xlu0 %v4039
        %v4069 = vpop.xlane.xlu0 %4068
        %4070 = vadd.xlane.f32.xlu0 %v4040
        %v4071 = vpop.xlane.xlu0 %4070
        %4072 = vadd.xlane.f32.xlu0 %v4041
        %v4073 = vpop.xlane.xlu0 %4072
        %4074 = vadd.xlane.f32.xlu0 %v4042
        %v4075 = vpop.xlane.xlu0 %4074
        %4076 = vadd.xlane.f32.xlu0 %v4043
        %v4077 = vpop.xlane.xlu0 %4076
        %v4078 = vmul.f32 %v4047, %v1211
        %v4079 = vmul.f32 %v4049, %v1211
        %v4080 = vmul.f32 %v4051, %v1211
        %v4081 = vmul.f32 %v4053, %v1211
        %v4082 = vmul.f32 %v4055, %v1211
        %v4083 = vmul.f32 %v4057, %v1211
        %v4084 = vmul.f32 %v4059, %v1211
        %v4085 = vmul.f32 %v4061, %v1211
        %v4086 = vmul.f32 %v4063, %v1211
        %v4087 = vmul.f32 %v4065, %v1211
        %v4088 = vmul.f32 %v4067, %v1211
        %v4089 = vmul.f32 %v4069, %v1211
        %v4090 = vmul.f32 %v4071, %v1211
        %v4091 = vmul.f32 %v4073, %v1211
        %v4092 = vmul.f32 %v4075, %v1211
        %v4093 = vmul.f32 %v4077, %v1211
        %v4094 = vsub.f32 %v4028, %v4078
        %v4095 = vsub.f32 %v4029, %v4079
        %v4096 = vsub.f32 %v4030, %v4080
        %v4097 = vsub.f32 %v4031, %v4081
        %v4098 = vsub.f32 %v4032, %v4082
        %v4099 = vsub.f32 %v4033, %v4083
        %v4100 = vsub.f32 %v4034, %v4084
        %v4101 = vsub.f32 %v4035, %v4085
        %v4102 = vsub.f32 %v4036, %v4086
        %v4103 = vsub.f32 %v4037, %v4087
        %v4104 = vsub.f32 %v4038, %v4088
        %v4105 = vsub.f32 %v4039, %v4089
        %v4106 = vsub.f32 %v4040, %v4090
        %v4107 = vsub.f32 %v4041, %v4091
        %v4108 = vsub.f32 %v4042, %v4092
        %v4109 = vsub.f32 %v4043, %v4093
        %v4110 = vmul.f32 %v4094, %v4094
        %v4111 = vmul.f32 %v4095, %v4095
        %v4112 = vmul.f32 %v4096, %v4096
        %v4113 = vmul.f32 %v4097, %v4097
        %v4114 = vmul.f32 %v4098, %v4098
        %v4115 = vmul.f32 %v4099, %v4099
        %v4116 = vmul.f32 %v4100, %v4100
        %v4117 = vmul.f32 %v4101, %v4101
        %v4118 = vmul.f32 %v4102, %v4102
        %v4119 = vmul.f32 %v4103, %v4103
        %v4120 = vmul.f32 %v4104, %v4104
        %v4121 = vmul.f32 %v4105, %v4105
        %v4122 = vmul.f32 %v4106, %v4106
        %v4123 = vmul.f32 %v4107, %v4107
        %v4124 = vmul.f32 %v4108, %v4108
        %v4125 = vmul.f32 %v4109, %v4109
        %4126 = vadd.xlane.f32.xlu0 %v4110
        %v4127 = vpop.xlane.xlu0 %4126
        %4128 = vadd.xlane.f32.xlu0 %v4111
        %v4129 = vpop.xlane.xlu0 %4128
        %4130 = vadd.xlane.f32.xlu0 %v4112
        %v4131 = vpop.xlane.xlu0 %4130
        %4132 = vadd.xlane.f32.xlu0 %v4113
        %v4133 = vpop.xlane.xlu0 %4132
        %4134 = vadd.xlane.f32.xlu0 %v4114
        %v4135 = vpop.xlane.xlu0 %4134
        %4136 = vadd.xlane.f32.xlu0 %v4115
        %v4137 = vpop.xlane.xlu0 %4136
        %4138 = vadd.xlane.f32.xlu0 %v4116
        %v4139 = vpop.xlane.xlu0 %4138
        %4140 = vadd.xlane.f32.xlu0 %v4117
        %v4141 = vpop.xlane.xlu0 %4140
        %4142 = vadd.xlane.f32.xlu0 %v4118
        %v4143 = vpop.xlane.xlu0 %4142
        %4144 = vadd.xlane.f32.xlu0 %v4119
        %v4145 = vpop.xlane.xlu0 %4144
        %4146 = vadd.xlane.f32.xlu0 %v4120
        %v4147 = vpop.xlane.xlu0 %4146
        %4148 = vadd.xlane.f32.xlu0 %v4121
        %v4149 = vpop.xlane.xlu0 %4148
        %4150 = vadd.xlane.f32.xlu0 %v4122
        %v4151 = vpop.xlane.xlu0 %4150
        %4152 = vadd.xlane.f32.xlu0 %v4123
        %v4153 = vpop.xlane.xlu0 %4152
        %4154 = vadd.xlane.f32.xlu0 %v4124
        %v4155 = vpop.xlane.xlu0 %4154
        %4156 = vadd.xlane.f32.xlu0 %v4125
        %v4157 = vpop.xlane.xlu0 %4156
        %v4158 = vmul.f32 %v4127, %v1211
        %v4159 = vmul.f32 %v4129, %v1211
        %v4160 = vmul.f32 %v4131, %v1211
        %v4161 = vmul.f32 %v4133, %v1211
        %v4162 = vmul.f32 %v4135, %v1211
        %v4163 = vmul.f32 %v4137, %v1211
        %v4164 = vmul.f32 %v4139, %v1211
        %v4165 = vmul.f32 %v4141, %v1211
        %v4166 = vmul.f32 %v4143, %v1211
        %v4167 = vmul.f32 %v4145, %v1211
        %v4168 = vmul.f32 %v4147, %v1211
        %v4169 = vmul.f32 %v4149, %v1211
        %v4170 = vmul.f32 %v4151, %v1211
        %v4171 = vmul.f32 %v4153, %v1211
        %v4172 = vmul.f32 %v4155, %v1211
        %v4173 = vmul.f32 %v4157, %v1211
        %v4174 = vadd.f32 %v4158, 0.1
        %v4175 = vadd.f32 %v4159, 0.1
        %v4176 = vadd.f32 %v4160, 0.1
        %v4177 = vadd.f32 %v4161, 0.1
        %v4178 = vadd.f32 %v4162, 0.1
        %v4179 = vadd.f32 %v4163, 0.1
        %v4180 = vadd.f32 %v4164, 0.1
        %v4181 = vadd.f32 %v4165, 0.1
        %v4182 = vadd.f32 %v4166, 0.1
        %v4183 = vadd.f32 %v4167, 0.1
        %v4184 = vadd.f32 %v4168, 0.1
        %v4185 = vadd.f32 %v4169, 0.1
        %v4186 = vadd.f32 %v4170, 0.1
        %v4187 = vadd.f32 %v4171, 0.1
        %v4188 = vadd.f32 %v4172, 0.1
        %v4189 = vadd.f32 %v4173, 0.1
        %v4190 = vrsqrt.pop %v4174
        %v4191 = vrsqrt.pop %v4175
        %v4192 = vrsqrt.pop %v4176
        %v4193 = vrsqrt.pop %v4177
        %v4194 = vrsqrt.pop %v4178
        %v4195 = vrsqrt.pop %v4179
        %v4196 = vrsqrt.pop %v4180
        %v4197 = vrsqrt.pop %v4181
        %v4198 = vrsqrt.pop %v4182
        %v4199 = vrsqrt.pop %v4183
        %v4200 = vrsqrt.pop %v4184
        %v4201 = vrsqrt.pop %v4185
        %v4202 = vrsqrt.pop %v4186
        %v4203 = vrsqrt.pop %v4187
        %v4204 = vrsqrt.pop %v4188
        %v4205 = vrsqrt.pop %v4189
        %v4206 = vmul.f32 %v4094, %v4190
        %v4207 = vmul.f32 %v4095, %v4191
        %v4208 = vmul.f32 %v4096, %v4192
        %v4209 = vmul.f32 %v4097, %v4193
        %v4210 = vmul.f32 %v4098, %v4194
        %v4211 = vmul.f32 %v4099, %v4195
        %v4212 = vmul.f32 %v4100, %v4196
        %v4213 = vmul.f32 %v4101, %v4197
        %v4214 = vmul.f32 %v4102, %v4198
        %v4215 = vmul.f32 %v4103, %v4199
        %v4216 = vmul.f32 %v4104, %v4200
        %v4217 = vmul.f32 %v4105, %v4201
        %v4218 = vmul.f32 %v4106, %v4202
        %v4219 = vmul.f32 %v4107, %v4203
        %v4220 = vmul.f32 %v4108, %v4204
        %v4221 = vmul.f32 %v4109, %v4205
        %v4222 = vlaneseq
        %v4223 = vshrl.u32 %v4222, 7
        %v4224 = vsub.s32 0, %v4223
        %v4225 = vrot.slane %v4044, %v4224
        %v4226 = vmul.f32 %v4206, %v4225
        %v4227 = vmul.f32 %v4207, %v4225
        %v4228 = vmul.f32 %v4208, %v4225
        %v4229 = vmul.f32 %v4209, %v4225
        %v4230 = vmul.f32 %v4210, %v4225
        %v4231 = vmul.f32 %v4211, %v4225
        %v4232 = vmul.f32 %v4212, %v4225
        %v4233 = vmul.f32 %v4213, %v4225
        %v4234 = vmul.f32 %v4214, %v4225
        %v4235 = vmul.f32 %v4215, %v4225
        %v4236 = vmul.f32 %v4216, %v4225
        %v4237 = vmul.f32 %v4217, %v4225
        %v4238 = vmul.f32 %v4218, %v4225
        %v4239 = vmul.f32 %v4219, %v4225
        %v4240 = vmul.f32 %v4220, %v4225
        %v4241 = vmul.f32 %v4221, %v4225
        %v4242 = vlaneseq
        %v4243 = vshrl.u32 %v4242, 7
        %v4244 = vsub.s32 0, %v4243
        %v4245 = vrot.slane %v4045, %v4244
        %v4246 = vadd.f32 %v4226, %v4245
        %v4247 = vadd.f32 %v4227, %v4245
        %v4248 = vadd.f32 %v4228, %v4245
        %v4249 = vadd.f32 %v4229, %v4245
        %v4250 = vadd.f32 %v4230, %v4245
        %v4251 = vadd.f32 %v4231, %v4245
        %v4252 = vadd.f32 %v4232, %v4245
        %v4253 = vadd.f32 %v4233, %v4245
        %v4254 = vadd.f32 %v4234, %v4245
        %v4255 = vadd.f32 %v4235, %v4245
        %v4256 = vadd.f32 %v4236, %v4245
        %v4257 = vadd.f32 %v4237, %v4245
        %v4258 = vadd.f32 %v4238, %v4245
        %v4259 = vadd.f32 %v4239, %v4245
        %v4260 = vadd.f32 %v4240, %v4245
        %v4261 = vadd.f32 %v4241, %v4245
        %v4262 = vpack.c.bf16 %v4247, %v4246
        %v4263 = vpack.c.bf16 %v4249, %v4248
        %v4264 = vpack.c.bf16 %v4251, %v4250
        %v4265 = vpack.c.bf16 %v4253, %v4252
        %v4266 = vpack.c.bf16 %v4255, %v4254
        %v4267 = vpack.c.bf16 %v4257, %v4256
        %v4268 = vpack.c.bf16 %v4259, %v4258
        %v4269 = vpack.c.bf16 %v4261, %v4260
        %s4270 = scalar_lea.vmem [#allocation6], 256
        %v4271 = vld [vmem:[%s4270] sm:$0xf]
        %v4272 = vld [vmem:[%s4270 + $0x4] sm:$0xf]
        %v4273 = vld [vmem:[%s4270 + $0x8] sm:$0xf]
        %v4274 = vld [vmem:[%s4270 + $0xc] sm:$0xf]
        %v4275 = vld [vmem:[%s4270 + $0x10] sm:$0xf]
        %v4276 = vld [vmem:[%s4270 + $0x14] sm:$0xf]
        %v4277 = vld [vmem:[%s4270 + $0x18] sm:$0xf]
        %v4278 = vld [vmem:[%s4270 + $0x1c] sm:$0xf]
        %v4279 = vld [vmem:[%s4270 + $0x20] sm:$0xf]
        %v4280 = vld [vmem:[%s4270 + $0x24] sm:$0xf]
        %v4281 = vld [vmem:[%s4270 + $0x28] sm:$0xf]
        %v4282 = vld [vmem:[%s4270 + $0x2c] sm:$0xf]
        %v4283 = vld [vmem:[%s4270 + $0x30] sm:$0xf]
        %v4284 = vld [vmem:[%s4270 + $0x34] sm:$0xf]
        %v4285 = vld [vmem:[%s4270 + $0x38] sm:$0xf]
        %v4286 = vld [vmem:[%s4270 + $0x3c] sm:$0xf]
        %v4287 = vld [vmem:[#allocation7 + $0x4] sm:$0x1]
        %v4288 = vlaneseq
        %v4289 = vshrl.u32 %v4288, 7
        %v4290 = vsub.s32 0, %v4289
        %v4291 = vrot.slane %v4287, %v4290
        %v4308 = vunpack.c.l.b16 %v4271
        %v4309 = vunpack.c.l.b16 %v4272
        %v4310 = vunpack.c.l.b16 %v4273
        %v4311 = vunpack.c.l.b16 %v4274
        %v4312 = vunpack.c.l.b16 %v4275
        %v4313 = vunpack.c.l.b16 %v4276
        %v4314 = vunpack.c.l.b16 %v4277
        %v4315 = vunpack.c.l.b16 %v4278
        %v4316 = vunpack.c.l.b16 %v4279
        %v4317 = vunpack.c.l.b16 %v4280
        %v4318 = vunpack.c.l.b16 %v4281
        %v4319 = vunpack.c.l.b16 %v4282
        %v4320 = vunpack.c.l.b16 %v4283
        %v4321 = vunpack.c.l.b16 %v4284
        %v4322 = vunpack.c.l.b16 %v4285
        %v4323 = vunpack.c.l.b16 %v4286
        %v4324 = vpack.c.b16 %v4309, %v4308
        %v4325 = vpack.c.b16 %v4311, %v4310
        %v4326 = vpack.c.b16 %v4313, %v4312
        %v4327 = vpack.c.b16 %v4315, %v4314
        %v4328 = vpack.c.b16 %v4317, %v4316
        %v4329 = vpack.c.b16 %v4319, %v4318
        %v4330 = vpack.c.b16 %v4321, %v4320
        %v4331 = vpack.c.b16 %v4323, %v4322
        %4340 = vmatprep.subr.bf16.mxu0 0
        %4341 = vmatpush1.bf16.msra.mxu0 %v4324
        %4342 = vmatprep.subr.bf16.mxu0 0
        %4343 = vmatpush1.bf16.msra.mxu0 %v4325
        %4344 = vmatprep.subr.bf16.mxu0 0
        %4345 = vmatpush1.bf16.msra.mxu0 %v4326
        %4346 = vmatprep.subr.bf16.mxu0 0
        %4347 = vmatpush1.bf16.msra.mxu0 %v4327
        %4348 = vmatprep.subr.bf16.mxu0 0
        %4349 = vmatpush1.bf16.msra.mxu0 %v4328
        %4350 = vmatprep.subr.bf16.mxu0 0
        %4351 = vmatpush1.bf16.msra.mxu0 %v4329
        %4352 = vmatprep.subr.bf16.mxu0 0
        %4353 = vmatpush1.bf16.msra.mxu0 %v4330
        %4354 = vmatprep.subr.bf16.mxu0 0
        %4355 = vmatpush1.bf16.msra.mxu0 %v4331
        %4356 = vmatprep.subr.bf16.mxu0 0
        %4357 = vmatpush1.bf16.msra.mxu0 0
        %4358 = vmatprep.subr.bf16.mxu0 0
        %4359 = vmatpush1.bf16.msra.mxu0 0
        %4360 = vmatprep.subr.bf16.mxu0 0
        %4361 = vmatpush1.bf16.msra.mxu0 0
        %4362 = vmatprep.subr.bf16.mxu0 0
        %4363 = vmatpush1.bf16.msra.mxu0 0
        %4364 = vmatprep.subr.bf16.mxu0 0
        %4365 = vmatpush1.bf16.msra.mxu0 0
        %4366 = vmatprep.subr.bf16.mxu0 0
        %4367 = vmatpush1.bf16.msra.mxu0 0
        %4368 = vmatprep.subr.bf16.mxu0 0
        %4369 = vmatpush1.bf16.msra.mxu0 0
        %4370 = vmatprep.subr.bf16.mxu0 0
        %4371 = vmatpush1.bf16.msra.mxu0 0
        %4372 = vmatprep.mubr.bf16.mxu0 0
        %4373 = vmatmul.mubr.bf16.gmra.mrb[0].mxu0 %v4262
        %v4374 = vpop.f32.mrb[0].mxu0
        %v4375 = vadd.f32 %v4291, %v4374
        %v4376 = vpop.f32.mrb[0].mxu0
        %v4377 = vpop.f32.mrb[0].mxu0
        %v4378 = vadd.f32 %v4291, %v4377
        %v4379 = vpop.f32.mrb[0].mxu0
        %4380 = vmatprep.mubr.bf16.mxu0 0
        %4381 = vmatmul.mubr.bf16.gmra.mrb[0].mxu0 %v4263
        %v4382 = vpop.f32.mrb[0].mxu0
        %v4383 = vadd.f32 %v4291, %v4382
        %v4384 = vpop.f32.mrb[0].mxu0
        %v4385 = vpop.f32.mrb[0].mxu0
        %v4386 = vadd.f32 %v4291, %v4385
        %v4387 = vpop.f32.mrb[0].mxu0
        %4388 = vmatprep.mubr.bf16.mxu0 0
        %4389 = vmatmul.mubr.bf16.gmra.mrb[0].mxu0 %v4264
        %v4390 = vpop.f32.mrb[0].mxu0
        %v4391 = vadd.f32 %v4291, %v4390
        %v4392 = vpop.f32.mrb[0].mxu0
        %v4393 = vpop.f32.mrb[0].mxu0
        %v4394 = vadd.f32 %v4291, %v4393
        %v4395 = vpop.f32.mrb[0].mxu0
        %4396 = vmatprep.mubr.bf16.mxu0 0
        %4397 = vmatmul.mubr.bf16.gmra.mrb[0].mxu0 %v4265
        %v4398 = vpop.f32.mrb[0].mxu0
        %v4399 = vadd.f32 %v4291, %v4398
        %v4400 = vpop.f32.mrb[0].mxu0
        %v4401 = vpop.f32.mrb[0].mxu0
        %v4402 = vadd.f32 %v4291, %v4401
        %v4403 = vpop.f32.mrb[0].mxu0
        %4404 = vmatprep.mubr.bf16.mxu0 0
        %4405 = vmatmul.mubr.bf16.gmra.mrb[0].mxu0 %v4266
        %v4406 = vpop.f32.mrb[0].mxu0
        %v4407 = vadd.f32 %v4291, %v4406
        %v4408 = vpop.f32.mrb[0].mxu0
        %v4409 = vpop.f32.mrb[0].mxu0
        %v4410 = vadd.f32 %v4291, %v4409
        %v4411 = vpop.f32.mrb[0].mxu0
        %4412 = vmatprep.mubr.bf16.mxu0 0
        %4413 = vmatmul.mubr.bf16.gmra.mrb[0].mxu0 %v4267
        %v4414 = vpop.f32.mrb[0].mxu0
        %v4415 = vadd.f32 %v4291, %v4414
        %v4416 = vpop.f32.mrb[0].mxu0
        %v4417 = vpop.f32.mrb[0].mxu0
        %v4418 = vadd.f32 %v4291, %v4417
        %v4419 = vpop.f32.mrb[0].mxu0
        %4420 = vmatprep.mubr.bf16.mxu0 0
        %4421 = vmatmul.mubr.bf16.gmra.mrb[0].mxu0 %v4268
        %v4422 = vpop.f32.mrb[0].mxu0
        %v4423 = vadd.f32 %v4291, %v4422
        %v4424 = vpop.f32.mrb[0].mxu0
        %v4425 = vpop.f32.mrb[0].mxu0
        %v4426 = vadd.f32 %v4291, %v4425
        %v4427 = vpop.f32.mrb[0].mxu0
        %4428 = vmatprep.mubr.bf16.mxu0 0
        %4429 = vmatmul.mubr.bf16.gmra.mrb[0].mxu0 %v4269
        %v4430 = vpop.f32.mrb[0].mxu0
        %v4431 = vadd.f32 %v4291, %v4430
        %v4432 = vpop.f32.mrb[0].mxu0
        %v4433 = vpop.f32.mrb[0].mxu0
        %v4434 = vadd.f32 %v4291, %v4433
        %v4435 = vpop.f32.mrb[0].mxu0
        %4436 = vdwg.mxu0
        %v4437 = vadd.f32 %v4375, %v4246
        %v4438 = vadd.f32 %v4378, %v4247
        %v4439 = vadd.f32 %v4383, %v4248
        %v4440 = vadd.f32 %v4386, %v4249
        %v4441 = vadd.f32 %v4391, %v4250
        %v4442 = vadd.f32 %v4394, %v4251
        %v4443 = vadd.f32 %v4399, %v4252
        %v4444 = vadd.f32 %v4402, %v4253
        %v4445 = vadd.f32 %v4407, %v4254
        %v4446 = vadd.f32 %v4410, %v4255
        %v4447 = vadd.f32 %v4415, %v4256
        %v4448 = vadd.f32 %v4418, %v4257
        %v4449 = vadd.f32 %v4423, %v4258
        %v4450 = vadd.f32 %v4426, %v4259
        %v4451 = vadd.f32 %v4431, %v4260
        %v4452 = vadd.f32 %v4434, %v4261
        %v4453 = vxor.u32 %v4437, 2147483648
        %v4454 = vxor.u32 %v4438, 2147483648
        %v4455 = vxor.u32 %v4439, 2147483648
        %v4456 = vxor.u32 %v4440, 2147483648
        %v4457 = vxor.u32 %v4441, 2147483648
        %v4458 = vxor.u32 %v4442, 2147483648
        %v4459 = vxor.u32 %v4443, 2147483648
        %v4460 = vxor.u32 %v4444, 2147483648
        %v4461 = vxor.u32 %v4445, 2147483648
        %v4462 = vxor.u32 %v4446, 2147483648
        %v4463 = vxor.u32 %v4447, 2147483648
        %v4464 = vxor.u32 %v4448, 2147483648
        %v4465 = vxor.u32 %v4449, 2147483648
        %v4466 = vxor.u32 %v4450, 2147483648
        %v4467 = vxor.u32 %v4451, 2147483648
        %v4468 = vxor.u32 %v4452, 2147483648
        %v4469 = vmul.f32 %v4453, 1.442695
        %v4470 = vpow.pop %v4469
        %v4471 = vmul.f32 %v4454, 1.442695
        %v4472 = vpow.pop %v4471
        %v4473 = vmul.f32 %v4455, 1.442695
        %v4474 = vpow.pop %v4473
        %v4475 = vmul.f32 %v4456, 1.442695
        %v4476 = vpow.pop %v4475
        %v4477 = vmul.f32 %v4457, 1.442695
        %v4478 = vpow.pop %v4477
        %v4479 = vmul.f32 %v4458, 1.442695
        %v4480 = vpow.pop %v4479
        %v4481 = vmul.f32 %v4459, 1.442695
        %v4482 = vpow.pop %v4481
        %v4483 = vmul.f32 %v4460, 1.442695
        %v4484 = vpow.pop %v4483
        %v4485 = vmul.f32 %v4461, 1.442695
        %v4486 = vpow.pop %v4485
        %v4487 = vmul.f32 %v4462, 1.442695
        %v4488 = vpow.pop %v4487
        %v4489 = vmul.f32 %v4463, 1.442695
        %v4490 = vpow.pop %v4489
        %v4491 = vmul.f32 %v4464, 1.442695
        %v4492 = vpow.pop %v4491
        %v4493 = vmul.f32 %v4465, 1.442695
        %v4494 = vpow.pop %v4493
        %v4495 = vmul.f32 %v4466, 1.442695
        %v4496 = vpow.pop %v4495
        %v4497 = vmul.f32 %v4467, 1.442695
        %v4498 = vpow.pop %v4497
        %v4499 = vmul.f32 %v4468, 1.442695
        %v4500 = vpow.pop %v4499
        %v4501 = vadd.f32 %v4470, 1.0
        %v4502 = vadd.f32 %v4472, 1.0
        %v4503 = vadd.f32 %v4474, 1.0
        %v4504 = vadd.f32 %v4476, 1.0
        %v4505 = vadd.f32 %v4478, 1.0
        %v4506 = vadd.f32 %v4480, 1.0
        %v4507 = vadd.f32 %v4482, 1.0
        %v4508 = vadd.f32 %v4484, 1.0
        %v4509 = vadd.f32 %v4486, 1.0
        %v4510 = vadd.f32 %v4488, 1.0
        %v4511 = vadd.f32 %v4490, 1.0
        %v4512 = vadd.f32 %v4492, 1.0
        %v4513 = vadd.f32 %v4494, 1.0
        %v4514 = vadd.f32 %v4496, 1.0
        %v4515 = vadd.f32 %v4498, 1.0
        %v4516 = vadd.f32 %v4500, 1.0
        %v4517 = vrcp.pop %v4501
        %v4518 = vmul.f32 1.0, %v4517
        %v4519 = vrcp.pop %v4502
        %v4520 = vmul.f32 1.0, %v4519
        %v4521 = vrcp.pop %v4503
        %v4522 = vmul.f32 1.0, %v4521
        %v4523 = vrcp.pop %v4504
        %v4524 = vmul.f32 1.0, %v4523
        %v4525 = vrcp.pop %v4505
        %v4526 = vmul.f32 1.0, %v4525
        %v4527 = vrcp.pop %v4506
        %v4528 = vmul.f32 1.0, %v4527
        %v4529 = vrcp.pop %v4507
        %v4530 = vmul.f32 1.0, %v4529
        %v4531 = vrcp.pop %v4508
        %v4532 = vmul.f32 1.0, %v4531
        %v4533 = vrcp.pop %v4509
        %v4534 = vmul.f32 1.0, %v4533
        %v4535 = vrcp.pop %v4510
        %v4536 = vmul.f32 1.0, %v4535
        %v4537 = vrcp.pop %v4511
        %v4538 = vmul.f32 1.0, %v4537
        %v4539 = vrcp.pop %v4512
        %v4540 = vmul.f32 1.0, %v4539
        %v4541 = vrcp.pop %v4513
        %v4542 = vmul.f32 1.0, %v4541
        %v4543 = vrcp.pop %v4514
        %v4544 = vmul.f32 1.0, %v4543
        %v4545 = vrcp.pop %v4515
        %v4546 = vmul.f32 1.0, %v4545
        %v4547 = vrcp.pop %v4516
        %v4548 = vmul.f32 1.0, %v4547
        %v4549 = vmul.f32 %v4437, %v4518
        %v4550 = vmul.f32 %v4438, %v4520
        %v4551 = vmul.f32 %v4439, %v4522
        %v4552 = vmul.f32 %v4440, %v4524
        %v4553 = vmul.f32 %v4441, %v4526
        %v4554 = vmul.f32 %v4442, %v4528
        %v4555 = vmul.f32 %v4443, %v4530
        %v4556 = vmul.f32 %v4444, %v4532
        %v4557 = vmul.f32 %v4445, %v4534
        %v4558 = vmul.f32 %v4446, %v4536
        %v4559 = vmul.f32 %v4447, %v4538
        %v4560 = vmul.f32 %v4448, %v4540
        %v4561 = vmul.f32 %v4449, %v4542
        %v4562 = vmul.f32 %v4450, %v4544
        %v4563 = vmul.f32 %v4451, %v4546
        %v4564 = vmul.f32 %v4452, %v4548
        %v4565 = vld [vmem:[%s5 + $0x6] sm:$0x1]
        %v4566 = vld [vmem:[#allocation9 + $0x6] sm:$0x1]
        %4567 = vadd.xlane.f32.xlu0 %v4549
        %v4568 = vpop.xlane.xlu0 %4567
        %4569 = vadd.xlane.f32.xlu0 %v4550
        %v4570 = vpop.xlane.xlu0 %4569
        %4571 = vadd.xlane.f32.xlu0 %v4551
        %v4572 = vpop.xlane.xlu0 %4571
        %4573 = vadd.xlane.f32.xlu0 %v4552
        %v4574 = vpop.xlane.xlu0 %4573
        %4575 = vadd.xlane.f32.xlu0 %v4553
        %v4576 = vpop.xlane.xlu0 %4575
        %4577 = vadd.xlane.f32.xlu0 %v4554
        %v4578 = vpop.xlane.xlu0 %4577
        %4579 = vadd.xlane.f32.xlu0 %v4555
        %v4580 = vpop.xlane.xlu0 %4579
        %4581 = vadd.xlane.f32.xlu0 %v4556
        %v4582 = vpop.xlane.xlu0 %4581
        %4583 = vadd.xlane.f32.xlu0 %v4557
        %v4584 = vpop.xlane.xlu0 %4583
        %4585 = vadd.xlane.f32.xlu0 %v4558
        %v4586 = vpop.xlane.xlu0 %4585
        %4587 = vadd.xlane.f32.xlu0 %v4559
        %v4588 = vpop.xlane.xlu0 %4587
        %4589 = vadd.xlane.f32.xlu0 %v4560
        %v4590 = vpop.xlane.xlu0 %4589
        %4591 = vadd.xlane.f32.xlu0 %v4561
        %v4592 = vpop.xlane.xlu0 %4591
        %4593 = vadd.xlane.f32.xlu0 %v4562
        %v4594 = vpop.xlane.xlu0 %4593
        %4595 = vadd.xlane.f32.xlu0 %v4563
        %v4596 = vpop.xlane.xlu0 %4595
        %4597 = vadd.xlane.f32.xlu0 %v4564
        %v4598 = vpop.xlane.xlu0 %4597
        %v4599 = vmul.f32 %v4568, %v1211
        %v4600 = vmul.f32 %v4570, %v1211
        %v4601 = vmul.f32 %v4572, %v1211
        %v4602 = vmul.f32 %v4574, %v1211
        %v4603 = vmul.f32 %v4576, %v1211
        %v4604 = vmul.f32 %v4578, %v1211
        %v4605 = vmul.f32 %v4580, %v1211
        %v4606 = vmul.f32 %v4582, %v1211
        %v4607 = vmul.f32 %v4584, %v1211
        %v4608 = vmul.f32 %v4586, %v1211
        %v4609 = vmul.f32 %v4588, %v1211
        %v4610 = vmul.f32 %v4590, %v1211
        %v4611 = vmul.f32 %v4592, %v1211
        %v4612 = vmul.f32 %v4594, %v1211
        %v4613 = vmul.f32 %v4596, %v1211
        %v4614 = vmul.f32 %v4598, %v1211
        %v4615 = vsub.f32 %v4549, %v4599
        %v4616 = vsub.f32 %v4550, %v4600
        %v4617 = vsub.f32 %v4551, %v4601
        %v4618 = vsub.f32 %v4552, %v4602
        %v4619 = vsub.f32 %v4553, %v4603
        %v4620 = vsub.f32 %v4554, %v4604
        %v4621 = vsub.f32 %v4555, %v4605
        %v4622 = vsub.f32 %v4556, %v4606
        %v4623 = vsub.f32 %v4557, %v4607
        %v4624 = vsub.f32 %v4558, %v4608
        %v4625 = vsub.f32 %v4559, %v4609
        %v4626 = vsub.f32 %v4560, %v4610
        %v4627 = vsub.f32 %v4561, %v4611
        %v4628 = vsub.f32 %v4562, %v4612
        %v4629 = vsub.f32 %v4563, %v4613
        %v4630 = vsub.f32 %v4564, %v4614
        %v4631 = vmul.f32 %v4615, %v4615
        %v4632 = vmul.f32 %v4616, %v4616
        %v4633 = vmul.f32 %v4617, %v4617
        %v4634 = vmul.f32 %v4618, %v4618
        %v4635 = vmul.f32 %v4619, %v4619
        %v4636 = vmul.f32 %v4620, %v4620
        %v4637 = vmul.f32 %v4621, %v4621
        %v4638 = vmul.f32 %v4622, %v4622
        %v4639 = vmul.f32 %v4623, %v4623
        %v4640 = vmul.f32 %v4624, %v4624
        %v4641 = vmul.f32 %v4625, %v4625
        %v4642 = vmul.f32 %v4626, %v4626
        %v4643 = vmul.f32 %v4627, %v4627
        %v4644 = vmul.f32 %v4628, %v4628
        %v4645 = vmul.f32 %v4629, %v4629
        %v4646 = vmul.f32 %v4630, %v4630
        %4647 = vadd.xlane.f32.xlu0 %v4631
        %v4648 = vpop.xlane.xlu0 %4647
        %4649 = vadd.xlane.f32.xlu0 %v4632
        %v4650 = vpop.xlane.xlu0 %4649
        %4651 = vadd.xlane.f32.xlu0 %v4633
        %v4652 = vpop.xlane.xlu0 %4651
        %4653 = vadd.xlane.f32.xlu0 %v4634
        %v4654 = vpop.xlane.xlu0 %4653
        %4655 = vadd.xlane.f32.xlu0 %v4635
        %v4656 = vpop.xlane.xlu0 %4655
        %4657 = vadd.xlane.f32.xlu0 %v4636
        %v4658 = vpop.xlane.xlu0 %4657
        %4659 = vadd.xlane.f32.xlu0 %v4637
        %v4660 = vpop.xlane.xlu0 %4659
        %4661 = vadd.xlane.f32.xlu0 %v4638
        %v4662 = vpop.xlane.xlu0 %4661
        %4663 = vadd.xlane.f32.xlu0 %v4639
        %v4664 = vpop.xlane.xlu0 %4663
        %4665 = vadd.xlane.f32.xlu0 %v4640
        %v4666 = vpop.xlane.xlu0 %4665
        %4667 = vadd.xlane.f32.xlu0 %v4641
        %v4668 = vpop.xlane.xlu0 %4667
        %4669 = vadd.xlane.f32.xlu0 %v4642
        %v4670 = vpop.xlane.xlu0 %4669
        %4671 = vadd.xlane.f32.xlu0 %v4643
        %v4672 = vpop.xlane.xlu0 %4671
        %4673 = vadd.xlane.f32.xlu0 %v4644
        %v4674 = vpop.xlane.xlu0 %4673
        %4675 = vadd.xlane.f32.xlu0 %v4645
        %v4676 = vpop.xlane.xlu0 %4675
        %4677 = vadd.xlane.f32.xlu0 %v4646
        %v4678 = vpop.xlane.xlu0 %4677
        %v4679 = vmul.f32 %v4648, %v1211
        %v4680 = vmul.f32 %v4650, %v1211
        %v4681 = vmul.f32 %v4652, %v1211
        %v4682 = vmul.f32 %v4654, %v1211
        %v4683 = vmul.f32 %v4656, %v1211
        %v4684 = vmul.f32 %v4658, %v1211
        %v4685 = vmul.f32 %v4660, %v1211
        %v4686 = vmul.f32 %v4662, %v1211
        %v4687 = vmul.f32 %v4664, %v1211
        %v4688 = vmul.f32 %v4666, %v1211
        %v4689 = vmul.f32 %v4668, %v1211
        %v4690 = vmul.f32 %v4670, %v1211
        %v4691 = vmul.f32 %v4672, %v1211
        %v4692 = vmul.f32 %v4674, %v1211
        %v4693 = vmul.f32 %v4676, %v1211
        %v4694 = vmul.f32 %v4678, %v1211
        %v4695 = vadd.f32 %v4679, 0.1
        %v4696 = vadd.f32 %v4680, 0.1
        %v4697 = vadd.f32 %v4681, 0.1
        %v4698 = vadd.f32 %v4682, 0.1
        %v4699 = vadd.f32 %v4683, 0.1
        %v4700 = vadd.f32 %v4684, 0.1
        %v4701 = vadd.f32 %v4685, 0.1
        %v4702 = vadd.f32 %v4686, 0.1
        %v4703 = vadd.f32 %v4687, 0.1
        %v4704 = vadd.f32 %v4688, 0.1
        %v4705 = vadd.f32 %v4689, 0.1
        %v4706 = vadd.f32 %v4690, 0.1
        %v4707 = vadd.f32 %v4691, 0.1
        %v4708 = vadd.f32 %v4692, 0.1
        %v4709 = vadd.f32 %v4693, 0.1
        %v4710 = vadd.f32 %v4694, 0.1
        %v4711 = vrsqrt.pop %v4695
        %v4712 = vrsqrt.pop %v4696
        %v4713 = vrsqrt.pop %v4697
        %v4714 = vrsqrt.pop %v4698
        %v4715 = vrsqrt.pop %v4699
        %v4716 = vrsqrt.pop %v4700
        %v4717 = vrsqrt.pop %v4701
        %v4718 = vrsqrt.pop %v4702
        %v4719 = vrsqrt.pop %v4703
        %v4720 = vrsqrt.pop %v4704
        %v4721 = vrsqrt.pop %v4705
        %v4722 = vrsqrt.pop %v4706
        %v4723 = vrsqrt.pop %v4707
        %v4724 = vrsqrt.pop %v4708
        %v4725 = vrsqrt.pop %v4709
        %v4726 = vrsqrt.pop %v4710
        %v4727 = vmul.f32 %v4615, %v4711
        %v4728 = vmul.f32 %v4616, %v4712
        %v4729 = vmul.f32 %v4617, %v4713
        %v4730 = vmul.f32 %v4618, %v4714
        %v4731 = vmul.f32 %v4619, %v4715
        %v4732 = vmul.f32 %v4620, %v4716
        %v4733 = vmul.f32 %v4621, %v4717
        %v4734 = vmul.f32 %v4622, %v4718
        %v4735 = vmul.f32 %v4623, %v4719
        %v4736 = vmul.f32 %v4624, %v4720
        %v4737 = vmul.f32 %v4625, %v4721
        %v4738 = vmul.f32 %v4626, %v4722
        %v4739 = vmul.f32 %v4627, %v4723
        %v4740 = vmul.f32 %v4628, %v4724
        %v4741 = vmul.f32 %v4629, %v4725
        %v4742 = vmul.f32 %v4630, %v4726
        %v4743 = vlaneseq
        %v4744 = vshrl.u32 %v4743, 7
        %v4745 = vsub.s32 0, %v4744
        %v4746 = vrot.slane %v4565, %v4745
        %v4747 = vmul.f32 %v4727, %v4746
        %v4748 = vmul.f32 %v4728, %v4746
        %v4749 = vmul.f32 %v4729, %v4746
        %v4750 = vmul.f32 %v4730, %v4746
        %v4751 = vmul.f32 %v4731, %v4746
        %v4752 = vmul.f32 %v4732, %v4746
        %v4753 = vmul.f32 %v4733, %v4746
        %v4754 = vmul.f32 %v4734, %v4746
        %v4755 = vmul.f32 %v4735, %v4746
        %v4756 = vmul.f32 %v4736, %v4746
        %v4757 = vmul.f32 %v4737, %v4746
        %v4758 = vmul.f32 %v4738, %v4746
        %v4759 = vmul.f32 %v4739, %v4746
        %v4760 = vmul.f32 %v4740, %v4746
        %v4761 = vmul.f32 %v4741, %v4746
        %v4762 = vmul.f32 %v4742, %v4746
        %v4763 = vlaneseq
        %v4764 = vshrl.u32 %v4763, 7
        %v4765 = vsub.s32 0, %v4764
        %v4766 = vrot.slane %v4566, %v4765
        %v4767 = vadd.f32 %v4747, %v4766
        %v4768 = vadd.f32 %v4748, %v4766
        %v4769 = vadd.f32 %v4749, %v4766
        %v4770 = vadd.f32 %v4750, %v4766
        %v4771 = vadd.f32 %v4751, %v4766
        %v4772 = vadd.f32 %v4752, %v4766
        %v4773 = vadd.f32 %v4753, %v4766
        %v4774 = vadd.f32 %v4754, %v4766
        %v4775 = vadd.f32 %v4755, %v4766
        %v4776 = vadd.f32 %v4756, %v4766
        %v4777 = vadd.f32 %v4757, %v4766
        %v4778 = vadd.f32 %v4758, %v4766
        %v4779 = vadd.f32 %v4759, %v4766
        %v4780 = vadd.f32 %v4760, %v4766
        %v4781 = vadd.f32 %v4761, %v4766
        %v4782 = vadd.f32 %v4762, %v4766
        %v4783 = vadd.f32 %v4246, %v4767
        %v4784 = vadd.f32 %v4247, %v4768
        %v4785 = vadd.f32 %v4248, %v4769
        %v4786 = vadd.f32 %v4249, %v4770
        %v4787 = vadd.f32 %v4250, %v4771
        %v4788 = vadd.f32 %v4251, %v4772
        %v4789 = vadd.f32 %v4252, %v4773
        %v4790 = vadd.f32 %v4253, %v4774
        %v4791 = vadd.f32 %v4254, %v4775
        %v4792 = vadd.f32 %v4255, %v4776
        %v4793 = vadd.f32 %v4256, %v4777
        %v4794 = vadd.f32 %v4257, %v4778
        %v4795 = vadd.f32 %v4258, %v4779
        %v4796 = vadd.f32 %v4259, %v4780
        %v4797 = vadd.f32 %v4260, %v4781
        %v4798 = vadd.f32 %v4261, %v4782
        %v4799 = vpack.c.bf16 %v4768, %v4767
        %v4800 = vpack.c.bf16 %v4770, %v4769
        %v4801 = vpack.c.bf16 %v4772, %v4771
        %v4802 = vpack.c.bf16 %v4774, %v4773
        %v4803 = vpack.c.bf16 %v4776, %v4775
        %v4804 = vpack.c.bf16 %v4778, %v4777
        %v4805 = vpack.c.bf16 %v4780, %v4779
        %v4806 = vpack.c.bf16 %v4782, %v4781
        %s4807 = scalar_lea.vmem [#allocation6], 320
        %v4808 = vld [vmem:[%s4807] sm:$0xf]
        %v4809 = vld [vmem:[%s4807 + $0x4] sm:$0xf]
        %v4810 = vld [vmem:[%s4807 + $0x8] sm:$0xf]
        %v4811 = vld [vmem:[%s4807 + $0xc] sm:$0xf]
        %v4812 = vld [vmem:[%s4807 + $0x10] sm:$0xf]
        %v4813 = vld [vmem:[%s4807 + $0x14] sm:$0xf]
        %v4814 = vld [vmem:[%s4807 + $0x18] sm:$0xf]
        %v4815 = vld [vmem:[%s4807 + $0x1c] sm:$0xf]
        %v4816 = vld [vmem:[%s4807 + $0x20] sm:$0xf]
        %v4817 = vld [vmem:[%s4807 + $0x24] sm:$0xf]
        %v4818 = vld [vmem:[%s4807 + $0x28] sm:$0xf]
        %v4819 = vld [vmem:[%s4807 + $0x2c] sm:$0xf]
        %v4820 = vld [vmem:[%s4807 + $0x30] sm:$0xf]
        %v4821 = vld [vmem:[%s4807 + $0x34] sm:$0xf]
        %v4822 = vld [vmem:[%s4807 + $0x38] sm:$0xf]
        %v4823 = vld [vmem:[%s4807 + $0x3c] sm:$0xf]
        %v4824 = vld [vmem:[#allocation7 + $0x5] sm:$0x1]
        %v4825 = vlaneseq
        %v4826 = vshrl.u32 %v4825, 7
        %v4827 = vsub.s32 0, %v4826
        %v4828 = vrot.slane %v4824, %v4827
        %v4845 = vunpack.c.l.b16 %v4808
        %v4846 = vunpack.c.l.b16 %v4809
        %v4847 = vunpack.c.l.b16 %v4810
        %v4848 = vunpack.c.l.b16 %v4811
        %v4849 = vunpack.c.l.b16 %v4812
        %v4850 = vunpack.c.l.b16 %v4813
        %v4851 = vunpack.c.l.b16 %v4814
        %v4852 = vunpack.c.l.b16 %v4815
        %v4853 = vunpack.c.l.b16 %v4816
        %v4854 = vunpack.c.l.b16 %v4817
        %v4855 = vunpack.c.l.b16 %v4818
        %v4856 = vunpack.c.l.b16 %v4819
        %v4857 = vunpack.c.l.b16 %v4820
        %v4858 = vunpack.c.l.b16 %v4821
        %v4859 = vunpack.c.l.b16 %v4822
        %v4860 = vunpack.c.l.b16 %v4823
        %v4861 = vpack.c.b16 %v4846, %v4845
        %v4862 = vpack.c.b16 %v4848, %v4847
        %v4863 = vpack.c.b16 %v4850, %v4849
        %v4864 = vpack.c.b16 %v4852, %v4851
        %v4865 = vpack.c.b16 %v4854, %v4853
        %v4866 = vpack.c.b16 %v4856, %v4855
        %v4867 = vpack.c.b16 %v4858, %v4857
        %v4868 = vpack.c.b16 %v4860, %v4859
        %4877 = vmatprep.subr.bf16.mxu0 0
        %4878 = vmatpush1.bf16.msra.mxu0 %v4861
        %4879 = vmatprep.subr.bf16.mxu0 0
        %4880 = vmatpush1.bf16.msra.mxu0 %v4862
        %4881 = vmatprep.subr.bf16.mxu0 0
        %4882 = vmatpush1.bf16.msra.mxu0 %v4863
        %4883 = vmatprep.subr.bf16.mxu0 0
        %4884 = vmatpush1.bf16.msra.mxu0 %v4864
        %4885 = vmatprep.subr.bf16.mxu0 0
        %4886 = vmatpush1.bf16.msra.mxu0 %v4865
        %4887 = vmatprep.subr.bf16.mxu0 0
        %4888 = vmatpush1.bf16.msra.mxu0 %v4866
        %4889 = vmatprep.subr.bf16.mxu0 0
        %4890 = vmatpush1.bf16.msra.mxu0 %v4867
        %4891 = vmatprep.subr.bf16.mxu0 0
        %4892 = vmatpush1.bf16.msra.mxu0 %v4868
        %4893 = vmatprep.subr.bf16.mxu0 0
        %4894 = vmatpush1.bf16.msra.mxu0 0
        %4895 = vmatprep.subr.bf16.mxu0 0
        %4896 = vmatpush1.bf16.msra.mxu0 0
        %4897 = vmatprep.subr.bf16.mxu0 0
        %4898 = vmatpush1.bf16.msra.mxu0 0
        %4899 = vmatprep.subr.bf16.mxu0 0
        %4900 = vmatpush1.bf16.msra.mxu0 0
        %4901 = vmatprep.subr.bf16.mxu0 0
        %4902 = vmatpush1.bf16.msra.mxu0 0
        %4903 = vmatprep.subr.bf16.mxu0 0
        %4904 = vmatpush1.bf16.msra.mxu0 0
        %4905 = vmatprep.subr.bf16.mxu0 0
        %4906 = vmatpush1.bf16.msra.mxu0 0
        %4907 = vmatprep.subr.bf16.mxu0 0
        %4908 = vmatpush1.bf16.msra.mxu0 0
        %4909 = vmatprep.mubr.bf16.mxu0 0
        %4910 = vmatmul.mubr.bf16.gmra.mrb[0].mxu0 %v4799
        %v4911 = vpop.f32.mrb[0].mxu0
        %v4912 = vadd.f32 %v4828, %v4911
        %v4913 = vpop.f32.mrb[0].mxu0
        %v4914 = vpop.f32.mrb[0].mxu0
        %v4915 = vadd.f32 %v4828, %v4914
        %v4916 = vpop.f32.mrb[0].mxu0
        %4917 = vmatprep.mubr.bf16.mxu0 0
        %4918 = vmatmul.mubr.bf16.gmra.mrb[0].mxu0 %v4800
        %v4919 = vpop.f32.mrb[0].mxu0
        %v4920 = vadd.f32 %v4828, %v4919
        %v4921 = vpop.f32.mrb[0].mxu0
        %v4922 = vpop.f32.mrb[0].mxu0
        %v4923 = vadd.f32 %v4828, %v4922
        %v4924 = vpop.f32.mrb[0].mxu0
        %4925 = vmatprep.mubr.bf16.mxu0 0
        %4926 = vmatmul.mubr.bf16.gmra.mrb[0].mxu0 %v4801
        %v4927 = vpop.f32.mrb[0].mxu0
        %v4928 = vadd.f32 %v4828, %v4927
        %v4929 = vpop.f32.mrb[0].mxu0
        %v4930 = vpop.f32.mrb[0].mxu0
        %v4931 = vadd.f32 %v4828, %v4930
        %v4932 = vpop.f32.mrb[0].mxu0
        %4933 = vmatprep.mubr.bf16.mxu0 0
        %4934 = vmatmul.mubr.bf16.gmra.mrb[0].mxu0 %v4802
        %v4935 = vpop.f32.mrb[0].mxu0
        %v4936 = vadd.f32 %v4828, %v4935
        %v4937 = vpop.f32.mrb[0].mxu0
        %v4938 = vpop.f32.mrb[0].mxu0
        %v4939 = vadd.f32 %v4828, %v4938
        %v4940 = vpop.f32.mrb[0].mxu0
        %4941 = vmatprep.mubr.bf16.mxu0 0
        %4942 = vmatmul.mubr.bf16.gmra.mrb[0].mxu0 %v4803
        %v4943 = vpop.f32.mrb[0].mxu0
        %v4944 = vadd.f32 %v4828, %v4943
        %v4945 = vpop.f32.mrb[0].mxu0
        %v4946 = vpop.f32.mrb[0].mxu0
        %v4947 = vadd.f32 %v4828, %v4946
        %v4948 = vpop.f32.mrb[0].mxu0
        %4949 = vmatprep.mubr.bf16.mxu0 0
        %4950 = vmatmul.mubr.bf16.gmra.mrb[0].mxu0 %v4804
        %v4951 = vpop.f32.mrb[0].mxu0
        %v4952 = vadd.f32 %v4828, %v4951
        %v4953 = vpop.f32.mrb[0].mxu0
        %v4954 = vpop.f32.mrb[0].mxu0
        %v4955 = vadd.f32 %v4828, %v4954
        %v4956 = vpop.f32.mrb[0].mxu0
        %4957 = vmatprep.mubr.bf16.mxu0 0
        %4958 = vmatmul.mubr.bf16.gmra.mrb[0].mxu0 %v4805
        %v4959 = vpop.f32.mrb[0].mxu0
        %v4960 = vadd.f32 %v4828, %v4959
        %v4961 = vpop.f32.mrb[0].mxu0
        %v4962 = vpop.f32.mrb[0].mxu0
        %v4963 = vadd.f32 %v4828, %v4962
        %v4964 = vpop.f32.mrb[0].mxu0
        %4965 = vmatprep.mubr.bf16.mxu0 0
        %4966 = vmatmul.mubr.bf16.gmra.mrb[0].mxu0 %v4806
        %v4967 = vpop.f32.mrb[0].mxu0
        %v4968 = vadd.f32 %v4828, %v4967
        %v4969 = vpop.f32.mrb[0].mxu0
        %v4970 = vpop.f32.mrb[0].mxu0
        %v4971 = vadd.f32 %v4828, %v4970
        %v4972 = vpop.f32.mrb[0].mxu0
        %4973 = vdwg.mxu0
        %v4974 = vadd.f32 %v4912, %v4783
        %v4975 = vadd.f32 %v4915, %v4784
        %v4976 = vadd.f32 %v4920, %v4785
        %v4977 = vadd.f32 %v4923, %v4786
        %v4978 = vadd.f32 %v4928, %v4787
        %v4979 = vadd.f32 %v4931, %v4788
        %v4980 = vadd.f32 %v4936, %v4789
        %v4981 = vadd.f32 %v4939, %v4790
        %v4982 = vadd.f32 %v4944, %v4791
        %v4983 = vadd.f32 %v4947, %v4792
        %v4984 = vadd.f32 %v4952, %v4793
        %v4985 = vadd.f32 %v4955, %v4794
        %v4986 = vadd.f32 %v4960, %v4795
        %v4987 = vadd.f32 %v4963, %v4796
        %v4988 = vadd.f32 %v4968, %v4797
        %v4989 = vadd.f32 %v4971, %v4798
        %v4990 = vxor.u32 %v4974, 2147483648
        %v4991 = vxor.u32 %v4975, 2147483648
        %v4992 = vxor.u32 %v4976, 2147483648
        %v4993 = vxor.u32 %v4977, 2147483648
        %v4994 = vxor.u32 %v4978, 2147483648
        %v4995 = vxor.u32 %v4979, 2147483648
        %v4996 = vxor.u32 %v4980, 2147483648
        %v4997 = vxor.u32 %v4981, 2147483648
        %v4998 = vxor.u32 %v4982, 2147483648
        %v4999 = vxor.u32 %v4983, 2147483648
        %v5000 = vxor.u32 %v4984, 2147483648
        %v5001 = vxor.u32 %v4985, 2147483648
        %v5002 = vxor.u32 %v4986, 2147483648
        %v5003 = vxor.u32 %v4987, 2147483648
        %v5004 = vxor.u32 %v4988, 2147483648
        %v5005 = vxor.u32 %v4989, 2147483648
        %v5006 = vmul.f32 %v4990, 1.442695
        %v5007 = vpow.pop %v5006
        %v5008 = vmul.f32 %v4991, 1.442695
        %v5009 = vpow.pop %v5008
        %v5010 = vmul.f32 %v4992, 1.442695
        %v5011 = vpow.pop %v5010
        %v5012 = vmul.f32 %v4993, 1.442695
        %v5013 = vpow.pop %v5012
        %v5014 = vmul.f32 %v4994, 1.442695
        %v5015 = vpow.pop %v5014
        %v5016 = vmul.f32 %v4995, 1.442695
        %v5017 = vpow.pop %v5016
        %v5018 = vmul.f32 %v4996, 1.442695
        %v5019 = vpow.pop %v5018
        %v5020 = vmul.f32 %v4997, 1.442695
        %v5021 = vpow.pop %v5020
        %v5022 = vmul.f32 %v4998, 1.442695
        %v5023 = vpow.pop %v5022
        %v5024 = vmul.f32 %v4999, 1.442695
        %v5025 = vpow.pop %v5024
        %v5026 = vmul.f32 %v5000, 1.442695
        %v5027 = vpow.pop %v5026
        %v5028 = vmul.f32 %v5001, 1.442695
        %v5029 = vpow.pop %v5028
        %v5030 = vmul.f32 %v5002, 1.442695
        %v5031 = vpow.pop %v5030
        %v5032 = vmul.f32 %v5003, 1.442695
        %v5033 = vpow.pop %v5032
        %v5034 = vmul.f32 %v5004, 1.442695
        %v5035 = vpow.pop %v5034
        %v5036 = vmul.f32 %v5005, 1.442695
        %v5037 = vpow.pop %v5036
        %v5038 = vadd.f32 %v5007, 1.0
        %v5039 = vadd.f32 %v5009, 1.0
        %v5040 = vadd.f32 %v5011, 1.0
        %v5041 = vadd.f32 %v5013, 1.0
        %v5042 = vadd.f32 %v5015, 1.0
        %v5043 = vadd.f32 %v5017, 1.0
        %v5044 = vadd.f32 %v5019, 1.0
        %v5045 = vadd.f32 %v5021, 1.0
        %v5046 = vadd.f32 %v5023, 1.0
        %v5047 = vadd.f32 %v5025, 1.0
        %v5048 = vadd.f32 %v5027, 1.0
        %v5049 = vadd.f32 %v5029, 1.0
        %v5050 = vadd.f32 %v5031, 1.0
        %v5051 = vadd.f32 %v5033, 1.0
        %v5052 = vadd.f32 %v5035, 1.0
        %v5053 = vadd.f32 %v5037, 1.0
        %v5054 = vrcp.pop %v5038
        %v5055 = vmul.f32 1.0, %v5054
        %v5056 = vrcp.pop %v5039
        %v5057 = vmul.f32 1.0, %v5056
        %v5058 = vrcp.pop %v5040
        %v5059 = vmul.f32 1.0, %v5058
        %v5060 = vrcp.pop %v5041
        %v5061 = vmul.f32 1.0, %v5060
        %v5062 = vrcp.pop %v5042
        %v5063 = vmul.f32 1.0, %v5062
        %v5064 = vrcp.pop %v5043
        %v5065 = vmul.f32 1.0, %v5064
        %v5066 = vrcp.pop %v5044
        %v5067 = vmul.f32 1.0, %v5066
        %v5068 = vrcp.pop %v5045
        %v5069 = vmul.f32 1.0, %v5068
        %v5070 = vrcp.pop %v5046
        %v5071 = vmul.f32 1.0, %v5070
        %v5072 = vrcp.pop %v5047
        %v5073 = vmul.f32 1.0, %v5072
        %v5074 = vrcp.pop %v5048
        %v5075 = vmul.f32 1.0, %v5074
        %v5076 = vrcp.pop %v5049
        %v5077 = vmul.f32 1.0, %v5076
        %v5078 = vrcp.pop %v5050
        %v5079 = vmul.f32 1.0, %v5078
        %v5080 = vrcp.pop %v5051
        %v5081 = vmul.f32 1.0, %v5080
        %v5082 = vrcp.pop %v5052
        %v5083 = vmul.f32 1.0, %v5082
        %v5084 = vrcp.pop %v5053
        %v5085 = vmul.f32 1.0, %v5084
        %v5086 = vmul.f32 %v4974, %v5055
        %v5087 = vmul.f32 %v4975, %v5057
        %v5088 = vmul.f32 %v4976, %v5059
        %v5089 = vmul.f32 %v4977, %v5061
        %v5090 = vmul.f32 %v4978, %v5063
        %v5091 = vmul.f32 %v4979, %v5065
        %v5092 = vmul.f32 %v4980, %v5067
        %v5093 = vmul.f32 %v4981, %v5069
        %v5094 = vmul.f32 %v4982, %v5071
        %v5095 = vmul.f32 %v4983, %v5073
        %v5096 = vmul.f32 %v4984, %v5075
        %v5097 = vmul.f32 %v4985, %v5077
        %v5098 = vmul.f32 %v4986, %v5079
        %v5099 = vmul.f32 %v4987, %v5081
        %v5100 = vmul.f32 %v4988, %v5083
        %v5101 = vmul.f32 %v4989, %v5085
        %v5102 = vld [vmem:[%s5 + $0x7] sm:$0x1]
        %v5103 = vld [vmem:[#allocation9 + $0x7] sm:$0x1]
        %5104 = vadd.xlane.f32.xlu0 %v5086
        %v5105 = vpop.xlane.xlu0 %5104
        %5106 = vadd.xlane.f32.xlu0 %v5087
        %v5107 = vpop.xlane.xlu0 %5106
        %5108 = vadd.xlane.f32.xlu0 %v5088
        %v5109 = vpop.xlane.xlu0 %5108
        %5110 = vadd.xlane.f32.xlu0 %v5089
        %v5111 = vpop.xlane.xlu0 %5110
        %5112 = vadd.xlane.f32.xlu0 %v5090
        %v5113 = vpop.xlane.xlu0 %5112
        %5114 = vadd.xlane.f32.xlu0 %v5091
        %v5115 = vpop.xlane.xlu0 %5114
        %5116 = vadd.xlane.f32.xlu0 %v5092
        %v5117 = vpop.xlane.xlu0 %5116
        %5118 = vadd.xlane.f32.xlu0 %v5093
        %v5119 = vpop.xlane.xlu0 %5118
        %5120 = vadd.xlane.f32.xlu0 %v5094
        %v5121 = vpop.xlane.xlu0 %5120
        %5122 = vadd.xlane.f32.xlu0 %v5095
        %v5123 = vpop.xlane.xlu0 %5122
        %5124 = vadd.xlane.f32.xlu0 %v5096
        %v5125 = vpop.xlane.xlu0 %5124
        %5126 = vadd.xlane.f32.xlu0 %v5097
        %v5127 = vpop.xlane.xlu0 %5126
        %5128 = vadd.xlane.f32.xlu0 %v5098
        %v5129 = vpop.xlane.xlu0 %5128
        %5130 = vadd.xlane.f32.xlu0 %v5099
        %v5131 = vpop.xlane.xlu0 %5130
        %5132 = vadd.xlane.f32.xlu0 %v5100
        %v5133 = vpop.xlane.xlu0 %5132
        %5134 = vadd.xlane.f32.xlu0 %v5101
        %v5135 = vpop.xlane.xlu0 %5134
        %v5136 = vmul.f32 %v5105, %v1211
        %v5137 = vmul.f32 %v5107, %v1211
        %v5138 = vmul.f32 %v5109, %v1211
        %v5139 = vmul.f32 %v5111, %v1211
        %v5140 = vmul.f32 %v5113, %v1211
        %v5141 = vmul.f32 %v5115, %v1211
        %v5142 = vmul.f32 %v5117, %v1211
        %v5143 = vmul.f32 %v5119, %v1211
        %v5144 = vmul.f32 %v5121, %v1211
        %v5145 = vmul.f32 %v5123, %v1211
        %v5146 = vmul.f32 %v5125, %v1211
        %v5147 = vmul.f32 %v5127, %v1211
        %v5148 = vmul.f32 %v5129, %v1211
        %v5149 = vmul.f32 %v5131, %v1211
        %v5150 = vmul.f32 %v5133, %v1211
        %v5151 = vmul.f32 %v5135, %v1211
        %v5152 = vsub.f32 %v5086, %v5136
        %v5153 = vsub.f32 %v5087, %v5137
        %v5154 = vsub.f32 %v5088, %v5138
        %v5155 = vsub.f32 %v5089, %v5139
        %v5156 = vsub.f32 %v5090, %v5140
        %v5157 = vsub.f32 %v5091, %v5141
        %v5158 = vsub.f32 %v5092, %v5142
        %v5159 = vsub.f32 %v5093, %v5143
        %v5160 = vsub.f32 %v5094, %v5144
        %v5161 = vsub.f32 %v5095, %v5145
        %v5162 = vsub.f32 %v5096, %v5146
        %v5163 = vsub.f32 %v5097, %v5147
        %v5164 = vsub.f32 %v5098, %v5148
        %v5165 = vsub.f32 %v5099, %v5149
        %v5166 = vsub.f32 %v5100, %v5150
        %v5167 = vsub.f32 %v5101, %v5151
        %v5168 = vmul.f32 %v5152, %v5152
        %v5169 = vmul.f32 %v5153, %v5153
        %v5170 = vmul.f32 %v5154, %v5154
        %v5171 = vmul.f32 %v5155, %v5155
        %v5172 = vmul.f32 %v5156, %v5156
        %v5173 = vmul.f32 %v5157, %v5157
        %v5174 = vmul.f32 %v5158, %v5158
        %v5175 = vmul.f32 %v5159, %v5159
        %v5176 = vmul.f32 %v5160, %v5160
        %v5177 = vmul.f32 %v5161, %v5161
        %v5178 = vmul.f32 %v5162, %v5162
        %v5179 = vmul.f32 %v5163, %v5163
        %v5180 = vmul.f32 %v5164, %v5164
        %v5181 = vmul.f32 %v5165, %v5165
        %v5182 = vmul.f32 %v5166, %v5166
        %v5183 = vmul.f32 %v5167, %v5167
        %5184 = vadd.xlane.f32.xlu0 %v5168
        %v5185 = vpop.xlane.xlu0 %5184
        %5186 = vadd.xlane.f32.xlu0 %v5169
        %v5187 = vpop.xlane.xlu0 %5186
        %5188 = vadd.xlane.f32.xlu0 %v5170
        %v5189 = vpop.xlane.xlu0 %5188
        %5190 = vadd.xlane.f32.xlu0 %v5171
        %v5191 = vpop.xlane.xlu0 %5190
        %5192 = vadd.xlane.f32.xlu0 %v5172
        %v5193 = vpop.xlane.xlu0 %5192
        %5194 = vadd.xlane.f32.xlu0 %v5173
        %v5195 = vpop.xlane.xlu0 %5194
        %5196 = vadd.xlane.f32.xlu0 %v5174
        %v5197 = vpop.xlane.xlu0 %5196
        %5198 = vadd.xlane.f32.xlu0 %v5175
        %v5199 = vpop.xlane.xlu0 %5198
        %5200 = vadd.xlane.f32.xlu0 %v5176
        %v5201 = vpop.xlane.xlu0 %5200
        %5202 = vadd.xlane.f32.xlu0 %v5177
        %v5203 = vpop.xlane.xlu0 %5202
        %5204 = vadd.xlane.f32.xlu0 %v5178
        %v5205 = vpop.xlane.xlu0 %5204
        %5206 = vadd.xlane.f32.xlu0 %v5179
        %v5207 = vpop.xlane.xlu0 %5206
        %5208 = vadd.xlane.f32.xlu0 %v5180
        %v5209 = vpop.xlane.xlu0 %5208
        %5210 = vadd.xlane.f32.xlu0 %v5181
        %v5211 = vpop.xlane.xlu0 %5210
        %5212 = vadd.xlane.f32.xlu0 %v5182
        %v5213 = vpop.xlane.xlu0 %5212
        %5214 = vadd.xlane.f32.xlu0 %v5183
        %v5215 = vpop.xlane.xlu0 %5214
        %v5216 = vmul.f32 %v5185, %v1211
        %v5217 = vmul.f32 %v5187, %v1211
        %v5218 = vmul.f32 %v5189, %v1211
        %v5219 = vmul.f32 %v5191, %v1211
        %v5220 = vmul.f32 %v5193, %v1211
        %v5221 = vmul.f32 %v5195, %v1211
        %v5222 = vmul.f32 %v5197, %v1211
        %v5223 = vmul.f32 %v5199, %v1211
        %v5224 = vmul.f32 %v5201, %v1211
        %v5225 = vmul.f32 %v5203, %v1211
        %v5226 = vmul.f32 %v5205, %v1211
        %v5227 = vmul.f32 %v5207, %v1211
        %v5228 = vmul.f32 %v5209, %v1211
        %v5229 = vmul.f32 %v5211, %v1211
        %v5230 = vmul.f32 %v5213, %v1211
        %v5231 = vmul.f32 %v5215, %v1211
        %v5232 = vadd.f32 %v5216, 0.1
        %v5233 = vadd.f32 %v5217, 0.1
        %v5234 = vadd.f32 %v5218, 0.1
        %v5235 = vadd.f32 %v5219, 0.1
        %v5236 = vadd.f32 %v5220, 0.1
        %v5237 = vadd.f32 %v5221, 0.1
        %v5238 = vadd.f32 %v5222, 0.1
        %v5239 = vadd.f32 %v5223, 0.1
        %v5240 = vadd.f32 %v5224, 0.1
        %v5241 = vadd.f32 %v5225, 0.1
        %v5242 = vadd.f32 %v5226, 0.1
        %v5243 = vadd.f32 %v5227, 0.1
        %v5244 = vadd.f32 %v5228, 0.1
        %v5245 = vadd.f32 %v5229, 0.1
        %v5246 = vadd.f32 %v5230, 0.1
        %v5247 = vadd.f32 %v5231, 0.1
        %v5248 = vrsqrt.pop %v5232
        %v5249 = vrsqrt.pop %v5233
        %v5250 = vrsqrt.pop %v5234
        %v5251 = vrsqrt.pop %v5235
        %v5252 = vrsqrt.pop %v5236
        %v5253 = vrsqrt.pop %v5237
        %v5254 = vrsqrt.pop %v5238
        %v5255 = vrsqrt.pop %v5239
        %v5256 = vrsqrt.pop %v5240
        %v5257 = vrsqrt.pop %v5241
        %v5258 = vrsqrt.pop %v5242
        %v5259 = vrsqrt.pop %v5243
        %v5260 = vrsqrt.pop %v5244
        %v5261 = vrsqrt.pop %v5245
        %v5262 = vrsqrt.pop %v5246
        %v5263 = vrsqrt.pop %v5247
        %v5264 = vmul.f32 %v5152, %v5248
        %v5265 = vmul.f32 %v5153, %v5249
        %v5266 = vmul.f32 %v5154, %v5250
        %v5267 = vmul.f32 %v5155, %v5251
        %v5268 = vmul.f32 %v5156, %v5252
        %v5269 = vmul.f32 %v5157, %v5253
        %v5270 = vmul.f32 %v5158, %v5254
        %v5271 = vmul.f32 %v5159, %v5255
        %v5272 = vmul.f32 %v5160, %v5256
        %v5273 = vmul.f32 %v5161, %v5257
        %v5274 = vmul.f32 %v5162, %v5258
        %v5275 = vmul.f32 %v5163, %v5259
        %v5276 = vmul.f32 %v5164, %v5260
        %v5277 = vmul.f32 %v5165, %v5261
        %v5278 = vmul.f32 %v5166, %v5262
        %v5279 = vmul.f32 %v5167, %v5263
        %v5280 = vlaneseq
        %v5281 = vshrl.u32 %v5280, 7
        %v5282 = vsub.s32 0, %v5281
        %v5283 = vrot.slane %v5102, %v5282
        %v5284 = vmul.f32 %v5264, %v5283
        %v5285 = vmul.f32 %v5265, %v5283
        %v5286 = vmul.f32 %v5266, %v5283
        %v5287 = vmul.f32 %v5267, %v5283
        %v5288 = vmul.f32 %v5268, %v5283
        %v5289 = vmul.f32 %v5269, %v5283
        %v5290 = vmul.f32 %v5270, %v5283
        %v5291 = vmul.f32 %v5271, %v5283
        %v5292 = vmul.f32 %v5272, %v5283
        %v5293 = vmul.f32 %v5273, %v5283
        %v5294 = vmul.f32 %v5274, %v5283
        %v5295 = vmul.f32 %v5275, %v5283
        %v5296 = vmul.f32 %v5276, %v5283
        %v5297 = vmul.f32 %v5277, %v5283
        %v5298 = vmul.f32 %v5278, %v5283
        %v5299 = vmul.f32 %v5279, %v5283
        %v5300 = vlaneseq
        %v5301 = vshrl.u32 %v5300, 7
        %v5302 = vsub.s32 0, %v5301
        %v5303 = vrot.slane %v5103, %v5302
        %v5304 = vadd.f32 %v5284, %v5303
        %v5305 = vadd.f32 %v5285, %v5303
        %v5306 = vadd.f32 %v5286, %v5303
        %v5307 = vadd.f32 %v5287, %v5303
        %v5308 = vadd.f32 %v5288, %v5303
        %v5309 = vadd.f32 %v5289, %v5303
        %v5310 = vadd.f32 %v5290, %v5303
        %v5311 = vadd.f32 %v5291, %v5303
        %v5312 = vadd.f32 %v5292, %v5303
        %v5313 = vadd.f32 %v5293, %v5303
        %v5314 = vadd.f32 %v5294, %v5303
        %v5315 = vadd.f32 %v5295, %v5303
        %v5316 = vadd.f32 %v5296, %v5303
        %v5317 = vadd.f32 %v5297, %v5303
        %v5318 = vadd.f32 %v5298, %v5303
        %v5319 = vadd.f32 %v5299, %v5303
        %v5320 = vadd.f32 %v4783, %v5304
        %v5321 = vadd.f32 %v4784, %v5305
        %v5322 = vadd.f32 %v4785, %v5306
        %v5323 = vadd.f32 %v4786, %v5307
        %v5324 = vadd.f32 %v4787, %v5308
        %v5325 = vadd.f32 %v4788, %v5309
        %v5326 = vadd.f32 %v4789, %v5310
        %v5327 = vadd.f32 %v4790, %v5311
        %v5328 = vadd.f32 %v4791, %v5312
        %v5329 = vadd.f32 %v4792, %v5313
        %v5330 = vadd.f32 %v4793, %v5314
        %v5331 = vadd.f32 %v4794, %v5315
        %v5332 = vadd.f32 %v4795, %v5316
        %v5333 = vadd.f32 %v4796, %v5317
        %v5334 = vadd.f32 %v4797, %v5318
        %v5335 = vadd.f32 %v4798, %v5319
        %v5336 = vpack.c.bf16 %v5305, %v5304
        %v5337 = vpack.c.bf16 %v5307, %v5306
        %v5338 = vpack.c.bf16 %v5309, %v5308
        %v5339 = vpack.c.bf16 %v5311, %v5310
        %v5340 = vpack.c.bf16 %v5313, %v5312
        %v5341 = vpack.c.bf16 %v5315, %v5314
        %v5342 = vpack.c.bf16 %v5317, %v5316
        %v5343 = vpack.c.bf16 %v5319, %v5318
        %s5344 = scalar_lea.vmem [#allocation6], 384
        %v5345 = vld [vmem:[%s5344] sm:$0xf]
        %v5346 = vld [vmem:[%s5344 + $0x4] sm:$0xf]
        %v5347 = vld [vmem:[%s5344 + $0x8] sm:$0xf]
        %v5348 = vld [vmem:[%s5344 + $0xc] sm:$0xf]
        %v5349 = vld [vmem:[%s5344 + $0x10] sm:$0xf]
        %v5350 = vld [vmem:[%s5344 + $0x14] sm:$0xf]
        %v5351 = vld [vmem:[%s5344 + $0x18] sm:$0xf]
        %v5352 = vld [vmem:[%s5344 + $0x1c] sm:$0xf]
        %v5353 = vld [vmem:[%s5344 + $0x20] sm:$0xf]
        %v5354 = vld [vmem:[%s5344 + $0x24] sm:$0xf]
        %v5355 = vld [vmem:[%s5344 + $0x28] sm:$0xf]
        %v5356 = vld [vmem:[%s5344 + $0x2c] sm:$0xf]
        %v5357 = vld [vmem:[%s5344 + $0x30] sm:$0xf]
        %v5358 = vld [vmem:[%s5344 + $0x34] sm:$0xf]
        %v5359 = vld [vmem:[%s5344 + $0x38] sm:$0xf]
        %v5360 = vld [vmem:[%s5344 + $0x3c] sm:$0xf]
        %v5361 = vld [vmem:[#allocation7 + $0x6] sm:$0x1]
        %v5362 = vlaneseq
        %v5363 = vshrl.u32 %v5362, 7
        %v5364 = vsub.s32 0, %v5363
        %v5365 = vrot.slane %v5361, %v5364
        %v5382 = vunpack.c.l.b16 %v5345
        %v5383 = vunpack.c.l.b16 %v5346
        %v5384 = vunpack.c.l.b16 %v5347
        %v5385 = vunpack.c.l.b16 %v5348
        %v5386 = vunpack.c.l.b16 %v5349
        %v5387 = vunpack.c.l.b16 %v5350
        %v5388 = vunpack.c.l.b16 %v5351
        %v5389 = vunpack.c.l.b16 %v5352
        %v5390 = vunpack.c.l.b16 %v5353
        %v5391 = vunpack.c.l.b16 %v5354
        %v5392 = vunpack.c.l.b16 %v5355
        %v5393 = vunpack.c.l.b16 %v5356
        %v5394 = vunpack.c.l.b16 %v5357
        %v5395 = vunpack.c.l.b16 %v5358
        %v5396 = vunpack.c.l.b16 %v5359
        %v5397 = vunpack.c.l.b16 %v5360
        %v5398 = vpack.c.b16 %v5383, %v5382
        %v5399 = vpack.c.b16 %v5385, %v5384
        %v5400 = vpack.c.b16 %v5387, %v5386
        %v5401 = vpack.c.b16 %v5389, %v5388
        %v5402 = vpack.c.b16 %v5391, %v5390
        %v5403 = vpack.c.b16 %v5393, %v5392
        %v5404 = vpack.c.b16 %v5395, %v5394
        %v5405 = vpack.c.b16 %v5397, %v5396
        %5414 = vmatprep.subr.bf16.mxu0 0
        %5415 = vmatpush1.bf16.msra.mxu0 %v5398
        %5416 = vmatprep.subr.bf16.mxu0 0
        %5417 = vmatpush1.bf16.msra.mxu0 %v5399
        %5418 = vmatprep.subr.bf16.mxu0 0
        %5419 = vmatpush1.bf16.msra.mxu0 %v5400
        %5420 = vmatprep.subr.bf16.mxu0 0
        %5421 = vmatpush1.bf16.msra.mxu0 %v5401
        %5422 = vmatprep.subr.bf16.mxu0 0
        %5423 = vmatpush1.bf16.msra.mxu0 %v5402
        %5424 = vmatprep.subr.bf16.mxu0 0
        %5425 = vmatpush1.bf16.msra.mxu0 %v5403
        %5426 = vmatprep.subr.bf16.mxu0 0
        %5427 = vmatpush1.bf16.msra.mxu0 %v5404
        %5428 = vmatprep.subr.bf16.mxu0 0
        %5429 = vmatpush1.bf16.msra.mxu0 %v5405
        %5430 = vmatprep.subr.bf16.mxu0 0
        %5431 = vmatpush1.bf16.msra.mxu0 0
        %5432 = vmatprep.subr.bf16.mxu0 0
        %5433 = vmatpush1.bf16.msra.mxu0 0
        %5434 = vmatprep.subr.bf16.mxu0 0
        %5435 = vmatpush1.bf16.msra.mxu0 0
        %5436 = vmatprep.subr.bf16.mxu0 0
        %5437 = vmatpush1.bf16.msra.mxu0 0
        %5438 = vmatprep.subr.bf16.mxu0 0
        %5439 = vmatpush1.bf16.msra.mxu0 0
        %5440 = vmatprep.subr.bf16.mxu0 0
        %5441 = vmatpush1.bf16.msra.mxu0 0
        %5442 = vmatprep.subr.bf16.mxu0 0
        %5443 = vmatpush1.bf16.msra.mxu0 0
        %5444 = vmatprep.subr.bf16.mxu0 0
        %5445 = vmatpush1.bf16.msra.mxu0 0
        %5446 = vmatprep.mubr.bf16.mxu0 0
        %5447 = vmatmul.mubr.bf16.gmra.mrb[0].mxu0 %v5336
        %v5448 = vpop.f32.mrb[0].mxu0
        %v5449 = vadd.f32 %v5365, %v5448
        %v5450 = vpop.f32.mrb[0].mxu0
        %v5451 = vpop.f32.mrb[0].mxu0
        %v5452 = vadd.f32 %v5365, %v5451
        %v5453 = vpop.f32.mrb[0].mxu0
        %5454 = vmatprep.mubr.bf16.mxu0 0
        %5455 = vmatmul.mubr.bf16.gmra.mrb[0].mxu0 %v5337
        %v5456 = vpop.f32.mrb[0].mxu0
        %v5457 = vadd.f32 %v5365, %v5456
        %v5458 = vpop.f32.mrb[0].mxu0
        %v5459 = vpop.f32.mrb[0].mxu0
        %v5460 = vadd.f32 %v5365, %v5459
        %v5461 = vpop.f32.mrb[0].mxu0
        %5462 = vmatprep.mubr.bf16.mxu0 0
        %5463 = vmatmul.mubr.bf16.gmra.mrb[0].mxu0 %v5338
        %v5464 = vpop.f32.mrb[0].mxu0
        %v5465 = vadd.f32 %v5365, %v5464
        %v5466 = vpop.f32.mrb[0].mxu0
        %v5467 = vpop.f32.mrb[0].mxu0
        %v5468 = vadd.f32 %v5365, %v5467
        %v5469 = vpop.f32.mrb[0].mxu0
        %5470 = vmatprep.mubr.bf16.mxu0 0
        %5471 = vmatmul.mubr.bf16.gmra.mrb[0].mxu0 %v5339
        %v5472 = vpop.f32.mrb[0].mxu0
        %v5473 = vadd.f32 %v5365, %v5472
        %v5474 = vpop.f32.mrb[0].mxu0
        %v5475 = vpop.f32.mrb[0].mxu0
        %v5476 = vadd.f32 %v5365, %v5475
        %v5477 = vpop.f32.mrb[0].mxu0
        %5478 = vmatprep.mubr.bf16.mxu0 0
        %5479 = vmatmul.mubr.bf16.gmra.mrb[0].mxu0 %v5340
        %v5480 = vpop.f32.mrb[0].mxu0
        %v5481 = vadd.f32 %v5365, %v5480
        %v5482 = vpop.f32.mrb[0].mxu0
        %v5483 = vpop.f32.mrb[0].mxu0
        %v5484 = vadd.f32 %v5365, %v5483
        %v5485 = vpop.f32.mrb[0].mxu0
        %5486 = vmatprep.mubr.bf16.mxu0 0
        %5487 = vmatmul.mubr.bf16.gmra.mrb[0].mxu0 %v5341
        %v5488 = vpop.f32.mrb[0].mxu0
        %v5489 = vadd.f32 %v5365, %v5488
        %v5490 = vpop.f32.mrb[0].mxu0
        %v5491 = vpop.f32.mrb[0].mxu0
        %v5492 = vadd.f32 %v5365, %v5491
        %v5493 = vpop.f32.mrb[0].mxu0
        %5494 = vmatprep.mubr.bf16.mxu0 0
        %5495 = vmatmul.mubr.bf16.gmra.mrb[0].mxu0 %v5342
        %v5496 = vpop.f32.mrb[0].mxu0
        %v5497 = vadd.f32 %v5365, %v5496
        %v5498 = vpop.f32.mrb[0].mxu0
        %v5499 = vpop.f32.mrb[0].mxu0
        %v5500 = vadd.f32 %v5365, %v5499
        %v5501 = vpop.f32.mrb[0].mxu0
        %5502 = vmatprep.mubr.bf16.mxu0 0
        %5503 = vmatmul.mubr.bf16.gmra.mrb[0].mxu0 %v5343
        %v5504 = vpop.f32.mrb[0].mxu0
        %v5505 = vadd.f32 %v5365, %v5504
        %v5506 = vpop.f32.mrb[0].mxu0
        %v5507 = vpop.f32.mrb[0].mxu0
        %v5508 = vadd.f32 %v5365, %v5507
        %v5509 = vpop.f32.mrb[0].mxu0
        %5510 = vdwg.mxu0
        %v5511 = vadd.f32 %v5449, %v5320
        %v5512 = vadd.f32 %v5452, %v5321
        %v5513 = vadd.f32 %v5457, %v5322
        %v5514 = vadd.f32 %v5460, %v5323
        %v5515 = vadd.f32 %v5465, %v5324
        %v5516 = vadd.f32 %v5468, %v5325
        %v5517 = vadd.f32 %v5473, %v5326
        %v5518 = vadd.f32 %v5476, %v5327
        %v5519 = vadd.f32 %v5481, %v5328
        %v5520 = vadd.f32 %v5484, %v5329
        %v5521 = vadd.f32 %v5489, %v5330
        %v5522 = vadd.f32 %v5492, %v5331
        %v5523 = vadd.f32 %v5497, %v5332
        %v5524 = vadd.f32 %v5500, %v5333
        %v5525 = vadd.f32 %v5505, %v5334
        %v5526 = vadd.f32 %v5508, %v5335
        %v5527 = vxor.u32 %v5511, 2147483648
        %v5528 = vxor.u32 %v5512, 2147483648
        %v5529 = vxor.u32 %v5513, 2147483648
        %v5530 = vxor.u32 %v5514, 2147483648
        %v5531 = vxor.u32 %v5515, 2147483648
        %v5532 = vxor.u32 %v5516, 2147483648
        %v5533 = vxor.u32 %v5517, 2147483648
        %v5534 = vxor.u32 %v5518, 2147483648
        %v5535 = vxor.u32 %v5519, 2147483648
        %v5536 = vxor.u32 %v5520, 2147483648
        %v5537 = vxor.u32 %v5521, 2147483648
        %v5538 = vxor.u32 %v5522, 2147483648
        %v5539 = vxor.u32 %v5523, 2147483648
        %v5540 = vxor.u32 %v5524, 2147483648
        %v5541 = vxor.u32 %v5525, 2147483648
        %v5542 = vxor.u32 %v5526, 2147483648
        %v5543 = vmul.f32 %v5527, 1.442695
        %v5544 = vpow.pop %v5543
        %v5545 = vmul.f32 %v5528, 1.442695
        %v5546 = vpow.pop %v5545
        %v5547 = vmul.f32 %v5529, 1.442695
        %v5548 = vpow.pop %v5547
        %v5549 = vmul.f32 %v5530, 1.442695
        %v5550 = vpow.pop %v5549
        %v5551 = vmul.f32 %v5531, 1.442695
        %v5552 = vpow.pop %v5551
        %v5553 = vmul.f32 %v5532, 1.442695
        %v5554 = vpow.pop %v5553
        %v5555 = vmul.f32 %v5533, 1.442695
        %v5556 = vpow.pop %v5555
        %v5557 = vmul.f32 %v5534, 1.442695
        %v5558 = vpow.pop %v5557
        %v5559 = vmul.f32 %v5535, 1.442695
        %v5560 = vpow.pop %v5559
        %v5561 = vmul.f32 %v5536, 1.442695
        %v5562 = vpow.pop %v5561
        %v5563 = vmul.f32 %v5537, 1.442695
        %v5564 = vpow.pop %v5563
        %v5565 = vmul.f32 %v5538, 1.442695
        %v5566 = vpow.pop %v5565
        %v5567 = vmul.f32 %v5539, 1.442695
        %v5568 = vpow.pop %v5567
        %v5569 = vmul.f32 %v5540, 1.442695
        %v5570 = vpow.pop %v5569
        %v5571 = vmul.f32 %v5541, 1.442695
        %v5572 = vpow.pop %v5571
        %v5573 = vmul.f32 %v5542, 1.442695
        %v5574 = vpow.pop %v5573
        %v5575 = vadd.f32 %v5544, 1.0
        %v5576 = vadd.f32 %v5546, 1.0
        %v5577 = vadd.f32 %v5548, 1.0
        %v5578 = vadd.f32 %v5550, 1.0
        %v5579 = vadd.f32 %v5552, 1.0
        %v5580 = vadd.f32 %v5554, 1.0
        %v5581 = vadd.f32 %v5556, 1.0
        %v5582 = vadd.f32 %v5558, 1.0
        %v5583 = vadd.f32 %v5560, 1.0
        %v5584 = vadd.f32 %v5562, 1.0
        %v5585 = vadd.f32 %v5564, 1.0
        %v5586 = vadd.f32 %v5566, 1.0
        %v5587 = vadd.f32 %v5568, 1.0
        %v5588 = vadd.f32 %v5570, 1.0
        %v5589 = vadd.f32 %v5572, 1.0
        %v5590 = vadd.f32 %v5574, 1.0
        %v5591 = vrcp.pop %v5575
        %v5592 = vmul.f32 1.0, %v5591
        %v5593 = vrcp.pop %v5576
        %v5594 = vmul.f32 1.0, %v5593
        %v5595 = vrcp.pop %v5577
        %v5596 = vmul.f32 1.0, %v5595
        %v5597 = vrcp.pop %v5578
        %v5598 = vmul.f32 1.0, %v5597
        %v5599 = vrcp.pop %v5579
        %v5600 = vmul.f32 1.0, %v5599
        %v5601 = vrcp.pop %v5580
        %v5602 = vmul.f32 1.0, %v5601
        %v5603 = vrcp.pop %v5581
        %v5604 = vmul.f32 1.0, %v5603
        %v5605 = vrcp.pop %v5582
        %v5606 = vmul.f32 1.0, %v5605
        %v5607 = vrcp.pop %v5583
        %v5608 = vmul.f32 1.0, %v5607
        %v5609 = vrcp.pop %v5584
        %v5610 = vmul.f32 1.0, %v5609
        %v5611 = vrcp.pop %v5585
        %v5612 = vmul.f32 1.0, %v5611
        %v5613 = vrcp.pop %v5586
        %v5614 = vmul.f32 1.0, %v5613
        %v5615 = vrcp.pop %v5587
        %v5616 = vmul.f32 1.0, %v5615
        %v5617 = vrcp.pop %v5588
        %v5618 = vmul.f32 1.0, %v5617
        %v5619 = vrcp.pop %v5589
        %v5620 = vmul.f32 1.0, %v5619
        %v5621 = vrcp.pop %v5590
        %v5622 = vmul.f32 1.0, %v5621
        %v5623 = vmul.f32 %v5511, %v5592
        %v5624 = vmul.f32 %v5512, %v5594
        %v5625 = vmul.f32 %v5513, %v5596
        %v5626 = vmul.f32 %v5514, %v5598
        %v5627 = vmul.f32 %v5515, %v5600
        %v5628 = vmul.f32 %v5516, %v5602
        %v5629 = vmul.f32 %v5517, %v5604
        %v5630 = vmul.f32 %v5518, %v5606
        %v5631 = vmul.f32 %v5519, %v5608
        %v5632 = vmul.f32 %v5520, %v5610
        %v5633 = vmul.f32 %v5521, %v5612
        %v5634 = vmul.f32 %v5522, %v5614
        %v5635 = vmul.f32 %v5523, %v5616
        %v5636 = vmul.f32 %v5524, %v5618
        %v5637 = vmul.f32 %v5525, %v5620
        %v5638 = vmul.f32 %v5526, %v5622
        %v5639 = vld [vmem:[%s5 + $0x8] sm:$0x1]
        %v5640 = vld [vmem:[#allocation9 + $0x8] sm:$0x1]
        %5641 = vadd.xlane.f32.xlu0 %v5623
        %v5642 = vpop.xlane.xlu0 %5641
        %5643 = vadd.xlane.f32.xlu0 %v5624
        %v5644 = vpop.xlane.xlu0 %5643
        %5645 = vadd.xlane.f32.xlu0 %v5625
        %v5646 = vpop.xlane.xlu0 %5645
        %5647 = vadd.xlane.f32.xlu0 %v5626
        %v5648 = vpop.xlane.xlu0 %5647
        %5649 = vadd.xlane.f32.xlu0 %v5627
        %v5650 = vpop.xlane.xlu0 %5649
        %5651 = vadd.xlane.f32.xlu0 %v5628
        %v5652 = vpop.xlane.xlu0 %5651
        %5653 = vadd.xlane.f32.xlu0 %v5629
        %v5654 = vpop.xlane.xlu0 %5653
        %5655 = vadd.xlane.f32.xlu0 %v5630
        %v5656 = vpop.xlane.xlu0 %5655
        %5657 = vadd.xlane.f32.xlu0 %v5631
        %v5658 = vpop.xlane.xlu0 %5657
        %5659 = vadd.xlane.f32.xlu0 %v5632
        %v5660 = vpop.xlane.xlu0 %5659
        %5661 = vadd.xlane.f32.xlu0 %v5633
        %v5662 = vpop.xlane.xlu0 %5661
        %5663 = vadd.xlane.f32.xlu0 %v5634
        %v5664 = vpop.xlane.xlu0 %5663
        %5665 = vadd.xlane.f32.xlu0 %v5635
        %v5666 = vpop.xlane.xlu0 %5665
        %5667 = vadd.xlane.f32.xlu0 %v5636
        %v5668 = vpop.xlane.xlu0 %5667
        %5669 = vadd.xlane.f32.xlu0 %v5637
        %v5670 = vpop.xlane.xlu0 %5669
        %5671 = vadd.xlane.f32.xlu0 %v5638
        %v5672 = vpop.xlane.xlu0 %5671
        %v5673 = vmul.f32 %v5642, %v1211
        %v5674 = vmul.f32 %v5644, %v1211
        %v5675 = vmul.f32 %v5646, %v1211
        %v5676 = vmul.f32 %v5648, %v1211
        %v5677 = vmul.f32 %v5650, %v1211
        %v5678 = vmul.f32 %v5652, %v1211
        %v5679 = vmul.f32 %v5654, %v1211
        %v5680 = vmul.f32 %v5656, %v1211
        %v5681 = vmul.f32 %v5658, %v1211
        %v5682 = vmul.f32 %v5660, %v1211
        %v5683 = vmul.f32 %v5662, %v1211
        %v5684 = vmul.f32 %v5664, %v1211
        %v5685 = vmul.f32 %v5666, %v1211
        %v5686 = vmul.f32 %v5668, %v1211
        %v5687 = vmul.f32 %v5670, %v1211
        %v5688 = vmul.f32 %v5672, %v1211
        %v5689 = vsub.f32 %v5623, %v5673
        %v5690 = vsub.f32 %v5624, %v5674
        %v5691 = vsub.f32 %v5625, %v5675
        %v5692 = vsub.f32 %v5626, %v5676
        %v5693 = vsub.f32 %v5627, %v5677
        %v5694 = vsub.f32 %v5628, %v5678
        %v5695 = vsub.f32 %v5629, %v5679
        %v5696 = vsub.f32 %v5630, %v5680
        %v5697 = vsub.f32 %v5631, %v5681
        %v5698 = vsub.f32 %v5632, %v5682
        %v5699 = vsub.f32 %v5633, %v5683
        %v5700 = vsub.f32 %v5634, %v5684
        %v5701 = vsub.f32 %v5635, %v5685
        %v5702 = vsub.f32 %v5636, %v5686
        %v5703 = vsub.f32 %v5637, %v5687
        %v5704 = vsub.f32 %v5638, %v5688
        %v5705 = vmul.f32 %v5689, %v5689
        %v5706 = vmul.f32 %v5690, %v5690
        %v5707 = vmul.f32 %v5691, %v5691
        %v5708 = vmul.f32 %v5692, %v5692
        %v5709 = vmul.f32 %v5693, %v5693
        %v5710 = vmul.f32 %v5694, %v5694
        %v5711 = vmul.f32 %v5695, %v5695
        %v5712 = vmul.f32 %v5696, %v5696
        %v5713 = vmul.f32 %v5697, %v5697
        %v5714 = vmul.f32 %v5698, %v5698
        %v5715 = vmul.f32 %v5699, %v5699
        %v5716 = vmul.f32 %v5700, %v5700
        %v5717 = vmul.f32 %v5701, %v5701
        %v5718 = vmul.f32 %v5702, %v5702
        %v5719 = vmul.f32 %v5703, %v5703
        %v5720 = vmul.f32 %v5704, %v5704
        %5721 = vadd.xlane.f32.xlu0 %v5705
        %v5722 = vpop.xlane.xlu0 %5721
        %5723 = vadd.xlane.f32.xlu0 %v5706
        %v5724 = vpop.xlane.xlu0 %5723
        %5725 = vadd.xlane.f32.xlu0 %v5707
        %v5726 = vpop.xlane.xlu0 %5725
        %5727 = vadd.xlane.f32.xlu0 %v5708
        %v5728 = vpop.xlane.xlu0 %5727
        %5729 = vadd.xlane.f32.xlu0 %v5709
        %v5730 = vpop.xlane.xlu0 %5729
        %5731 = vadd.xlane.f32.xlu0 %v5710
        %v5732 = vpop.xlane.xlu0 %5731
        %5733 = vadd.xlane.f32.xlu0 %v5711
        %v5734 = vpop.xlane.xlu0 %5733
        %5735 = vadd.xlane.f32.xlu0 %v5712
        %v5736 = vpop.xlane.xlu0 %5735
        %5737 = vadd.xlane.f32.xlu0 %v5713
        %v5738 = vpop.xlane.xlu0 %5737
        %5739 = vadd.xlane.f32.xlu0 %v5714
        %v5740 = vpop.xlane.xlu0 %5739
        %5741 = vadd.xlane.f32.xlu0 %v5715
        %v5742 = vpop.xlane.xlu0 %5741
        %5743 = vadd.xlane.f32.xlu0 %v5716
        %v5744 = vpop.xlane.xlu0 %5743
        %5745 = vadd.xlane.f32.xlu0 %v5717
        %v5746 = vpop.xlane.xlu0 %5745
        %5747 = vadd.xlane.f32.xlu0 %v5718
        %v5748 = vpop.xlane.xlu0 %5747
        %5749 = vadd.xlane.f32.xlu0 %v5719
        %v5750 = vpop.xlane.xlu0 %5749
        %5751 = vadd.xlane.f32.xlu0 %v5720
        %v5752 = vpop.xlane.xlu0 %5751
        %v5753 = vmul.f32 %v5722, %v1211
        %v5754 = vmul.f32 %v5724, %v1211
        %v5755 = vmul.f32 %v5726, %v1211
        %v5756 = vmul.f32 %v5728, %v1211
        %v5757 = vmul.f32 %v5730, %v1211
        %v5758 = vmul.f32 %v5732, %v1211
        %v5759 = vmul.f32 %v5734, %v1211
        %v5760 = vmul.f32 %v5736, %v1211
        %v5761 = vmul.f32 %v5738, %v1211
        %v5762 = vmul.f32 %v5740, %v1211
        %v5763 = vmul.f32 %v5742, %v1211
        %v5764 = vmul.f32 %v5744, %v1211
        %v5765 = vmul.f32 %v5746, %v1211
        %v5766 = vmul.f32 %v5748, %v1211
        %v5767 = vmul.f32 %v5750, %v1211
        %v5768 = vmul.f32 %v5752, %v1211
        %v5769 = vadd.f32 %v5753, 0.1
        %v5770 = vadd.f32 %v5754, 0.1
        %v5771 = vadd.f32 %v5755, 0.1
        %v5772 = vadd.f32 %v5756, 0.1
        %v5773 = vadd.f32 %v5757, 0.1
        %v5774 = vadd.f32 %v5758, 0.1
        %v5775 = vadd.f32 %v5759, 0.1
        %v5776 = vadd.f32 %v5760, 0.1
        %v5777 = vadd.f32 %v5761, 0.1
        %v5778 = vadd.f32 %v5762, 0.1
        %v5779 = vadd.f32 %v5763, 0.1
        %v5780 = vadd.f32 %v5764, 0.1
        %v5781 = vadd.f32 %v5765, 0.1
        %v5782 = vadd.f32 %v5766, 0.1
        %v5783 = vadd.f32 %v5767, 0.1
        %v5784 = vadd.f32 %v5768, 0.1
        %v5785 = vrsqrt.pop %v5769
        %v5786 = vrsqrt.pop %v5770
        %v5787 = vrsqrt.pop %v5771
        %v5788 = vrsqrt.pop %v5772
        %v5789 = vrsqrt.pop %v5773
        %v5790 = vrsqrt.pop %v5774
        %v5791 = vrsqrt.pop %v5775
        %v5792 = vrsqrt.pop %v5776
        %v5793 = vrsqrt.pop %v5777
        %v5794 = vrsqrt.pop %v5778
        %v5795 = vrsqrt.pop %v5779
        %v5796 = vrsqrt.pop %v5780
        %v5797 = vrsqrt.pop %v5781
        %v5798 = vrsqrt.pop %v5782
        %v5799 = vrsqrt.pop %v5783
        %v5800 = vrsqrt.pop %v5784
        %v5801 = vmul.f32 %v5689, %v5785
        %v5802 = vmul.f32 %v5690, %v5786
        %v5803 = vmul.f32 %v5691, %v5787
        %v5804 = vmul.f32 %v5692, %v5788
        %v5805 = vmul.f32 %v5693, %v5789
        %v5806 = vmul.f32 %v5694, %v5790
        %v5807 = vmul.f32 %v5695, %v5791
        %v5808 = vmul.f32 %v5696, %v5792
        %v5809 = vmul.f32 %v5697, %v5793
        %v5810 = vmul.f32 %v5698, %v5794
        %v5811 = vmul.f32 %v5699, %v5795
        %v5812 = vmul.f32 %v5700, %v5796
        %v5813 = vmul.f32 %v5701, %v5797
        %v5814 = vmul.f32 %v5702, %v5798
        %v5815 = vmul.f32 %v5703, %v5799
        %v5816 = vmul.f32 %v5704, %v5800
        %v5817 = vlaneseq
        %v5818 = vshrl.u32 %v5817, 7
        %v5819 = vsub.s32 0, %v5818
        %v5820 = vrot.slane %v5639, %v5819
        %v5821 = vmul.f32 %v5801, %v5820
        %v5822 = vmul.f32 %v5802, %v5820
        %v5823 = vmul.f32 %v5803, %v5820
        %v5824 = vmul.f32 %v5804, %v5820
        %v5825 = vmul.f32 %v5805, %v5820
        %v5826 = vmul.f32 %v5806, %v5820
        %v5827 = vmul.f32 %v5807, %v5820
        %v5828 = vmul.f32 %v5808, %v5820
        %v5829 = vmul.f32 %v5809, %v5820
        %v5830 = vmul.f32 %v5810, %v5820
        %v5831 = vmul.f32 %v5811, %v5820
        %v5832 = vmul.f32 %v5812, %v5820
        %v5833 = vmul.f32 %v5813, %v5820
        %v5834 = vmul.f32 %v5814, %v5820
        %v5835 = vmul.f32 %v5815, %v5820
        %v5836 = vmul.f32 %v5816, %v5820
        %v5837 = vlaneseq
        %v5838 = vshrl.u32 %v5837, 7
        %v5839 = vsub.s32 0, %v5838
        %v5840 = vrot.slane %v5640, %v5839
        %v5841 = vadd.f32 %v5821, %v5840
        %v5842 = vadd.f32 %v5822, %v5840
        %v5843 = vadd.f32 %v5823, %v5840
        %v5844 = vadd.f32 %v5824, %v5840
        %v5845 = vadd.f32 %v5825, %v5840
        %v5846 = vadd.f32 %v5826, %v5840
        %v5847 = vadd.f32 %v5827, %v5840
        %v5848 = vadd.f32 %v5828, %v5840
        %v5849 = vadd.f32 %v5829, %v5840
        %v5850 = vadd.f32 %v5830, %v5840
        %v5851 = vadd.f32 %v5831, %v5840
        %v5852 = vadd.f32 %v5832, %v5840
        %v5853 = vadd.f32 %v5833, %v5840
        %v5854 = vadd.f32 %v5834, %v5840
        %v5855 = vadd.f32 %v5835, %v5840
        %v5856 = vadd.f32 %v5836, %v5840
        %v5857 = vadd.f32 %v5320, %v5841
        %v5858 = vadd.f32 %v5321, %v5842
        %v5859 = vadd.f32 %v5322, %v5843
        %v5860 = vadd.f32 %v5323, %v5844
        %v5861 = vadd.f32 %v5324, %v5845
        %v5862 = vadd.f32 %v5325, %v5846
        %v5863 = vadd.f32 %v5326, %v5847
        %v5864 = vadd.f32 %v5327, %v5848
        %v5865 = vadd.f32 %v5328, %v5849
        %v5866 = vadd.f32 %v5329, %v5850
        %v5867 = vadd.f32 %v5330, %v5851
        %v5868 = vadd.f32 %v5331, %v5852
        %v5869 = vadd.f32 %v5332, %v5853
        %v5870 = vadd.f32 %v5333, %v5854
        %v5871 = vadd.f32 %v5334, %v5855
        %v5872 = vadd.f32 %v5335, %v5856
        %v5873 = vpack.c.bf16 %v5842, %v5841
        %v5874 = vpack.c.bf16 %v5844, %v5843
        %v5875 = vpack.c.bf16 %v5846, %v5845
        %v5876 = vpack.c.bf16 %v5848, %v5847
        %v5877 = vpack.c.bf16 %v5850, %v5849
        %v5878 = vpack.c.bf16 %v5852, %v5851
        %v5879 = vpack.c.bf16 %v5854, %v5853
        %v5880 = vpack.c.bf16 %v5856, %v5855
        %s5881 = scalar_lea.vmem [#allocation6], 448
        %v5882 = vld [vmem:[%s5881] sm:$0xf]
        %v5883 = vld [vmem:[%s5881 + $0x4] sm:$0xf]
        %v5884 = vld [vmem:[%s5881 + $0x8] sm:$0xf]
        %v5885 = vld [vmem:[%s5881 + $0xc] sm:$0xf]
        %v5886 = vld [vmem:[%s5881 + $0x10] sm:$0xf]
        %v5887 = vld [vmem:[%s5881 + $0x14] sm:$0xf]
        %v5888 = vld [vmem:[%s5881 + $0x18] sm:$0xf]
        %v5889 = vld [vmem:[%s5881 + $0x1c] sm:$0xf]
        %v5890 = vld [vmem:[%s5881 + $0x20] sm:$0xf]
        %v5891 = vld [vmem:[%s5881 + $0x24] sm:$0xf]
        %v5892 = vld [vmem:[%s5881 + $0x28] sm:$0xf]
        %v5893 = vld [vmem:[%s5881 + $0x2c] sm:$0xf]
        %v5894 = vld [vmem:[%s5881 + $0x30] sm:$0xf]
        %v5895 = vld [vmem:[%s5881 + $0x34] sm:$0xf]
        %v5896 = vld [vmem:[%s5881 + $0x38] sm:$0xf]
        %v5897 = vld [vmem:[%s5881 + $0x3c] sm:$0xf]
        %v5898 = vld [vmem:[#allocation7 + $0x7] sm:$0x1]
        %v5899 = vlaneseq
        %v5900 = vshrl.u32 %v5899, 7
        %v5901 = vsub.s32 0, %v5900
        %v5902 = vrot.slane %v5898, %v5901
        %v5919 = vunpack.c.l.b16 %v5882
        %v5920 = vunpack.c.l.b16 %v5883
        %v5921 = vunpack.c.l.b16 %v5884
        %v5922 = vunpack.c.l.b16 %v5885
        %v5923 = vunpack.c.l.b16 %v5886
        %v5924 = vunpack.c.l.b16 %v5887
        %v5925 = vunpack.c.l.b16 %v5888
        %v5926 = vunpack.c.l.b16 %v5889
        %v5927 = vunpack.c.l.b16 %v5890
        %v5928 = vunpack.c.l.b16 %v5891
        %v5929 = vunpack.c.l.b16 %v5892
        %v5930 = vunpack.c.l.b16 %v5893
        %v5931 = vunpack.c.l.b16 %v5894
        %v5932 = vunpack.c.l.b16 %v5895
        %v5933 = vunpack.c.l.b16 %v5896
        %v5934 = vunpack.c.l.b16 %v5897
        %v5935 = vpack.c.b16 %v5920, %v5919
        %v5936 = vpack.c.b16 %v5922, %v5921
        %v5937 = vpack.c.b16 %v5924, %v5923
        %v5938 = vpack.c.b16 %v5926, %v5925
        %v5939 = vpack.c.b16 %v5928, %v5927
        %v5940 = vpack.c.b16 %v5930, %v5929
        %v5941 = vpack.c.b16 %v5932, %v5931
        %v5942 = vpack.c.b16 %v5934, %v5933
        %5951 = vmatprep.subr.bf16.mxu0 0
        %5952 = vmatpush1.bf16.msra.mxu0 %v5935
        %5953 = vmatprep.subr.bf16.mxu0 0
        %5954 = vmatpush1.bf16.msra.mxu0 %v5936
        %5955 = vmatprep.subr.bf16.mxu0 0
        %5956 = vmatpush1.bf16.msra.mxu0 %v5937
        %5957 = vmatprep.subr.bf16.mxu0 0
        %5958 = vmatpush1.bf16.msra.mxu0 %v5938
        %5959 = vmatprep.subr.bf16.mxu0 0
        %5960 = vmatpush1.bf16.msra.mxu0 %v5939
        %5961 = vmatprep.subr.bf16.mxu0 0
        %5962 = vmatpush1.bf16.msra.mxu0 %v5940
        %5963 = vmatprep.subr.bf16.mxu0 0
        %5964 = vmatpush1.bf16.msra.mxu0 %v5941
        %5965 = vmatprep.subr.bf16.mxu0 0
        %5966 = vmatpush1.bf16.msra.mxu0 %v5942
        %5967 = vmatprep.subr.bf16.mxu0 0
        %5968 = vmatpush1.bf16.msra.mxu0 0
        %5969 = vmatprep.subr.bf16.mxu0 0
        %5970 = vmatpush1.bf16.msra.mxu0 0
        %5971 = vmatprep.subr.bf16.mxu0 0
        %5972 = vmatpush1.bf16.msra.mxu0 0
        %5973 = vmatprep.subr.bf16.mxu0 0
        %5974 = vmatpush1.bf16.msra.mxu0 0
        %5975 = vmatprep.subr.bf16.mxu0 0
        %5976 = vmatpush1.bf16.msra.mxu0 0
        %5977 = vmatprep.subr.bf16.mxu0 0
        %5978 = vmatpush1.bf16.msra.mxu0 0
        %5979 = vmatprep.subr.bf16.mxu0 0
        %5980 = vmatpush1.bf16.msra.mxu0 0
        %5981 = vmatprep.subr.bf16.mxu0 0
        %5982 = vmatpush1.bf16.msra.mxu0 0
        %5983 = vmatprep.mubr.bf16.mxu0 0
        %5984 = vmatmul.mubr.bf16.gmra.mrb[0].mxu0 %v5873
        %v5985 = vpop.f32.mrb[0].mxu0
        %v5986 = vadd.f32 %v5902, %v5985
        %v5987 = vpop.f32.mrb[0].mxu0
        %v5988 = vpop.f32.mrb[0].mxu0
        %v5989 = vadd.f32 %v5902, %v5988
        %v5990 = vpop.f32.mrb[0].mxu0
        %5991 = vmatprep.mubr.bf16.mxu0 0
        %5992 = vmatmul.mubr.bf16.gmra.mrb[0].mxu0 %v5874
        %v5993 = vpop.f32.mrb[0].mxu0
        %v5994 = vadd.f32 %v5902, %v5993
        %v5995 = vpop.f32.mrb[0].mxu0
        %v5996 = vpop.f32.mrb[0].mxu0
        %v5997 = vadd.f32 %v5902, %v5996
        %v5998 = vpop.f32.mrb[0].mxu0
        %5999 = vmatprep.mubr.bf16.mxu0 0
        %6000 = vmatmul.mubr.bf16.gmra.mrb[0].mxu0 %v5875
        %v6001 = vpop.f32.mrb[0].mxu0
        %v6002 = vadd.f32 %v5902, %v6001
        %v6003 = vpop.f32.mrb[0].mxu0
        %v6004 = vpop.f32.mrb[0].mxu0
        %v6005 = vadd.f32 %v5902, %v6004
        %v6006 = vpop.f32.mrb[0].mxu0
        %6007 = vmatprep.mubr.bf16.mxu0 0
        %6008 = vmatmul.mubr.bf16.gmra.mrb[0].mxu0 %v5876
        %v6009 = vpop.f32.mrb[0].mxu0
        %v6010 = vadd.f32 %v5902, %v6009
        %v6011 = vpop.f32.mrb[0].mxu0
        %v6012 = vpop.f32.mrb[0].mxu0
        %v6013 = vadd.f32 %v5902, %v6012
        %v6014 = vpop.f32.mrb[0].mxu0
        %6015 = vmatprep.mubr.bf16.mxu0 0
        %6016 = vmatmul.mubr.bf16.gmra.mrb[0].mxu0 %v5877
        %v6017 = vpop.f32.mrb[0].mxu0
        %v6018 = vadd.f32 %v5902, %v6017
        %v6019 = vpop.f32.mrb[0].mxu0
        %v6020 = vpop.f32.mrb[0].mxu0
        %v6021 = vadd.f32 %v5902, %v6020
        %v6022 = vpop.f32.mrb[0].mxu0
        %6023 = vmatprep.mubr.bf16.mxu0 0
        %6024 = vmatmul.mubr.bf16.gmra.mrb[0].mxu0 %v5878
        %v6025 = vpop.f32.mrb[0].mxu0
        %v6026 = vadd.f32 %v5902, %v6025
        %v6027 = vpop.f32.mrb[0].mxu0
        %v6028 = vpop.f32.mrb[0].mxu0
        %v6029 = vadd.f32 %v5902, %v6028
        %v6030 = vpop.f32.mrb[0].mxu0
        %6031 = vmatprep.mubr.bf16.mxu0 0
        %6032 = vmatmul.mubr.bf16.gmra.mrb[0].mxu0 %v5879
        %v6033 = vpop.f32.mrb[0].mxu0
        %v6034 = vadd.f32 %v5902, %v6033
        %v6035 = vpop.f32.mrb[0].mxu0
        %v6036 = vpop.f32.mrb[0].mxu0
        %v6037 = vadd.f32 %v5902, %v6036
        %v6038 = vpop.f32.mrb[0].mxu0
        %6039 = vmatprep.mubr.bf16.mxu0 0
        %6040 = vmatmul.mubr.bf16.gmra.mrb[0].mxu0 %v5880
        %v6041 = vpop.f32.mrb[0].mxu0
        %v6042 = vadd.f32 %v5902, %v6041
        %v6043 = vpop.f32.mrb[0].mxu0
        %v6044 = vpop.f32.mrb[0].mxu0
        %v6045 = vadd.f32 %v5902, %v6044
        %v6046 = vpop.f32.mrb[0].mxu0
        %6047 = vdwg.mxu0
        %v6048 = vadd.f32 %v5986, %v5857
        %v6049 = vadd.f32 %v5989, %v5858
        %v6050 = vadd.f32 %v5994, %v5859
        %v6051 = vadd.f32 %v5997, %v5860
        %v6052 = vadd.f32 %v6002, %v5861
        %v6053 = vadd.f32 %v6005, %v5862
        %v6054 = vadd.f32 %v6010, %v5863
        %v6055 = vadd.f32 %v6013, %v5864
        %v6056 = vadd.f32 %v6018, %v5865
        %v6057 = vadd.f32 %v6021, %v5866
        %v6058 = vadd.f32 %v6026, %v5867
        %v6059 = vadd.f32 %v6029, %v5868
        %v6060 = vadd.f32 %v6034, %v5869
        %v6061 = vadd.f32 %v6037, %v5870
        %v6062 = vadd.f32 %v6042, %v5871
        %v6063 = vadd.f32 %v6045, %v5872
        %v6064 = vxor.u32 %v6048, 2147483648
        %v6065 = vxor.u32 %v6049, 2147483648
        %v6066 = vxor.u32 %v6050, 2147483648
        %v6067 = vxor.u32 %v6051, 2147483648
        %v6068 = vxor.u32 %v6052, 2147483648
        %v6069 = vxor.u32 %v6053, 2147483648
        %v6070 = vxor.u32 %v6054, 2147483648
        %v6071 = vxor.u32 %v6055, 2147483648
        %v6072 = vxor.u32 %v6056, 2147483648
        %v6073 = vxor.u32 %v6057, 2147483648
        %v6074 = vxor.u32 %v6058, 2147483648
        %v6075 = vxor.u32 %v6059, 2147483648
        %v6076 = vxor.u32 %v6060, 2147483648
        %v6077 = vxor.u32 %v6061, 2147483648
        %v6078 = vxor.u32 %v6062, 2147483648
        %v6079 = vxor.u32 %v6063, 2147483648
        %v6080 = vmul.f32 %v6064, 1.442695
        %v6081 = vpow.pop %v6080
        %v6082 = vmul.f32 %v6065, 1.442695
        %v6083 = vpow.pop %v6082
        %v6084 = vmul.f32 %v6066, 1.442695
        %v6085 = vpow.pop %v6084
        %v6086 = vmul.f32 %v6067, 1.442695
        %v6087 = vpow.pop %v6086
        %v6088 = vmul.f32 %v6068, 1.442695
        %v6089 = vpow.pop %v6088
        %v6090 = vmul.f32 %v6069, 1.442695
        %v6091 = vpow.pop %v6090
        %v6092 = vmul.f32 %v6070, 1.442695
        %v6093 = vpow.pop %v6092
        %v6094 = vmul.f32 %v6071, 1.442695
        %v6095 = vpow.pop %v6094
        %v6096 = vmul.f32 %v6072, 1.442695
        %v6097 = vpow.pop %v6096
        %v6098 = vmul.f32 %v6073, 1.442695
        %v6099 = vpow.pop %v6098
        %v6100 = vmul.f32 %v6074, 1.442695
        %v6101 = vpow.pop %v6100
        %v6102 = vmul.f32 %v6075, 1.442695
        %v6103 = vpow.pop %v6102
        %v6104 = vmul.f32 %v6076, 1.442695
        %v6105 = vpow.pop %v6104
        %v6106 = vmul.f32 %v6077, 1.442695
        %v6107 = vpow.pop %v6106
        %v6108 = vmul.f32 %v6078, 1.442695
        %v6109 = vpow.pop %v6108
        %v6110 = vmul.f32 %v6079, 1.442695
        %v6111 = vpow.pop %v6110
        %v6112 = vadd.f32 %v6081, 1.0
        %v6113 = vadd.f32 %v6083, 1.0
        %v6114 = vadd.f32 %v6085, 1.0
        %v6115 = vadd.f32 %v6087, 1.0
        %v6116 = vadd.f32 %v6089, 1.0
        %v6117 = vadd.f32 %v6091, 1.0
        %v6118 = vadd.f32 %v6093, 1.0
        %v6119 = vadd.f32 %v6095, 1.0
        %v6120 = vadd.f32 %v6097, 1.0
        %v6121 = vadd.f32 %v6099, 1.0
        %v6122 = vadd.f32 %v6101, 1.0
        %v6123 = vadd.f32 %v6103, 1.0
        %v6124 = vadd.f32 %v6105, 1.0
        %v6125 = vadd.f32 %v6107, 1.0
        %v6126 = vadd.f32 %v6109, 1.0
        %v6127 = vadd.f32 %v6111, 1.0
        %v6128 = vrcp.pop %v6112
        %v6129 = vmul.f32 1.0, %v6128
        %v6130 = vrcp.pop %v6113
        %v6131 = vmul.f32 1.0, %v6130
        %v6132 = vrcp.pop %v6114
        %v6133 = vmul.f32 1.0, %v6132
        %v6134 = vrcp.pop %v6115
        %v6135 = vmul.f32 1.0, %v6134
        %v6136 = vrcp.pop %v6116
        %v6137 = vmul.f32 1.0, %v6136
        %v6138 = vrcp.pop %v6117
        %v6139 = vmul.f32 1.0, %v6138
        %v6140 = vrcp.pop %v6118
        %v6141 = vmul.f32 1.0, %v6140
        %v6142 = vrcp.pop %v6119
        %v6143 = vmul.f32 1.0, %v6142
        %v6144 = vrcp.pop %v6120
        %v6145 = vmul.f32 1.0, %v6144
        %v6146 = vrcp.pop %v6121
        %v6147 = vmul.f32 1.0, %v6146
        %v6148 = vrcp.pop %v6122
        %v6149 = vmul.f32 1.0, %v6148
        %v6150 = vrcp.pop %v6123
        %v6151 = vmul.f32 1.0, %v6150
        %v6152 = vrcp.pop %v6124
        %v6153 = vmul.f32 1.0, %v6152
        %v6154 = vrcp.pop %v6125
        %v6155 = vmul.f32 1.0, %v6154
        %v6156 = vrcp.pop %v6126
        %v6157 = vmul.f32 1.0, %v6156
        %v6158 = vrcp.pop %v6127
        %v6159 = vmul.f32 1.0, %v6158
        %v6160 = vmul.f32 %v6048, %v6129
        %v6161 = vmul.f32 %v6049, %v6131
        %v6162 = vmul.f32 %v6050, %v6133
        %v6163 = vmul.f32 %v6051, %v6135
        %v6164 = vmul.f32 %v6052, %v6137
        %v6165 = vmul.f32 %v6053, %v6139
        %v6166 = vmul.f32 %v6054, %v6141
        %v6167 = vmul.f32 %v6055, %v6143
        %v6168 = vmul.f32 %v6056, %v6145
        %v6169 = vmul.f32 %v6057, %v6147
        %v6170 = vmul.f32 %v6058, %v6149
        %v6171 = vmul.f32 %v6059, %v6151
        %v6172 = vmul.f32 %v6060, %v6153
        %v6173 = vmul.f32 %v6061, %v6155
        %v6174 = vmul.f32 %v6062, %v6157
        %v6175 = vmul.f32 %v6063, %v6159
        %v6176 = vld [vmem:[%s5 + $0x9] sm:$0x1]
        %v6177 = vld [vmem:[#allocation9 + $0x9] sm:$0x1]
        %6178 = vadd.xlane.f32.xlu0 %v6160
        %v6179 = vpop.xlane.xlu0 %6178
        %6180 = vadd.xlane.f32.xlu0 %v6161
        %v6181 = vpop.xlane.xlu0 %6180
        %6182 = vadd.xlane.f32.xlu0 %v6162
        %v6183 = vpop.xlane.xlu0 %6182
        %6184 = vadd.xlane.f32.xlu0 %v6163
        %v6185 = vpop.xlane.xlu0 %6184
        %6186 = vadd.xlane.f32.xlu0 %v6164
        %v6187 = vpop.xlane.xlu0 %6186
        %6188 = vadd.xlane.f32.xlu0 %v6165
        %v6189 = vpop.xlane.xlu0 %6188
        %6190 = vadd.xlane.f32.xlu0 %v6166
        %v6191 = vpop.xlane.xlu0 %6190
        %6192 = vadd.xlane.f32.xlu0 %v6167
        %v6193 = vpop.xlane.xlu0 %6192
        %6194 = vadd.xlane.f32.xlu0 %v6168
        %v6195 = vpop.xlane.xlu0 %6194
        %6196 = vadd.xlane.f32.xlu0 %v6169
        %v6197 = vpop.xlane.xlu0 %6196
        %6198 = vadd.xlane.f32.xlu0 %v6170
        %v6199 = vpop.xlane.xlu0 %6198
        %6200 = vadd.xlane.f32.xlu0 %v6171
        %v6201 = vpop.xlane.xlu0 %6200
        %6202 = vadd.xlane.f32.xlu0 %v6172
        %v6203 = vpop.xlane.xlu0 %6202
        %6204 = vadd.xlane.f32.xlu0 %v6173
        %v6205 = vpop.xlane.xlu0 %6204
        %6206 = vadd.xlane.f32.xlu0 %v6174
        %v6207 = vpop.xlane.xlu0 %6206
        %6208 = vadd.xlane.f32.xlu0 %v6175
        %v6209 = vpop.xlane.xlu0 %6208
        %v6210 = vmul.f32 %v6179, %v1211
        %v6211 = vmul.f32 %v6181, %v1211
        %v6212 = vmul.f32 %v6183, %v1211
        %v6213 = vmul.f32 %v6185, %v1211
        %v6214 = vmul.f32 %v6187, %v1211
        %v6215 = vmul.f32 %v6189, %v1211
        %v6216 = vmul.f32 %v6191, %v1211
        %v6217 = vmul.f32 %v6193, %v1211
        %v6218 = vmul.f32 %v6195, %v1211
        %v6219 = vmul.f32 %v6197, %v1211
        %v6220 = vmul.f32 %v6199, %v1211
        %v6221 = vmul.f32 %v6201, %v1211
        %v6222 = vmul.f32 %v6203, %v1211
        %v6223 = vmul.f32 %v6205, %v1211
        %v6224 = vmul.f32 %v6207, %v1211
        %v6225 = vmul.f32 %v6209, %v1211
        %v6226 = vsub.f32 %v6160, %v6210
        %v6227 = vsub.f32 %v6161, %v6211
        %v6228 = vsub.f32 %v6162, %v6212
        %v6229 = vsub.f32 %v6163, %v6213
        %v6230 = vsub.f32 %v6164, %v6214
        %v6231 = vsub.f32 %v6165, %v6215
        %v6232 = vsub.f32 %v6166, %v6216
        %v6233 = vsub.f32 %v6167, %v6217
        %v6234 = vsub.f32 %v6168, %v6218
        %v6235 = vsub.f32 %v6169, %v6219
        %v6236 = vsub.f32 %v6170, %v6220
        %v6237 = vsub.f32 %v6171, %v6221
        %v6238 = vsub.f32 %v6172, %v6222
        %v6239 = vsub.f32 %v6173, %v6223
        %v6240 = vsub.f32 %v6174, %v6224
        %v6241 = vsub.f32 %v6175, %v6225
        %v6242 = vmul.f32 %v6226, %v6226
        %v6243 = vmul.f32 %v6227, %v6227
        %v6244 = vmul.f32 %v6228, %v6228
        %v6245 = vmul.f32 %v6229, %v6229
        %v6246 = vmul.f32 %v6230, %v6230
        %v6247 = vmul.f32 %v6231, %v6231
        %v6248 = vmul.f32 %v6232, %v6232
        %v6249 = vmul.f32 %v6233, %v6233
        %v6250 = vmul.f32 %v6234, %v6234
        %v6251 = vmul.f32 %v6235, %v6235
        %v6252 = vmul.f32 %v6236, %v6236
        %v6253 = vmul.f32 %v6237, %v6237
        %v6254 = vmul.f32 %v6238, %v6238
        %v6255 = vmul.f32 %v6239, %v6239
        %v6256 = vmul.f32 %v6240, %v6240
        %v6257 = vmul.f32 %v6241, %v6241
        %6258 = vadd.xlane.f32.xlu0 %v6242
        %v6259 = vpop.xlane.xlu0 %6258
        %6260 = vadd.xlane.f32.xlu0 %v6243
        %v6261 = vpop.xlane.xlu0 %6260
        %6262 = vadd.xlane.f32.xlu0 %v6244
        %v6263 = vpop.xlane.xlu0 %6262
        %6264 = vadd.xlane.f32.xlu0 %v6245
        %v6265 = vpop.xlane.xlu0 %6264
        %6266 = vadd.xlane.f32.xlu0 %v6246
        %v6267 = vpop.xlane.xlu0 %6266
        %6268 = vadd.xlane.f32.xlu0 %v6247
        %v6269 = vpop.xlane.xlu0 %6268
        %6270 = vadd.xlane.f32.xlu0 %v6248
        %v6271 = vpop.xlane.xlu0 %6270
        %6272 = vadd.xlane.f32.xlu0 %v6249
        %v6273 = vpop.xlane.xlu0 %6272
        %6274 = vadd.xlane.f32.xlu0 %v6250
        %v6275 = vpop.xlane.xlu0 %6274
        %6276 = vadd.xlane.f32.xlu0 %v6251
        %v6277 = vpop.xlane.xlu0 %6276
        %6278 = vadd.xlane.f32.xlu0 %v6252
        %v6279 = vpop.xlane.xlu0 %6278
        %6280 = vadd.xlane.f32.xlu0 %v6253
        %v6281 = vpop.xlane.xlu0 %6280
        %6282 = vadd.xlane.f32.xlu0 %v6254
        %v6283 = vpop.xlane.xlu0 %6282
        %6284 = vadd.xlane.f32.xlu0 %v6255
        %v6285 = vpop.xlane.xlu0 %6284
        %6286 = vadd.xlane.f32.xlu0 %v6256
        %v6287 = vpop.xlane.xlu0 %6286
        %6288 = vadd.xlane.f32.xlu0 %v6257
        %v6289 = vpop.xlane.xlu0 %6288
        %v6290 = vmul.f32 %v6259, %v1211
        %v6291 = vmul.f32 %v6261, %v1211
        %v6292 = vmul.f32 %v6263, %v1211
        %v6293 = vmul.f32 %v6265, %v1211
        %v6294 = vmul.f32 %v6267, %v1211
        %v6295 = vmul.f32 %v6269, %v1211
        %v6296 = vmul.f32 %v6271, %v1211
        %v6297 = vmul.f32 %v6273, %v1211
        %v6298 = vmul.f32 %v6275, %v1211
        %v6299 = vmul.f32 %v6277, %v1211
        %v6300 = vmul.f32 %v6279, %v1211
        %v6301 = vmul.f32 %v6281, %v1211
        %v6302 = vmul.f32 %v6283, %v1211
        %v6303 = vmul.f32 %v6285, %v1211
        %v6304 = vmul.f32 %v6287, %v1211
        %v6305 = vmul.f32 %v6289, %v1211
        %v6306 = vadd.f32 %v6290, 0.1
        %v6307 = vadd.f32 %v6291, 0.1
        %v6308 = vadd.f32 %v6292, 0.1
        %v6309 = vadd.f32 %v6293, 0.1
        %v6310 = vadd.f32 %v6294, 0.1
        %v6311 = vadd.f32 %v6295, 0.1
        %v6312 = vadd.f32 %v6296, 0.1
        %v6313 = vadd.f32 %v6297, 0.1
        %v6314 = vadd.f32 %v6298, 0.1
        %v6315 = vadd.f32 %v6299, 0.1
        %v6316 = vadd.f32 %v6300, 0.1
        %v6317 = vadd.f32 %v6301, 0.1
        %v6318 = vadd.f32 %v6302, 0.1
        %v6319 = vadd.f32 %v6303, 0.1
        %v6320 = vadd.f32 %v6304, 0.1
        %v6321 = vadd.f32 %v6305, 0.1
        %v6322 = vrsqrt.pop %v6306
        %v6323 = vrsqrt.pop %v6307
        %v6324 = vrsqrt.pop %v6308
        %v6325 = vrsqrt.pop %v6309
        %v6326 = vrsqrt.pop %v6310
        %v6327 = vrsqrt.pop %v6311
        %v6328 = vrsqrt.pop %v6312
        %v6329 = vrsqrt.pop %v6313
        %v6330 = vrsqrt.pop %v6314
        %v6331 = vrsqrt.pop %v6315
        %v6332 = vrsqrt.pop %v6316
        %v6333 = vrsqrt.pop %v6317
        %v6334 = vrsqrt.pop %v6318
        %v6335 = vrsqrt.pop %v6319
        %v6336 = vrsqrt.pop %v6320
        %v6337 = vrsqrt.pop %v6321
        %v6338 = vmul.f32 %v6226, %v6322
        %v6339 = vmul.f32 %v6227, %v6323
        %v6340 = vmul.f32 %v6228, %v6324
        %v6341 = vmul.f32 %v6229, %v6325
        %v6342 = vmul.f32 %v6230, %v6326
        %v6343 = vmul.f32 %v6231, %v6327
        %v6344 = vmul.f32 %v6232, %v6328
        %v6345 = vmul.f32 %v6233, %v6329
        %v6346 = vmul.f32 %v6234, %v6330
        %v6347 = vmul.f32 %v6235, %v6331
        %v6348 = vmul.f32 %v6236, %v6332
        %v6349 = vmul.f32 %v6237, %v6333
        %v6350 = vmul.f32 %v6238, %v6334
        %v6351 = vmul.f32 %v6239, %v6335
        %v6352 = vmul.f32 %v6240, %v6336
        %v6353 = vmul.f32 %v6241, %v6337
        %v6354 = vlaneseq
        %v6355 = vshrl.u32 %v6354, 7
        %v6356 = vsub.s32 0, %v6355
        %v6357 = vrot.slane %v6176, %v6356
        %v6358 = vmul.f32 %v6338, %v6357
        %v6359 = vmul.f32 %v6339, %v6357
        %v6360 = vmul.f32 %v6340, %v6357
        %v6361 = vmul.f32 %v6341, %v6357
        %v6362 = vmul.f32 %v6342, %v6357
        %v6363 = vmul.f32 %v6343, %v6357
        %v6364 = vmul.f32 %v6344, %v6357
        %v6365 = vmul.f32 %v6345, %v6357
        %v6366 = vmul.f32 %v6346, %v6357
        %v6367 = vmul.f32 %v6347, %v6357
        %v6368 = vmul.f32 %v6348, %v6357
        %v6369 = vmul.f32 %v6349, %v6357
        %v6370 = vmul.f32 %v6350, %v6357
        %v6371 = vmul.f32 %v6351, %v6357
        %v6372 = vmul.f32 %v6352, %v6357
        %v6373 = vmul.f32 %v6353, %v6357
        %v6374 = vlaneseq
        %v6375 = vshrl.u32 %v6374, 7
        %v6376 = vsub.s32 0, %v6375
        %v6377 = vrot.slane %v6177, %v6376
        %v6378 = vadd.f32 %v6358, %v6377
        %v6379 = vadd.f32 %v6359, %v6377
        %v6380 = vadd.f32 %v6360, %v6377
        %v6381 = vadd.f32 %v6361, %v6377
        %v6382 = vadd.f32 %v6362, %v6377
        %v6383 = vadd.f32 %v6363, %v6377
        %v6384 = vadd.f32 %v6364, %v6377
        %v6385 = vadd.f32 %v6365, %v6377
        %v6386 = vadd.f32 %v6366, %v6377
        %v6387 = vadd.f32 %v6367, %v6377
        %v6388 = vadd.f32 %v6368, %v6377
        %v6389 = vadd.f32 %v6369, %v6377
        %v6390 = vadd.f32 %v6370, %v6377
        %v6391 = vadd.f32 %v6371, %v6377
        %v6392 = vadd.f32 %v6372, %v6377
        %v6393 = vadd.f32 %v6373, %v6377
        %v6394 = vpack.c.bf16 %v6379, %v6378
        %v6395 = vpack.c.bf16 %v6381, %v6380
        %v6396 = vpack.c.bf16 %v6383, %v6382
        %v6397 = vpack.c.bf16 %v6385, %v6384
        %v6398 = vpack.c.bf16 %v6387, %v6386
        %v6399 = vpack.c.bf16 %v6389, %v6388
        %v6400 = vpack.c.bf16 %v6391, %v6390
        %v6401 = vpack.c.bf16 %v6393, %v6392
        %s6402 = scalar_lea.vmem [#allocation10], 64
        %v6403 = vld [vmem:[%s6402] sm:$0xf]
        %v6404 = vld [vmem:[%s6402 + $0x4] sm:$0xf]
        %v6405 = vld [vmem:[%s6402 + $0x8] sm:$0xf]
        %v6406 = vld [vmem:[%s6402 + $0xc] sm:$0xf]
        %v6407 = vld [vmem:[%s6402 + $0x10] sm:$0xf]
        %v6408 = vld [vmem:[%s6402 + $0x14] sm:$0xf]
        %v6409 = vld [vmem:[%s6402 + $0x18] sm:$0xf]
        %v6410 = vld [vmem:[%s6402 + $0x1c] sm:$0xf]
        %v6411 = vld [vmem:[%s6402 + $0x20] sm:$0xf]
        %v6412 = vld [vmem:[%s6402 + $0x24] sm:$0xf]
        %v6413 = vld [vmem:[%s6402 + $0x28] sm:$0xf]
        %v6414 = vld [vmem:[%s6402 + $0x2c] sm:$0xf]
        %v6415 = vld [vmem:[%s6402 + $0x30] sm:$0xf]
        %v6416 = vld [vmem:[%s6402 + $0x34] sm:$0xf]
        %v6417 = vld [vmem:[%s6402 + $0x38] sm:$0xf]
        %v6418 = vld [vmem:[%s6402 + $0x3c] sm:$0xf]
        %v6419 = vld [vmem:[%s8 + $0x1] sm:$0x1]
        %v6420 = vlaneseq
        %v6421 = vshrl.u32 %v6420, 7
        %v6422 = vsub.s32 0, %v6421
        %v6423 = vrot.slane %v6419, %v6422
        %v6440 = vunpack.c.l.b16 %v6403
        %v6441 = vunpack.c.l.b16 %v6404
        %v6442 = vunpack.c.l.b16 %v6405
        %v6443 = vunpack.c.l.b16 %v6406
        %v6444 = vunpack.c.l.b16 %v6407
        %v6445 = vunpack.c.l.b16 %v6408
        %v6446 = vunpack.c.l.b16 %v6409
        %v6447 = vunpack.c.l.b16 %v6410
        %v6448 = vunpack.c.l.b16 %v6411
        %v6449 = vunpack.c.l.b16 %v6412
        %v6450 = vunpack.c.l.b16 %v6413
        %v6451 = vunpack.c.l.b16 %v6414
        %v6452 = vunpack.c.l.b16 %v6415
        %v6453 = vunpack.c.l.b16 %v6416
        %v6454 = vunpack.c.l.b16 %v6417
        %v6455 = vunpack.c.l.b16 %v6418
        %v6456 = vpack.c.b16 %v6441, %v6440
        %v6457 = vpack.c.b16 %v6443, %v6442
        %v6458 = vpack.c.b16 %v6445, %v6444
        %v6459 = vpack.c.b16 %v6447, %v6446
        %v6460 = vpack.c.b16 %v6449, %v6448
        %v6461 = vpack.c.b16 %v6451, %v6450
        %v6462 = vpack.c.b16 %v6453, %v6452
        %v6463 = vpack.c.b16 %v6455, %v6454
        %6472 = vmatprep.subr.bf16.mxu0 0
        %6473 = vmatpush1.bf16.msra.mxu0 %v6456
        %6474 = vmatprep.subr.bf16.mxu0 0
        %6475 = vmatpush1.bf16.msra.mxu0 %v6457
        %6476 = vmatprep.subr.bf16.mxu0 0
        %6477 = vmatpush1.bf16.msra.mxu0 %v6458
        %6478 = vmatprep.subr.bf16.mxu0 0
        %6479 = vmatpush1.bf16.msra.mxu0 %v6459
        %6480 = vmatprep.subr.bf16.mxu0 0
        %6481 = vmatpush1.bf16.msra.mxu0 %v6460
        %6482 = vmatprep.subr.bf16.mxu0 0
        %6483 = vmatpush1.bf16.msra.mxu0 %v6461
        %6484 = vmatprep.subr.bf16.mxu0 0
        %6485 = vmatpush1.bf16.msra.mxu0 %v6462
        %6486 = vmatprep.subr.bf16.mxu0 0
        %6487 = vmatpush1.bf16.msra.mxu0 %v6463
        %6488 = vmatprep.subr.bf16.mxu0 0
        %6489 = vmatpush1.bf16.msra.mxu0 0
        %6490 = vmatprep.subr.bf16.mxu0 0
        %6491 = vmatpush1.bf16.msra.mxu0 0
        %6492 = vmatprep.subr.bf16.mxu0 0
        %6493 = vmatpush1.bf16.msra.mxu0 0
        %6494 = vmatprep.subr.bf16.mxu0 0
        %6495 = vmatpush1.bf16.msra.mxu0 0
        %6496 = vmatprep.subr.bf16.mxu0 0
        %6497 = vmatpush1.bf16.msra.mxu0 0
        %6498 = vmatprep.subr.bf16.mxu0 0
        %6499 = vmatpush1.bf16.msra.mxu0 0
        %6500 = vmatprep.subr.bf16.mxu0 0
        %6501 = vmatpush1.bf16.msra.mxu0 0
        %6502 = vmatprep.subr.bf16.mxu0 0
        %6503 = vmatpush1.bf16.msra.mxu0 0
        %6504 = vmatprep.mubr.bf16.mxu0 0
        %6505 = vmatmul.mubr.bf16.gmra.mrb[0].mxu0 %v6394
        %v6506 = vpop.f32.mrb[0].mxu0
        %v6507 = vadd.f32 %v6423, %v6506
        %v6508 = vpop.f32.mrb[0].mxu0
        %v6509 = vpop.f32.mrb[0].mxu0
        %v6510 = vadd.f32 %v6423, %v6509
        %v6511 = vpop.f32.mrb[0].mxu0
        %6512 = vmatprep.mubr.bf16.mxu0 0
        %6513 = vmatmul.mubr.bf16.gmra.mrb[0].mxu0 %v6395
        %v6514 = vpop.f32.mrb[0].mxu0
        %v6515 = vadd.f32 %v6423, %v6514
        %v6516 = vpop.f32.mrb[0].mxu0
        %v6517 = vpop.f32.mrb[0].mxu0
        %v6518 = vadd.f32 %v6423, %v6517
        %v6519 = vpop.f32.mrb[0].mxu0
        %6520 = vmatprep.mubr.bf16.mxu0 0
        %6521 = vmatmul.mubr.bf16.gmra.mrb[0].mxu0 %v6396
        %v6522 = vpop.f32.mrb[0].mxu0
        %v6523 = vadd.f32 %v6423, %v6522
        %v6524 = vpop.f32.mrb[0].mxu0
        %v6525 = vpop.f32.mrb[0].mxu0
        %v6526 = vadd.f32 %v6423, %v6525
        %v6527 = vpop.f32.mrb[0].mxu0
        %6528 = vmatprep.mubr.bf16.mxu0 0
        %6529 = vmatmul.mubr.bf16.gmra.mrb[0].mxu0 %v6397
        %v6530 = vpop.f32.mrb[0].mxu0
        %v6531 = vadd.f32 %v6423, %v6530
        %v6532 = vpop.f32.mrb[0].mxu0
        %v6533 = vpop.f32.mrb[0].mxu0
        %v6534 = vadd.f32 %v6423, %v6533
        %v6535 = vpop.f32.mrb[0].mxu0
        %6536 = vmatprep.mubr.bf16.mxu0 0
        %6537 = vmatmul.mubr.bf16.gmra.mrb[0].mxu0 %v6398
        %v6538 = vpop.f32.mrb[0].mxu0
        %v6539 = vadd.f32 %v6423, %v6538
        %v6540 = vpop.f32.mrb[0].mxu0
        %v6541 = vpop.f32.mrb[0].mxu0
        %v6542 = vadd.f32 %v6423, %v6541
        %v6543 = vpop.f32.mrb[0].mxu0
        %6544 = vmatprep.mubr.bf16.mxu0 0
        %6545 = vmatmul.mubr.bf16.gmra.mrb[0].mxu0 %v6399
        %v6546 = vpop.f32.mrb[0].mxu0
        %v6547 = vadd.f32 %v6423, %v6546
        %v6548 = vpop.f32.mrb[0].mxu0
        %v6549 = vpop.f32.mrb[0].mxu0
        %v6550 = vadd.f32 %v6423, %v6549
        %v6551 = vpop.f32.mrb[0].mxu0
        %6552 = vmatprep.mubr.bf16.mxu0 0
        %6553 = vmatmul.mubr.bf16.gmra.mrb[0].mxu0 %v6400
        %v6554 = vpop.f32.mrb[0].mxu0
        %v6555 = vadd.f32 %v6423, %v6554
        %v6556 = vpop.f32.mrb[0].mxu0
        %v6557 = vpop.f32.mrb[0].mxu0
        %v6558 = vadd.f32 %v6423, %v6557
        %v6559 = vpop.f32.mrb[0].mxu0
        %6560 = vmatprep.mubr.bf16.mxu0 0
        %6561 = vmatmul.mubr.bf16.gmra.mrb[0].mxu0 %v6401
        %v6562 = vpop.f32.mrb[0].mxu0
        %v6563 = vadd.f32 %v6423, %v6562
        %v6564 = vpop.f32.mrb[0].mxu0
        %v6565 = vpop.f32.mrb[0].mxu0
        %v6566 = vadd.f32 %v6423, %v6565
        %v6567 = vpop.f32.mrb[0].mxu0
        %6568 = vdwg.mxu0
        %v6569 = vpack.c.bf16 %v3642, %v3639
        %v6570 = vpack.c.bf16 %v3650, %v3647
        %v6571 = vpack.c.bf16 %v3658, %v3655
        %v6572 = vpack.c.bf16 %v3666, %v3663
        %v6573 = vpack.c.bf16 %v3674, %v3671
        %v6574 = vpack.c.bf16 %v3682, %v3679
        %v6575 = vpack.c.bf16 %v3690, %v3687
        %v6576 = vpack.c.bf16 %v3698, %v3695
        %v6577 = vld [vmem:[#allocation12] sm:$0xff]
        %v6578 = vld [vmem:[#allocation12 + $0x8] sm:$0xff]
        %v6579 = vld [vmem:[#allocation12 + $0x10] sm:$0xff]
        %v6580 = vld [vmem:[#allocation12 + $0x18] sm:$0xff]
        %v6581 = vld [vmem:[#allocation12 + $0x20] sm:$0xff]
        %v6582 = vld [vmem:[#allocation12 + $0x28] sm:$0xff]
        %v6583 = vld [vmem:[#allocation12 + $0x30] sm:$0xff]
        %v6584 = vld [vmem:[#allocation12 + $0x38] sm:$0xff]
        %v6585 = vld [vmem:[%s10] sm:$0x3]
        %v6587 = vlaneseq
        %v6588 = vshrl.u32 %v6587, 7
        %v6589 = vsub.s32 0, %v6588
        %v6590 = vrot.slane %v6585, %v6589
        %v6591 = vlaneseq
        %v6592 = vshrl.u32 %v6591, 7
        %v6593 = vsub.s32 1, %v6592
        %v6594 = vrot.slane %v6585, %v6593
        %v6605 = vunpack.c.l.b16 %v6577
        %v6606 = vunpack.c.h.b16 %v6577
        %v6607 = vunpack.c.l.b16 %v6578
        %v6608 = vunpack.c.h.b16 %v6578
        %v6609 = vunpack.c.l.b16 %v6579
        %v6610 = vunpack.c.h.b16 %v6579
        %v6611 = vunpack.c.l.b16 %v6580
        %v6612 = vunpack.c.h.b16 %v6580
        %v6613 = vunpack.c.l.b16 %v6581
        %v6614 = vunpack.c.h.b16 %v6581
        %v6615 = vunpack.c.l.b16 %v6582
        %v6616 = vunpack.c.h.b16 %v6582
        %v6617 = vunpack.c.l.b16 %v6583
        %v6618 = vunpack.c.h.b16 %v6583
        %v6619 = vunpack.c.l.b16 %v6584
        %v6620 = vunpack.c.h.b16 %v6584
        %v6621 = vpack.c.b16 %v6607, %v6605
        %v6622 = vpack.c.b16 %v6608, %v6606
        %v6623 = vpack.c.b16 %v6611, %v6609
        %v6624 = vpack.c.b16 %v6612, %v6610
        %v6625 = vpack.c.b16 %v6615, %v6613
        %v6626 = vpack.c.b16 %v6616, %v6614
        %v6627 = vpack.c.b16 %v6619, %v6617
        %v6628 = vpack.c.b16 %v6620, %v6618
        %vm6637 = vcmask 523264
        %v6639 = vsel %vm6637, %v6569, 0
        %v6642 = vsel %vm6637, %v6570, 0
        %v6645 = vsel %vm6637, %v6571, 0
        %v6648 = vsel %vm6637, %v6572, 0
        %v6651 = vsel %vm6637, %v6573, 0
        %v6654 = vsel %vm6637, %v6574, 0
        %v6657 = vsel %vm6637, %v6575, 0
        %v6660 = vsel %vm6637, %v6576, 0
        %6662 = vmatprep.subr.bf16.mxu0 %v6622
        %6663 = vmatpush1.bf16.msra.mxu0 %v6621
        %6664 = vmatprep.subr.bf16.mxu0 %v6624
        %6665 = vmatpush1.bf16.msra.mxu0 %v6623
        %6666 = vmatprep.subr.bf16.mxu0 %v6626
        %6667 = vmatpush1.bf16.msra.mxu0 %v6625
        %6668 = vmatprep.subr.bf16.mxu0 %v6628
        %6669 = vmatpush1.bf16.msra.mxu0 %v6627
        %6670 = vmatprep.subr.bf16.mxu0 0
        %6671 = vmatpush1.bf16.msra.mxu0 0
        %6672 = vmatprep.subr.bf16.mxu0 0
        %6673 = vmatpush1.bf16.msra.mxu0 0
        %6674 = vmatprep.subr.bf16.mxu0 0
        %6675 = vmatpush1.bf16.msra.mxu0 0
        %6676 = vmatprep.subr.bf16.mxu0 0
        %6677 = vmatpush1.bf16.msra.mxu0 0
        %6678 = vmatprep.subr.bf16.mxu0 0
        %6679 = vmatpush1.bf16.msra.mxu0 0
        %6680 = vmatprep.subr.bf16.mxu0 0
        %6681 = vmatpush1.bf16.msra.mxu0 0
        %6682 = vmatprep.subr.bf16.mxu0 0
        %6683 = vmatpush1.bf16.msra.mxu0 0
        %6684 = vmatprep.subr.bf16.mxu0 0
        %6685 = vmatpush1.bf16.msra.mxu0 0
        %6686 = vmatprep.subr.bf16.mxu0 0
        %6687 = vmatpush1.bf16.msra.mxu0 0
        %6688 = vmatprep.subr.bf16.mxu0 0
        %6689 = vmatpush1.bf16.msra.mxu0 0
        %6690 = vmatprep.subr.bf16.mxu0 0
        %6691 = vmatpush1.bf16.msra.mxu0 0
        %6692 = vmatprep.subr.bf16.mxu0 0
        %6693 = vmatpush1.bf16.msra.mxu0 0
        %6694 = vmatprep.mubr.bf16.mxu0 0
        %6695 = vmatmul.mubr.bf16.gmra.mrb[0].mxu0 %v6639
        %v6696 = vpop.f32.mrb[0].mxu0
        %v6697 = vadd.f32 %v6590, %v6696
        %v6698 = vpop.f32.mrb[0].mxu0
        %v6699 = vadd.f32 %v6594, %v6698
        %v6700 = vpop.f32.mrb[0].mxu0
        %v6701 = vadd.f32 %v6590, %v6700
        %v6702 = vpop.f32.mrb[0].mxu0
        %v6703 = vadd.f32 %v6594, %v6702
        %6704 = vmatprep.mubr.bf16.mxu0 0
        %6705 = vmatmul.mubr.bf16.gmra.mrb[0].mxu0 %v6642
        %v6706 = vpop.f32.mrb[0].mxu0
        %v6707 = vadd.f32 %v6590, %v6706
        %v6708 = vpop.f32.mrb[0].mxu0
        %v6709 = vadd.f32 %v6594, %v6708
        %v6710 = vpop.f32.mrb[0].mxu0
        %v6711 = vadd.f32 %v6590, %v6710
        %v6712 = vpop.f32.mrb[0].mxu0
        %v6713 = vadd.f32 %v6594, %v6712
        %6714 = vmatprep.mubr.bf16.mxu0 0
        %6715 = vmatmul.mubr.bf16.gmra.mrb[0].mxu0 %v6645
        %v6716 = vpop.f32.mrb[0].mxu0
        %v6717 = vadd.f32 %v6590, %v6716
        %v6718 = vpop.f32.mrb[0].mxu0
        %v6719 = vadd.f32 %v6594, %v6718
        %v6720 = vpop.f32.mrb[0].mxu0
        %v6721 = vadd.f32 %v6590, %v6720
        %v6722 = vpop.f32.mrb[0].mxu0
        %v6723 = vadd.f32 %v6594, %v6722
        %6724 = vmatprep.mubr.bf16.mxu0 0
        %6725 = vmatmul.mubr.bf16.gmra.mrb[0].mxu0 %v6648
        %v6726 = vpop.f32.mrb[0].mxu0
        %v6727 = vadd.f32 %v6590, %v6726
        %v6728 = vpop.f32.mrb[0].mxu0
        %v6729 = vadd.f32 %v6594, %v6728
        %v6730 = vpop.f32.mrb[0].mxu0
        %v6731 = vadd.f32 %v6590, %v6730
        %v6732 = vpop.f32.mrb[0].mxu0
        %v6733 = vadd.f32 %v6594, %v6732
        %6734 = vmatprep.mubr.bf16.mxu0 0
        %6735 = vmatmul.mubr.bf16.gmra.mrb[0].mxu0 %v6651
        %v6736 = vpop.f32.mrb[0].mxu0
        %v6737 = vadd.f32 %v6590, %v6736
        %v6738 = vpop.f32.mrb[0].mxu0
        %v6739 = vadd.f32 %v6594, %v6738
        %v6740 = vpop.f32.mrb[0].mxu0
        %v6741 = vadd.f32 %v6590, %v6740
        %v6742 = vpop.f32.mrb[0].mxu0
        %v6743 = vadd.f32 %v6594, %v6742
        %6744 = vmatprep.mubr.bf16.mxu0 0
        %6745 = vmatmul.mubr.bf16.gmra.mrb[0].mxu0 %v6654
        %v6746 = vpop.f32.mrb[0].mxu0
        %v6747 = vadd.f32 %v6590, %v6746
        %v6748 = vpop.f32.mrb[0].mxu0
        %v6749 = vadd.f32 %v6594, %v6748
        %v6750 = vpop.f32.mrb[0].mxu0
        %v6751 = vadd.f32 %v6590, %v6750
        %v6752 = vpop.f32.mrb[0].mxu0
        %v6753 = vadd.f32 %v6594, %v6752
        %6754 = vmatprep.mubr.bf16.mxu0 0
        %6755 = vmatmul.mubr.bf16.gmra.mrb[0].mxu0 %v6657
        %v6756 = vpop.f32.mrb[0].mxu0
        %v6757 = vadd.f32 %v6590, %v6756
        %v6758 = vpop.f32.mrb[0].mxu0
        %v6759 = vadd.f32 %v6594, %v6758
        %v6760 = vpop.f32.mrb[0].mxu0
        %v6761 = vadd.f32 %v6590, %v6760
        %v6762 = vpop.f32.mrb[0].mxu0
        %v6763 = vadd.f32 %v6594, %v6762
        %6764 = vmatprep.mubr.bf16.mxu0 0
        %6765 = vmatmul.mubr.bf16.gmra.mrb[0].mxu0 %v6660
        %v6766 = vpop.f32.mrb[0].mxu0
        %v6767 = vadd.f32 %v6590, %v6766
        %v6768 = vpop.f32.mrb[0].mxu0
        %v6769 = vadd.f32 %v6594, %v6768
        %v6770 = vpop.f32.mrb[0].mxu0
        %v6771 = vadd.f32 %v6590, %v6770
        %v6772 = vpop.f32.mrb[0].mxu0
        %v6773 = vadd.f32 %v6594, %v6772
        %6774 = vdwg.mxu0
        %v6775 = vmax.f32 %v6697, %v6699
        %6776 = vmax.xlane.f32.xlu0 %v6775
        %v6777 = vpop.xlane.xlu0 %6776
        %v6778 = vmax.f32 %v6701, %v6703
        %6779 = vmax.xlane.f32.xlu0 %v6778
        %v6780 = vpop.xlane.xlu0 %6779
        %v6781 = vmax.f32 %v6707, %v6709
        %6782 = vmax.xlane.f32.xlu0 %v6781
        %v6783 = vpop.xlane.xlu0 %6782
        %v6784 = vmax.f32 %v6711, %v6713
        %6785 = vmax.xlane.f32.xlu0 %v6784
        %v6786 = vpop.xlane.xlu0 %6785
        %v6787 = vmax.f32 %v6717, %v6719
        %6788 = vmax.xlane.f32.xlu0 %v6787
        %v6789 = vpop.xlane.xlu0 %6788
        %v6790 = vmax.f32 %v6721, %v6723
        %6791 = vmax.xlane.f32.xlu0 %v6790
        %v6792 = vpop.xlane.xlu0 %6791
        %v6793 = vmax.f32 %v6727, %v6729
        %6794 = vmax.xlane.f32.xlu0 %v6793
        %v6795 = vpop.xlane.xlu0 %6794
        %v6796 = vmax.f32 %v6731, %v6733
        %6797 = vmax.xlane.f32.xlu0 %v6796
        %v6798 = vpop.xlane.xlu0 %6797
        %v6799 = vmax.f32 %v6737, %v6739
        %6800 = vmax.xlane.f32.xlu0 %v6799
        %v6801 = vpop.xlane.xlu0 %6800
        %v6802 = vmax.f32 %v6741, %v6743
        %6803 = vmax.xlane.f32.xlu0 %v6802
        %v6804 = vpop.xlane.xlu0 %6803
        %v6805 = vmax.f32 %v6747, %v6749
        %6806 = vmax.xlane.f32.xlu0 %v6805
        %v6807 = vpop.xlane.xlu0 %6806
        %v6808 = vmax.f32 %v6751, %v6753
        %6809 = vmax.xlane.f32.xlu0 %v6808
        %v6810 = vpop.xlane.xlu0 %6809
        %v6811 = vmax.f32 %v6757, %v6759
        %6812 = vmax.xlane.f32.xlu0 %v6811
        %v6813 = vpop.xlane.xlu0 %6812
        %v6814 = vmax.f32 %v6761, %v6763
        %6815 = vmax.xlane.f32.xlu0 %v6814
        %v6816 = vpop.xlane.xlu0 %6815
        %v6817 = vmax.f32 %v6767, %v6769
        %6818 = vmax.xlane.f32.xlu0 %v6817
        %v6819 = vpop.xlane.xlu0 %6818
        %v6820 = vmax.f32 %v6771, %v6773
        %6821 = vmax.xlane.f32.xlu0 %v6820
        %v6822 = vpop.xlane.xlu0 %6821
        %v6823 = vsub.f32 %v6697, %v6777
        %v6824 = vsub.f32 %v6699, %v6777
        %v6825 = vsub.f32 %v6701, %v6780
        %v6826 = vsub.f32 %v6703, %v6780
        %v6827 = vsub.f32 %v6707, %v6783
        %v6828 = vsub.f32 %v6709, %v6783
        %v6829 = vsub.f32 %v6711, %v6786
        %v6830 = vsub.f32 %v6713, %v6786
        %v6831 = vsub.f32 %v6717, %v6789
        %v6832 = vsub.f32 %v6719, %v6789
        %v6833 = vsub.f32 %v6721, %v6792
        %v6834 = vsub.f32 %v6723, %v6792
        %v6835 = vsub.f32 %v6727, %v6795
        %v6836 = vsub.f32 %v6729, %v6795
        %v6837 = vsub.f32 %v6731, %v6798
        %v6838 = vsub.f32 %v6733, %v6798
        %v6839 = vsub.f32 %v6737, %v6801
        %v6840 = vsub.f32 %v6739, %v6801
        %v6841 = vsub.f32 %v6741, %v6804
        %v6842 = vsub.f32 %v6743, %v6804
        %v6843 = vsub.f32 %v6747, %v6807
        %v6844 = vsub.f32 %v6749, %v6807
        %v6845 = vsub.f32 %v6751, %v6810
        %v6846 = vsub.f32 %v6753, %v6810
        %v6847 = vsub.f32 %v6757, %v6813
        %v6848 = vsub.f32 %v6759, %v6813
        %v6849 = vsub.f32 %v6761, %v6816
        %v6850 = vsub.f32 %v6763, %v6816
        %v6851 = vsub.f32 %v6767, %v6819
        %v6852 = vsub.f32 %v6769, %v6819
        %v6853 = vsub.f32 %v6771, %v6822
        %v6854 = vsub.f32 %v6773, %v6822
        %v6855 = vmul.f32 %v6823, 1.442695
        %v6856 = vpow.pop %v6855
        %v6857 = vmul.f32 %v6824, 1.442695
        %v6858 = vpow.pop %v6857
        %v6859 = vmul.f32 %v6825, 1.442695
        %v6860 = vpow.pop %v6859
        %v6861 = vmul.f32 %v6826, 1.442695
        %v6862 = vpow.pop %v6861
        %v6863 = vmul.f32 %v6827, 1.442695
        %v6864 = vpow.pop %v6863
        %v6865 = vmul.f32 %v6828, 1.442695
        %v6866 = vpow.pop %v6865
        %v6867 = vmul.f32 %v6829, 1.442695
        %v6868 = vpow.pop %v6867
        %v6869 = vmul.f32 %v6830, 1.442695
        %v6870 = vpow.pop %v6869
        %v6871 = vmul.f32 %v6831, 1.442695
        %v6872 = vpow.pop %v6871
        %v6873 = vmul.f32 %v6832, 1.442695
        %v6874 = vpow.pop %v6873
        %v6875 = vmul.f32 %v6833, 1.442695
        %v6876 = vpow.pop %v6875
        %v6877 = vmul.f32 %v6834, 1.442695
        %v6878 = vpow.pop %v6877
        %v6879 = vmul.f32 %v6835, 1.442695
        %v6880 = vpow.pop %v6879
        %v6881 = vmul.f32 %v6836, 1.442695
        %v6882 = vpow.pop %v6881
        %v6883 = vmul.f32 %v6837, 1.442695
        %v6884 = vpow.pop %v6883
        %v6885 = vmul.f32 %v6838, 1.442695
        %v6886 = vpow.pop %v6885
        %v6887 = vmul.f32 %v6839, 1.442695
        %v6888 = vpow.pop %v6887
        %v6889 = vmul.f32 %v6840, 1.442695
        %v6890 = vpow.pop %v6889
        %v6891 = vmul.f32 %v6841, 1.442695
        %v6892 = vpow.pop %v6891
        %v6893 = vmul.f32 %v6842, 1.442695
        %v6894 = vpow.pop %v6893
        %v6895 = vmul.f32 %v6843, 1.442695
        %v6896 = vpow.pop %v6895
        %v6897 = vmul.f32 %v6844, 1.442695
        %v6898 = vpow.pop %v6897
        %v6899 = vmul.f32 %v6845, 1.442695
        %v6900 = vpow.pop %v6899
        %v6901 = vmul.f32 %v6846, 1.442695
        %v6902 = vpow.pop %v6901
        %v6903 = vmul.f32 %v6847, 1.442695
        %v6904 = vpow.pop %v6903
        %v6905 = vmul.f32 %v6848, 1.442695
        %v6906 = vpow.pop %v6905
        %v6907 = vmul.f32 %v6849, 1.442695
        %v6908 = vpow.pop %v6907
        %v6909 = vmul.f32 %v6850, 1.442695
        %v6910 = vpow.pop %v6909
        %v6911 = vmul.f32 %v6851, 1.442695
        %v6912 = vpow.pop %v6911
        %v6913 = vmul.f32 %v6852, 1.442695
        %v6914 = vpow.pop %v6913
        %v6915 = vmul.f32 %v6853, 1.442695
        %v6916 = vpow.pop %v6915
        %v6917 = vmul.f32 %v6854, 1.442695
        %v6918 = vpow.pop %v6917
        %v6919 = vadd.f32 %v6856, %v6858
        %6920 = vadd.xlane.f32.xlu0 %v6919
        %v6921 = vpop.xlane.xlu0 %6920
        %v6922 = vadd.f32 %v6860, %v6862
        %6923 = vadd.xlane.f32.xlu0 %v6922
        %v6924 = vpop.xlane.xlu0 %6923
        %v6925 = vadd.f32 %v6864, %v6866
        %6926 = vadd.xlane.f32.xlu0 %v6925
        %v6927 = vpop.xlane.xlu0 %6926
        %v6928 = vadd.f32 %v6868, %v6870
        %6929 = vadd.xlane.f32.xlu0 %v6928
        %v6930 = vpop.xlane.xlu0 %6929
        %v6931 = vadd.f32 %v6872, %v6874
        %6932 = vadd.xlane.f32.xlu0 %v6931
        %v6933 = vpop.xlane.xlu0 %6932
        %v6934 = vadd.f32 %v6876, %v6878
        %6935 = vadd.xlane.f32.xlu0 %v6934
        %v6936 = vpop.xlane.xlu0 %6935
        %v6937 = vadd.f32 %v6880, %v6882
        %6938 = vadd.xlane.f32.xlu0 %v6937
        %v6939 = vpop.xlane.xlu0 %6938
        %v6940 = vadd.f32 %v6884, %v6886
        %6941 = vadd.xlane.f32.xlu0 %v6940
        %v6942 = vpop.xlane.xlu0 %6941
        %v6943 = vadd.f32 %v6888, %v6890
        %6944 = vadd.xlane.f32.xlu0 %v6943
        %v6945 = vpop.xlane.xlu0 %6944
        %v6946 = vadd.f32 %v6892, %v6894
        %6947 = vadd.xlane.f32.xlu0 %v6946
        %v6948 = vpop.xlane.xlu0 %6947
        %v6949 = vadd.f32 %v6896, %v6898
        %6950 = vadd.xlane.f32.xlu0 %v6949
        %v6951 = vpop.xlane.xlu0 %6950
        %v6952 = vadd.f32 %v6900, %v6902
        %6953 = vadd.xlane.f32.xlu0 %v6952
        %v6954 = vpop.xlane.xlu0 %6953
        %v6955 = vadd.f32 %v6904, %v6906
        %6956 = vadd.xlane.f32.xlu0 %v6955
        %v6957 = vpop.xlane.xlu0 %6956
        %v6958 = vadd.f32 %v6908, %v6910
        %6959 = vadd.xlane.f32.xlu0 %v6958
        %v6960 = vpop.xlane.xlu0 %6959
        %v6961 = vadd.f32 %v6912, %v6914
        %6962 = vadd.xlane.f32.xlu0 %v6961
        %v6963 = vpop.xlane.xlu0 %6962
        %v6964 = vadd.f32 %v6916, %v6918
        %6965 = vadd.xlane.f32.xlu0 %v6964
        %v6966 = vpop.xlane.xlu0 %6965
        %v6967 = vlog2.pop %v6921
        %v6968 = vmul.f32 %v6967, 0.6931472
        %v6969 = vlog2.pop %v6924
        %v6970 = vmul.f32 %v6969, 0.6931472
        %v6971 = vlog2.pop %v6927
        %v6972 = vmul.f32 %v6971, 0.6931472
        %v6973 = vlog2.pop %v6930
        %v6974 = vmul.f32 %v6973, 0.6931472
        %v6975 = vlog2.pop %v6933
        %v6976 = vmul.f32 %v6975, 0.6931472
        %v6977 = vlog2.pop %v6936
        %v6978 = vmul.f32 %v6977, 0.6931472
        %v6979 = vlog2.pop %v6939
        %v6980 = vmul.f32 %v6979, 0.6931472
        %v6981 = vlog2.pop %v6942
        %v6982 = vmul.f32 %v6981, 0.6931472
        %v6983 = vlog2.pop %v6945
        %v6984 = vmul.f32 %v6983, 0.6931472
        %v6985 = vlog2.pop %v6948
        %v6986 = vmul.f32 %v6985, 0.6931472
        %v6987 = vlog2.pop %v6951
        %v6988 = vmul.f32 %v6987, 0.6931472
        %v6989 = vlog2.pop %v6954
        %v6990 = vmul.f32 %v6989, 0.6931472
        %v6991 = vlog2.pop %v6957
        %v6992 = vmul.f32 %v6991, 0.6931472
        %v6993 = vlog2.pop %v6960
        %v6994 = vmul.f32 %v6993, 0.6931472
        %v6995 = vlog2.pop %v6963
        %v6996 = vmul.f32 %v6995, 0.6931472
        %v6997 = vlog2.pop %v6966
        %v6998 = vmul.f32 %v6997, 0.6931472
        %v6999 = vadd.f32 %v6968, %v6777
        %v7000 = vadd.f32 %v6970, %v6780
        %v7001 = vadd.f32 %v6972, %v6783
        %v7002 = vadd.f32 %v6974, %v6786
        %v7003 = vadd.f32 %v6976, %v6789
        %v7004 = vadd.f32 %v6978, %v6792
        %v7005 = vadd.f32 %v6980, %v6795
        %v7006 = vadd.f32 %v6982, %v6798
        %v7007 = vadd.f32 %v6984, %v6801
        %v7008 = vadd.f32 %v6986, %v6804
        %v7009 = vadd.f32 %v6988, %v6807
        %v7010 = vadd.f32 %v6990, %v6810
        %v7011 = vadd.f32 %v6992, %v6813
        %v7012 = vadd.f32 %v6994, %v6816
        %v7013 = vadd.f32 %v6996, %v6819
        %v7014 = vadd.f32 %v6998, %v6822
        %v7015 = vsub.f32 %v6697, %v6999
        %v7016 = vsub.f32 %v6699, %v6999
        %v7017 = vsub.f32 %v6701, %v7000
        %v7018 = vsub.f32 %v6703, %v7000
        %v7019 = vsub.f32 %v6707, %v7001
        %v7020 = vsub.f32 %v6709, %v7001
        %v7021 = vsub.f32 %v6711, %v7002
        %v7022 = vsub.f32 %v6713, %v7002
        %v7023 = vsub.f32 %v6717, %v7003
        %v7024 = vsub.f32 %v6719, %v7003
        %v7025 = vsub.f32 %v6721, %v7004
        %v7026 = vsub.f32 %v6723, %v7004
        %v7027 = vsub.f32 %v6727, %v7005
        %v7028 = vsub.f32 %v6729, %v7005
        %v7029 = vsub.f32 %v6731, %v7006
        %v7030 = vsub.f32 %v6733, %v7006
        %v7031 = vsub.f32 %v6737, %v7007
        %v7032 = vsub.f32 %v6739, %v7007
        %v7033 = vsub.f32 %v6741, %v7008
        %v7034 = vsub.f32 %v6743, %v7008
        %v7035 = vsub.f32 %v6747, %v7009
        %v7036 = vsub.f32 %v6749, %v7009
        %v7037 = vsub.f32 %v6751, %v7010
        %v7038 = vsub.f32 %v6753, %v7010
        %v7039 = vsub.f32 %v6757, %v7011
        %v7040 = vsub.f32 %v6759, %v7011
        %v7041 = vsub.f32 %v6761, %v7012
        %v7042 = vsub.f32 %v6763, %v7012
        %v7043 = vsub.f32 %v6767, %v7013
        %v7044 = vsub.f32 %v6769, %v7013
        %v7045 = vsub.f32 %v6771, %v7014
        %v7046 = vsub.f32 %v6773, %v7014
        %v7047 = vmul.f32 %v7015, %v531
        %v7048 = vmul.f32 %v7016, %v532
        %v7049 = vmul.f32 %v7017, %v533
        %v7050 = vmul.f32 %v7018, %v534
        %v7051 = vmul.f32 %v7019, %v535
        %v7052 = vmul.f32 %v7020, %v536
        %v7053 = vmul.f32 %v7021, %v537
        %v7054 = vmul.f32 %v7022, %v538
        %v7055 = vmul.f32 %v7023, %v539
        %v7056 = vmul.f32 %v7024, %v540
        %v7057 = vmul.f32 %v7025, %v541
        %v7058 = vmul.f32 %v7026, %v542
        %v7059 = vmul.f32 %v7027, %v543
        %v7060 = vmul.f32 %v7028, %v544
        %v7061 = vmul.f32 %v7029, %v545
        %v7062 = vmul.f32 %v7030, %v546
        %v7063 = vmul.f32 %v7031, %v547
        %v7064 = vmul.f32 %v7032, %v548
        %v7065 = vmul.f32 %v7033, %v549
        %v7066 = vmul.f32 %v7034, %v550
        %v7067 = vmul.f32 %v7035, %v551
        %v7068 = vmul.f32 %v7036, %v552
        %v7069 = vmul.f32 %v7037, %v553
        %v7070 = vmul.f32 %v7038, %v554
        %v7071 = vmul.f32 %v7039, %v555
        %v7072 = vmul.f32 %v7040, %v556
        %v7073 = vmul.f32 %v7041, %v557
        %v7074 = vmul.f32 %v7042, %v558
        %v7075 = vmul.f32 %v7043, %v559
        %v7076 = vmul.f32 %v7044, %v560
        %v7077 = vmul.f32 %v7045, %v561
        %v7078 = vmul.f32 %v7046, %v562
        %v7079 = vadd.f32 %v7047, %v7048
        %7080 = vadd.xlane.f32.xlu0 %v7079
        %v7081 = vpop.xlane.xlu0 %7080
        %v7082 = vadd.f32 %v7049, %v7050
        %7083 = vadd.xlane.f32.xlu0 %v7082
        %v7084 = vpop.xlane.xlu0 %7083
        %v7085 = vadd.f32 %v7051, %v7052
        %7086 = vadd.xlane.f32.xlu0 %v7085
        %v7087 = vpop.xlane.xlu0 %7086
        %v7088 = vadd.f32 %v7053, %v7054
        %7089 = vadd.xlane.f32.xlu0 %v7088
        %v7090 = vpop.xlane.xlu0 %7089
        %v7091 = vadd.f32 %v7055, %v7056
        %7092 = vadd.xlane.f32.xlu0 %v7091
        %v7093 = vpop.xlane.xlu0 %7092
        %v7094 = vadd.f32 %v7057, %v7058
        %7095 = vadd.xlane.f32.xlu0 %v7094
        %v7096 = vpop.xlane.xlu0 %7095
        %v7097 = vadd.f32 %v7059, %v7060
        %7098 = vadd.xlane.f32.xlu0 %v7097
        %v7099 = vpop.xlane.xlu0 %7098
        %v7100 = vadd.f32 %v7061, %v7062
        %7101 = vadd.xlane.f32.xlu0 %v7100
        %v7102 = vpop.xlane.xlu0 %7101
        %v7103 = vadd.f32 %v7063, %v7064
        %7104 = vadd.xlane.f32.xlu0 %v7103
        %v7105 = vpop.xlane.xlu0 %7104
        %v7106 = vadd.f32 %v7065, %v7066
        %7107 = vadd.xlane.f32.xlu0 %v7106
        %v7108 = vpop.xlane.xlu0 %7107
        %v7109 = vadd.f32 %v7067, %v7068
        %7110 = vadd.xlane.f32.xlu0 %v7109
        %v7111 = vpop.xlane.xlu0 %7110
        %v7112 = vadd.f32 %v7069, %v7070
        %7113 = vadd.xlane.f32.xlu0 %v7112
        %v7114 = vpop.xlane.xlu0 %7113
        %v7115 = vadd.f32 %v7071, %v7072
        %7116 = vadd.xlane.f32.xlu0 %v7115
        %v7117 = vpop.xlane.xlu0 %7116
        %v7118 = vadd.f32 %v7073, %v7074
        %7119 = vadd.xlane.f32.xlu0 %v7118
        %v7120 = vpop.xlane.xlu0 %7119
        %v7121 = vadd.f32 %v7075, %v7076
        %7122 = vadd.xlane.f32.xlu0 %v7121
        %v7123 = vpop.xlane.xlu0 %7122
        %v7124 = vadd.f32 %v7077, %v7078
        %7125 = vadd.xlane.f32.xlu0 %v7124
        %v7126 = vpop.xlane.xlu0 %7125
        %v7127 = vmul.f32 %v3639, %v3639
        %v7128 = vmul.f32 %v3642, %v3642
        %v7129 = vmul.f32 %v3647, %v3647
        %v7130 = vmul.f32 %v3650, %v3650
        %v7131 = vmul.f32 %v3655, %v3655
        %v7132 = vmul.f32 %v3658, %v3658
        %v7133 = vmul.f32 %v3663, %v3663
        %v7134 = vmul.f32 %v3666, %v3666
        %v7135 = vmul.f32 %v3671, %v3671
        %v7136 = vmul.f32 %v3674, %v3674
        %v7137 = vmul.f32 %v3679, %v3679
        %v7138 = vmul.f32 %v3682, %v3682
        %v7139 = vmul.f32 %v3687, %v3687
        %v7140 = vmul.f32 %v3690, %v3690
        %v7141 = vmul.f32 %v3695, %v3695
        %v7142 = vmul.f32 %v3698, %v3698
        %v7143 = vadd.f32 %v7127, 1.837877
        %v7144 = vadd.f32 %v7128, 1.837877
        %v7145 = vadd.f32 %v7129, 1.837877
        %v7146 = vadd.f32 %v7130, 1.837877
        %v7147 = vadd.f32 %v7131, 1.837877
        %v7148 = vadd.f32 %v7132, 1.837877
        %v7149 = vadd.f32 %v7133, 1.837877
        %v7150 = vadd.f32 %v7134, 1.837877
        %v7151 = vadd.f32 %v7135, 1.837877
        %v7152 = vadd.f32 %v7136, 1.837877
        %v7153 = vadd.f32 %v7137, 1.837877
        %v7154 = vadd.f32 %v7138, 1.837877
        %v7155 = vadd.f32 %v7139, 1.837877
        %v7156 = vadd.f32 %v7140, 1.837877
        %v7157 = vadd.f32 %v7141, 1.837877
        %v7158 = vadd.f32 %v7142, 1.837877
        %v7159 = vmul.f32 %v7143, -0.5
        %v7160 = vmul.f32 %v7144, -0.5
        %v7161 = vmul.f32 %v7145, -0.5
        %v7162 = vmul.f32 %v7146, -0.5
        %v7163 = vmul.f32 %v7147, -0.5
        %v7164 = vmul.f32 %v7148, -0.5
        %v7165 = vmul.f32 %v7149, -0.5
        %v7166 = vmul.f32 %v7150, -0.5
        %v7167 = vmul.f32 %v7151, -0.5
        %v7168 = vmul.f32 %v7152, -0.5
        %v7169 = vmul.f32 %v7153, -0.5
        %v7170 = vmul.f32 %v7154, -0.5
        %v7171 = vmul.f32 %v7155, -0.5
        %v7172 = vmul.f32 %v7156, -0.5
        %v7173 = vmul.f32 %v7157, -0.5
        %v7174 = vmul.f32 %v7158, -0.5
        %v7175 = vadd.f32 %v7159, -1.89712
        %v7176 = vadd.f32 %v7160, -1.89712
        %v7177 = vadd.f32 %v7161, -1.89712
        %v7178 = vadd.f32 %v7162, -1.89712
        %v7179 = vadd.f32 %v7163, -1.89712
        %v7180 = vadd.f32 %v7164, -1.89712
        %v7181 = vadd.f32 %v7165, -1.89712
        %v7182 = vadd.f32 %v7166, -1.89712
        %v7183 = vadd.f32 %v7167, -1.89712
        %v7184 = vadd.f32 %v7168, -1.89712
        %v7185 = vadd.f32 %v7169, -1.89712
        %v7186 = vadd.f32 %v7170, -1.89712
        %v7187 = vadd.f32 %v7171, -1.89712
        %v7188 = vadd.f32 %v7172, -1.89712
        %v7189 = vadd.f32 %v7173, -1.89712
        %v7190 = vadd.f32 %v7174, -1.89712
        %v7191 = vadd.f32 %v6507, 1.837877
        %v7192 = vadd.f32 %v6510, 1.837877
        %v7193 = vadd.f32 %v6515, 1.837877
        %v7194 = vadd.f32 %v6518, 1.837877
        %v7195 = vadd.f32 %v6523, 1.837877
        %v7196 = vadd.f32 %v6526, 1.837877
        %v7197 = vadd.f32 %v6531, 1.837877
        %v7198 = vadd.f32 %v6534, 1.837877
        %v7199 = vadd.f32 %v6539, 1.837877
        %v7200 = vadd.f32 %v6542, 1.837877
        %v7201 = vadd.f32 %v6547, 1.837877
        %v7202 = vadd.f32 %v6550, 1.837877
        %v7203 = vadd.f32 %v6555, 1.837877
        %v7204 = vadd.f32 %v6558, 1.837877
        %v7205 = vadd.f32 %v6563, 1.837877
        %v7206 = vadd.f32 %v6566, 1.837877
        %v7207 = vsub.f32 %v3639, %v6507
        %v7208 = vsub.f32 %v3642, %v6510
        %v7209 = vsub.f32 %v3647, %v6515
        %v7210 = vsub.f32 %v3650, %v6518
        %v7211 = vsub.f32 %v3655, %v6523
        %v7212 = vsub.f32 %v3658, %v6526
        %v7213 = vsub.f32 %v3663, %v6531
        %v7214 = vsub.f32 %v3666, %v6534
        %v7215 = vsub.f32 %v3671, %v6539
        %v7216 = vsub.f32 %v3674, %v6542
        %v7217 = vsub.f32 %v3679, %v6547
        %v7218 = vsub.f32 %v3682, %v6550
        %v7219 = vsub.f32 %v3687, %v6555
        %v7220 = vsub.f32 %v3690, %v6558
        %v7221 = vsub.f32 %v3695, %v6563
        %v7222 = vsub.f32 %v3698, %v6566
        %v7223 = vmul.f32 %v7207, %v7207
        %v7224 = vmul.f32 %v7208, %v7208
        %v7225 = vmul.f32 %v7209, %v7209
        %v7226 = vmul.f32 %v7210, %v7210
        %v7227 = vmul.f32 %v7211, %v7211
        %v7228 = vmul.f32 %v7212, %v7212
        %v7229 = vmul.f32 %v7213, %v7213
        %v7230 = vmul.f32 %v7214, %v7214
        %v7231 = vmul.f32 %v7215, %v7215
        %v7232 = vmul.f32 %v7216, %v7216
        %v7233 = vmul.f32 %v7217, %v7217
        %v7234 = vmul.f32 %v7218, %v7218
        %v7235 = vmul.f32 %v7219, %v7219
        %v7236 = vmul.f32 %v7220, %v7220
        %v7237 = vmul.f32 %v7221, %v7221
        %v7238 = vmul.f32 %v7222, %v7222
        %v7239 = vsub.f32 0.0, %v6507
        %v7240 = vsub.f32 0.0, %v6510
        %v7241 = vsub.f32 0.0, %v6515
        %v7242 = vsub.f32 0.0, %v6518
        %v7243 = vsub.f32 0.0, %v6523
        %v7244 = vsub.f32 0.0, %v6526
        %v7245 = vsub.f32 0.0, %v6531
        %v7246 = vsub.f32 0.0, %v6534
        %v7247 = vsub.f32 0.0, %v6539
        %v7248 = vsub.f32 0.0, %v6542
        %v7249 = vsub.f32 0.0, %v6547
        %v7250 = vsub.f32 0.0, %v6550
        %v7251 = vsub.f32 0.0, %v6555
        %v7252 = vsub.f32 0.0, %v6558
        %v7253 = vsub.f32 0.0, %v6563
        %v7254 = vsub.f32 0.0, %v6566
        %v7255 = vmul.f32 %v7239, 1.442695
        %v7256 = vpow.pop %v7255
        %v7257 = vmul.f32 %v7240, 1.442695
        %v7258 = vpow.pop %v7257
        %v7259 = vmul.f32 %v7241, 1.442695
        %v7260 = vpow.pop %v7259
        %v7261 = vmul.f32 %v7242, 1.442695
        %v7262 = vpow.pop %v7261
        %v7263 = vmul.f32 %v7243, 1.442695
        %v7264 = vpow.pop %v7263
        %v7265 = vmul.f32 %v7244, 1.442695
        %v7266 = vpow.pop %v7265
        %v7267 = vmul.f32 %v7245, 1.442695
        %v7268 = vpow.pop %v7267
        %v7269 = vmul.f32 %v7246, 1.442695
        %v7270 = vpow.pop %v7269
        %v7271 = vmul.f32 %v7247, 1.442695
        %v7272 = vpow.pop %v7271
        %v7273 = vmul.f32 %v7248, 1.442695
        %v7274 = vpow.pop %v7273
        %v7275 = vmul.f32 %v7249, 1.442695
        %v7276 = vpow.pop %v7275
        %v7277 = vmul.f32 %v7250, 1.442695
        %v7278 = vpow.pop %v7277
        %v7279 = vmul.f32 %v7251, 1.442695
        %v7280 = vpow.pop %v7279
        %v7281 = vmul.f32 %v7252, 1.442695
        %v7282 = vpow.pop %v7281
        %v7283 = vmul.f32 %v7253, 1.442695
        %v7284 = vpow.pop %v7283
        %v7285 = vmul.f32 %v7254, 1.442695
        %v7286 = vpow.pop %v7285
        %7303 = vrot.lane.b32.xlu0 %v7256, 64
        %v7304 = vpop.permute.xlu0 %7303
        %7305 = vrot.lane.b32.xlu0 %v7258, 64
        %v7306 = vpop.permute.xlu0 %7305
        %7307 = vrot.lane.b32.xlu0 %v7260, 64
        %v7308 = vpop.permute.xlu0 %7307
        %7309 = vrot.lane.b32.xlu0 %v7262, 64
        %v7310 = vpop.permute.xlu0 %7309
        %7311 = vrot.lane.b32.xlu0 %v7264, 64
        %v7312 = vpop.permute.xlu0 %7311
        %7313 = vrot.lane.b32.xlu0 %v7266, 64
        %v7314 = vpop.permute.xlu0 %7313
        %7315 = vrot.lane.b32.xlu0 %v7268, 64
        %v7316 = vpop.permute.xlu0 %7315
        %7317 = vrot.lane.b32.xlu0 %v7270, 64
        %v7318 = vpop.permute.xlu0 %7317
        %7319 = vrot.lane.b32.xlu0 %v7272, 64
        %v7320 = vpop.permute.xlu0 %7319
        %7321 = vrot.lane.b32.xlu0 %v7274, 64
        %v7322 = vpop.permute.xlu0 %7321
        %7323 = vrot.lane.b32.xlu0 %v7276, 64
        %v7324 = vpop.permute.xlu0 %7323
        %7325 = vrot.lane.b32.xlu0 %v7278, 64
        %v7326 = vpop.permute.xlu0 %7325
        %7327 = vrot.lane.b32.xlu0 %v7280, 64
        %v7328 = vpop.permute.xlu0 %7327
        %7329 = vrot.lane.b32.xlu0 %v7282, 64
        %v7330 = vpop.permute.xlu0 %7329
        %7331 = vrot.lane.b32.xlu0 %v7284, 64
        %v7332 = vpop.permute.xlu0 %7331
        %7333 = vrot.lane.b32.xlu0 %v7286, 64
        %v7334 = vpop.permute.xlu0 %7333
        %v7351 = vmul.f32 %v7223, %v7304
        %v7352 = vmul.f32 %v7224, %v7306
        %v7353 = vmul.f32 %v7225, %v7308
        %v7354 = vmul.f32 %v7226, %v7310
        %v7355 = vmul.f32 %v7227, %v7312
        %v7356 = vmul.f32 %v7228, %v7314
        %v7357 = vmul.f32 %v7229, %v7316
        %v7358 = vmul.f32 %v7230, %v7318
        %v7359 = vmul.f32 %v7231, %v7320
        %v7360 = vmul.f32 %v7232, %v7322
        %v7361 = vmul.f32 %v7233, %v7324
        %v7362 = vmul.f32 %v7234, %v7326
        %v7363 = vmul.f32 %v7235, %v7328
        %v7364 = vmul.f32 %v7236, %v7330
        %v7365 = vmul.f32 %v7237, %v7332
        %v7366 = vmul.f32 %v7238, %v7334
        %7383 = vrot.lane.b32.xlu0 %v7351, 64
        %v7384 = vpop.permute.xlu0 %7383
        %7385 = vrot.lane.b32.xlu0 %v7352, 64
        %v7386 = vpop.permute.xlu0 %7385
        %7387 = vrot.lane.b32.xlu0 %v7353, 64
        %v7388 = vpop.permute.xlu0 %7387
        %7389 = vrot.lane.b32.xlu0 %v7354, 64
        %v7390 = vpop.permute.xlu0 %7389
        %7391 = vrot.lane.b32.xlu0 %v7355, 64
        %v7392 = vpop.permute.xlu0 %7391
        %7393 = vrot.lane.b32.xlu0 %v7356, 64
        %v7394 = vpop.permute.xlu0 %7393
        %7395 = vrot.lane.b32.xlu0 %v7357, 64
        %v7396 = vpop.permute.xlu0 %7395
        %7397 = vrot.lane.b32.xlu0 %v7358, 64
        %v7398 = vpop.permute.xlu0 %7397
        %7399 = vrot.lane.b32.xlu0 %v7359, 64
        %v7400 = vpop.permute.xlu0 %7399
        %7401 = vrot.lane.b32.xlu0 %v7360, 64
        %v7402 = vpop.permute.xlu0 %7401
        %7403 = vrot.lane.b32.xlu0 %v7361, 64
        %v7404 = vpop.permute.xlu0 %7403
        %7405 = vrot.lane.b32.xlu0 %v7362, 64
        %v7406 = vpop.permute.xlu0 %7405
        %7407 = vrot.lane.b32.xlu0 %v7363, 64
        %v7408 = vpop.permute.xlu0 %7407
        %7409 = vrot.lane.b32.xlu0 %v7364, 64
        %v7410 = vpop.permute.xlu0 %7409
        %7411 = vrot.lane.b32.xlu0 %v7365, 64
        %v7412 = vpop.permute.xlu0 %7411
        %7413 = vrot.lane.b32.xlu0 %v7366, 64
        %v7414 = vpop.permute.xlu0 %7413
        %v7431 = vadd.f32 %v7191, %v7384
        %v7432 = vadd.f32 %v7192, %v7386
        %v7433 = vadd.f32 %v7193, %v7388
        %v7434 = vadd.f32 %v7194, %v7390
        %v7435 = vadd.f32 %v7195, %v7392
        %v7436 = vadd.f32 %v7196, %v7394
        %v7437 = vadd.f32 %v7197, %v7396
        %v7438 = vadd.f32 %v7198, %v7398
        %v7439 = vadd.f32 %v7199, %v7400
        %v7440 = vadd.f32 %v7200, %v7402
        %v7441 = vadd.f32 %v7201, %v7404
        %v7442 = vadd.f32 %v7202, %v7406
        %v7443 = vadd.f32 %v7203, %v7408
        %v7444 = vadd.f32 %v7204, %v7410
        %v7445 = vadd.f32 %v7205, %v7412
        %v7446 = vadd.f32 %v7206, %v7414
        %v7447 = vmul.f32 %v7431, -0.5
        %v7448 = vmul.f32 %v7432, -0.5
        %v7449 = vmul.f32 %v7433, -0.5
        %v7450 = vmul.f32 %v7434, -0.5
        %v7451 = vmul.f32 %v7435, -0.5
        %v7452 = vmul.f32 %v7436, -0.5
        %v7453 = vmul.f32 %v7437, -0.5
        %v7454 = vmul.f32 %v7438, -0.5
        %v7455 = vmul.f32 %v7439, -0.5
        %v7456 = vmul.f32 %v7440, -0.5
        %v7457 = vmul.f32 %v7441, -0.5
        %v7458 = vmul.f32 %v7442, -0.5
        %v7459 = vmul.f32 %v7443, -0.5
        %v7460 = vmul.f32 %v7444, -0.5
        %v7461 = vmul.f32 %v7445, -0.5
        %v7462 = vmul.f32 %v7446, -0.5
        %v7463 = vadd.f32 %v7447, -0.2876821
        %v7464 = vadd.f32 %v7448, -0.2876821
        %v7465 = vadd.f32 %v7449, -0.2876821
        %v7466 = vadd.f32 %v7450, -0.2876821
        %v7467 = vadd.f32 %v7451, -0.2876821
        %v7468 = vadd.f32 %v7452, -0.2876821
        %v7469 = vadd.f32 %v7453, -0.2876821
        %v7470 = vadd.f32 %v7454, -0.2876821
        %v7471 = vadd.f32 %v7455, -0.2876821
        %v7472 = vadd.f32 %v7456, -0.2876821
        %v7473 = vadd.f32 %v7457, -0.2876821
        %v7474 = vadd.f32 %v7458, -0.2876821
        %v7475 = vadd.f32 %v7459, -0.2876821
        %v7476 = vadd.f32 %v7460, -0.2876821
        %v7477 = vadd.f32 %v7461, -0.2876821
        %v7478 = vadd.f32 %v7462, -0.2876821
        %v7479 = vmul.f32 %v7127, 4.539993e-05
        %v7480 = vmul.f32 %v7128, 4.539993e-05
        %v7481 = vmul.f32 %v7129, 4.539993e-05
        %v7482 = vmul.f32 %v7130, 4.539993e-05
        %v7483 = vmul.f32 %v7131, 4.539993e-05
        %v7484 = vmul.f32 %v7132, 4.539993e-05
        %v7485 = vmul.f32 %v7133, 4.539993e-05
        %v7486 = vmul.f32 %v7134, 4.539993e-05
        %v7487 = vmul.f32 %v7135, 4.539993e-05
        %v7488 = vmul.f32 %v7136, 4.539993e-05
        %v7489 = vmul.f32 %v7137, 4.539993e-05
        %v7490 = vmul.f32 %v7138, 4.539993e-05
        %v7491 = vmul.f32 %v7139, 4.539993e-05
        %v7492 = vmul.f32 %v7140, 4.539993e-05
        %v7493 = vmul.f32 %v7141, 4.539993e-05
        %v7494 = vmul.f32 %v7142, 4.539993e-05
        %v7495 = vadd.f32 %v7479, 11.837877
        %v7496 = vadd.f32 %v7480, 11.837877
        %v7497 = vadd.f32 %v7481, 11.837877
        %v7498 = vadd.f32 %v7482, 11.837877
        %v7499 = vadd.f32 %v7483, 11.837877
        %v7500 = vadd.f32 %v7484, 11.837877
        %v7501 = vadd.f32 %v7485, 11.837877
        %v7502 = vadd.f32 %v7486, 11.837877
        %v7503 = vadd.f32 %v7487, 11.837877
        %v7504 = vadd.f32 %v7488, 11.837877
        %v7505 = vadd.f32 %v7489, 11.837877
        %v7506 = vadd.f32 %v7490, 11.837877
        %v7507 = vadd.f32 %v7491, 11.837877
        %v7508 = vadd.f32 %v7492, 11.837877
        %v7509 = vadd.f32 %v7493, 11.837877
        %v7510 = vadd.f32 %v7494, 11.837877
        %v7511 = vmul.f32 %v7495, -0.5
        %v7512 = vmul.f32 %v7496, -0.5
        %v7513 = vmul.f32 %v7497, -0.5
        %v7514 = vmul.f32 %v7498, -0.5
        %v7515 = vmul.f32 %v7499, -0.5
        %v7516 = vmul.f32 %v7500, -0.5
        %v7517 = vmul.f32 %v7501, -0.5
        %v7518 = vmul.f32 %v7502, -0.5
        %v7519 = vmul.f32 %v7503, -0.5
        %v7520 = vmul.f32 %v7504, -0.5
        %v7521 = vmul.f32 %v7505, -0.5
        %v7522 = vmul.f32 %v7506, -0.5
        %v7523 = vmul.f32 %v7507, -0.5
        %v7524 = vmul.f32 %v7508, -0.5
        %v7525 = vmul.f32 %v7509, -0.5
        %v7526 = vmul.f32 %v7510, -0.5
        %v7527 = vadd.f32 %v7511, -2.3025851
        %v7528 = vadd.f32 %v7512, -2.3025851
        %v7529 = vadd.f32 %v7513, -2.3025851
        %v7530 = vadd.f32 %v7514, -2.3025851
        %v7531 = vadd.f32 %v7515, -2.3025851
        %v7532 = vadd.f32 %v7516, -2.3025851
        %v7533 = vadd.f32 %v7517, -2.3025851
        %v7534 = vadd.f32 %v7518, -2.3025851
        %v7535 = vadd.f32 %v7519, -2.3025851
        %v7536 = vadd.f32 %v7520, -2.3025851
        %v7537 = vadd.f32 %v7521, -2.3025851
        %v7538 = vadd.f32 %v7522, -2.3025851
        %v7539 = vadd.f32 %v7523, -2.3025851
        %v7540 = vadd.f32 %v7524, -2.3025851
        %v7541 = vadd.f32 %v7525, -2.3025851
        %v7542 = vadd.f32 %v7526, -2.3025851
        %7559 = vrot.lane.b32.xlu0 %v7463, 64
        %v7560 = vpop.permute.xlu0 %7559
        %7561 = vrot.lane.b32.xlu0 %v7464, 64
        %v7562 = vpop.permute.xlu0 %7561
        %7563 = vrot.lane.b32.xlu0 %v7465, 64
        %v7564 = vpop.permute.xlu0 %7563
        %7565 = vrot.lane.b32.xlu0 %v7466, 64
        %v7566 = vpop.permute.xlu0 %7565
        %7567 = vrot.lane.b32.xlu0 %v7467, 64
        %v7568 = vpop.permute.xlu0 %7567
        %7569 = vrot.lane.b32.xlu0 %v7468, 64
        %v7570 = vpop.permute.xlu0 %7569
        %7571 = vrot.lane.b32.xlu0 %v7469, 64
        %v7572 = vpop.permute.xlu0 %7571
        %7573 = vrot.lane.b32.xlu0 %v7470, 64
        %v7574 = vpop.permute.xlu0 %7573
        %7575 = vrot.lane.b32.xlu0 %v7471, 64
        %v7576 = vpop.permute.xlu0 %7575
        %7577 = vrot.lane.b32.xlu0 %v7472, 64
        %v7578 = vpop.permute.xlu0 %7577
        %7579 = vrot.lane.b32.xlu0 %v7473, 64
        %v7580 = vpop.permute.xlu0 %7579
        %7581 = vrot.lane.b32.xlu0 %v7474, 64
        %v7582 = vpop.permute.xlu0 %7581
        %7583 = vrot.lane.b32.xlu0 %v7475, 64
        %v7584 = vpop.permute.xlu0 %7583
        %7585 = vrot.lane.b32.xlu0 %v7476, 64
        %v7586 = vpop.permute.xlu0 %7585
        %7587 = vrot.lane.b32.xlu0 %v7477, 64
        %v7588 = vpop.permute.xlu0 %7587
        %7589 = vrot.lane.b32.xlu0 %v7478, 64
        %v7590 = vpop.permute.xlu0 %7589
        %v7607 = vmax.f32 %v7175, %v7560
        %v7608 = vmax.f32 %v7176, %v7562
        %v7609 = vmax.f32 %v7177, %v7564
        %v7610 = vmax.f32 %v7178, %v7566
        %v7611 = vmax.f32 %v7179, %v7568
        %v7612 = vmax.f32 %v7180, %v7570
        %v7613 = vmax.f32 %v7181, %v7572
        %v7614 = vmax.f32 %v7182, %v7574
        %v7615 = vmax.f32 %v7183, %v7576
        %v7616 = vmax.f32 %v7184, %v7578
        %v7617 = vmax.f32 %v7185, %v7580
        %v7618 = vmax.f32 %v7186, %v7582
        %v7619 = vmax.f32 %v7187, %v7584
        %v7620 = vmax.f32 %v7188, %v7586
        %v7621 = vmax.f32 %v7189, %v7588
        %v7622 = vmax.f32 %v7190, %v7590
        %v7623 = vmax.f32 %v7607, %v7527
        %v7624 = vmax.f32 %v7608, %v7528
        %v7625 = vmax.f32 %v7609, %v7529
        %v7626 = vmax.f32 %v7610, %v7530
        %v7627 = vmax.f32 %v7611, %v7531
        %v7628 = vmax.f32 %v7612, %v7532
        %v7629 = vmax.f32 %v7613, %v7533
        %v7630 = vmax.f32 %v7614, %v7534
        %v7631 = vmax.f32 %v7615, %v7535
        %v7632 = vmax.f32 %v7616, %v7536
        %v7633 = vmax.f32 %v7617, %v7537
        %v7634 = vmax.f32 %v7618, %v7538
        %v7635 = vmax.f32 %v7619, %v7539
        %v7636 = vmax.f32 %v7620, %v7540
        %v7637 = vmax.f32 %v7621, %v7541
        %v7638 = vmax.f32 %v7622, %v7542
        %v7639 = vsub.f32 %v7175, %v7623
        %v7640 = vsub.f32 %v7176, %v7624
        %v7641 = vsub.f32 %v7177, %v7625
        %v7642 = vsub.f32 %v7178, %v7626
        %v7643 = vsub.f32 %v7179, %v7627
        %v7644 = vsub.f32 %v7180, %v7628
        %v7645 = vsub.f32 %v7181, %v7629
        %v7646 = vsub.f32 %v7182, %v7630
        %v7647 = vsub.f32 %v7183, %v7631
        %v7648 = vsub.f32 %v7184, %v7632
        %v7649 = vsub.f32 %v7185, %v7633
        %v7650 = vsub.f32 %v7186, %v7634
        %v7651 = vsub.f32 %v7187, %v7635
        %v7652 = vsub.f32 %v7188, %v7636
        %v7653 = vsub.f32 %v7189, %v7637
        %v7654 = vsub.f32 %v7190, %v7638
        %v7655 = vmul.f32 %v7639, 1.442695
        %v7656 = vpow.pop %v7655
        %v7657 = vmul.f32 %v7640, 1.442695
        %v7658 = vpow.pop %v7657
        %v7659 = vmul.f32 %v7641, 1.442695
        %v7660 = vpow.pop %v7659
        %v7661 = vmul.f32 %v7642, 1.442695
        %v7662 = vpow.pop %v7661
        %v7663 = vmul.f32 %v7643, 1.442695
        %v7664 = vpow.pop %v7663
        %v7665 = vmul.f32 %v7644, 1.442695
        %v7666 = vpow.pop %v7665
        %v7667 = vmul.f32 %v7645, 1.442695
        %v7668 = vpow.pop %v7667
        %v7669 = vmul.f32 %v7646, 1.442695
        %v7670 = vpow.pop %v7669
        %v7671 = vmul.f32 %v7647, 1.442695
        %v7672 = vpow.pop %v7671
        %v7673 = vmul.f32 %v7648, 1.442695
        %v7674 = vpow.pop %v7673
        %v7675 = vmul.f32 %v7649, 1.442695
        %v7676 = vpow.pop %v7675
        %v7677 = vmul.f32 %v7650, 1.442695
        %v7678 = vpow.pop %v7677
        %v7679 = vmul.f32 %v7651, 1.442695
        %v7680 = vpow.pop %v7679
        %v7681 = vmul.f32 %v7652, 1.442695
        %v7682 = vpow.pop %v7681
        %v7683 = vmul.f32 %v7653, 1.442695
        %v7684 = vpow.pop %v7683
        %v7685 = vmul.f32 %v7654, 1.442695
        %v7686 = vpow.pop %v7685
        %7703 = vrot.lane.b32.xlu0 %v7623, 64
        %v7704 = vpop.permute.xlu0 %7703
        %7705 = vrot.lane.b32.xlu0 %v7624, 64
        %v7706 = vpop.permute.xlu0 %7705
        %7707 = vrot.lane.b32.xlu0 %v7625, 64
        %v7708 = vpop.permute.xlu0 %7707
        %7709 = vrot.lane.b32.xlu0 %v7626, 64
        %v7710 = vpop.permute.xlu0 %7709
        %7711 = vrot.lane.b32.xlu0 %v7627, 64
        %v7712 = vpop.permute.xlu0 %7711
        %7713 = vrot.lane.b32.xlu0 %v7628, 64
        %v7714 = vpop.permute.xlu0 %7713
        %7715 = vrot.lane.b32.xlu0 %v7629, 64
        %v7716 = vpop.permute.xlu0 %7715
        %7717 = vrot.lane.b32.xlu0 %v7630, 64
        %v7718 = vpop.permute.xlu0 %7717
        %7719 = vrot.lane.b32.xlu0 %v7631, 64
        %v7720 = vpop.permute.xlu0 %7719
        %7721 = vrot.lane.b32.xlu0 %v7632, 64
        %v7722 = vpop.permute.xlu0 %7721
        %7723 = vrot.lane.b32.xlu0 %v7633, 64
        %v7724 = vpop.permute.xlu0 %7723
        %7725 = vrot.lane.b32.xlu0 %v7634, 64
        %v7726 = vpop.permute.xlu0 %7725
        %7727 = vrot.lane.b32.xlu0 %v7635, 64
        %v7728 = vpop.permute.xlu0 %7727
        %7729 = vrot.lane.b32.xlu0 %v7636, 64
        %v7730 = vpop.permute.xlu0 %7729
        %7731 = vrot.lane.b32.xlu0 %v7637, 64
        %v7732 = vpop.permute.xlu0 %7731
        %7733 = vrot.lane.b32.xlu0 %v7638, 64
        %v7734 = vpop.permute.xlu0 %7733
        %v7751 = vsub.f32 %v7463, %v7704
        %v7752 = vsub.f32 %v7464, %v7706
        %v7753 = vsub.f32 %v7465, %v7708
        %v7754 = vsub.f32 %v7466, %v7710
        %v7755 = vsub.f32 %v7467, %v7712
        %v7756 = vsub.f32 %v7468, %v7714
        %v7757 = vsub.f32 %v7469, %v7716
        %v7758 = vsub.f32 %v7470, %v7718
        %v7759 = vsub.f32 %v7471, %v7720
        %v7760 = vsub.f32 %v7472, %v7722
        %v7761 = vsub.f32 %v7473, %v7724
        %v7762 = vsub.f32 %v7474, %v7726
        %v7763 = vsub.f32 %v7475, %v7728
        %v7764 = vsub.f32 %v7476, %v7730
        %v7765 = vsub.f32 %v7477, %v7732
        %v7766 = vsub.f32 %v7478, %v7734
        %v7767 = vmul.f32 %v7751, 1.442695
        %v7768 = vpow.pop %v7767
        %v7769 = vmul.f32 %v7752, 1.442695
        %v7770 = vpow.pop %v7769
        %v7771 = vmul.f32 %v7753, 1.442695
        %v7772 = vpow.pop %v7771
        %v7773 = vmul.f32 %v7754, 1.442695
        %v7774 = vpow.pop %v7773
        %v7775 = vmul.f32 %v7755, 1.442695
        %v7776 = vpow.pop %v7775
        %v7777 = vmul.f32 %v7756, 1.442695
        %v7778 = vpow.pop %v7777
        %v7779 = vmul.f32 %v7757, 1.442695
        %v7780 = vpow.pop %v7779
        %v7781 = vmul.f32 %v7758, 1.442695
        %v7782 = vpow.pop %v7781
        %v7783 = vmul.f32 %v7759, 1.442695
        %v7784 = vpow.pop %v7783
        %v7785 = vmul.f32 %v7760, 1.442695
        %v7786 = vpow.pop %v7785
        %v7787 = vmul.f32 %v7761, 1.442695
        %v7788 = vpow.pop %v7787
        %v7789 = vmul.f32 %v7762, 1.442695
        %v7790 = vpow.pop %v7789
        %v7791 = vmul.f32 %v7763, 1.442695
        %v7792 = vpow.pop %v7791
        %v7793 = vmul.f32 %v7764, 1.442695
        %v7794 = vpow.pop %v7793
        %v7795 = vmul.f32 %v7765, 1.442695
        %v7796 = vpow.pop %v7795
        %v7797 = vmul.f32 %v7766, 1.442695
        %v7798 = vpow.pop %v7797
        %7815 = vrot.lane.b32.xlu0 %v7768, 64
        %v7816 = vpop.permute.xlu0 %7815
        %7817 = vrot.lane.b32.xlu0 %v7770, 64
        %v7818 = vpop.permute.xlu0 %7817
        %7819 = vrot.lane.b32.xlu0 %v7772, 64
        %v7820 = vpop.permute.xlu0 %7819
        %7821 = vrot.lane.b32.xlu0 %v7774, 64
        %v7822 = vpop.permute.xlu0 %7821
        %7823 = vrot.lane.b32.xlu0 %v7776, 64
        %v7824 = vpop.permute.xlu0 %7823
        %7825 = vrot.lane.b32.xlu0 %v7778, 64
        %v7826 = vpop.permute.xlu0 %7825
        %7827 = vrot.lane.b32.xlu0 %v7780, 64
        %v7828 = vpop.permute.xlu0 %7827
        %7829 = vrot.lane.b32.xlu0 %v7782, 64
        %v7830 = vpop.permute.xlu0 %7829
        %7831 = vrot.lane.b32.xlu0 %v7784, 64
        %v7832 = vpop.permute.xlu0 %7831
        %7833 = vrot.lane.b32.xlu0 %v7786, 64
        %v7834 = vpop.permute.xlu0 %7833
        %7835 = vrot.lane.b32.xlu0 %v7788, 64
        %v7836 = vpop.permute.xlu0 %7835
        %7837 = vrot.lane.b32.xlu0 %v7790, 64
        %v7838 = vpop.permute.xlu0 %7837
        %7839 = vrot.lane.b32.xlu0 %v7792, 64
        %v7840 = vpop.permute.xlu0 %7839
        %7841 = vrot.lane.b32.xlu0 %v7794, 64
        %v7842 = vpop.permute.xlu0 %7841
        %7843 = vrot.lane.b32.xlu0 %v7796, 64
        %v7844 = vpop.permute.xlu0 %7843
        %7845 = vrot.lane.b32.xlu0 %v7798, 64
        %v7846 = vpop.permute.xlu0 %7845
        %v7863 = vadd.f32 %v7656, %v7816
        %v7864 = vadd.f32 %v7658, %v7818
        %v7865 = vadd.f32 %v7660, %v7820
        %v7866 = vadd.f32 %v7662, %v7822
        %v7867 = vadd.f32 %v7664, %v7824
        %v7868 = vadd.f32 %v7666, %v7826
        %v7869 = vadd.f32 %v7668, %v7828
        %v7870 = vadd.f32 %v7670, %v7830
        %v7871 = vadd.f32 %v7672, %v7832
        %v7872 = vadd.f32 %v7674, %v7834
        %v7873 = vadd.f32 %v7676, %v7836
        %v7874 = vadd.f32 %v7678, %v7838
        %v7875 = vadd.f32 %v7680, %v7840
        %v7876 = vadd.f32 %v7682, %v7842
        %v7877 = vadd.f32 %v7684, %v7844
        %v7878 = vadd.f32 %v7686, %v7846
        %v7879 = vsub.f32 %v7527, %v7623
        %v7880 = vsub.f32 %v7528, %v7624
        %v7881 = vsub.f32 %v7529, %v7625
        %v7882 = vsub.f32 %v7530, %v7626
        %v7883 = vsub.f32 %v7531, %v7627
        %v7884 = vsub.f32 %v7532, %v7628
        %v7885 = vsub.f32 %v7533, %v7629
        %v7886 = vsub.f32 %v7534, %v7630
        %v7887 = vsub.f32 %v7535, %v7631
        %v7888 = vsub.f32 %v7536, %v7632
        %v7889 = vsub.f32 %v7537, %v7633
        %v7890 = vsub.f32 %v7538, %v7634
        %v7891 = vsub.f32 %v7539, %v7635
        %v7892 = vsub.f32 %v7540, %v7636
        %v7893 = vsub.f32 %v7541, %v7637
        %v7894 = vsub.f32 %v7542, %v7638
        %v7895 = vmul.f32 %v7879, 1.442695
        %v7896 = vpow.pop %v7895
        %v7897 = vmul.f32 %v7880, 1.442695
        %v7898 = vpow.pop %v7897
        %v7899 = vmul.f32 %v7881, 1.442695
        %v7900 = vpow.pop %v7899
        %v7901 = vmul.f32 %v7882, 1.442695
        %v7902 = vpow.pop %v7901
        %v7903 = vmul.f32 %v7883, 1.442695
        %v7904 = vpow.pop %v7903
        %v7905 = vmul.f32 %v7884, 1.442695
        %v7906 = vpow.pop %v7905
        %v7907 = vmul.f32 %v7885, 1.442695
        %v7908 = vpow.pop %v7907
        %v7909 = vmul.f32 %v7886, 1.442695
        %v7910 = vpow.pop %v7909
        %v7911 = vmul.f32 %v7887, 1.442695
        %v7912 = vpow.pop %v7911
        %v7913 = vmul.f32 %v7888, 1.442695
        %v7914 = vpow.pop %v7913
        %v7915 = vmul.f32 %v7889, 1.442695
        %v7916 = vpow.pop %v7915
        %v7917 = vmul.f32 %v7890, 1.442695
        %v7918 = vpow.pop %v7917
        %v7919 = vmul.f32 %v7891, 1.442695
        %v7920 = vpow.pop %v7919
        %v7921 = vmul.f32 %v7892, 1.442695
        %v7922 = vpow.pop %v7921
        %v7923 = vmul.f32 %v7893, 1.442695
        %v7924 = vpow.pop %v7923
        %v7925 = vmul.f32 %v7894, 1.442695
        %v7926 = vpow.pop %v7925
        %v7927 = vadd.f32 %v7863, %v7896
        %v7928 = vadd.f32 %v7864, %v7898
        %v7929 = vadd.f32 %v7865, %v7900
        %v7930 = vadd.f32 %v7866, %v7902
        %v7931 = vadd.f32 %v7867, %v7904
        %v7932 = vadd.f32 %v7868, %v7906
        %v7933 = vadd.f32 %v7869, %v7908
        %v7934 = vadd.f32 %v7870, %v7910
        %v7935 = vadd.f32 %v7871, %v7912
        %v7936 = vadd.f32 %v7872, %v7914
        %v7937 = vadd.f32 %v7873, %v7916
        %v7938 = vadd.f32 %v7874, %v7918
        %v7939 = vadd.f32 %v7875, %v7920
        %v7940 = vadd.f32 %v7876, %v7922
        %v7941 = vadd.f32 %v7877, %v7924
        %v7942 = vadd.f32 %v7878, %v7926
        %v7943 = vlog2.pop %v7927
        %v7944 = vmul.f32 %v7943, 0.6931472
        %v7945 = vlog2.pop %v7928
        %v7946 = vmul.f32 %v7945, 0.6931472
        %v7947 = vlog2.pop %v7929
        %v7948 = vmul.f32 %v7947, 0.6931472
        %v7949 = vlog2.pop %v7930
        %v7950 = vmul.f32 %v7949, 0.6931472
        %v7951 = vlog2.pop %v7931
        %v7952 = vmul.f32 %v7951, 0.6931472
        %v7953 = vlog2.pop %v7932
        %v7954 = vmul.f32 %v7953, 0.6931472
        %v7955 = vlog2.pop %v7933
        %v7956 = vmul.f32 %v7955, 0.6931472
        %v7957 = vlog2.pop %v7934
        %v7958 = vmul.f32 %v7957, 0.6931472
        %v7959 = vlog2.pop %v7935
        %v7960 = vmul.f32 %v7959, 0.6931472
        %v7961 = vlog2.pop %v7936
        %v7962 = vmul.f32 %v7961, 0.6931472
        %v7963 = vlog2.pop %v7937
        %v7964 = vmul.f32 %v7963, 0.6931472
        %v7965 = vlog2.pop %v7938
        %v7966 = vmul.f32 %v7965, 0.6931472
        %v7967 = vlog2.pop %v7939
        %v7968 = vmul.f32 %v7967, 0.6931472
        %v7969 = vlog2.pop %v7940
        %v7970 = vmul.f32 %v7969, 0.6931472
        %v7971 = vlog2.pop %v7941
        %v7972 = vmul.f32 %v7971, 0.6931472
        %v7973 = vlog2.pop %v7942
        %v7974 = vmul.f32 %v7973, 0.6931472
        %v7975 = vadd.f32 %v7623, %v7944
        %v7976 = vadd.f32 %v7624, %v7946
        %v7977 = vadd.f32 %v7625, %v7948
        %v7978 = vadd.f32 %v7626, %v7950
        %v7979 = vadd.f32 %v7627, %v7952
        %v7980 = vadd.f32 %v7628, %v7954
        %v7981 = vadd.f32 %v7629, %v7956
        %v7982 = vadd.f32 %v7630, %v7958
        %v7983 = vadd.f32 %v7631, %v7960
        %v7984 = vadd.f32 %v7632, %v7962
        %v7985 = vadd.f32 %v7633, %v7964
        %v7986 = vadd.f32 %v7634, %v7966
        %v7987 = vadd.f32 %v7635, %v7968
        %v7988 = vadd.f32 %v7636, %v7970
        %v7989 = vadd.f32 %v7637, %v7972
        %v7990 = vadd.f32 %v7638, %v7974
        %v7991 = vadd.f32 %v3639, 1.837877
        %v7992 = vadd.f32 %v3642, 1.837877
        %v7993 = vadd.f32 %v3647, 1.837877
        %v7994 = vadd.f32 %v3650, 1.837877
        %v7995 = vadd.f32 %v3655, 1.837877
        %v7996 = vadd.f32 %v3658, 1.837877
        %v7997 = vadd.f32 %v3663, 1.837877
        %v7998 = vadd.f32 %v3666, 1.837877
        %v7999 = vadd.f32 %v3671, 1.837877
        %v8000 = vadd.f32 %v3674, 1.837877
        %v8001 = vadd.f32 %v3679, 1.837877
        %v8002 = vadd.f32 %v3682, 1.837877
        %v8003 = vadd.f32 %v3687, 1.837877
        %v8004 = vadd.f32 %v3690, 1.837877
        %v8005 = vadd.f32 %v3695, 1.837877
        %v8006 = vadd.f32 %v3698, 1.837877
        %v8007 = vsub.f32 %v3639, %v3639
        %v8008 = vsub.f32 %v3642, %v3642
        %v8009 = vsub.f32 %v3647, %v3647
        %v8010 = vsub.f32 %v3650, %v3650
        %v8011 = vsub.f32 %v3655, %v3655
        %v8012 = vsub.f32 %v3658, %v3658
        %v8013 = vsub.f32 %v3663, %v3663
        %v8014 = vsub.f32 %v3666, %v3666
        %v8015 = vsub.f32 %v3671, %v3671
        %v8016 = vsub.f32 %v3674, %v3674
        %v8017 = vsub.f32 %v3679, %v3679
        %v8018 = vsub.f32 %v3682, %v3682
        %v8019 = vsub.f32 %v3687, %v3687
        %v8020 = vsub.f32 %v3690, %v3690
        %v8021 = vsub.f32 %v3695, %v3695
        %v8022 = vsub.f32 %v3698, %v3698
        %v8023 = vmul.f32 %v8007, %v8007
        %v8024 = vmul.f32 %v8008, %v8008
        %v8025 = vmul.f32 %v8009, %v8009
        %v8026 = vmul.f32 %v8010, %v8010
        %v8027 = vmul.f32 %v8011, %v8011
        %v8028 = vmul.f32 %v8012, %v8012
        %v8029 = vmul.f32 %v8013, %v8013
        %v8030 = vmul.f32 %v8014, %v8014
        %v8031 = vmul.f32 %v8015, %v8015
        %v8032 = vmul.f32 %v8016, %v8016
        %v8033 = vmul.f32 %v8017, %v8017
        %v8034 = vmul.f32 %v8018, %v8018
        %v8035 = vmul.f32 %v8019, %v8019
        %v8036 = vmul.f32 %v8020, %v8020
        %v8037 = vmul.f32 %v8021, %v8021
        %v8038 = vmul.f32 %v8022, %v8022
        %v8039 = vsub.f32 0.0, %v3639
        %v8040 = vsub.f32 0.0, %v3642
        %v8041 = vsub.f32 0.0, %v3647
        %v8042 = vsub.f32 0.0, %v3650
        %v8043 = vsub.f32 0.0, %v3655
        %v8044 = vsub.f32 0.0, %v3658
        %v8045 = vsub.f32 0.0, %v3663
        %v8046 = vsub.f32 0.0, %v3666
        %v8047 = vsub.f32 0.0, %v3671
        %v8048 = vsub.f32 0.0, %v3674
        %v8049 = vsub.f32 0.0, %v3679
        %v8050 = vsub.f32 0.0, %v3682
        %v8051 = vsub.f32 0.0, %v3687
        %v8052 = vsub.f32 0.0, %v3690
        %v8053 = vsub.f32 0.0, %v3695
        %v8054 = vsub.f32 0.0, %v3698
        %v8055 = vmul.f32 %v8039, 1.442695
        %v8056 = vpow.pop %v8055
        %v8057 = vmul.f32 %v8040, 1.442695
        %v8058 = vpow.pop %v8057
        %v8059 = vmul.f32 %v8041, 1.442695
        %v8060 = vpow.pop %v8059
        %v8061 = vmul.f32 %v8042, 1.442695
        %v8062 = vpow.pop %v8061
        %v8063 = vmul.f32 %v8043, 1.442695
        %v8064 = vpow.pop %v8063
        %v8065 = vmul.f32 %v8044, 1.442695
        %v8066 = vpow.pop %v8065
        %v8067 = vmul.f32 %v8045, 1.442695
        %v8068 = vpow.pop %v8067
        %v8069 = vmul.f32 %v8046, 1.442695
        %v8070 = vpow.pop %v8069
        %v8071 = vmul.f32 %v8047, 1.442695
        %v8072 = vpow.pop %v8071
        %v8073 = vmul.f32 %v8048, 1.442695
        %v8074 = vpow.pop %v8073
        %v8075 = vmul.f32 %v8049, 1.442695
        %v8076 = vpow.pop %v8075
        %v8077 = vmul.f32 %v8050, 1.442695
        %v8078 = vpow.pop %v8077
        %v8079 = vmul.f32 %v8051, 1.442695
        %v8080 = vpow.pop %v8079
        %v8081 = vmul.f32 %v8052, 1.442695
        %v8082 = vpow.pop %v8081
        %v8083 = vmul.f32 %v8053, 1.442695
        %v8084 = vpow.pop %v8083
        %v8085 = vmul.f32 %v8054, 1.442695
        %v8086 = vpow.pop %v8085
        %8103 = vrot.lane.b32.xlu0 %v8056, 64
        %v8104 = vpop.permute.xlu0 %8103
        %8105 = vrot.lane.b32.xlu0 %v8058, 64
        %v8106 = vpop.permute.xlu0 %8105
        %8107 = vrot.lane.b32.xlu0 %v8060, 64
        %v8108 = vpop.permute.xlu0 %8107
        %8109 = vrot.lane.b32.xlu0 %v8062, 64
        %v8110 = vpop.permute.xlu0 %8109
        %8111 = vrot.lane.b32.xlu0 %v8064, 64
        %v8112 = vpop.permute.xlu0 %8111
        %8113 = vrot.lane.b32.xlu0 %v8066, 64
        %v8114 = vpop.permute.xlu0 %8113
        %8115 = vrot.lane.b32.xlu0 %v8068, 64
        %v8116 = vpop.permute.xlu0 %8115
        %8117 = vrot.lane.b32.xlu0 %v8070, 64
        %v8118 = vpop.permute.xlu0 %8117
        %8119 = vrot.lane.b32.xlu0 %v8072, 64
        %v8120 = vpop.permute.xlu0 %8119
        %8121 = vrot.lane.b32.xlu0 %v8074, 64
        %v8122 = vpop.permute.xlu0 %8121
        %8123 = vrot.lane.b32.xlu0 %v8076, 64
        %v8124 = vpop.permute.xlu0 %8123
        %8125 = vrot.lane.b32.xlu0 %v8078, 64
        %v8126 = vpop.permute.xlu0 %8125
        %8127 = vrot.lane.b32.xlu0 %v8080, 64
        %v8128 = vpop.permute.xlu0 %8127
        %8129 = vrot.lane.b32.xlu0 %v8082, 64
        %v8130 = vpop.permute.xlu0 %8129
        %8131 = vrot.lane.b32.xlu0 %v8084, 64
        %v8132 = vpop.permute.xlu0 %8131
        %8133 = vrot.lane.b32.xlu0 %v8086, 64
        %v8134 = vpop.permute.xlu0 %8133
        %v8151 = vmul.f32 %v8023, %v8104
        %v8152 = vmul.f32 %v8024, %v8106
        %v8153 = vmul.f32 %v8025, %v8108
        %v8154 = vmul.f32 %v8026, %v8110
        %v8155 = vmul.f32 %v8027, %v8112
        %v8156 = vmul.f32 %v8028, %v8114
        %v8157 = vmul.f32 %v8029, %v8116
        %v8158 = vmul.f32 %v8030, %v8118
        %v8159 = vmul.f32 %v8031, %v8120
        %v8160 = vmul.f32 %v8032, %v8122
        %v8161 = vmul.f32 %v8033, %v8124
        %v8162 = vmul.f32 %v8034, %v8126
        %v8163 = vmul.f32 %v8035, %v8128
        %v8164 = vmul.f32 %v8036, %v8130
        %v8165 = vmul.f32 %v8037, %v8132
        %v8166 = vmul.f32 %v8038, %v8134
        %8183 = vrot.lane.b32.xlu0 %v8151, 64
        %v8184 = vpop.permute.xlu0 %8183
        %8185 = vrot.lane.b32.xlu0 %v8152, 64
        %v8186 = vpop.permute.xlu0 %8185
        %8187 = vrot.lane.b32.xlu0 %v8153, 64
        %v8188 = vpop.permute.xlu0 %8187
        %8189 = vrot.lane.b32.xlu0 %v8154, 64
        %v8190 = vpop.permute.xlu0 %8189
        %8191 = vrot.lane.b32.xlu0 %v8155, 64
        %v8192 = vpop.permute.xlu0 %8191
        %8193 = vrot.lane.b32.xlu0 %v8156, 64
        %v8194 = vpop.permute.xlu0 %8193
        %8195 = vrot.lane.b32.xlu0 %v8157, 64
        %v8196 = vpop.permute.xlu0 %8195
        %8197 = vrot.lane.b32.xlu0 %v8158, 64
        %v8198 = vpop.permute.xlu0 %8197
        %8199 = vrot.lane.b32.xlu0 %v8159, 64
        %v8200 = vpop.permute.xlu0 %8199
        %8201 = vrot.lane.b32.xlu0 %v8160, 64
        %v8202 = vpop.permute.xlu0 %8201
        %8203 = vrot.lane.b32.xlu0 %v8161, 64
        %v8204 = vpop.permute.xlu0 %8203
        %8205 = vrot.lane.b32.xlu0 %v8162, 64
        %v8206 = vpop.permute.xlu0 %8205
        %8207 = vrot.lane.b32.xlu0 %v8163, 64
        %v8208 = vpop.permute.xlu0 %8207
        %8209 = vrot.lane.b32.xlu0 %v8164, 64
        %v8210 = vpop.permute.xlu0 %8209
        %8211 = vrot.lane.b32.xlu0 %v8165, 64
        %v8212 = vpop.permute.xlu0 %8211
        %8213 = vrot.lane.b32.xlu0 %v8166, 64
        %v8214 = vpop.permute.xlu0 %8213
        %v8231 = vadd.f32 %v7991, %v8184
        %v8232 = vadd.f32 %v7992, %v8186
        %v8233 = vadd.f32 %v7993, %v8188
        %v8234 = vadd.f32 %v7994, %v8190
        %v8235 = vadd.f32 %v7995, %v8192
        %v8236 = vadd.f32 %v7996, %v8194
        %v8237 = vadd.f32 %v7997, %v8196
        %v8238 = vadd.f32 %v7998, %v8198
        %v8239 = vadd.f32 %v7999, %v8200
        %v8240 = vadd.f32 %v8000, %v8202
        %v8241 = vadd.f32 %v8001, %v8204
        %v8242 = vadd.f32 %v8002, %v8206
        %v8243 = vadd.f32 %v8003, %v8208
        %v8244 = vadd.f32 %v8004, %v8210
        %v8245 = vadd.f32 %v8005, %v8212
        %v8246 = vadd.f32 %v8006, %v8214
        %v8247 = vmul.f32 %v8231, -0.5
        %v8248 = vmul.f32 %v8232, -0.5
        %v8249 = vmul.f32 %v8233, -0.5
        %v8250 = vmul.f32 %v8234, -0.5
        %v8251 = vmul.f32 %v8235, -0.5
        %v8252 = vmul.f32 %v8236, -0.5
        %v8253 = vmul.f32 %v8237, -0.5
        %v8254 = vmul.f32 %v8238, -0.5
        %v8255 = vmul.f32 %v8239, -0.5
        %v8256 = vmul.f32 %v8240, -0.5
        %v8257 = vmul.f32 %v8241, -0.5
        %v8258 = vmul.f32 %v8242, -0.5
        %v8259 = vmul.f32 %v8243, -0.5
        %v8260 = vmul.f32 %v8244, -0.5
        %v8261 = vmul.f32 %v8245, -0.5
        %v8262 = vmul.f32 %v8246, -0.5
        %8279 = vrot.lane.b32.xlu0 %v7975, 64
        %v8280 = vpop.permute.xlu0 %8279
        %8281 = vrot.lane.b32.xlu0 %v7976, 64
        %v8282 = vpop.permute.xlu0 %8281
        %8283 = vrot.lane.b32.xlu0 %v7977, 64
        %v8284 = vpop.permute.xlu0 %8283
        %8285 = vrot.lane.b32.xlu0 %v7978, 64
        %v8286 = vpop.permute.xlu0 %8285
        %8287 = vrot.lane.b32.xlu0 %v7979, 64
        %v8288 = vpop.permute.xlu0 %8287
        %8289 = vrot.lane.b32.xlu0 %v7980, 64
        %v8290 = vpop.permute.xlu0 %8289
        %8291 = vrot.lane.b32.xlu0 %v7981, 64
        %v8292 = vpop.permute.xlu0 %8291
        %8293 = vrot.lane.b32.xlu0 %v7982, 64
        %v8294 = vpop.permute.xlu0 %8293
        %8295 = vrot.lane.b32.xlu0 %v7983, 64
        %v8296 = vpop.permute.xlu0 %8295
        %8297 = vrot.lane.b32.xlu0 %v7984, 64
        %v8298 = vpop.permute.xlu0 %8297
        %8299 = vrot.lane.b32.xlu0 %v7985, 64
        %v8300 = vpop.permute.xlu0 %8299
        %8301 = vrot.lane.b32.xlu0 %v7986, 64
        %v8302 = vpop.permute.xlu0 %8301
        %8303 = vrot.lane.b32.xlu0 %v7987, 64
        %v8304 = vpop.permute.xlu0 %8303
        %8305 = vrot.lane.b32.xlu0 %v7988, 64
        %v8306 = vpop.permute.xlu0 %8305
        %8307 = vrot.lane.b32.xlu0 %v7989, 64
        %v8308 = vpop.permute.xlu0 %8307
        %8309 = vrot.lane.b32.xlu0 %v7990, 64
        %v8310 = vpop.permute.xlu0 %8309
        %v8327 = vsub.f32 %v8247, %v8280
        %v8328 = vsub.f32 %v8248, %v8282
        %v8329 = vsub.f32 %v8249, %v8284
        %v8330 = vsub.f32 %v8250, %v8286
        %v8331 = vsub.f32 %v8251, %v8288
        %v8332 = vsub.f32 %v8252, %v8290
        %v8333 = vsub.f32 %v8253, %v8292
        %v8334 = vsub.f32 %v8254, %v8294
        %v8335 = vsub.f32 %v8255, %v8296
        %v8336 = vsub.f32 %v8256, %v8298
        %v8337 = vsub.f32 %v8257, %v8300
        %v8338 = vsub.f32 %v8258, %v8302
        %v8339 = vsub.f32 %v8259, %v8304
        %v8340 = vsub.f32 %v8260, %v8306
        %v8341 = vsub.f32 %v8261, %v8308
        %v8342 = vsub.f32 %v8262, %v8310
        %8359 = vrot.lane.b32.xlu0 %v8327, 64
        %v8360 = vpop.permute.xlu0 %8359
        %8361 = vrot.lane.b32.xlu0 %v8328, 64
        %v8362 = vpop.permute.xlu0 %8361
        %8363 = vrot.lane.b32.xlu0 %v8329, 64
        %v8364 = vpop.permute.xlu0 %8363
        %8365 = vrot.lane.b32.xlu0 %v8330, 64
        %v8366 = vpop.permute.xlu0 %8365
        %8367 = vrot.lane.b32.xlu0 %v8331, 64
        %v8368 = vpop.permute.xlu0 %8367
        %8369 = vrot.lane.b32.xlu0 %v8332, 64
        %v8370 = vpop.permute.xlu0 %8369
        %8371 = vrot.lane.b32.xlu0 %v8333, 64
        %v8372 = vpop.permute.xlu0 %8371
        %8373 = vrot.lane.b32.xlu0 %v8334, 64
        %v8374 = vpop.permute.xlu0 %8373
        %8375 = vrot.lane.b32.xlu0 %v8335, 64
        %v8376 = vpop.permute.xlu0 %8375
        %8377 = vrot.lane.b32.xlu0 %v8336, 64
        %v8378 = vpop.permute.xlu0 %8377
        %8379 = vrot.lane.b32.xlu0 %v8337, 64
        %v8380 = vpop.permute.xlu0 %8379
        %8381 = vrot.lane.b32.xlu0 %v8338, 64
        %v8382 = vpop.permute.xlu0 %8381
        %8383 = vrot.lane.b32.xlu0 %v8339, 64
        %v8384 = vpop.permute.xlu0 %8383
        %8385 = vrot.lane.b32.xlu0 %v8340, 64
        %v8386 = vpop.permute.xlu0 %8385
        %8387 = vrot.lane.b32.xlu0 %v8341, 64
        %v8388 = vpop.permute.xlu0 %8387
        %8389 = vrot.lane.b32.xlu0 %v8342, 64
        %v8390 = vpop.permute.xlu0 %8389
        %v8407 = vsel %vm6637, %v8360, 0.0
        %8408 = vadd.xlane.f32.xlu0 %v8407
        %v8409 = vpop.xlane.xlu0 %8408
        %v8410 = vsel %vm6637, %v8362, 0.0
        %8411 = vadd.xlane.f32.xlu0 %v8410
        %v8412 = vpop.xlane.xlu0 %8411
        %v8413 = vsel %vm6637, %v8364, 0.0
        %8414 = vadd.xlane.f32.xlu0 %v8413
        %v8415 = vpop.xlane.xlu0 %8414
        %v8416 = vsel %vm6637, %v8366, 0.0
        %8417 = vadd.xlane.f32.xlu0 %v8416
        %v8418 = vpop.xlane.xlu0 %8417
        %v8419 = vsel %vm6637, %v8368, 0.0
        %8420 = vadd.xlane.f32.xlu0 %v8419
        %v8421 = vpop.xlane.xlu0 %8420
        %v8422 = vsel %vm6637, %v8370, 0.0
        %8423 = vadd.xlane.f32.xlu0 %v8422
        %v8424 = vpop.xlane.xlu0 %8423
        %v8425 = vsel %vm6637, %v8372, 0.0
        %8426 = vadd.xlane.f32.xlu0 %v8425
        %v8427 = vpop.xlane.xlu0 %8426
        %v8428 = vsel %vm6637, %v8374, 0.0
        %8429 = vadd.xlane.f32.xlu0 %v8428
        %v8430 = vpop.xlane.xlu0 %8429
        %v8431 = vsel %vm6637, %v8376, 0.0
        %8432 = vadd.xlane.f32.xlu0 %v8431
        %v8433 = vpop.xlane.xlu0 %8432
        %v8434 = vsel %vm6637, %v8378, 0.0
        %8435 = vadd.xlane.f32.xlu0 %v8434
        %v8436 = vpop.xlane.xlu0 %8435
        %v8437 = vsel %vm6637, %v8380, 0.0
        %8438 = vadd.xlane.f32.xlu0 %v8437
        %v8439 = vpop.xlane.xlu0 %8438
        %v8440 = vsel %vm6637, %v8382, 0.0
        %8441 = vadd.xlane.f32.xlu0 %v8440
        %v8442 = vpop.xlane.xlu0 %8441
        %v8443 = vsel %vm6637, %v8384, 0.0
        %8444 = vadd.xlane.f32.xlu0 %v8443
        %v8445 = vpop.xlane.xlu0 %8444
        %v8446 = vsel %vm6637, %v8386, 0.0
        %8447 = vadd.xlane.f32.xlu0 %v8446
        %v8448 = vpop.xlane.xlu0 %8447
        %v8449 = vsel %vm6637, %v8388, 0.0
        %8450 = vadd.xlane.f32.xlu0 %v8449
        %v8451 = vpop.xlane.xlu0 %8450
        %v8452 = vsel %vm6637, %v8390, 0.0
        %8453 = vadd.xlane.f32.xlu0 %v8452
        %v8454 = vpop.xlane.xlu0 %8453
        %v8455 = vadd.f32 %v531, %v532
        %8456 = vadd.xlane.f32.xlu0 %v8455
        %v8457 = vpop.xlane.xlu0 %8456
        %v8458 = vadd.f32 %v533, %v534
        %8459 = vadd.xlane.f32.xlu0 %v8458
        %v8460 = vpop.xlane.xlu0 %8459
        %v8461 = vadd.f32 %v535, %v536
        %8462 = vadd.xlane.f32.xlu0 %v8461
        %v8463 = vpop.xlane.xlu0 %8462
        %v8464 = vadd.f32 %v537, %v538
        %8465 = vadd.xlane.f32.xlu0 %v8464
        %v8466 = vpop.xlane.xlu0 %8465
        %v8467 = vadd.f32 %v539, %v540
        %8468 = vadd.xlane.f32.xlu0 %v8467
        %v8469 = vpop.xlane.xlu0 %8468
        %v8470 = vadd.f32 %v541, %v542
        %8471 = vadd.xlane.f32.xlu0 %v8470
        %v8472 = vpop.xlane.xlu0 %8471
        %v8473 = vadd.f32 %v543, %v544
        %8474 = vadd.xlane.f32.xlu0 %v8473
        %v8475 = vpop.xlane.xlu0 %8474
        %v8476 = vadd.f32 %v545, %v546
        %8477 = vadd.xlane.f32.xlu0 %v8476
        %v8478 = vpop.xlane.xlu0 %8477
        %v8479 = vadd.f32 %v547, %v548
        %8480 = vadd.xlane.f32.xlu0 %v8479
        %v8481 = vpop.xlane.xlu0 %8480
        %v8482 = vadd.f32 %v549, %v550
        %8483 = vadd.xlane.f32.xlu0 %v8482
        %v8484 = vpop.xlane.xlu0 %8483
        %v8485 = vadd.f32 %v551, %v552
        %8486 = vadd.xlane.f32.xlu0 %v8485
        %v8487 = vpop.xlane.xlu0 %8486
        %v8488 = vadd.f32 %v553, %v554
        %8489 = vadd.xlane.f32.xlu0 %v8488
        %v8490 = vpop.xlane.xlu0 %8489
        %v8491 = vadd.f32 %v555, %v556
        %8492 = vadd.xlane.f32.xlu0 %v8491
        %v8493 = vpop.xlane.xlu0 %8492
        %v8494 = vadd.f32 %v557, %v558
        %8495 = vadd.xlane.f32.xlu0 %v8494
        %v8496 = vpop.xlane.xlu0 %8495
        %v8497 = vadd.f32 %v559, %v560
        %8498 = vadd.xlane.f32.xlu0 %v8497
        %v8499 = vpop.xlane.xlu0 %8498
        %v8500 = vadd.f32 %v561, %v562
        %8501 = vadd.xlane.f32.xlu0 %v8500
        %v8502 = vpop.xlane.xlu0 %8501
        %v8503 = vmul.f32 %v8409, %v8457
        %v8504 = vmul.f32 %v8412, %v8460
        %v8505 = vmul.f32 %v8415, %v8463
        %v8506 = vmul.f32 %v8418, %v8466
        %v8507 = vmul.f32 %v8421, %v8469
        %v8508 = vmul.f32 %v8424, %v8472
        %v8509 = vmul.f32 %v8427, %v8475
        %v8510 = vmul.f32 %v8430, %v8478
        %v8511 = vmul.f32 %v8433, %v8481
        %v8512 = vmul.f32 %v8436, %v8484
        %v8513 = vmul.f32 %v8439, %v8487
        %v8514 = vmul.f32 %v8442, %v8490
        %v8515 = vmul.f32 %v8445, %v8493
        %v8516 = vmul.f32 %v8448, %v8496
        %v8517 = vmul.f32 %v8451, %v8499
        %v8518 = vmul.f32 %v8454, %v8502
        %v8519 = vadd.f32 %v7081, %v7084
        %v8520 = vadd.f32 %v8519, %v7087
        %v8521 = vadd.f32 %v8520, %v7090
        %v8522 = vadd.f32 %v8521, %v7093
        %v8523 = vadd.f32 %v8522, %v7096
        %v8524 = vadd.f32 %v8523, %v7099
        %v8525 = vadd.f32 %v8524, %v7102
        %v8526 = vadd.f32 %v8525, %v7105
        %v8527 = vadd.f32 %v8526, %v7108
        %v8528 = vadd.f32 %v8527, %v7111
        %v8529 = vadd.f32 %v8528, %v7114
        %v8530 = vadd.f32 %v8529, %v7117
        %v8531 = vadd.f32 %v8530, %v7120
        %v8532 = vadd.f32 %v8531, %v7123
        %v8533 = vadd.f32 %v8532, %v7126
        %v8534 = vrot.slane %v8533, 4
        %v8535 = vadd.f32 %v8533, %v8534
        %v8536 = vrot.slane %v8535, 2
        %v8537 = vadd.f32 %v8535, %v8536
        %v8538 = vrot.slane %v8537, 1
        %v8539 = vadd.f32 %v8537, %v8538
        %8540 = vst [vmem:[%s525] sm:$0xff] %v8539
        %v8541 = vadd.f32 %v8503, %v8504
        %v8542 = vadd.f32 %v8541, %v8505
        %v8543 = vadd.f32 %v8542, %v8506
        %v8544 = vadd.f32 %v8543, %v8507
        %v8545 = vadd.f32 %v8544, %v8508
        %v8546 = vadd.f32 %v8545, %v8509
        %v8547 = vadd.f32 %v8546, %v8510
        %v8548 = vadd.f32 %v8547, %v8511
        %v8549 = vadd.f32 %v8548, %v8512
        %v8550 = vadd.f32 %v8549, %v8513
        %v8551 = vadd.f32 %v8550, %v8514
        %v8552 = vadd.f32 %v8551, %v8515
        %v8553 = vadd.f32 %v8552, %v8516
        %v8554 = vadd.f32 %v8553, %v8517
        %v8555 = vadd.f32 %v8554, %v8518
        %v8556 = vrot.slane %v8555, 4
        %v8557 = vadd.f32 %v8555, %v8556
        %v8558 = vrot.slane %v8557, 2
        %v8559 = vadd.f32 %v8557, %v8558
        %v8560 = vrot.slane %v8559, 1
        %v8561 = vadd.f32 %v8559, %v8560
        %8562 = vst [vmem:[%s529] sm:$0xff] %v8561
        %p8563 = scmp.lt.s32.totalorder %s30, 1
        %s8564 = scalar_select %p8563, %s30, 1
        %s8565 = smul.addr %s8564, 8
        %s8566 = scalar_lea.vmem %s11, %s8565
        %p8567 = scmp.lt.s32.totalorder %s30, 1
        %s8568 = scalar_select %p8567, %s30, 1
        %s8569 = smul.addr %s8568, 8
        %s8570 = scalar_lea.vmem %s12, %s8569
        // Predicated region
        $region93: #{vae_forward.1} parent=63 // pred_check
          %p8571 = pneg %p284
        $region94: #{vae_forward.1} parent=63 // pred_check_branch
          %8573 = sbr.rel (%p8571) target = $region96
        $region95: #{vae_forward.1} parent=63 // pred_region
          _
        $region96: #{vae_forward.1} parent=63 // pred_fallthru
          _
        // Predicated region
        $region97: #{vae_forward.1} parent=63 // pred_check
          %p8574 = pneg %p310
        $region98: #{vae_forward.1} parent=63 // pred_check_branch
          %8576 = sbr.rel (%p8574) target = $region100
        $region99: #{vae_forward.1} parent=63 // pred_region
          _
        $region100: #{vae_forward.1} parent=63 // pred_fallthru
          _
      $region64: #{vae_forward.1} parent=5 // pred_fallthru
        _
      %p8577 = scmp.le.s32.totalorder 2, %s25
      // Predicated region
      $region101: #{vae_forward.1} parent=5 // pred_check
        %p8578 = pneg %p8577
      $region102: #{vae_forward.1} parent=5 // pred_check_branch
        %8580 = sbr.rel (%p8578) target = $region104
      $region103: #{vae_forward.1} parent=5 // pred_region
        %s8581 = ssub.s32 %s25, 2
        // Predicated region
        $region105: #{vae_forward.1} parent=103 // pred_check
          %p8582 = pneg %p290
        $region106: #{vae_forward.1} parent=103 // pred_check_branch
          %8584 = sbr.rel (%p8582) target = $region108
        $region107: #{vae_forward.1} parent=103 // pred_region
          %p8585 = scmp.lt.s32.totalorder %s31, 1
          %s8586 = scalar_select %p8585, %s31, 1
          %s8587 = smul.addr %s8586, 8
          %s8588 = scalar_lea.vmem %s11, %s8587
        $region108: #{vae_forward.1} parent=103 // pred_fallthru
          _
        // Predicated region
        $region109: #{vae_forward.1} parent=103 // pred_check
          %p8589 = pneg %p316
        $region110: #{vae_forward.1} parent=103 // pred_check_branch
          %8591 = sbr.rel (%p8589) target = $region112
        $region111: #{vae_forward.1} parent=103 // pred_region
          %p8592 = scmp.lt.s32.totalorder %s31, 1
          %s8593 = scalar_select %p8592, %s31, 1
          %s8594 = smul.addr %s8593, 8
          %s8595 = scalar_lea.vmem %s12, %s8594
        $region112: #{vae_forward.1} parent=103 // pred_fallthru
          _
      $region104: #{vae_forward.1} parent=5 // pred_fallthru
        _
    $region6: #{vae_forward.1} parent=1 // loop_footer
      %s29 = sadd.s32 1, %s25
    $region7: #{vae_forward.1} parent=1 // loop_footer_branch
      %24 = sbr.rel target = $region3
    $region8: #{vae_forward.1} parent=1 // loop_exit
      _
    %8596 = vsyncpa [#allocation3], 1
    %s8597 = scalar_lea.sflag [#allocation3], 1
    %8598 = vsyncpa %s8597, 1
    %8599 = vsyncpa [#allocation5], 1
    %8600 = vsyncpa [#allocation8], 1
    %8601 = vsyncpa [#allocation11], 1

</llo_original>
